<compile_context>
chip_gen: v6e
topology: v6e:2x2x1
jax: 0.10.0
libtpu: 0.0.40
codegen_flags: <defaults>
</compile_context>

<pallas_src>
import functools

import numpy as np
import jax
import jax.numpy as jnp
from jax.experimental import pallas as pl
from jax.experimental.pallas import tpu as pltpu

EPS = 1e-5


def _stn_kernel(x_ref, w1_ref, s1_ref, w2_ref, s2_ref, w3_ref, s3_ref,
                wf1_ref, s4_ref, wf2_ref, s5_ref, wf3_ref, s6_ref, out_ref,
                *, bt, n):
    """One grid step == a tile of `bt` batch elements.

    x_ref  : (bt*n, k)  bf16 points, channels-last, batch folded into rows
    w*_ref : (in, out)  bf16 weights, eval-BN scale folded into the columns
    s*_ref : (1, out)   f32 folded shift (conv/fc bias + BN shift)
    s6_ref : (1, k*k)   f32 fc3 bias + flattened identity
    out_ref: (bt, k*k)  f32
    """

    def lin_relu_bf16(h, w_ref, s_ref):
        y = jnp.dot(h, w_ref[...], preferred_element_type=jnp.float32)
        y = jnp.maximum(y + s_ref[...], 0.0)
        return y.astype(jnp.bfloat16)

    x = x_ref[...]                                # (bt*n, k) bf16

    # point-wise MLP (conv1d k=1 == per-point matmul) + folded BN + ReLU
    h = lin_relu_bf16(x, w1_ref, s1_ref)          # (bt*n, 64)
    h = lin_relu_bf16(h, w2_ref, s2_ref)          # (bt*n, 128)
    h = lin_relu_bf16(h, w3_ref, s3_ref)          # (bt*n, 1024)

    # torch.max over the points dimension (dim=2 in NCW)
    g = jnp.max(h.reshape(bt, n, h.shape[-1]), axis=1)   # (bt, 1024)

    # FC head over the whole batch tile
    f = lin_relu_bf16(g, wf1_ref, s4_ref)         # (bt, 512)
    f = lin_relu_bf16(f, wf2_ref, s5_ref)         # (bt, 256)
    out = jnp.dot(f, wf3_ref[...], preferred_element_type=jnp.float32)
    out_ref[...] = out + s6_ref[...]              # (bt, k*k) + bias + identity


def stnkd_forward(x_bcn, folded_params, *, batch_tile=8):
    """x_bcn: (B, C=k, N) float32, PyTorch layout. Returns (B, k, k) float32."""
    B, C, N = x_bcn.shape
    k = C
    kk = k * k

    # batch tile: keep the (bt, k*k) output block sublane-aligned (bt % 8 == 0)
    # or fall back to a single grid step over the whole batch.
    if B % batch_tile == 0 and batch_tile % 8 == 0:
        bt = batch_tile
    else:
        bt = B
    grid = (B // bt,)

    # channels-last, batch folded into rows, bf16 for the MXU (half the DMA).
    x_rows = jnp.transpose(x_bcn, (0, 2, 1)).reshape(B * N, C).astype(jnp.bfloat16)

    def const_spec(a):
        # full-array block, constant index_map => fetched once, stays resident
        return pl.BlockSpec(a.shape, lambda b, _nd=a.ndim: (0,) * _nd)

    in_specs = [pl.BlockSpec((bt * N, C), lambda b: (b, 0))]
    in_specs += [const_spec(a) for a in folded_params]

    flops = 2 * B * (N * (k * 64 + 64 * 128 + 128 * 1024)
                     + 1024 * 512 + 512 * 256 + 256 * kk)
    bytes_accessed = (x_rows.size * x_rows.dtype.itemsize
                      + sum(int(a.size) * a.dtype.itemsize for a in folded_params)
                      + B * kk * 4)

    out = pl.pallas_call(
        functools.partial(_stn_kernel, bt=bt, n=N),
        out_shape=jax.ShapeDtypeStruct((B, kk), jnp.float32),
        grid=grid,
        in_specs=in_specs,
        out_specs=pl.BlockSpec((bt, kk), lambda b: (b, 0)),
        compiler_params=pltpu.CompilerParams(
            dimension_semantics=("parallel",),          # batch blocks independent
            vmem_limit_bytes=32 * 1024 * 1024,          # < v7x 64 MiB physical VMEM
        ),
        cost_estimate=pl.CostEstimate(
            flops=flops, transcendentals=0, bytes_accessed=bytes_accessed),
    )(x_rows, *folded_params)
    return out.reshape(B, k, k)


# ---------------------------------------------------------------------------
# Deterministic parameter construction (synthetic; no checkpoint load)
# ---------------------------------------------------------------------------
def make_raw_params(key, k):
    """PyTorch-style raw params: conv/fc weights (out, in), biases, BN stats."""
    dims_conv = [(64, k), (128, 64), (1024, 128)]
    dims_fc = [(512, 1024), (256, 512), (k * k, 256)]
    raw = {}
    keys = jax.random.split(key, 32)
    ki = 0

    def nxt():
        nonlocal ki
        kk_ = keys[ki]
        ki += 1
        return kk_

    for i, (o, c) in enumerate(dims_conv, start=1):
        raw[f"conv{i}_w"] = 0.05 * jax.random.normal(nxt(), (o, c), jnp.float32)
        raw[f"conv{i}_b"] = 0.05 * jax.random.normal(nxt(), (o,), jnp.float32)
        raw[f"bn{i}_g"] = 1.0 + 0.1 * jax.random.normal(nxt(), (o,), jnp.float32)
        raw[f"bn{i}_b"] = 0.1 * jax.random.normal(nxt(), (o,), jnp.float32)
        raw[f"bn{i}_m"] = 0.1 * jax.random.normal(nxt(), (o,), jnp.float32)
        raw[f"bn{i}_v"] = 0.5 + jnp.abs(0.5 * jax.random.normal(nxt(), (o,), jnp.float32))
    for i, (o, c) in enumerate(dims_fc, start=1):
        raw[f"fc{i}_w"] = 0.05 * jax.random.normal(nxt(), (o, c), jnp.float32)
        raw[f"fc{i}_b"] = 0.05 * jax.random.normal(nxt(), (o,), jnp.float32)
        if i < 3:
            j = i + 3  # bn4, bn5
            raw[f"bn{j}_g"] = 1.0 + 0.1 * jax.random.normal(nxt(), (o,), jnp.float32)
            raw[f"bn{j}_b"] = 0.1 * jax.random.normal(nxt(), (o,), jnp.float32)
            raw[f"bn{j}_m"] = 0.1 * jax.random.normal(nxt(), (o,), jnp.float32)
            raw[f"bn{j}_v"] = 0.5 + jnp.abs(0.5 * jax.random.normal(nxt(), (o,), jnp.float32))
    return raw


def fold_params(raw, k):
    """Fold bias + eval-mode BN into the weights; transpose to (in, out), bf16.

        scale = gamma / sqrt(running_var + eps)
        W'    = W.T * scale        (bf16, fed to the MXU)
        shift = (bias - running_mean) * scale + beta   (f32, post-accumulate add)
    """
    def fold(w, b, g, be, m, v):
        scale = g / jnp.sqrt(v + EPS)
        shift = (b - m) * scale + be
        w_folded = (w.T * scale[None, :]).astype(jnp.bfloat16)   # (in, out)
        return w_folded, shift[None, :].astype(jnp.float32)      # (1, out)

    w1, s1 = fold(raw["conv1_w"], raw["conv1_b"], raw["bn1_g"], raw["bn1_b"], raw["bn1_m"], raw["bn1_v"])
    w2, s2 = fold(raw["conv2_w"], raw["conv2_b"], raw["bn2_g"], raw["bn2_b"], raw["bn2_m"], raw["bn2_v"])
    w3, s3 = fold(raw["conv3_w"], raw["conv3_b"], raw["bn3_g"], raw["bn3_b"], raw["bn3_m"], raw["bn3_v"])
    wf1, s4 = fold(raw["fc1_w"], raw["fc1_b"], raw["bn4_g"], raw["bn4_b"], raw["bn4_m"], raw["bn4_v"])
    wf2, s5 = fold(raw["fc2_w"], raw["fc2_b"], raw["bn5_g"], raw["bn5_b"], raw["bn5_m"], raw["bn5_v"])
    wf3 = raw["fc3_w"].T.astype(jnp.bfloat16)                               # (256, k*k)
    s6 = (raw["fc3_b"] + jnp.eye(k, dtype=jnp.float32).reshape(-1))[None, :].astype(jnp.float32)
    return (w1, s1, w2, s2, w3, s3, wf1, s4, wf2, s5, wf3, s6)


# ---------------------------------------------------------------------------
# Pure-JAX reference (straight transcription of the PyTorch forward, eval BN)
# ---------------------------------------------------------------------------
def reference_forward(x_bcn, raw, k):
    def bn(x_bcn_, g, be, m, v):  # BN over channel axis 1 of (B, C, N)
        return (x_bcn_ - m[None, :, None]) / jnp.sqrt(v[None, :, None] + EPS) \
            * g[None, :, None] + be[None, :, None]

    def conv1(x_bcn_, w, b):  # conv1d, kernel size 1
        return jnp.einsum("bcn,oc->bon", x_bcn_, w) + b[None, :, None]

    x = x_bcn
    x = jax.nn.relu(bn(conv1(x, raw["conv1_w"], raw["conv1_b"]),
                       raw["bn1_g"], raw["bn1_b"], raw["bn1_m"], raw["bn1_v"]))
    x = jax.nn.relu(bn(conv1(x, raw["conv2_w"], raw["conv2_b"]),
                       raw["bn2_g"], raw["bn2_b"], raw["bn2_m"], raw["bn2_v"]))
    x = jax.nn.relu(bn(conv1(x, raw["conv3_w"], raw["conv3_b"]),
                       raw["bn3_g"], raw["bn3_b"], raw["bn3_m"], raw["bn3_v"]))
    x = jnp.max(x, axis=2)  # (B, 1024)

    def bn1d(x2d, g, be, m, v):
        return (x2d - m[None, :]) / jnp.sqrt(v[None, :] + EPS) * g[None, :] + be[None, :]

    x = jax.nn.relu(bn1d(x @ raw["fc1_w"].T + raw["fc1_b"],
                         raw["bn4_g"], raw["bn4_b"], raw["bn4_m"], raw["bn4_v"]))
    x = jax.nn.relu(bn1d(x @ raw["fc2_w"].T + raw["fc2_b"],
                         raw["bn5_g"], raw["bn5_b"], raw["bn5_m"], raw["bn5_v"]))
    x = x @ raw["fc3_w"].T + raw["fc3_b"]
    x = x + jnp.eye(k, dtype=jnp.float32).reshape(1, -1)
    return x.reshape(-1, k, k)


if __name__ == "__main__":
    # small shapes: batch=16, k=16 channels, 128 points  (batch tile of 8 -> grid=(2,))
    B, k, N = 16, 16, 128
    key = jax.random.PRNGKey(0)
    kx, kp = jax.random.split(key)

    x = jax.random.normal(kx, (B, k, N), jnp.float32)  # PyTorch layout (B, C=k, N)

    raw = make_raw_params(kp, k)
    folded = fold_params(raw, k)

    out = jax.block_until_ready(stnkd_forward(x, folded))
    assert out.shape == (B, k, k)

    ref = jax.block_until_ready(reference_forward(x, raw, k))
    # bf16 MXU inputs with f32 accumulation -> relaxed tolerance vs f32 reference
    np.testing.assert_allclose(np.asarray(out), np.asarray(ref), rtol=2e-2, atol=2e-2)

    print("KERNEL_OK")
</pallas_src>

<mosaic_0001>
module attributes {stable_mosaic.version = 11 : i64} {
  func.func @_stn_kernel(%arg0: i32, %arg1: memref<1024x16xbf16, #tpu.memory_space<vmem>>, %arg2: memref<16x64xbf16, #tpu.memory_space<vmem>>, %arg3: memref<1x64xf32, #tpu.memory_space<vmem>>, %arg4: memref<64x128xbf16, #tpu.memory_space<vmem>>, %arg5: memref<1x128xf32, #tpu.memory_space<vmem>>, %arg6: memref<128x1024xbf16, #tpu.memory_space<vmem>>, %arg7: memref<1x1024xf32, #tpu.memory_space<vmem>>, %arg8: memref<1024x512xbf16, #tpu.memory_space<vmem>>, %arg9: memref<1x512xf32, #tpu.memory_space<vmem>>, %arg10: memref<512x256xbf16, #tpu.memory_space<vmem>>, %arg11: memref<1x256xf32, #tpu.memory_space<vmem>>, %arg12: memref<256x256xbf16, #tpu.memory_space<vmem>>, %arg13: memref<1x256xf32, #tpu.memory_space<vmem>>, %arg14: memref<8x256xf32, #tpu.memory_space<vmem>>) attributes {dimension_semantics = [#tpu.dimension_semantics<parallel>], iteration_bounds = array<i64: 2>, scalar_prefetch = 0 : i64, scratch_operands = 0 : i64, tpu.core_type = #tpu.core_type<tc>, window_params = [{transform_indices = @transform_0, window_bounds = array<i64: 1024, 16>}, {pipeline_mode = #tpu.pipeline_mode<synchronous>, transform_indices = @transform_1, window_bounds = array<i64: 16, 64>}, {pipeline_mode = #tpu.pipeline_mode<synchronous>, transform_indices = @transform_2, window_bounds = array<i64: 1, 64>}, {pipeline_mode = #tpu.pipeline_mode<synchronous>, transform_indices = @transform_3, window_bounds = array<i64: 64, 128>}, {pipeline_mode = #tpu.pipeline_mode<synchronous>, transform_indices = @transform_4, window_bounds = array<i64: 1, 128>}, {pipeline_mode = #tpu.pipeline_mode<synchronous>, transform_indices = @transform_5, window_bounds = array<i64: 128, 1024>}, {pipeline_mode = #tpu.pipeline_mode<synchronous>, transform_indices = @transform_6, window_bounds = array<i64: 1, 1024>}, {pipeline_mode = #tpu.pipeline_mode<synchronous>, transform_indices = @transform_7, window_bounds = array<i64: 1024, 512>}, {pipeline_mode = #tpu.pipeline_mode<synchronous>, transform_indices = @transform_8, window_bounds = array<i64: 1, 512>}, {pipeline_mode = #tpu.pipeline_mode<synchronous>, transform_indices = @transform_9, window_bounds = array<i64: 512, 256>}, {pipeline_mode = #tpu.pipeline_mode<synchronous>, transform_indices = @transform_10, window_bounds = array<i64: 1, 256>}, {pipeline_mode = #tpu.pipeline_mode<synchronous>, transform_indices = @transform_11, window_bounds = array<i64: 256, 256>}, {pipeline_mode = #tpu.pipeline_mode<synchronous>, transform_indices = @transform_12, window_bounds = array<i64: 1, 256>}, {transform_indices = @transform_13, window_bounds = array<i64: 8, 256>}]} {
    %c0 = arith.constant 0 : index
    %c0_0 = arith.constant 0 : index
    %0 = vector.load %arg1[%c0, %c0_0] : memref<1024x16xbf16, #tpu.memory_space<vmem>>, vector<1024x16xbf16>
    %c0_1 = arith.constant 0 : index
    %c0_2 = arith.constant 0 : index
    %1 = vector.load %arg2[%c0_1, %c0_2] : memref<16x64xbf16, #tpu.memory_space<vmem>>, vector<16x64xbf16>
    %cst = arith.constant dense<0.000000e+00> : vector<1024x64xf32>
    %2 = tpu.matmul %0, %1, %cst {dimension_numbers = #tpu.dot_dimension_numbers<[1], [0], [0], [1], [0, 0, 1, 1], [], []>} : vector<1024x16xbf16>, vector<16x64xbf16>, vector<1024x64xf32> -> vector<1024x64xf32>
    %c0_3 = arith.constant 0 : index
    %c0_4 = arith.constant 0 : index
    %3 = vector.load %arg3[%c0_3, %c0_4] : memref<1x64xf32, #tpu.memory_space<vmem>>, vector<1x64xf32>
    %4 = vector.broadcast %3 : vector<1x64xf32> to vector<1024x64xf32>
    %5 = arith.addf %2, %4 : vector<1024x64xf32>
    %cst_5 = arith.constant 0.000000e+00 : f32
    %6 = vector.broadcast %cst_5 : f32 to vector<1024x64xf32>
    %7 = arith.maximumf %5, %6 : vector<1024x64xf32>
    %8 = arith.truncf %7 : vector<1024x64xf32> to vector<1024x64xbf16>
    %c0_6 = arith.constant 0 : index
    %c0_7 = arith.constant 0 : index
    %9 = vector.load %arg4[%c0_6, %c0_7] : memref<64x128xbf16, #tpu.memory_space<vmem>>, vector<64x128xbf16>
    %cst_8 = arith.constant dense<0.000000e+00> : vector<1024x128xf32>
    %10 = tpu.matmul %8, %9, %cst_8 {dimension_numbers = #tpu.dot_dimension_numbers<[1], [0], [0], [1], [0, 0, 1, 1], [], []>} : vector<1024x64xbf16>, vector<64x128xbf16>, vector<1024x128xf32> -> vector<1024x128xf32>
    %c0_9 = arith.constant 0 : index
    %c0_10 = arith.constant 0 : index
    %11 = vector.load %arg5[%c0_9, %c0_10] : memref<1x128xf32, #tpu.memory_space<vmem>>, vector<1x128xf32>
    %12 = vector.broadcast %11 : vector<1x128xf32> to vector<1024x128xf32>
    %13 = arith.addf %10, %12 : vector<1024x128xf32>
    %cst_11 = arith.constant 0.000000e+00 : f32
    %14 = vector.broadcast %cst_11 : f32 to vector<1024x128xf32>
    %15 = arith.maximumf %13, %14 : vector<1024x128xf32>
    %16 = arith.truncf %15 : vector<1024x128xf32> to vector<1024x128xbf16>
    %c0_12 = arith.constant 0 : index
    %c0_13 = arith.constant 0 : index
    %17 = vector.load %arg6[%c0_12, %c0_13] : memref<128x1024xbf16, #tpu.memory_space<vmem>>, vector<128x1024xbf16>
    %cst_14 = arith.constant dense<0.000000e+00> : vector<1024x1024xf32>
    %18 = tpu.matmul %16, %17, %cst_14 {dimension_numbers = #tpu.dot_dimension_numbers<[1], [0], [0], [1], [0, 0, 1, 1], [], []>} : vector<1024x128xbf16>, vector<128x1024xbf16>, vector<1024x1024xf32> -> vector<1024x1024xf32>
    %c0_15 = arith.constant 0 : index
    %c0_16 = arith.constant 0 : index
    %19 = vector.load %arg7[%c0_15, %c0_16] : memref<1x1024xf32, #tpu.memory_space<vmem>>, vector<1x1024xf32>
    %20 = vector.broadcast %19 : vector<1x1024xf32> to vector<1024x1024xf32>
    %21 = arith.addf %18, %20 : vector<1024x1024xf32>
    %cst_17 = arith.constant 0.000000e+00 : f32
    %22 = vector.broadcast %cst_17 : f32 to vector<1024x1024xf32>
    %23 = arith.maximumf %21, %22 : vector<1024x1024xf32>
    %24 = arith.truncf %23 : vector<1024x1024xf32> to vector<1024x1024xbf16>
    %25 = vector.shape_cast %24 : vector<1024x1024xbf16> to vector<8x128x1024xbf16>
    %cst_18 = arith.constant dense<0xFF80> : vector<8x1024xbf16>
    %26 = vector.multi_reduction <maximumf>, %25, %cst_18 [1] : vector<8x128x1024xbf16> to vector<8x1024xbf16>
    %c0_19 = arith.constant 0 : index
    %c0_20 = arith.constant 0 : index
    %27 = vector.load %arg8[%c0_19, %c0_20] : memref<1024x512xbf16, #tpu.memory_space<vmem>>, vector<1024x512xbf16>
    %cst_21 = arith.constant dense<0.000000e+00> : vector<8x512xf32>
    %28 = tpu.matmul %26, %27, %cst_21 {dimension_numbers = #tpu.dot_dimension_numbers<[1], [0], [0], [1], [0, 0, 1, 1], [], []>} : vector<8x1024xbf16>, vector<1024x512xbf16>, vector<8x512xf32> -> vector<8x512xf32>
    %c0_22 = arith.constant 0 : index
    %c0_23 = arith.constant 0 : index
    %29 = vector.load %arg9[%c0_22, %c0_23] : memref<1x512xf32, #tpu.memory_space<vmem>>, vector<1x512xf32>
    %30 = vector.broadcast %29 : vector<1x512xf32> to vector<8x512xf32>
    %31 = arith.addf %28, %30 : vector<8x512xf32>
    %cst_24 = arith.constant 0.000000e+00 : f32
    %32 = vector.broadcast %cst_24 : f32 to vector<8x512xf32>
    %33 = arith.maximumf %31, %32 : vector<8x512xf32>
    %34 = arith.truncf %33 : vector<8x512xf32> to vector<8x512xbf16>
    %c0_25 = arith.constant 0 : index
    %c0_26 = arith.constant 0 : index
    %35 = vector.load %arg10[%c0_25, %c0_26] : memref<512x256xbf16, #tpu.memory_space<vmem>>, vector<512x256xbf16>
    %cst_27 = arith.constant dense<0.000000e+00> : vector<8x256xf32>
    %36 = tpu.matmul %34, %35, %cst_27 {dimension_numbers = #tpu.dot_dimension_numbers<[1], [0], [0], [1], [0, 0, 1, 1], [], []>} : vector<8x512xbf16>, vector<512x256xbf16>, vector<8x256xf32> -> vector<8x256xf32>
    %c0_28 = arith.constant 0 : index
    %c0_29 = arith.constant 0 : index
    %37 = vector.load %arg11[%c0_28, %c0_29] : memref<1x256xf32, #tpu.memory_space<vmem>>, vector<1x256xf32>
    %38 = vector.broadcast %37 : vector<1x256xf32> to vector<8x256xf32>
    %39 = arith.addf %36, %38 : vector<8x256xf32>
    %cst_30 = arith.constant 0.000000e+00 : f32
    %40 = vector.broadcast %cst_30 : f32 to vector<8x256xf32>
    %41 = arith.maximumf %39, %40 : vector<8x256xf32>
    %42 = arith.truncf %41 : vector<8x256xf32> to vector<8x256xbf16>
    %c0_31 = arith.constant 0 : index
    %c0_32 = arith.constant 0 : index
    %43 = vector.load %arg12[%c0_31, %c0_32] : memref<256x256xbf16, #tpu.memory_space<vmem>>, vector<256x256xbf16>
    %cst_33 = arith.constant dense<0.000000e+00> : vector<8x256xf32>
    %44 = tpu.matmul %42, %43, %cst_33 {dimension_numbers = #tpu.dot_dimension_numbers<[1], [0], [0], [1], [0, 0, 1, 1], [], []>} : vector<8x256xbf16>, vector<256x256xbf16>, vector<8x256xf32> -> vector<8x256xf32>
    %c0_34 = arith.constant 0 : index
    %c0_35 = arith.constant 0 : index
    %45 = vector.load %arg13[%c0_34, %c0_35] : memref<1x256xf32, #tpu.memory_space<vmem>>, vector<1x256xf32>
    %46 = vector.broadcast %45 : vector<1x256xf32> to vector<8x256xf32>
    %47 = arith.addf %44, %46 : vector<8x256xf32>
    %c0_36 = arith.constant 0 : index
    %c0_37 = arith.constant 0 : index
    %48 = vector.load %arg14[%c0_36, %c0_37] : memref<8x256xf32, #tpu.memory_space<vmem>>, vector<8x256xf32>
    tpu.vector_store %arg14[%c0_36, %c0_37], %47 {strides = array<i32>} : memref<8x256xf32, #tpu.memory_space<vmem>>, vector<8x256xf32>,
    return
  }
  func.func @transform_0(%arg0: i32) -> (i32, i32) {
    %c0_i32 = arith.constant 0 : i32
    %c0_i32_0 = arith.constant 0 : i32
    return %arg0, %c0_i32 : i32, i32
  }
  func.func @transform_1(%arg0: i32) -> (i32, i32) {
    %c0_i32 = arith.constant 0 : i32
    %c0_i32_0 = arith.constant 0 : i32
    %c0_i32_1 = arith.constant 0 : i32
    return %c0_i32, %c0_i32_0 : i32, i32
  }
  func.func @transform_2(%arg0: i32) -> (i32, i32) {
    %c0_i32 = arith.constant 0 : i32
    %c0_i32_0 = arith.constant 0 : i32
    %c0_i32_1 = arith.constant 0 : i32
    return %c0_i32, %c0_i32_0 : i32, i32
  }
  func.func @transform_3(%arg0: i32) -> (i32, i32) {
    %c0_i32 = arith.constant 0 : i32
    %c0_i32_0 = arith.constant 0 : i32
    %c0_i32_1 = arith.constant 0 : i32
    return %c0_i32, %c0_i32_0 : i32, i32
  }
  func.func @transform_4(%arg0: i32) -> (i32, i32) {
    %c0_i32 = arith.constant 0 : i32
    %c0_i32_0 = arith.constant 0 : i32
    %c0_i32_1 = arith.constant 0 : i32
    return %c0_i32, %c0_i32_0 : i32, i32
  }
  func.func @transform_5(%arg0: i32) -> (i32, i32) {
    %c0_i32 = arith.constant 0 : i32
    %c0_i32_0 = arith.constant 0 : i32
    %c0_i32_1 = arith.constant 0 : i32
    return %c0_i32, %c0_i32_0 : i32, i32
  }
  func.func @transform_6(%arg0: i32) -> (i32, i32) {
    %c0_i32 = arith.constant 0 : i32
    %c0_i32_0 = arith.constant 0 : i32
    %c0_i32_1 = arith.constant 0 : i32
    return %c0_i32, %c0_i32_0 : i32, i32
  }
  func.func @transform_7(%arg0: i32) -> (i32, i32) {
    %c0_i32 = arith.constant 0 : i32
    %c0_i32_0 = arith.constant 0 : i32
    %c0_i32_1 = arith.constant 0 : i32
    return %c0_i32, %c0_i32_0 : i32, i32
  }
  func.func @transform_8(%arg0: i32) -> (i32, i32) {
    %c0_i32 = arith.constant 0 : i32
    %c0_i32_0 = arith.constant 0 : i32
    %c0_i32_1 = arith.constant 0 : i32
    return %c0_i32, %c0_i32_0 : i32, i32
  }
  func.func @transform_9(%arg0: i32) -> (i32, i32) {
    %c0_i32 = arith.constant 0 : i32
    %c0_i32_0 = arith.constant 0 : i32
    %c0_i32_1 = arith.constant 0 : i32
    return %c0_i32, %c0_i32_0 : i32, i32
  }
  func.func @transform_10(%arg0: i32) -> (i32, i32) {
    %c0_i32 = arith.constant 0 : i32
    %c0_i32_0 = arith.constant 0 : i32
    %c0_i32_1 = arith.constant 0 : i32
    return %c0_i32, %c0_i32_0 : i32, i32
  }
  func.func @transform_11(%arg0: i32) -> (i32, i32) {
    %c0_i32 = arith.constant 0 : i32
    %c0_i32_0 = arith.constant 0 : i32
    %c0_i32_1 = arith.constant 0 : i32
    return %c0_i32, %c0_i32_0 : i32, i32
  }
  func.func @transform_12(%arg0: i32) -> (i32, i32) {
    %c0_i32 = arith.constant 0 : i32
    %c0_i32_0 = arith.constant 0 : i32
    %c0_i32_1 = arith.constant 0 : i32
    return %c0_i32, %c0_i32_0 : i32, i32
  }
  func.func @transform_13(%arg0: i32) -> (i32, i32) {
    %c0_i32 = arith.constant 0 : i32
    %c0_i32_0 = arith.constant 0 : i32
    return %arg0, %c0_i32 : i32, i32
  }
}

</mosaic_0001>

<llo_original>
// kernel: tpu_custom_call.1
$region0: #{tpu_custom_call.1}
  #allocation0 [shape = 'u32[]', space=smem, size = 0x4, offset = 0x4, fixed_abs, tag = 'smem constant byte address 0x4 - core index']
  #allocation1 [shape = 'u32[144,128]{1,0:T(1,128)}', space=vmem, size = 0x12000, scoped, tag = 'internal scratch']
  %s0 = inlined_call_operand.vmem [shape: bf16[2048,16], index: 0, kind: input, shape index: {}]
  %s1 = inlined_call_operand.vmem [shape: bf16[16,64], index: 1, kind: input, shape index: {}]
  %s2 = inlined_call_operand.vmem [shape: f32[1,64], index: 2, kind: input, shape index: {}]
  %s3 = inlined_call_operand.vmem [shape: bf16[64,128], index: 3, kind: input, shape index: {}]
  %s4 = inlined_call_operand.vmem [shape: f32[1,128], index: 4, kind: input, shape index: {}]
  %s5 = inlined_call_operand.vmem [shape: bf16[128,1024], index: 5, kind: input, shape index: {}]
  %s6 = inlined_call_operand.vmem [shape: f32[1,1024], index: 6, kind: input, shape index: {}]
  %s7 = inlined_call_operand.hbm [shape: bf16[1024,512], index: 7, kind: input, shape index: {}]
  %s8 = inlined_call_operand.vmem [shape: f32[1,512], index: 8, kind: input, shape index: {}]
  %s9 = inlined_call_operand.vmem [shape: bf16[512,256], index: 9, kind: input, shape index: {}]
  %s10 = inlined_call_operand.vmem [shape: f32[1,256], index: 10, kind: input, shape index: {}]
  %s11 = inlined_call_operand.hbm [shape: bf16[256,256], index: 11, kind: input, shape index: {}]
  %s12 = inlined_call_operand.vmem [shape: f32[1,256], index: 12, kind: input, shape index: {}]
  %s13 = inlined_call_operand.hbm [shape: f32[16,256], index: 13, kind: output, shape index: {}]
  %s14 = sld [smem:[#allocation0]]
  $region93: #{tpu_custom_call.1} parent=0
    _
  %s16 = ssub.s32 1, %s14
  %s17 = scalar_select 0, %s16, %s14
  $region1: #{tpu_custom_call.1} parent=0
    #allocation2 [shape = 'u8[1048576]{0}', space=vmem, size = 0x100000, scoped, tag = 'input window, operand 7, single buffered']
    #allocation3 [shape = 's32[2]{0}', space=sflag, size = 0x8, scoped, tag = 'scoped memory for tpu_custom_call.1']
    #allocation4 [shape = 's32[2]{0}', space=sflag, size = 0x8, scoped, tag = 'scoped memory for tpu_custom_call.1']
    #allocation5 [shape = 'u8[131072]{0}', space=vmem, size = 0x20000, scoped, tag = 'input window, operand 11, single buffered']
    #allocation6 [shape = 's32[1]{0}', space=sflag, size = 0x4, scoped, tag = 'scoped memory for tpu_custom_call.1']
    #allocation7 [shape = 'u8[16384]{0}', space=vmem, size = 0x4000, scoped, tag = 'output window, operand 0']
    %18 = vsyncpa [#allocation3], 0
    %19 = vsyncpa [#allocation6], 0
    %20 = vsyncpa [#allocation4], 0
    %s21 = scalar_lea.sflag [#allocation4], 1
    %22 = vsyncpa %s21, 0
    loop: start=0, step=1, limit=4
    $region2: #{tpu_custom_call.1} parent=1 // loop_pre_header
      _
    $region3: #{tpu_custom_call.1} parent=1 // loop_header
      %s24 = sphi 0, %s28
      %p25 = scmp.ge.s32.totalorder %s24, 4
      %s34 = sphi 0, %s36
      %s37 = sphi 0, %s34
      %s38 = sphi 0, %s37
      %s54 = sphi 0, %s38
      %s58 = sphi 0, %s58
      %s60 = sphi 0, %s58
      %s61 = sphi 0, %s60
      %s75 = sphi 0, %s61
      %s79 = sphi 0, %s79
      %s81 = sphi 0, %s79
      %s82 = sphi 0, %s81
      %s96 = sphi 0, %s82
      %s100 = sphi 0, %s100
      %s102 = sphi 0, %s100
      %s103 = sphi 0, %s102
      %s117 = sphi 0, %s103
      %s121 = sphi 0, %s121
      %s123 = sphi 0, %s121
      %s124 = sphi 0, %s123
      %s138 = sphi 0, %s124
      %s142 = sphi 0, %s142
      %s144 = sphi 0, %s142
      %s145 = sphi 0, %s144
      %s159 = sphi 0, %s145
      %s163 = sphi 0, %s163
      %s165 = sphi 0, %s163
      %s166 = sphi 0, %s165
      %s180 = sphi 0, %s166
      %s184 = sphi 0, %s184
      %s186 = sphi 0, %s184
      %s187 = sphi 0, %s186
      %s201 = sphi 0, %s187
      %s205 = sphi 0, %s205
      %s207 = sphi 0, %s205
      %s208 = sphi 0, %s207
      %s222 = sphi 0, %s208
      %s226 = sphi 0, %s226
      %s228 = sphi 0, %s226
      %s229 = sphi 0, %s228
      %s243 = sphi 0, %s229
      %s247 = sphi 0, %s247
      %s249 = sphi 0, %s247
      %s250 = sphi 0, %s249
      %s264 = sphi 0, %s250
      %s268 = sphi 0, %s268
      %s270 = sphi 0, %s268
      %s271 = sphi 0, %s270
      %s285 = sphi 0, %s271
      %s289 = sphi 0, %s289
      %s291 = sphi 0, %s289
      %s292 = sphi 0, %s291
      %s306 = sphi 0, %s292
      %s312 = sphi 0, %s314
      %s315 = sphi 0, %s312
      %s316 = sphi 0, %s315
      %s332 = sphi 0, %s316
    $region4: #{tpu_custom_call.1} parent=1 // loop_header_branch
      %27 = sbr.rel (%p25) target = $region8
    $region5: #{tpu_custom_call.1} parent=1 // loop_body
      %s29 = ssub.s32 %s24, 1
      %s30 = ssub.s32 %s24, 2
      %s31 = sadd.s32 %s24, 1
      %s32 = ssub.s32 %s24, %s31
      %p33 = scmp.eq.s32.totalorder %s32, 0
      %s35 = sadd.s32 %s34, 1
      %s36 = scalar_select %p33, %s34, %s35
      %p39 = pneg %p33
      %p40 = scmp.eq.s32.totalorder %s24, 1
      %p41 = por %p39, %p40
      %p42 = scmp.ne.s32.totalorder %s34, %s37
      %p43 = scmp.eq.s32.totalorder %s24, 0
      %p44 = por %p42, %p43
      %p45 = scmp.ne.s32.totalorder %s34, %s37
      %p46 = scmp.eq.s32.totalorder %s29, 1
      %p47 = por %p45, %p46
      %p48 = scmp.ne.s32.totalorder %s37, %s38
      %p49 = scmp.eq.s32.totalorder %s29, 0
      %p50 = por %p48, %p49
      %p51 = scmp.ne.s32.totalorder %s37, %s38
      %p52 = scmp.eq.s32.totalorder %s30, 1
      %p53 = por %p51, %p52
      %p55 = scmp.ne.s32.totalorder %s38, %s54
      %p56 = scmp.eq.s32.totalorder %s30, 0
      %p57 = por %p55, %p56
      %s59 = sadd.s32 %s58, 1
      %p62 = scmp.eq.s32.totalorder %s24, 1
      %p63 = scmp.ne.s32.totalorder %s58, %s60
      %p64 = scmp.eq.s32.totalorder %s24, 0
      %p65 = por %p63, %p64
      %p66 = scmp.ne.s32.totalorder %s58, %s60
      %p67 = scmp.eq.s32.totalorder %s29, 1
      %p68 = por %p66, %p67
      %p69 = scmp.ne.s32.totalorder %s60, %s61
      %p70 = scmp.eq.s32.totalorder %s29, 0
      %p71 = por %p69, %p70
      %p72 = scmp.ne.s32.totalorder %s60, %s61
      %p73 = scmp.eq.s32.totalorder %s30, 1
      %p74 = por %p72, %p73
      %p76 = scmp.ne.s32.totalorder %s61, %s75
      %p77 = scmp.eq.s32.totalorder %s30, 0
      %p78 = por %p76, %p77
      %s80 = sadd.s32 %s79, 1
      %p83 = scmp.eq.s32.totalorder %s24, 1
      %p84 = scmp.ne.s32.totalorder %s79, %s81
      %p85 = scmp.eq.s32.totalorder %s24, 0
      %p86 = por %p84, %p85
      %p87 = scmp.ne.s32.totalorder %s79, %s81
      %p88 = scmp.eq.s32.totalorder %s29, 1
      %p89 = por %p87, %p88
      %p90 = scmp.ne.s32.totalorder %s81, %s82
      %p91 = scmp.eq.s32.totalorder %s29, 0
      %p92 = por %p90, %p91
      %p93 = scmp.ne.s32.totalorder %s81, %s82
      %p94 = scmp.eq.s32.totalorder %s30, 1
      %p95 = por %p93, %p94
      %p97 = scmp.ne.s32.totalorder %s82, %s96
      %p98 = scmp.eq.s32.totalorder %s30, 0
      %p99 = por %p97, %p98
      %s101 = sadd.s32 %s100, 1
      %p104 = scmp.eq.s32.totalorder %s24, 1
      %p105 = scmp.ne.s32.totalorder %s100, %s102
      %p106 = scmp.eq.s32.totalorder %s24, 0
      %p107 = por %p105, %p106
      %p108 = scmp.ne.s32.totalorder %s100, %s102
      %p109 = scmp.eq.s32.totalorder %s29, 1
      %p110 = por %p108, %p109
      %p111 = scmp.ne.s32.totalorder %s102, %s103
      %p112 = scmp.eq.s32.totalorder %s29, 0
      %p113 = por %p111, %p112
      %p114 = scmp.ne.s32.totalorder %s102, %s103
      %p115 = scmp.eq.s32.totalorder %s30, 1
      %p116 = por %p114, %p115
      %p118 = scmp.ne.s32.totalorder %s103, %s117
      %p119 = scmp.eq.s32.totalorder %s30, 0
      %p120 = por %p118, %p119
      %s122 = sadd.s32 %s121, 1
      %p125 = scmp.eq.s32.totalorder %s24, 1
      %p126 = scmp.ne.s32.totalorder %s121, %s123
      %p127 = scmp.eq.s32.totalorder %s24, 0
      %p128 = por %p126, %p127
      %p129 = scmp.ne.s32.totalorder %s121, %s123
      %p130 = scmp.eq.s32.totalorder %s29, 1
      %p131 = por %p129, %p130
      %p132 = scmp.ne.s32.totalorder %s123, %s124
      %p133 = scmp.eq.s32.totalorder %s29, 0
      %p134 = por %p132, %p133
      %p135 = scmp.ne.s32.totalorder %s123, %s124
      %p136 = scmp.eq.s32.totalorder %s30, 1
      %p137 = por %p135, %p136
      %p139 = scmp.ne.s32.totalorder %s124, %s138
      %p140 = scmp.eq.s32.totalorder %s30, 0
      %p141 = por %p139, %p140
      %s143 = sadd.s32 %s142, 1
      %p146 = scmp.eq.s32.totalorder %s24, 1
      %p147 = scmp.ne.s32.totalorder %s142, %s144
      %p148 = scmp.eq.s32.totalorder %s24, 0
      %p149 = por %p147, %p148
      %p150 = scmp.ne.s32.totalorder %s142, %s144
      %p151 = scmp.eq.s32.totalorder %s29, 1
      %p152 = por %p150, %p151
      %p153 = scmp.ne.s32.totalorder %s144, %s145
      %p154 = scmp.eq.s32.totalorder %s29, 0
      %p155 = por %p153, %p154
      %p156 = scmp.ne.s32.totalorder %s144, %s145
      %p157 = scmp.eq.s32.totalorder %s30, 1
      %p158 = por %p156, %p157
      %p160 = scmp.ne.s32.totalorder %s145, %s159
      %p161 = scmp.eq.s32.totalorder %s30, 0
      %p162 = por %p160, %p161
      %s164 = sadd.s32 %s163, 1
      %p167 = scmp.eq.s32.totalorder %s24, 1
      %p168 = scmp.ne.s32.totalorder %s163, %s165
      %p169 = scmp.eq.s32.totalorder %s24, 0
      %p170 = por %p168, %p169
      %p171 = scmp.ne.s32.totalorder %s163, %s165
      %p172 = scmp.eq.s32.totalorder %s29, 1
      %p173 = por %p171, %p172
      %p174 = scmp.ne.s32.totalorder %s165, %s166
      %p175 = scmp.eq.s32.totalorder %s29, 0
      %p176 = por %p174, %p175
      %p177 = scmp.ne.s32.totalorder %s165, %s166
      %p178 = scmp.eq.s32.totalorder %s30, 1
      %p179 = por %p177, %p178
      %p181 = scmp.ne.s32.totalorder %s166, %s180
      %p182 = scmp.eq.s32.totalorder %s30, 0
      %p183 = por %p181, %p182
      %s185 = sadd.s32 %s184, 1
      %p188 = scmp.eq.s32.totalorder %s24, 1
      %p189 = scmp.ne.s32.totalorder %s184, %s186
      %p190 = scmp.eq.s32.totalorder %s24, 0
      %p191 = por %p189, %p190
      %p192 = scmp.ne.s32.totalorder %s184, %s186
      %p193 = scmp.eq.s32.totalorder %s29, 1
      %p194 = por %p192, %p193
      %p195 = scmp.ne.s32.totalorder %s186, %s187
      %p196 = scmp.eq.s32.totalorder %s29, 0
      %p197 = por %p195, %p196
      %p198 = scmp.ne.s32.totalorder %s186, %s187
      %p199 = scmp.eq.s32.totalorder %s30, 1
      %p200 = por %p198, %p199
      %p202 = scmp.ne.s32.totalorder %s187, %s201
      %p203 = scmp.eq.s32.totalorder %s30, 0
      %p204 = por %p202, %p203
      %s206 = sadd.s32 %s205, 1
      %p209 = scmp.eq.s32.totalorder %s24, 1
      %p210 = scmp.ne.s32.totalorder %s205, %s207
      %p211 = scmp.eq.s32.totalorder %s24, 0
      %p212 = por %p210, %p211
      %p213 = scmp.ne.s32.totalorder %s205, %s207
      %p214 = scmp.eq.s32.totalorder %s29, 1
      %p215 = por %p213, %p214
      %p216 = scmp.ne.s32.totalorder %s207, %s208
      %p217 = scmp.eq.s32.totalorder %s29, 0
      %p218 = por %p216, %p217
      %p219 = scmp.ne.s32.totalorder %s207, %s208
      %p220 = scmp.eq.s32.totalorder %s30, 1
      %p221 = por %p219, %p220
      %p223 = scmp.ne.s32.totalorder %s208, %s222
      %p224 = scmp.eq.s32.totalorder %s30, 0
      %p225 = por %p223, %p224
      %s227 = sadd.s32 %s226, 1
      %p230 = scmp.eq.s32.totalorder %s24, 1
      %p231 = scmp.ne.s32.totalorder %s226, %s228
      %p232 = scmp.eq.s32.totalorder %s24, 0
      %p233 = por %p231, %p232
      %p234 = scmp.ne.s32.totalorder %s226, %s228
      %p235 = scmp.eq.s32.totalorder %s29, 1
      %p236 = por %p234, %p235
      %p237 = scmp.ne.s32.totalorder %s228, %s229
      %p238 = scmp.eq.s32.totalorder %s29, 0
      %p239 = por %p237, %p238
      %p240 = scmp.ne.s32.totalorder %s228, %s229
      %p241 = scmp.eq.s32.totalorder %s30, 1
      %p242 = por %p240, %p241
      %p244 = scmp.ne.s32.totalorder %s229, %s243
      %p245 = scmp.eq.s32.totalorder %s30, 0
      %p246 = por %p244, %p245
      %s248 = sadd.s32 %s247, 1
      %p251 = scmp.eq.s32.totalorder %s24, 1
      %p252 = scmp.ne.s32.totalorder %s247, %s249
      %p253 = scmp.eq.s32.totalorder %s24, 0
      %p254 = por %p252, %p253
      %p255 = scmp.ne.s32.totalorder %s247, %s249
      %p256 = scmp.eq.s32.totalorder %s29, 1
      %p257 = por %p255, %p256
      %p258 = scmp.ne.s32.totalorder %s249, %s250
      %p259 = scmp.eq.s32.totalorder %s29, 0
      %p260 = por %p258, %p259
      %p261 = scmp.ne.s32.totalorder %s249, %s250
      %p262 = scmp.eq.s32.totalorder %s30, 1
      %p263 = por %p261, %p262
      %p265 = scmp.ne.s32.totalorder %s250, %s264
      %p266 = scmp.eq.s32.totalorder %s30, 0
      %p267 = por %p265, %p266
      %s269 = sadd.s32 %s268, 1
      %p272 = scmp.eq.s32.totalorder %s24, 1
      %p273 = scmp.ne.s32.totalorder %s268, %s270
      %p274 = scmp.eq.s32.totalorder %s24, 0
      %p275 = por %p273, %p274
      %p276 = scmp.ne.s32.totalorder %s268, %s270
      %p277 = scmp.eq.s32.totalorder %s29, 1
      %p278 = por %p276, %p277
      %p279 = scmp.ne.s32.totalorder %s270, %s271
      %p280 = scmp.eq.s32.totalorder %s29, 0
      %p281 = por %p279, %p280
      %p282 = scmp.ne.s32.totalorder %s270, %s271
      %p283 = scmp.eq.s32.totalorder %s30, 1
      %p284 = por %p282, %p283
      %p286 = scmp.ne.s32.totalorder %s271, %s285
      %p287 = scmp.eq.s32.totalorder %s30, 0
      %p288 = por %p286, %p287
      %s290 = sadd.s32 %s289, 1
      %p293 = scmp.eq.s32.totalorder %s24, 1
      %p294 = scmp.ne.s32.totalorder %s289, %s291
      %p295 = scmp.eq.s32.totalorder %s24, 0
      %p296 = por %p294, %p295
      %p297 = scmp.ne.s32.totalorder %s289, %s291
      %p298 = scmp.eq.s32.totalorder %s29, 1
      %p299 = por %p297, %p298
      %p300 = scmp.ne.s32.totalorder %s291, %s292
      %p301 = scmp.eq.s32.totalorder %s29, 0
      %p302 = por %p300, %p301
      %p303 = scmp.ne.s32.totalorder %s291, %s292
      %p304 = scmp.eq.s32.totalorder %s30, 1
      %p305 = por %p303, %p304
      %p307 = scmp.ne.s32.totalorder %s292, %s306
      %p308 = scmp.eq.s32.totalorder %s30, 0
      %p309 = por %p307, %p308
      %s310 = ssub.s32 %s24, %s31
      %p311 = scmp.eq.s32.totalorder %s310, 0
      %s313 = sadd.s32 %s312, 1
      %s314 = scalar_select %p311, %s312, %s313
      %p317 = pneg %p311
      %p318 = scmp.eq.s32.totalorder %s24, 1
      %p319 = por %p317, %p318
      %p320 = scmp.ne.s32.totalorder %s312, %s315
      %p321 = scmp.eq.s32.totalorder %s24, 0
      %p322 = por %p320, %p321
      %p323 = scmp.ne.s32.totalorder %s312, %s315
      %p324 = scmp.eq.s32.totalorder %s29, 1
      %p325 = por %p323, %p324
      %p326 = scmp.ne.s32.totalorder %s315, %s316
      %p327 = scmp.eq.s32.totalorder %s29, 0
      %p328 = por %p326, %p327
      %p329 = scmp.ne.s32.totalorder %s315, %s316
      %p330 = scmp.eq.s32.totalorder %s30, 1
      %p331 = por %p329, %p330
      %p333 = scmp.ne.s32.totalorder %s316, %s332
      %p334 = scmp.eq.s32.totalorder %s30, 0
      %p335 = por %p333, %p334
      %p336 = scmp.le.s32.totalorder 1, %s24
      %p337 = scmp.lt.s32.totalorder %s24, 3
      %p338 = pnand %p336, %p337
      %p339 = pneg %p338
      // Predicated region
      $region9: #{tpu_custom_call.1} parent=5 // pred_check
        _
      $region10: #{tpu_custom_call.1} parent=5 // pred_check_branch
        %341 = sbr.rel (%p338) target = $region12
      $region11: #{tpu_custom_call.1} parent=5 // pred_region
        %s342 = ssub.s32 %s24, 1
        // Predicated region
        $region13: #{tpu_custom_call.1} parent=11 // pred_check
          %p343 = pneg %p71
        $region14: #{tpu_custom_call.1} parent=11 // pred_check_branch
          %345 = sbr.rel (%p343) target = $region16
        $region15: #{tpu_custom_call.1} parent=11 // pred_region
          _
        $region16: #{tpu_custom_call.1} parent=11 // pred_fallthru
          _
        // Predicated region
        $region17: #{tpu_custom_call.1} parent=11 // pred_check
          %p346 = pneg %p92
        $region18: #{tpu_custom_call.1} parent=11 // pred_check_branch
          %348 = sbr.rel (%p346) target = $region20
        $region19: #{tpu_custom_call.1} parent=11 // pred_region
          _
        $region20: #{tpu_custom_call.1} parent=11 // pred_fallthru
          _
        // Predicated region
        $region21: #{tpu_custom_call.1} parent=11 // pred_check
          %p349 = pneg %p113
        $region22: #{tpu_custom_call.1} parent=11 // pred_check_branch
          %351 = sbr.rel (%p349) target = $region24
        $region23: #{tpu_custom_call.1} parent=11 // pred_region
          _
        $region24: #{tpu_custom_call.1} parent=11 // pred_fallthru
          _
        // Predicated region
        $region25: #{tpu_custom_call.1} parent=11 // pred_check
          %p352 = pneg %p134
        $region26: #{tpu_custom_call.1} parent=11 // pred_check_branch
          %354 = sbr.rel (%p352) target = $region28
        $region27: #{tpu_custom_call.1} parent=11 // pred_region
          _
        $region28: #{tpu_custom_call.1} parent=11 // pred_fallthru
          _
        // Predicated region
        $region29: #{tpu_custom_call.1} parent=11 // pred_check
          %p355 = pneg %p155
        $region30: #{tpu_custom_call.1} parent=11 // pred_check_branch
          %357 = sbr.rel (%p355) target = $region32
        $region31: #{tpu_custom_call.1} parent=11 // pred_region
          _
        $region32: #{tpu_custom_call.1} parent=11 // pred_fallthru
          _
        // Predicated region
        $region33: #{tpu_custom_call.1} parent=11 // pred_check
          %p358 = pneg %p176
        $region34: #{tpu_custom_call.1} parent=11 // pred_check_branch
          %360 = sbr.rel (%p358) target = $region36
        $region35: #{tpu_custom_call.1} parent=11 // pred_region
          _
        $region36: #{tpu_custom_call.1} parent=11 // pred_fallthru
          _
        // Predicated region
        $region37: #{tpu_custom_call.1} parent=11 // pred_check
          %p361 = pneg %p197
        $region38: #{tpu_custom_call.1} parent=11 // pred_check_branch
          %363 = sbr.rel (%p361) target = $region40
        $region39: #{tpu_custom_call.1} parent=11 // pred_region
          %s365 = ssub.s32 32768, 32768
          %366 = vsyncadd [#allocation3], %s365
          %s367 = sshll.u32 [#allocation2], 4
          %s368 = int_to_ptr.vmem [resolvable:$true] %s367
          %373 = dma.hbm_to_vmem [thread:$0]  %s7, 32768, %s368, [#allocation3], 256, 256, 16
        $region40: #{tpu_custom_call.1} parent=11 // pred_fallthru
          _
        // Predicated region
        $region41: #{tpu_custom_call.1} parent=11 // pred_check
          %p374 = pneg %p218
        $region42: #{tpu_custom_call.1} parent=11 // pred_check_branch
          %376 = sbr.rel (%p374) target = $region44
        $region43: #{tpu_custom_call.1} parent=11 // pred_region
          _
        $region44: #{tpu_custom_call.1} parent=11 // pred_fallthru
          _
        // Predicated region
        $region45: #{tpu_custom_call.1} parent=11 // pred_check
          %p377 = pneg %p239
        $region46: #{tpu_custom_call.1} parent=11 // pred_check_branch
          %379 = sbr.rel (%p377) target = $region48
        $region47: #{tpu_custom_call.1} parent=11 // pred_region
          _
        $region48: #{tpu_custom_call.1} parent=11 // pred_fallthru
          _
        // Predicated region
        $region49: #{tpu_custom_call.1} parent=11 // pred_check
          %p380 = pneg %p260
        $region50: #{tpu_custom_call.1} parent=11 // pred_check_branch
          %382 = sbr.rel (%p380) target = $region52
        $region51: #{tpu_custom_call.1} parent=11 // pred_region
          _
        $region52: #{tpu_custom_call.1} parent=11 // pred_fallthru
          _
        // Predicated region
        $region53: #{tpu_custom_call.1} parent=11 // pred_check
          %p383 = pneg %p281
        $region54: #{tpu_custom_call.1} parent=11 // pred_check_branch
          %385 = sbr.rel (%p383) target = $region56
        $region55: #{tpu_custom_call.1} parent=11 // pred_region
          %s387 = ssub.s32 4096, 4096
          %388 = vsyncadd [#allocation6], %s387
          %s389 = sshll.u32 [#allocation5], 4
          %s390 = int_to_ptr.vmem [resolvable:$true] %s389
          %395 = dma.hbm_to_vmem [thread:$0]  %s11, 4096, %s390, [#allocation6], 128, 128, 8
        $region56: #{tpu_custom_call.1} parent=11 // pred_fallthru
          _
        // Predicated region
        $region57: #{tpu_custom_call.1} parent=11 // pred_check
          %p396 = pneg %p302
        $region58: #{tpu_custom_call.1} parent=11 // pred_check_branch
          %398 = sbr.rel (%p396) target = $region60
        $region59: #{tpu_custom_call.1} parent=11 // pred_region
          _
        $region60: #{tpu_custom_call.1} parent=11 // pred_fallthru
          _
      $region12: #{tpu_custom_call.1} parent=5 // pred_fallthru
        _
      %p399 = scmp.lt.s32.totalorder %s24, 2
      // Predicated region
      $region61: #{tpu_custom_call.1} parent=5 // pred_check
        %p400 = pneg %p399
      $region62: #{tpu_custom_call.1} parent=5 // pred_check_branch
        %402 = sbr.rel (%p400) target = $region64
      $region63: #{tpu_custom_call.1} parent=5 // pred_region
        // Predicated region
        $region65: #{tpu_custom_call.1} parent=63 // pred_check
          %p403 = pneg %p44
        $region66: #{tpu_custom_call.1} parent=63 // pred_check_branch
          %405 = sbr.rel (%p403) target = $region68
        $region67: #{tpu_custom_call.1} parent=63 // pred_region
          %s406 = smul.u32 128, %s24
          %p407 = scmp.lt.s32.totalorder %s406, 255
          %s408 = scalar_select %p407, %s406, 255
          %s409 = smul.addr %s408, 4
          %s410 = scalar_lea.vmem %s0, %s409
          %s411 = smul.u32 128, %s24
        $region68: #{tpu_custom_call.1} parent=63 // pred_fallthru
          _
      $region64: #{tpu_custom_call.1} parent=5 // pred_fallthru
        _
      %p412 = scmp.le.s32.totalorder 1, %s24
      %p413 = scmp.lt.s32.totalorder %s24, 3
      %p414 = pnand %p412, %p413
      %p415 = pneg %p414
      // Predicated region
      $region69: #{tpu_custom_call.1} parent=5 // pred_check
        _
      $region70: #{tpu_custom_call.1} parent=5 // pred_check_branch
        %417 = sbr.rel (%p414) target = $region72
      $region71: #{tpu_custom_call.1} parent=5 // pred_region
        %s418 = ssub.s32 %s24, 1
        // Predicated region
        $region73: #{tpu_custom_call.1} parent=71 // pred_check
          %p419 = pneg %p197
        $region74: #{tpu_custom_call.1} parent=71 // pred_check_branch
          %421 = sbr.rel (%p419) target = $region76
        $region75: #{tpu_custom_call.1} parent=71 // pred_region
          %422 = dma.done [#allocation3], 32768
        $region76: #{tpu_custom_call.1} parent=71 // pred_fallthru
          _
        // Predicated region
        $region77: #{tpu_custom_call.1} parent=71 // pred_check
          %p423 = pneg %p281
        $region78: #{tpu_custom_call.1} parent=71 // pred_check_branch
          %425 = sbr.rel (%p423) target = $region80
        $region79: #{tpu_custom_call.1} parent=71 // pred_region
          %426 = dma.done [#allocation6], 4096
        $region80: #{tpu_custom_call.1} parent=71 // pred_fallthru
          _
        %s427 = smul.u32 128, %s29
        %p428 = scmp.lt.s32.totalorder %s427, 255
        %s429 = scalar_select %p428, %s427, 255
        %s430 = smul.addr %s429, 4
        %s431 = scalar_lea.vmem %s0, %s430
        %p432 = pneg %p50
        %p433 = pneg %p47
        %p434 = pneg %p71
        %p435 = pneg %p68
        %p436 = pneg %p92
        %p437 = pneg %p89
        %p438 = pneg %p113
        %p439 = pneg %p110
        %p440 = pneg %p134
        %p441 = pneg %p131
        %p442 = pneg %p155
        %p443 = pneg %p152
        %p444 = pneg %p176
        %p445 = pneg %p173
        %p446 = pneg %p197
        %p447 = pneg %p194
        %p448 = pneg %p218
        %p449 = pneg %p215
        %p450 = pneg %p239
        %p451 = pneg %p236
        %p452 = pneg %p260
        %p453 = pneg %p257
        %p454 = pneg %p281
        %p455 = pneg %p278
        %p456 = pneg %p302
        %p457 = pneg %p299
        %p458 = pneg %p328
        %p459 = pneg %p325
        %s460 = sand.u32 %s315, 1
        %s461 = scalar_lea.sflag [#allocation4], %s460
        %s462 = sand.u32 %s315, 1
        %s463 = smul.addr %s462, 16
        %s464 = scalar_lea.vmem [#allocation7], %s463
        %s465 = smul.u32 128, %s29
        %p466 = scmp.lt.s32.totalorder %s465, 255
        %s467 = scalar_select %p466, %s465, 255
        %s468 = smul.addr %s467, 4
        %s469 = scalar_lea.vmem %s0, %s468
        %s470 = smul.u32 128, %s29
        %v472 = vld [vmem:[%s469] sm:$0xf]
        %v473 = vld [vmem:[%s469 + $0x4] sm:$0xf]
        %v474 = vld [vmem:[%s469 + $0x8] sm:$0xf]
        %v475 = vld [vmem:[%s469 + $0xc] sm:$0xf]
        %v476 = vld [vmem:[%s469 + $0x10] sm:$0xf]
        %v477 = vld [vmem:[%s469 + $0x14] sm:$0xf]
        %v478 = vld [vmem:[%s469 + $0x18] sm:$0xf]
        %v479 = vld [vmem:[%s469 + $0x1c] sm:$0xf]
        %v480 = vld [vmem:[%s469 + $0x20] sm:$0xf]
        %v481 = vld [vmem:[%s469 + $0x24] sm:$0xf]
        %v482 = vld [vmem:[%s469 + $0x28] sm:$0xf]
        %v483 = vld [vmem:[%s469 + $0x2c] sm:$0xf]
        %v484 = vld [vmem:[%s469 + $0x30] sm:$0xf]
        %v485 = vld [vmem:[%s469 + $0x34] sm:$0xf]
        %v486 = vld [vmem:[%s469 + $0x38] sm:$0xf]
        %v487 = vld [vmem:[%s469 + $0x3c] sm:$0xf]
        %v488 = vld [vmem:[%s469 + $0x40] sm:$0xf]
        %v489 = vld [vmem:[%s469 + $0x44] sm:$0xf]
        %v490 = vld [vmem:[%s469 + $0x48] sm:$0xf]
        %v491 = vld [vmem:[%s469 + $0x4c] sm:$0xf]
        %v492 = vld [vmem:[%s469 + $0x50] sm:$0xf]
        %v493 = vld [vmem:[%s469 + $0x54] sm:$0xf]
        %v494 = vld [vmem:[%s469 + $0x58] sm:$0xf]
        %v495 = vld [vmem:[%s469 + $0x5c] sm:$0xf]
        %v496 = vld [vmem:[%s469 + $0x60] sm:$0xf]
        %v497 = vld [vmem:[%s469 + $0x64] sm:$0xf]
        %v498 = vld [vmem:[%s469 + $0x68] sm:$0xf]
        %v499 = vld [vmem:[%s469 + $0x6c] sm:$0xf]
        %v500 = vld [vmem:[%s469 + $0x70] sm:$0xf]
        %v501 = vld [vmem:[%s469 + $0x74] sm:$0xf]
        %v502 = vld [vmem:[%s469 + $0x78] sm:$0xf]
        %v503 = vld [vmem:[%s469 + $0x7c] sm:$0xf]
        %v504 = vld [vmem:[%s469 + $0x80] sm:$0xf]
        %v505 = vld [vmem:[%s469 + $0x84] sm:$0xf]
        %v506 = vld [vmem:[%s469 + $0x88] sm:$0xf]
        %v507 = vld [vmem:[%s469 + $0x8c] sm:$0xf]
        %v508 = vld [vmem:[%s469 + $0x90] sm:$0xf]
        %v509 = vld [vmem:[%s469 + $0x94] sm:$0xf]
        %v510 = vld [vmem:[%s469 + $0x98] sm:$0xf]
        %v511 = vld [vmem:[%s469 + $0x9c] sm:$0xf]
        %v512 = vld [vmem:[%s469 + $0xa0] sm:$0xf]
        %v513 = vld [vmem:[%s469 + $0xa4] sm:$0xf]
        %v514 = vld [vmem:[%s469 + $0xa8] sm:$0xf]
        %v515 = vld [vmem:[%s469 + $0xac] sm:$0xf]
        %v516 = vld [vmem:[%s469 + $0xb0] sm:$0xf]
        %v517 = vld [vmem:[%s469 + $0xb4] sm:$0xf]
        %v518 = vld [vmem:[%s469 + $0xb8] sm:$0xf]
        %v519 = vld [vmem:[%s469 + $0xbc] sm:$0xf]
        %v520 = vld [vmem:[%s469 + $0xc0] sm:$0xf]
        %v521 = vld [vmem:[%s469 + $0xc4] sm:$0xf]
        %v522 = vld [vmem:[%s469 + $0xc8] sm:$0xf]
        %v523 = vld [vmem:[%s469 + $0xcc] sm:$0xf]
        %v524 = vld [vmem:[%s469 + $0xd0] sm:$0xf]
        %v525 = vld [vmem:[%s469 + $0xd4] sm:$0xf]
        %v526 = vld [vmem:[%s469 + $0xd8] sm:$0xf]
        %v527 = vld [vmem:[%s469 + $0xdc] sm:$0xf]
        %v528 = vld [vmem:[%s469 + $0xe0] sm:$0xf]
        %v529 = vld [vmem:[%s469 + $0xe4] sm:$0xf]
        %v530 = vld [vmem:[%s469 + $0xe8] sm:$0xf]
        %v531 = vld [vmem:[%s469 + $0xec] sm:$0xf]
        %v532 = vld [vmem:[%s469 + $0xf0] sm:$0xf]
        %v533 = vld [vmem:[%s469 + $0xf4] sm:$0xf]
        %v534 = vld [vmem:[%s469 + $0xf8] sm:$0xf]
        %v535 = vld [vmem:[%s469 + $0xfc] sm:$0xf]
        %v536 = vld [vmem:[%s469 + $0x100] sm:$0xf]
        %v537 = vld [vmem:[%s469 + $0x104] sm:$0xf]
        %v538 = vld [vmem:[%s469 + $0x108] sm:$0xf]
        %v539 = vld [vmem:[%s469 + $0x10c] sm:$0xf]
        %v540 = vld [vmem:[%s469 + $0x110] sm:$0xf]
        %v541 = vld [vmem:[%s469 + $0x114] sm:$0xf]
        %v542 = vld [vmem:[%s469 + $0x118] sm:$0xf]
        %v543 = vld [vmem:[%s469 + $0x11c] sm:$0xf]
        %v544 = vld [vmem:[%s469 + $0x120] sm:$0xf]
        %v545 = vld [vmem:[%s469 + $0x124] sm:$0xf]
        %v546 = vld [vmem:[%s469 + $0x128] sm:$0xf]
        %v547 = vld [vmem:[%s469 + $0x12c] sm:$0xf]
        %v548 = vld [vmem:[%s469 + $0x130] sm:$0xf]
        %v549 = vld [vmem:[%s469 + $0x134] sm:$0xf]
        %v550 = vld [vmem:[%s469 + $0x138] sm:$0xf]
        %v551 = vld [vmem:[%s469 + $0x13c] sm:$0xf]
        %v552 = vld [vmem:[%s469 + $0x140] sm:$0xf]
        %v553 = vld [vmem:[%s469 + $0x144] sm:$0xf]
        %v554 = vld [vmem:[%s469 + $0x148] sm:$0xf]
        %v555 = vld [vmem:[%s469 + $0x14c] sm:$0xf]
        %v556 = vld [vmem:[%s469 + $0x150] sm:$0xf]
        %v557 = vld [vmem:[%s469 + $0x154] sm:$0xf]
        %v558 = vld [vmem:[%s469 + $0x158] sm:$0xf]
        %v559 = vld [vmem:[%s469 + $0x15c] sm:$0xf]
        %v560 = vld [vmem:[%s469 + $0x160] sm:$0xf]
        %v561 = vld [vmem:[%s469 + $0x164] sm:$0xf]
        %v562 = vld [vmem:[%s469 + $0x168] sm:$0xf]
        %v563 = vld [vmem:[%s469 + $0x16c] sm:$0xf]
        %v564 = vld [vmem:[%s469 + $0x170] sm:$0xf]
        %v565 = vld [vmem:[%s469 + $0x174] sm:$0xf]
        %v566 = vld [vmem:[%s469 + $0x178] sm:$0xf]
        %v567 = vld [vmem:[%s469 + $0x17c] sm:$0xf]
        %v568 = vld [vmem:[%s469 + $0x180] sm:$0xf]
        %v569 = vld [vmem:[%s469 + $0x184] sm:$0xf]
        %v570 = vld [vmem:[%s469 + $0x188] sm:$0xf]
        %v571 = vld [vmem:[%s469 + $0x18c] sm:$0xf]
        %v572 = vld [vmem:[%s469 + $0x190] sm:$0xf]
        %v573 = vld [vmem:[%s469 + $0x194] sm:$0xf]
        %v574 = vld [vmem:[%s469 + $0x198] sm:$0xf]
        %v575 = vld [vmem:[%s469 + $0x19c] sm:$0xf]
        %v576 = vld [vmem:[%s469 + $0x1a0] sm:$0xf]
        %v577 = vld [vmem:[%s469 + $0x1a4] sm:$0xf]
        %v578 = vld [vmem:[%s469 + $0x1a8] sm:$0xf]
        %v579 = vld [vmem:[%s469 + $0x1ac] sm:$0xf]
        %v580 = vld [vmem:[%s469 + $0x1b0] sm:$0xf]
        %v581 = vld [vmem:[%s469 + $0x1b4] sm:$0xf]
        %v582 = vld [vmem:[%s469 + $0x1b8] sm:$0xf]
        %v583 = vld [vmem:[%s469 + $0x1bc] sm:$0xf]
        %v584 = vld [vmem:[%s469 + $0x1c0] sm:$0xf]
        %v585 = vld [vmem:[%s469 + $0x1c4] sm:$0xf]
        %v586 = vld [vmem:[%s469 + $0x1c8] sm:$0xf]
        %v587 = vld [vmem:[%s469 + $0x1cc] sm:$0xf]
        %v588 = vld [vmem:[%s469 + $0x1d0] sm:$0xf]
        %v589 = vld [vmem:[%s469 + $0x1d4] sm:$0xf]
        %v590 = vld [vmem:[%s469 + $0x1d8] sm:$0xf]
        %v591 = vld [vmem:[%s469 + $0x1dc] sm:$0xf]
        %v592 = vld [vmem:[%s469 + $0x1e0] sm:$0xf]
        %v593 = vld [vmem:[%s469 + $0x1e4] sm:$0xf]
        %v594 = vld [vmem:[%s469 + $0x1e8] sm:$0xf]
        %v595 = vld [vmem:[%s469 + $0x1ec] sm:$0xf]
        %v596 = vld [vmem:[%s469 + $0x1f0] sm:$0xf]
        %v597 = vld [vmem:[%s469 + $0x1f4] sm:$0xf]
        %v598 = vld [vmem:[%s469 + $0x1f8] sm:$0xf]
        %v599 = vld [vmem:[%s469 + $0x1fc] sm:$0xf]
        %v600 = vld [vmem:[%s1] sm:$0xf]
        %v601 = vld [vmem:[%s1 + $0x4] sm:$0xf]
        %v602 = vld [vmem:[%s2] sm:$0x1]
        %v604 = vlaneseq
        %v605 = vshrl.u32 %v604, 7
        %v606 = vsub.s32 0, %v605
        %v607 = vrot.slane %v602, %v606
        %v737 = vunpack.c.l.b16 %v472
        %v738 = vunpack.c.l.b16 %v473
        %v739 = vunpack.c.l.b16 %v474
        %v740 = vunpack.c.l.b16 %v475
        %v741 = vunpack.c.l.b16 %v476
        %v742 = vunpack.c.l.b16 %v477
        %v743 = vunpack.c.l.b16 %v478
        %v744 = vunpack.c.l.b16 %v479
        %v745 = vunpack.c.l.b16 %v480
        %v746 = vunpack.c.l.b16 %v481
        %v747 = vunpack.c.l.b16 %v482
        %v748 = vunpack.c.l.b16 %v483
        %v749 = vunpack.c.l.b16 %v484
        %v750 = vunpack.c.l.b16 %v485
        %v751 = vunpack.c.l.b16 %v486
        %v752 = vunpack.c.l.b16 %v487
        %v753 = vunpack.c.l.b16 %v488
        %v754 = vunpack.c.l.b16 %v489
        %v755 = vunpack.c.l.b16 %v490
        %v756 = vunpack.c.l.b16 %v491
        %v757 = vunpack.c.l.b16 %v492
        %v758 = vunpack.c.l.b16 %v493
        %v759 = vunpack.c.l.b16 %v494
        %v760 = vunpack.c.l.b16 %v495
        %v761 = vunpack.c.l.b16 %v496
        %v762 = vunpack.c.l.b16 %v497
        %v763 = vunpack.c.l.b16 %v498
        %v764 = vunpack.c.l.b16 %v499
        %v765 = vunpack.c.l.b16 %v500
        %v766 = vunpack.c.l.b16 %v501
        %v767 = vunpack.c.l.b16 %v502
        %v768 = vunpack.c.l.b16 %v503
        %v769 = vunpack.c.l.b16 %v504
        %v770 = vunpack.c.l.b16 %v505
        %v771 = vunpack.c.l.b16 %v506
        %v772 = vunpack.c.l.b16 %v507
        %v773 = vunpack.c.l.b16 %v508
        %v774 = vunpack.c.l.b16 %v509
        %v775 = vunpack.c.l.b16 %v510
        %v776 = vunpack.c.l.b16 %v511
        %v777 = vunpack.c.l.b16 %v512
        %v778 = vunpack.c.l.b16 %v513
        %v779 = vunpack.c.l.b16 %v514
        %v780 = vunpack.c.l.b16 %v515
        %v781 = vunpack.c.l.b16 %v516
        %v782 = vunpack.c.l.b16 %v517
        %v783 = vunpack.c.l.b16 %v518
        %v784 = vunpack.c.l.b16 %v519
        %v785 = vunpack.c.l.b16 %v520
        %v786 = vunpack.c.l.b16 %v521
        %v787 = vunpack.c.l.b16 %v522
        %v788 = vunpack.c.l.b16 %v523
        %v789 = vunpack.c.l.b16 %v524
        %v790 = vunpack.c.l.b16 %v525
        %v791 = vunpack.c.l.b16 %v526
        %v792 = vunpack.c.l.b16 %v527
        %v793 = vunpack.c.l.b16 %v528
        %v794 = vunpack.c.l.b16 %v529
        %v795 = vunpack.c.l.b16 %v530
        %v796 = vunpack.c.l.b16 %v531
        %v797 = vunpack.c.l.b16 %v532
        %v798 = vunpack.c.l.b16 %v533
        %v799 = vunpack.c.l.b16 %v534
        %v800 = vunpack.c.l.b16 %v535
        %v801 = vunpack.c.l.b16 %v536
        %v802 = vunpack.c.l.b16 %v537
        %v803 = vunpack.c.l.b16 %v538
        %v804 = vunpack.c.l.b16 %v539
        %v805 = vunpack.c.l.b16 %v540
        %v806 = vunpack.c.l.b16 %v541
        %v807 = vunpack.c.l.b16 %v542
        %v808 = vunpack.c.l.b16 %v543
        %v809 = vunpack.c.l.b16 %v544
        %v810 = vunpack.c.l.b16 %v545
        %v811 = vunpack.c.l.b16 %v546
        %v812 = vunpack.c.l.b16 %v547
        %v813 = vunpack.c.l.b16 %v548
        %v814 = vunpack.c.l.b16 %v549
        %v815 = vunpack.c.l.b16 %v550
        %v816 = vunpack.c.l.b16 %v551
        %v817 = vunpack.c.l.b16 %v552
        %v818 = vunpack.c.l.b16 %v553
        %v819 = vunpack.c.l.b16 %v554
        %v820 = vunpack.c.l.b16 %v555
        %v821 = vunpack.c.l.b16 %v556
        %v822 = vunpack.c.l.b16 %v557
        %v823 = vunpack.c.l.b16 %v558
        %v824 = vunpack.c.l.b16 %v559
        %v825 = vunpack.c.l.b16 %v560
        %v826 = vunpack.c.l.b16 %v561
        %v827 = vunpack.c.l.b16 %v562
        %v828 = vunpack.c.l.b16 %v563
        %v829 = vunpack.c.l.b16 %v564
        %v830 = vunpack.c.l.b16 %v565
        %v831 = vunpack.c.l.b16 %v566
        %v832 = vunpack.c.l.b16 %v567
        %v833 = vunpack.c.l.b16 %v568
        %v834 = vunpack.c.l.b16 %v569
        %v835 = vunpack.c.l.b16 %v570
        %v836 = vunpack.c.l.b16 %v571
        %v837 = vunpack.c.l.b16 %v572
        %v838 = vunpack.c.l.b16 %v573
        %v839 = vunpack.c.l.b16 %v574
        %v840 = vunpack.c.l.b16 %v575
        %v841 = vunpack.c.l.b16 %v576
        %v842 = vunpack.c.l.b16 %v577
        %v843 = vunpack.c.l.b16 %v578
        %v844 = vunpack.c.l.b16 %v579
        %v845 = vunpack.c.l.b16 %v580
        %v846 = vunpack.c.l.b16 %v581
        %v847 = vunpack.c.l.b16 %v582
        %v848 = vunpack.c.l.b16 %v583
        %v849 = vunpack.c.l.b16 %v584
        %v850 = vunpack.c.l.b16 %v585
        %v851 = vunpack.c.l.b16 %v586
        %v852 = vunpack.c.l.b16 %v587
        %v853 = vunpack.c.l.b16 %v588
        %v854 = vunpack.c.l.b16 %v589
        %v855 = vunpack.c.l.b16 %v590
        %v856 = vunpack.c.l.b16 %v591
        %v857 = vunpack.c.l.b16 %v592
        %v858 = vunpack.c.l.b16 %v593
        %v859 = vunpack.c.l.b16 %v594
        %v860 = vunpack.c.l.b16 %v595
        %v861 = vunpack.c.l.b16 %v596
        %v862 = vunpack.c.l.b16 %v597
        %v863 = vunpack.c.l.b16 %v598
        %v864 = vunpack.c.l.b16 %v599
        %v865 = vpack.c.b16 %v738, %v737
        %v866 = vpack.c.b16 %v740, %v739
        %v867 = vpack.c.b16 %v742, %v741
        %v868 = vpack.c.b16 %v744, %v743
        %v869 = vpack.c.b16 %v746, %v745
        %v870 = vpack.c.b16 %v748, %v747
        %v871 = vpack.c.b16 %v750, %v749
        %v872 = vpack.c.b16 %v752, %v751
        %v873 = vpack.c.b16 %v754, %v753
        %v874 = vpack.c.b16 %v756, %v755
        %v875 = vpack.c.b16 %v758, %v757
        %v876 = vpack.c.b16 %v760, %v759
        %v877 = vpack.c.b16 %v762, %v761
        %v878 = vpack.c.b16 %v764, %v763
        %v879 = vpack.c.b16 %v766, %v765
        %v880 = vpack.c.b16 %v768, %v767
        %v881 = vpack.c.b16 %v770, %v769
        %v882 = vpack.c.b16 %v772, %v771
        %v883 = vpack.c.b16 %v774, %v773
        %v884 = vpack.c.b16 %v776, %v775
        %v885 = vpack.c.b16 %v778, %v777
        %v886 = vpack.c.b16 %v780, %v779
        %v887 = vpack.c.b16 %v782, %v781
        %v888 = vpack.c.b16 %v784, %v783
        %v889 = vpack.c.b16 %v786, %v785
        %v890 = vpack.c.b16 %v788, %v787
        %v891 = vpack.c.b16 %v790, %v789
        %v892 = vpack.c.b16 %v792, %v791
        %v893 = vpack.c.b16 %v794, %v793
        %v894 = vpack.c.b16 %v796, %v795
        %v895 = vpack.c.b16 %v798, %v797
        %v896 = vpack.c.b16 %v800, %v799
        %v897 = vpack.c.b16 %v802, %v801
        %v898 = vpack.c.b16 %v804, %v803
        %v899 = vpack.c.b16 %v806, %v805
        %v900 = vpack.c.b16 %v808, %v807
        %v901 = vpack.c.b16 %v810, %v809
        %v902 = vpack.c.b16 %v812, %v811
        %v903 = vpack.c.b16 %v814, %v813
        %v904 = vpack.c.b16 %v816, %v815
        %v905 = vpack.c.b16 %v818, %v817
        %v906 = vpack.c.b16 %v820, %v819
        %v907 = vpack.c.b16 %v822, %v821
        %v908 = vpack.c.b16 %v824, %v823
        %v909 = vpack.c.b16 %v826, %v825
        %v910 = vpack.c.b16 %v828, %v827
        %v911 = vpack.c.b16 %v830, %v829
        %v912 = vpack.c.b16 %v832, %v831
        %v913 = vpack.c.b16 %v834, %v833
        %v914 = vpack.c.b16 %v836, %v835
        %v915 = vpack.c.b16 %v838, %v837
        %v916 = vpack.c.b16 %v840, %v839
        %v917 = vpack.c.b16 %v842, %v841
        %v918 = vpack.c.b16 %v844, %v843
        %v919 = vpack.c.b16 %v846, %v845
        %v920 = vpack.c.b16 %v848, %v847
        %v921 = vpack.c.b16 %v850, %v849
        %v922 = vpack.c.b16 %v852, %v851
        %v923 = vpack.c.b16 %v854, %v853
        %v924 = vpack.c.b16 %v856, %v855
        %v925 = vpack.c.b16 %v858, %v857
        %v926 = vpack.c.b16 %v860, %v859
        %v927 = vpack.c.b16 %v862, %v861
        %v928 = vpack.c.b16 %v864, %v863
        %v931 = vunpack.c.l.b16 %v600
        %v932 = vunpack.c.l.b16 %v601
        %v933 = vpack.c.b16 %v932, %v931
        %vm935 = vcmask 130048
        %v937 = vsel %vm935, %v865, 0
        %v940 = vsel %vm935, %v866, 0
        %v943 = vsel %vm935, %v867, 0
        %v946 = vsel %vm935, %v868, 0
        %v949 = vsel %vm935, %v869, 0
        %v952 = vsel %vm935, %v870, 0
        %v955 = vsel %vm935, %v871, 0
        %v958 = vsel %vm935, %v872, 0
        %v961 = vsel %vm935, %v873, 0
        %v964 = vsel %vm935, %v874, 0
        %v967 = vsel %vm935, %v875, 0
        %v970 = vsel %vm935, %v876, 0
        %v973 = vsel %vm935, %v877, 0
        %v976 = vsel %vm935, %v878, 0
        %v979 = vsel %vm935, %v879, 0
        %v982 = vsel %vm935, %v880, 0
        %v985 = vsel %vm935, %v881, 0
        %v988 = vsel %vm935, %v882, 0
        %v991 = vsel %vm935, %v883, 0
        %v994 = vsel %vm935, %v884, 0
        %v997 = vsel %vm935, %v885, 0
        %v1000 = vsel %vm935, %v886, 0
        %v1003 = vsel %vm935, %v887, 0
        %v1006 = vsel %vm935, %v888, 0
        %v1009 = vsel %vm935, %v889, 0
        %v1012 = vsel %vm935, %v890, 0
        %v1015 = vsel %vm935, %v891, 0
        %v1018 = vsel %vm935, %v892, 0
        %v1021 = vsel %vm935, %v893, 0
        %v1024 = vsel %vm935, %v894, 0
        %v1027 = vsel %vm935, %v895, 0
        %v1030 = vsel %vm935, %v896, 0
        %v1033 = vsel %vm935, %v897, 0
        %v1036 = vsel %vm935, %v898, 0
        %v1039 = vsel %vm935, %v899, 0
        %v1042 = vsel %vm935, %v900, 0
        %v1045 = vsel %vm935, %v901, 0
        %v1048 = vsel %vm935, %v902, 0
        %v1051 = vsel %vm935, %v903, 0
        %v1054 = vsel %vm935, %v904, 0
        %v1057 = vsel %vm935, %v905, 0
        %v1060 = vsel %vm935, %v906, 0
        %v1063 = vsel %vm935, %v907, 0
        %v1066 = vsel %vm935, %v908, 0
        %v1069 = vsel %vm935, %v909, 0
        %v1072 = vsel %vm935, %v910, 0
        %v1075 = vsel %vm935, %v911, 0
        %v1078 = vsel %vm935, %v912, 0
        %v1081 = vsel %vm935, %v913, 0
        %v1084 = vsel %vm935, %v914, 0
        %v1087 = vsel %vm935, %v915, 0
        %v1090 = vsel %vm935, %v916, 0
        %v1093 = vsel %vm935, %v917, 0
        %v1096 = vsel %vm935, %v918, 0
        %v1099 = vsel %vm935, %v919, 0
        %v1102 = vsel %vm935, %v920, 0
        %v1105 = vsel %vm935, %v921, 0
        %v1108 = vsel %vm935, %v922, 0
        %v1111 = vsel %vm935, %v923, 0
        %v1114 = vsel %vm935, %v924, 0
        %v1117 = vsel %vm935, %v925, 0
        %v1120 = vsel %vm935, %v926, 0
        %v1123 = vsel %vm935, %v927, 0
        %v1126 = vsel %vm935, %v928, 0
        %1128 = vmatprep.subr.bf16.mxu0 0
        %1129 = vmatpush1.bf16.msra.mxu0 0
        %1130 = vmatprep.subr.bf16.mxu0 0
        %1131 = vmatpush1.bf16.msra.mxu0 0
        %1132 = vmatprep.subr.bf16.mxu0 0
        %1133 = vmatpush1.bf16.msra.mxu0 0
        %1134 = vmatprep.subr.bf16.mxu0 0
        %1135 = vmatpush1.bf16.msra.mxu0 0
        %1136 = vmatprep.subr.bf16.mxu0 0
        %1137 = vmatpush1.bf16.msra.mxu0 0
        %1138 = vmatprep.subr.bf16.mxu0 0
        %1139 = vmatpush1.bf16.msra.mxu0 0
        %1140 = vmatprep.subr.bf16.mxu0 0
        %1141 = vmatpush1.bf16.msra.mxu0 0
        %1142 = vmatprep.subr.bf16.mxu0 0
        %1143 = vmatpush1.bf16.msra.mxu0 %v933
        %1144 = vmatprep.subr.bf16.mxu0 0
        %1145 = vmatpush2.bf16.msra.mxu0 0
        %1146 = vmatprep.subr.bf16.mxu0 0
        %1147 = vmatpush2.bf16.msra.mxu0 0
        %1148 = vmatprep.subr.bf16.mxu0 0
        %1149 = vmatpush2.bf16.msra.mxu0 0
        %1150 = vmatprep.subr.bf16.mxu0 0
        %1151 = vmatpush2.bf16.msra.mxu0 0
        %1152 = vmatprep.subr.bf16.mxu0 0
        %1153 = vmatpush2.bf16.msra.mxu0 0
        %1154 = vmatprep.subr.bf16.mxu0 0
        %1155 = vmatpush2.bf16.msra.mxu0 0
        %1156 = vmatprep.subr.bf16.mxu0 0
        %1157 = vmatpush2.bf16.msra.mxu0 0
        %1158 = vmatprep.subr.bf16.mxu0 0
        %1159 = vmatpush2.bf16.msra.mxu0 0
        %1160 = vmatprep.mubr.bf16.mxu0 0
        %1161 = vmatmul.mubr.bf16.gmra.mxu0 %v937
        %v1162 = vpop.f32.mrf.mxu0
        %v1163 = vadd.f32 %v607, %v1162
        %v1164 = vpop.f32.mrf.mxu0
        %v1165 = vpop.f32.mrf.mxu0
        %v1166 = vadd.f32 %v607, %v1165
        %v1167 = vpop.f32.mrf.mxu0
        %1168 = vmatprep.mubr.bf16.mxu0 0
        %1169 = vmatmul.mubr.bf16.gmra.mxu0 %v940
        %v1170 = vpop.f32.mrf.mxu0
        %v1171 = vadd.f32 %v607, %v1170
        %v1172 = vpop.f32.mrf.mxu0
        %v1173 = vpop.f32.mrf.mxu0
        %v1174 = vadd.f32 %v607, %v1173
        %v1175 = vpop.f32.mrf.mxu0
        %1176 = vmatprep.mubr.bf16.mxu0 0
        %1177 = vmatmul.mubr.bf16.gmra.mxu0 %v943
        %v1178 = vpop.f32.mrf.mxu0
        %v1179 = vadd.f32 %v607, %v1178
        %v1180 = vpop.f32.mrf.mxu0
        %v1181 = vpop.f32.mrf.mxu0
        %v1182 = vadd.f32 %v607, %v1181
        %v1183 = vpop.f32.mrf.mxu0
        %1184 = vmatprep.mubr.bf16.mxu0 0
        %1185 = vmatmul.mubr.bf16.gmra.mxu0 %v946
        %v1186 = vpop.f32.mrf.mxu0
        %v1187 = vadd.f32 %v607, %v1186
        %v1188 = vpop.f32.mrf.mxu0
        %v1189 = vpop.f32.mrf.mxu0
        %v1190 = vadd.f32 %v607, %v1189
        %v1191 = vpop.f32.mrf.mxu0
        %1192 = vmatprep.mubr.bf16.mxu0 0
        %1193 = vmatmul.mubr.bf16.gmra.mxu0 %v949
        %v1194 = vpop.f32.mrf.mxu0
        %v1195 = vadd.f32 %v607, %v1194
        %v1196 = vpop.f32.mrf.mxu0
        %v1197 = vpop.f32.mrf.mxu0
        %v1198 = vadd.f32 %v607, %v1197
        %v1199 = vpop.f32.mrf.mxu0
        %1200 = vmatprep.mubr.bf16.mxu0 0
        %1201 = vmatmul.mubr.bf16.gmra.mxu0 %v952
        %v1202 = vpop.f32.mrf.mxu0
        %v1203 = vadd.f32 %v607, %v1202
        %v1204 = vpop.f32.mrf.mxu0
        %v1205 = vpop.f32.mrf.mxu0
        %v1206 = vadd.f32 %v607, %v1205
        %v1207 = vpop.f32.mrf.mxu0
        %1208 = vmatprep.mubr.bf16.mxu0 0
        %1209 = vmatmul.mubr.bf16.gmra.mxu0 %v955
        %v1210 = vpop.f32.mrf.mxu0
        %v1211 = vadd.f32 %v607, %v1210
        %v1212 = vpop.f32.mrf.mxu0
        %v1213 = vpop.f32.mrf.mxu0
        %v1214 = vadd.f32 %v607, %v1213
        %v1215 = vpop.f32.mrf.mxu0
        %1216 = vmatprep.mubr.bf16.mxu0 0
        %1217 = vmatmul.mubr.bf16.gmra.mxu0 %v958
        %v1218 = vpop.f32.mrf.mxu0
        %v1219 = vadd.f32 %v607, %v1218
        %v1220 = vpop.f32.mrf.mxu0
        %v1221 = vpop.f32.mrf.mxu0
        %v1222 = vadd.f32 %v607, %v1221
        %v1223 = vpop.f32.mrf.mxu0
        %1224 = vmatprep.mubr.bf16.mxu0 0
        %1225 = vmatmul.mubr.bf16.gmra.mxu0 %v961
        %v1226 = vpop.f32.mrf.mxu0
        %v1227 = vadd.f32 %v607, %v1226
        %v1228 = vpop.f32.mrf.mxu0
        %v1229 = vpop.f32.mrf.mxu0
        %v1230 = vadd.f32 %v607, %v1229
        %v1231 = vpop.f32.mrf.mxu0
        %1232 = vmatprep.mubr.bf16.mxu0 0
        %1233 = vmatmul.mubr.bf16.gmra.mxu0 %v964
        %v1234 = vpop.f32.mrf.mxu0
        %v1235 = vadd.f32 %v607, %v1234
        %v1236 = vpop.f32.mrf.mxu0
        %v1237 = vpop.f32.mrf.mxu0
        %v1238 = vadd.f32 %v607, %v1237
        %v1239 = vpop.f32.mrf.mxu0
        %1240 = vmatprep.mubr.bf16.mxu0 0
        %1241 = vmatmul.mubr.bf16.gmra.mxu0 %v967
        %v1242 = vpop.f32.mrf.mxu0
        %v1243 = vadd.f32 %v607, %v1242
        %v1244 = vpop.f32.mrf.mxu0
        %v1245 = vpop.f32.mrf.mxu0
        %v1246 = vadd.f32 %v607, %v1245
        %v1247 = vpop.f32.mrf.mxu0
        %1248 = vmatprep.mubr.bf16.mxu0 0
        %1249 = vmatmul.mubr.bf16.gmra.mxu0 %v970
        %v1250 = vpop.f32.mrf.mxu0
        %v1251 = vadd.f32 %v607, %v1250
        %v1252 = vpop.f32.mrf.mxu0
        %v1253 = vpop.f32.mrf.mxu0
        %v1254 = vadd.f32 %v607, %v1253
        %v1255 = vpop.f32.mrf.mxu0
        %1256 = vmatprep.mubr.bf16.mxu0 0
        %1257 = vmatmul.mubr.bf16.gmra.mxu0 %v973
        %v1258 = vpop.f32.mrf.mxu0
        %v1259 = vadd.f32 %v607, %v1258
        %v1260 = vpop.f32.mrf.mxu0
        %v1261 = vpop.f32.mrf.mxu0
        %v1262 = vadd.f32 %v607, %v1261
        %v1263 = vpop.f32.mrf.mxu0
        %1264 = vmatprep.mubr.bf16.mxu0 0
        %1265 = vmatmul.mubr.bf16.gmra.mxu0 %v976
        %v1266 = vpop.f32.mrf.mxu0
        %v1267 = vadd.f32 %v607, %v1266
        %v1268 = vpop.f32.mrf.mxu0
        %v1269 = vpop.f32.mrf.mxu0
        %v1270 = vadd.f32 %v607, %v1269
        %v1271 = vpop.f32.mrf.mxu0
        %1272 = vmatprep.mubr.bf16.mxu0 0
        %1273 = vmatmul.mubr.bf16.gmra.mxu0 %v979
        %v1274 = vpop.f32.mrf.mxu0
        %v1275 = vadd.f32 %v607, %v1274
        %v1276 = vpop.f32.mrf.mxu0
        %v1277 = vpop.f32.mrf.mxu0
        %v1278 = vadd.f32 %v607, %v1277
        %v1279 = vpop.f32.mrf.mxu0
        %1280 = vmatprep.mubr.bf16.mxu0 0
        %1281 = vmatmul.mubr.bf16.gmra.mxu0 %v982
        %v1282 = vpop.f32.mrf.mxu0
        %v1283 = vadd.f32 %v607, %v1282
        %v1284 = vpop.f32.mrf.mxu0
        %v1285 = vpop.f32.mrf.mxu0
        %v1286 = vadd.f32 %v607, %v1285
        %v1287 = vpop.f32.mrf.mxu0
        %1288 = vmatprep.mubr.bf16.mxu0 0
        %1289 = vmatmul.mubr.bf16.gmra.mxu0 %v985
        %v1290 = vpop.f32.mrf.mxu0
        %v1291 = vadd.f32 %v607, %v1290
        %v1292 = vpop.f32.mrf.mxu0
        %v1293 = vpop.f32.mrf.mxu0
        %v1294 = vadd.f32 %v607, %v1293
        %v1295 = vpop.f32.mrf.mxu0
        %1296 = vmatprep.mubr.bf16.mxu0 0
        %1297 = vmatmul.mubr.bf16.gmra.mxu0 %v988
        %v1298 = vpop.f32.mrf.mxu0
        %v1299 = vadd.f32 %v607, %v1298
        %v1300 = vpop.f32.mrf.mxu0
        %v1301 = vpop.f32.mrf.mxu0
        %v1302 = vadd.f32 %v607, %v1301
        %v1303 = vpop.f32.mrf.mxu0
        %1304 = vmatprep.mubr.bf16.mxu0 0
        %1305 = vmatmul.mubr.bf16.gmra.mxu0 %v991
        %v1306 = vpop.f32.mrf.mxu0
        %v1307 = vadd.f32 %v607, %v1306
        %v1308 = vpop.f32.mrf.mxu0
        %v1309 = vpop.f32.mrf.mxu0
        %v1310 = vadd.f32 %v607, %v1309
        %v1311 = vpop.f32.mrf.mxu0
        %1312 = vmatprep.mubr.bf16.mxu0 0
        %1313 = vmatmul.mubr.bf16.gmra.mxu0 %v994
        %v1314 = vpop.f32.mrf.mxu0
        %v1315 = vadd.f32 %v607, %v1314
        %v1316 = vpop.f32.mrf.mxu0
        %v1317 = vpop.f32.mrf.mxu0
        %v1318 = vadd.f32 %v607, %v1317
        %v1319 = vpop.f32.mrf.mxu0
        %1320 = vmatprep.mubr.bf16.mxu0 0
        %1321 = vmatmul.mubr.bf16.gmra.mxu0 %v997
        %v1322 = vpop.f32.mrf.mxu0
        %v1323 = vadd.f32 %v607, %v1322
        %v1324 = vpop.f32.mrf.mxu0
        %v1325 = vpop.f32.mrf.mxu0
        %v1326 = vadd.f32 %v607, %v1325
        %v1327 = vpop.f32.mrf.mxu0
        %1328 = vmatprep.mubr.bf16.mxu0 0
        %1329 = vmatmul.mubr.bf16.gmra.mxu0 %v1000
        %v1330 = vpop.f32.mrf.mxu0
        %v1331 = vadd.f32 %v607, %v1330
        %v1332 = vpop.f32.mrf.mxu0
        %v1333 = vpop.f32.mrf.mxu0
        %v1334 = vadd.f32 %v607, %v1333
        %v1335 = vpop.f32.mrf.mxu0
        %1336 = vmatprep.mubr.bf16.mxu0 0
        %1337 = vmatmul.mubr.bf16.gmra.mxu0 %v1003
        %v1338 = vpop.f32.mrf.mxu0
        %v1339 = vadd.f32 %v607, %v1338
        %v1340 = vpop.f32.mrf.mxu0
        %v1341 = vpop.f32.mrf.mxu0
        %v1342 = vadd.f32 %v607, %v1341
        %v1343 = vpop.f32.mrf.mxu0
        %1344 = vmatprep.mubr.bf16.mxu0 0
        %1345 = vmatmul.mubr.bf16.gmra.mxu0 %v1006
        %v1346 = vpop.f32.mrf.mxu0
        %v1347 = vadd.f32 %v607, %v1346
        %v1348 = vpop.f32.mrf.mxu0
        %v1349 = vpop.f32.mrf.mxu0
        %v1350 = vadd.f32 %v607, %v1349
        %v1351 = vpop.f32.mrf.mxu0
        %1352 = vmatprep.mubr.bf16.mxu0 0
        %1353 = vmatmul.mubr.bf16.gmra.mxu0 %v1009
        %v1354 = vpop.f32.mrf.mxu0
        %v1355 = vadd.f32 %v607, %v1354
        %v1356 = vpop.f32.mrf.mxu0
        %v1357 = vpop.f32.mrf.mxu0
        %v1358 = vadd.f32 %v607, %v1357
        %v1359 = vpop.f32.mrf.mxu0
        %1360 = vmatprep.mubr.bf16.mxu0 0
        %1361 = vmatmul.mubr.bf16.gmra.mxu0 %v1012
        %v1362 = vpop.f32.mrf.mxu0
        %v1363 = vadd.f32 %v607, %v1362
        %v1364 = vpop.f32.mrf.mxu0
        %v1365 = vpop.f32.mrf.mxu0
        %v1366 = vadd.f32 %v607, %v1365
        %v1367 = vpop.f32.mrf.mxu0
        %1368 = vmatprep.mubr.bf16.mxu0 0
        %1369 = vmatmul.mubr.bf16.gmra.mxu0 %v1015
        %v1370 = vpop.f32.mrf.mxu0
        %v1371 = vadd.f32 %v607, %v1370
        %v1372 = vpop.f32.mrf.mxu0
        %v1373 = vpop.f32.mrf.mxu0
        %v1374 = vadd.f32 %v607, %v1373
        %v1375 = vpop.f32.mrf.mxu0
        %1376 = vmatprep.mubr.bf16.mxu0 0
        %1377 = vmatmul.mubr.bf16.gmra.mxu0 %v1018
        %v1378 = vpop.f32.mrf.mxu0
        %v1379 = vadd.f32 %v607, %v1378
        %v1380 = vpop.f32.mrf.mxu0
        %v1381 = vpop.f32.mrf.mxu0
        %v1382 = vadd.f32 %v607, %v1381
        %v1383 = vpop.f32.mrf.mxu0
        %1384 = vmatprep.mubr.bf16.mxu0 0
        %1385 = vmatmul.mubr.bf16.gmra.mxu0 %v1021
        %v1386 = vpop.f32.mrf.mxu0
        %v1387 = vadd.f32 %v607, %v1386
        %v1388 = vpop.f32.mrf.mxu0
        %v1389 = vpop.f32.mrf.mxu0
        %v1390 = vadd.f32 %v607, %v1389
        %v1391 = vpop.f32.mrf.mxu0
        %1392 = vmatprep.mubr.bf16.mxu0 0
        %1393 = vmatmul.mubr.bf16.gmra.mxu0 %v1024
        %v1394 = vpop.f32.mrf.mxu0
        %v1395 = vadd.f32 %v607, %v1394
        %v1396 = vpop.f32.mrf.mxu0
        %v1397 = vpop.f32.mrf.mxu0
        %v1398 = vadd.f32 %v607, %v1397
        %v1399 = vpop.f32.mrf.mxu0
        %1400 = vmatprep.mubr.bf16.mxu0 0
        %1401 = vmatmul.mubr.bf16.gmra.mxu0 %v1027
        %v1402 = vpop.f32.mrf.mxu0
        %v1403 = vadd.f32 %v607, %v1402
        %v1404 = vpop.f32.mrf.mxu0
        %v1405 = vpop.f32.mrf.mxu0
        %v1406 = vadd.f32 %v607, %v1405
        %v1407 = vpop.f32.mrf.mxu0
        %1408 = vmatprep.mubr.bf16.mxu0 0
        %1409 = vmatmul.mubr.bf16.gmra.mxu0 %v1030
        %v1410 = vpop.f32.mrf.mxu0
        %v1411 = vadd.f32 %v607, %v1410
        %v1412 = vpop.f32.mrf.mxu0
        %v1413 = vpop.f32.mrf.mxu0
        %v1414 = vadd.f32 %v607, %v1413
        %v1415 = vpop.f32.mrf.mxu0
        %1416 = vmatprep.mubr.bf16.mxu0 0
        %1417 = vmatmul.mubr.bf16.gmra.mxu0 %v1033
        %v1418 = vpop.f32.mrf.mxu0
        %v1419 = vadd.f32 %v607, %v1418
        %v1420 = vpop.f32.mrf.mxu0
        %v1421 = vpop.f32.mrf.mxu0
        %v1422 = vadd.f32 %v607, %v1421
        %v1423 = vpop.f32.mrf.mxu0
        %1424 = vmatprep.mubr.bf16.mxu0 0
        %1425 = vmatmul.mubr.bf16.gmra.mxu0 %v1036
        %v1426 = vpop.f32.mrf.mxu0
        %v1427 = vadd.f32 %v607, %v1426
        %v1428 = vpop.f32.mrf.mxu0
        %v1429 = vpop.f32.mrf.mxu0
        %v1430 = vadd.f32 %v607, %v1429
        %v1431 = vpop.f32.mrf.mxu0
        %1432 = vmatprep.mubr.bf16.mxu0 0
        %1433 = vmatmul.mubr.bf16.gmra.mxu0 %v1039
        %v1434 = vpop.f32.mrf.mxu0
        %v1435 = vadd.f32 %v607, %v1434
        %v1436 = vpop.f32.mrf.mxu0
        %v1437 = vpop.f32.mrf.mxu0
        %v1438 = vadd.f32 %v607, %v1437
        %v1439 = vpop.f32.mrf.mxu0
        %1440 = vmatprep.mubr.bf16.mxu0 0
        %1441 = vmatmul.mubr.bf16.gmra.mxu0 %v1042
        %v1442 = vpop.f32.mrf.mxu0
        %v1443 = vadd.f32 %v607, %v1442
        %v1444 = vpop.f32.mrf.mxu0
        %v1445 = vpop.f32.mrf.mxu0
        %v1446 = vadd.f32 %v607, %v1445
        %v1447 = vpop.f32.mrf.mxu0
        %1448 = vmatprep.mubr.bf16.mxu0 0
        %1449 = vmatmul.mubr.bf16.gmra.mxu0 %v1045
        %v1450 = vpop.f32.mrf.mxu0
        %v1451 = vadd.f32 %v607, %v1450
        %v1452 = vpop.f32.mrf.mxu0
        %v1453 = vpop.f32.mrf.mxu0
        %v1454 = vadd.f32 %v607, %v1453
        %v1455 = vpop.f32.mrf.mxu0
        %1456 = vmatprep.mubr.bf16.mxu0 0
        %1457 = vmatmul.mubr.bf16.gmra.mxu0 %v1048
        %v1458 = vpop.f32.mrf.mxu0
        %v1459 = vadd.f32 %v607, %v1458
        %v1460 = vpop.f32.mrf.mxu0
        %v1461 = vpop.f32.mrf.mxu0
        %v1462 = vadd.f32 %v607, %v1461
        %v1463 = vpop.f32.mrf.mxu0
        %1464 = vmatprep.mubr.bf16.mxu0 0
        %1465 = vmatmul.mubr.bf16.gmra.mxu0 %v1051
        %v1466 = vpop.f32.mrf.mxu0
        %v1467 = vadd.f32 %v607, %v1466
        %v1468 = vpop.f32.mrf.mxu0
        %v1469 = vpop.f32.mrf.mxu0
        %v1470 = vadd.f32 %v607, %v1469
        %v1471 = vpop.f32.mrf.mxu0
        %1472 = vmatprep.mubr.bf16.mxu0 0
        %1473 = vmatmul.mubr.bf16.gmra.mxu0 %v1054
        %v1474 = vpop.f32.mrf.mxu0
        %v1475 = vadd.f32 %v607, %v1474
        %v1476 = vpop.f32.mrf.mxu0
        %v1477 = vpop.f32.mrf.mxu0
        %v1478 = vadd.f32 %v607, %v1477
        %v1479 = vpop.f32.mrf.mxu0
        %1480 = vmatprep.mubr.bf16.mxu0 0
        %1481 = vmatmul.mubr.bf16.gmra.mxu0 %v1057
        %v1482 = vpop.f32.mrf.mxu0
        %v1483 = vadd.f32 %v607, %v1482
        %v1484 = vpop.f32.mrf.mxu0
        %v1485 = vpop.f32.mrf.mxu0
        %v1486 = vadd.f32 %v607, %v1485
        %v1487 = vpop.f32.mrf.mxu0
        %1488 = vmatprep.mubr.bf16.mxu0 0
        %1489 = vmatmul.mubr.bf16.gmra.mxu0 %v1060
        %v1490 = vpop.f32.mrf.mxu0
        %v1491 = vadd.f32 %v607, %v1490
        %v1492 = vpop.f32.mrf.mxu0
        %v1493 = vpop.f32.mrf.mxu0
        %v1494 = vadd.f32 %v607, %v1493
        %v1495 = vpop.f32.mrf.mxu0
        %1496 = vmatprep.mubr.bf16.mxu0 0
        %1497 = vmatmul.mubr.bf16.gmra.mxu0 %v1063
        %v1498 = vpop.f32.mrf.mxu0
        %v1499 = vadd.f32 %v607, %v1498
        %v1500 = vpop.f32.mrf.mxu0
        %v1501 = vpop.f32.mrf.mxu0
        %v1502 = vadd.f32 %v607, %v1501
        %v1503 = vpop.f32.mrf.mxu0
        %1504 = vmatprep.mubr.bf16.mxu0 0
        %1505 = vmatmul.mubr.bf16.gmra.mxu0 %v1066
        %v1506 = vpop.f32.mrf.mxu0
        %v1507 = vadd.f32 %v607, %v1506
        %v1508 = vpop.f32.mrf.mxu0
        %v1509 = vpop.f32.mrf.mxu0
        %v1510 = vadd.f32 %v607, %v1509
        %v1511 = vpop.f32.mrf.mxu0
        %1512 = vmatprep.mubr.bf16.mxu0 0
        %1513 = vmatmul.mubr.bf16.gmra.mxu0 %v1069
        %v1514 = vpop.f32.mrf.mxu0
        %v1515 = vadd.f32 %v607, %v1514
        %v1516 = vpop.f32.mrf.mxu0
        %v1517 = vpop.f32.mrf.mxu0
        %v1518 = vadd.f32 %v607, %v1517
        %v1519 = vpop.f32.mrf.mxu0
        %1520 = vmatprep.mubr.bf16.mxu0 0
        %1521 = vmatmul.mubr.bf16.gmra.mxu0 %v1072
        %v1522 = vpop.f32.mrf.mxu0
        %v1523 = vadd.f32 %v607, %v1522
        %v1524 = vpop.f32.mrf.mxu0
        %v1525 = vpop.f32.mrf.mxu0
        %v1526 = vadd.f32 %v607, %v1525
        %v1527 = vpop.f32.mrf.mxu0
        %1528 = vmatprep.mubr.bf16.mxu0 0
        %1529 = vmatmul.mubr.bf16.gmra.mxu0 %v1075
        %v1530 = vpop.f32.mrf.mxu0
        %v1531 = vadd.f32 %v607, %v1530
        %v1532 = vpop.f32.mrf.mxu0
        %v1533 = vpop.f32.mrf.mxu0
        %v1534 = vadd.f32 %v607, %v1533
        %v1535 = vpop.f32.mrf.mxu0
        %1536 = vmatprep.mubr.bf16.mxu0 0
        %1537 = vmatmul.mubr.bf16.gmra.mxu0 %v1078
        %v1538 = vpop.f32.mrf.mxu0
        %v1539 = vadd.f32 %v607, %v1538
        %v1540 = vpop.f32.mrf.mxu0
        %v1541 = vpop.f32.mrf.mxu0
        %v1542 = vadd.f32 %v607, %v1541
        %v1543 = vpop.f32.mrf.mxu0
        %1544 = vmatprep.mubr.bf16.mxu0 0
        %1545 = vmatmul.mubr.bf16.gmra.mxu0 %v1081
        %v1546 = vpop.f32.mrf.mxu0
        %v1547 = vadd.f32 %v607, %v1546
        %v1548 = vpop.f32.mrf.mxu0
        %v1549 = vpop.f32.mrf.mxu0
        %v1550 = vadd.f32 %v607, %v1549
        %v1551 = vpop.f32.mrf.mxu0
        %1552 = vmatprep.mubr.bf16.mxu0 0
        %1553 = vmatmul.mubr.bf16.gmra.mxu0 %v1084
        %v1554 = vpop.f32.mrf.mxu0
        %v1555 = vadd.f32 %v607, %v1554
        %v1556 = vpop.f32.mrf.mxu0
        %v1557 = vpop.f32.mrf.mxu0
        %v1558 = vadd.f32 %v607, %v1557
        %v1559 = vpop.f32.mrf.mxu0
        %1560 = vmatprep.mubr.bf16.mxu0 0
        %1561 = vmatmul.mubr.bf16.gmra.mxu0 %v1087
        %v1562 = vpop.f32.mrf.mxu0
        %v1563 = vadd.f32 %v607, %v1562
        %v1564 = vpop.f32.mrf.mxu0
        %v1565 = vpop.f32.mrf.mxu0
        %v1566 = vadd.f32 %v607, %v1565
        %v1567 = vpop.f32.mrf.mxu0
        %1568 = vmatprep.mubr.bf16.mxu0 0
        %1569 = vmatmul.mubr.bf16.gmra.mxu0 %v1090
        %v1570 = vpop.f32.mrf.mxu0
        %v1571 = vadd.f32 %v607, %v1570
        %v1572 = vpop.f32.mrf.mxu0
        %v1573 = vpop.f32.mrf.mxu0
        %v1574 = vadd.f32 %v607, %v1573
        %v1575 = vpop.f32.mrf.mxu0
        %1576 = vmatprep.mubr.bf16.mxu0 0
        %1577 = vmatmul.mubr.bf16.gmra.mxu0 %v1093
        %v1578 = vpop.f32.mrf.mxu0
        %v1579 = vadd.f32 %v607, %v1578
        %v1580 = vpop.f32.mrf.mxu0
        %v1581 = vpop.f32.mrf.mxu0
        %v1582 = vadd.f32 %v607, %v1581
        %v1583 = vpop.f32.mrf.mxu0
        %1584 = vmatprep.mubr.bf16.mxu0 0
        %1585 = vmatmul.mubr.bf16.gmra.mxu0 %v1096
        %v1586 = vpop.f32.mrf.mxu0
        %v1587 = vadd.f32 %v607, %v1586
        %v1588 = vpop.f32.mrf.mxu0
        %v1589 = vpop.f32.mrf.mxu0
        %v1590 = vadd.f32 %v607, %v1589
        %v1591 = vpop.f32.mrf.mxu0
        %1592 = vmatprep.mubr.bf16.mxu0 0
        %1593 = vmatmul.mubr.bf16.gmra.mxu0 %v1099
        %v1594 = vpop.f32.mrf.mxu0
        %v1595 = vadd.f32 %v607, %v1594
        %v1596 = vpop.f32.mrf.mxu0
        %v1597 = vpop.f32.mrf.mxu0
        %v1598 = vadd.f32 %v607, %v1597
        %v1599 = vpop.f32.mrf.mxu0
        %1600 = vmatprep.mubr.bf16.mxu0 0
        %1601 = vmatmul.mubr.bf16.gmra.mxu0 %v1102
        %v1602 = vpop.f32.mrf.mxu0
        %v1603 = vadd.f32 %v607, %v1602
        %v1604 = vpop.f32.mrf.mxu0
        %v1605 = vpop.f32.mrf.mxu0
        %v1606 = vadd.f32 %v607, %v1605
        %v1607 = vpop.f32.mrf.mxu0
        %1608 = vmatprep.mubr.bf16.mxu0 0
        %1609 = vmatmul.mubr.bf16.gmra.mxu0 %v1105
        %v1610 = vpop.f32.mrf.mxu0
        %v1611 = vadd.f32 %v607, %v1610
        %v1612 = vpop.f32.mrf.mxu0
        %v1613 = vpop.f32.mrf.mxu0
        %v1614 = vadd.f32 %v607, %v1613
        %v1615 = vpop.f32.mrf.mxu0
        %1616 = vmatprep.mubr.bf16.mxu0 0
        %1617 = vmatmul.mubr.bf16.gmra.mxu0 %v1108
        %v1618 = vpop.f32.mrf.mxu0
        %v1619 = vadd.f32 %v607, %v1618
        %v1620 = vpop.f32.mrf.mxu0
        %v1621 = vpop.f32.mrf.mxu0
        %v1622 = vadd.f32 %v607, %v1621
        %v1623 = vpop.f32.mrf.mxu0
        %1624 = vmatprep.mubr.bf16.mxu0 0
        %1625 = vmatmul.mubr.bf16.gmra.mxu0 %v1111
        %v1626 = vpop.f32.mrf.mxu0
        %v1627 = vadd.f32 %v607, %v1626
        %v1628 = vpop.f32.mrf.mxu0
        %v1629 = vpop.f32.mrf.mxu0
        %v1630 = vadd.f32 %v607, %v1629
        %v1631 = vpop.f32.mrf.mxu0
        %1632 = vmatprep.mubr.bf16.mxu0 0
        %1633 = vmatmul.mubr.bf16.gmra.mxu0 %v1114
        %v1634 = vpop.f32.mrf.mxu0
        %v1635 = vadd.f32 %v607, %v1634
        %v1636 = vpop.f32.mrf.mxu0
        %v1637 = vpop.f32.mrf.mxu0
        %v1638 = vadd.f32 %v607, %v1637
        %v1639 = vpop.f32.mrf.mxu0
        %1640 = vmatprep.mubr.bf16.mxu0 0
        %1641 = vmatmul.mubr.bf16.gmra.mxu0 %v1117
        %v1642 = vpop.f32.mrf.mxu0
        %v1643 = vadd.f32 %v607, %v1642
        %v1644 = vpop.f32.mrf.mxu0
        %v1645 = vpop.f32.mrf.mxu0
        %v1646 = vadd.f32 %v607, %v1645
        %v1647 = vpop.f32.mrf.mxu0
        %1648 = vmatprep.mubr.bf16.mxu0 0
        %1649 = vmatmul.mubr.bf16.gmra.mxu0 %v1120
        %v1650 = vpop.f32.mrf.mxu0
        %v1651 = vadd.f32 %v607, %v1650
        %v1652 = vpop.f32.mrf.mxu0
        %v1653 = vpop.f32.mrf.mxu0
        %v1654 = vadd.f32 %v607, %v1653
        %v1655 = vpop.f32.mrf.mxu0
        %1656 = vmatprep.mubr.bf16.mxu0 0
        %1657 = vmatmul.mubr.bf16.gmra.mxu0 %v1123
        %v1658 = vpop.f32.mrf.mxu0
        %v1659 = vadd.f32 %v607, %v1658
        %v1660 = vpop.f32.mrf.mxu0
        %v1661 = vpop.f32.mrf.mxu0
        %v1662 = vadd.f32 %v607, %v1661
        %v1663 = vpop.f32.mrf.mxu0
        %1664 = vmatprep.mubr.bf16.mxu0 0
        %1665 = vmatmul.mubr.bf16.gmra.mxu0 %v1126
        %v1666 = vpop.f32.mrf.mxu0
        %v1667 = vadd.f32 %v607, %v1666
        %v1668 = vpop.f32.mrf.mxu0
        %v1669 = vpop.f32.mrf.mxu0
        %v1670 = vadd.f32 %v607, %v1669
        %v1671 = vpop.f32.mrf.mxu0
        %1672 = vdwg.mxu0
        %v1673 = vmax.f32 %v1163, 0.0
        %v1674 = vmax.f32 %v1166, 0.0
        %v1675 = vmax.f32 %v1171, 0.0
        %v1676 = vmax.f32 %v1174, 0.0
        %v1677 = vmax.f32 %v1179, 0.0
        %v1678 = vmax.f32 %v1182, 0.0
        %v1679 = vmax.f32 %v1187, 0.0
        %v1680 = vmax.f32 %v1190, 0.0
        %v1681 = vmax.f32 %v1195, 0.0
        %v1682 = vmax.f32 %v1198, 0.0
        %v1683 = vmax.f32 %v1203, 0.0
        %v1684 = vmax.f32 %v1206, 0.0
        %v1685 = vmax.f32 %v1211, 0.0
        %v1686 = vmax.f32 %v1214, 0.0
        %v1687 = vmax.f32 %v1219, 0.0
        %v1688 = vmax.f32 %v1222, 0.0
        %v1689 = vmax.f32 %v1227, 0.0
        %v1690 = vmax.f32 %v1230, 0.0
        %v1691 = vmax.f32 %v1235, 0.0
        %v1692 = vmax.f32 %v1238, 0.0
        %v1693 = vmax.f32 %v1243, 0.0
        %v1694 = vmax.f32 %v1246, 0.0
        %v1695 = vmax.f32 %v1251, 0.0
        %v1696 = vmax.f32 %v1254, 0.0
        %v1697 = vmax.f32 %v1259, 0.0
        %v1698 = vmax.f32 %v1262, 0.0
        %v1699 = vmax.f32 %v1267, 0.0
        %v1700 = vmax.f32 %v1270, 0.0
        %v1701 = vmax.f32 %v1275, 0.0
        %v1702 = vmax.f32 %v1278, 0.0
        %v1703 = vmax.f32 %v1283, 0.0
        %v1704 = vmax.f32 %v1286, 0.0
        %v1705 = vmax.f32 %v1291, 0.0
        %v1706 = vmax.f32 %v1294, 0.0
        %v1707 = vmax.f32 %v1299, 0.0
        %v1708 = vmax.f32 %v1302, 0.0
        %v1709 = vmax.f32 %v1307, 0.0
        %v1710 = vmax.f32 %v1310, 0.0
        %v1711 = vmax.f32 %v1315, 0.0
        %v1712 = vmax.f32 %v1318, 0.0
        %v1713 = vmax.f32 %v1323, 0.0
        %v1714 = vmax.f32 %v1326, 0.0
        %v1715 = vmax.f32 %v1331, 0.0
        %v1716 = vmax.f32 %v1334, 0.0
        %v1717 = vmax.f32 %v1339, 0.0
        %v1718 = vmax.f32 %v1342, 0.0
        %v1719 = vmax.f32 %v1347, 0.0
        %v1720 = vmax.f32 %v1350, 0.0
        %v1721 = vmax.f32 %v1355, 0.0
        %v1722 = vmax.f32 %v1358, 0.0
        %v1723 = vmax.f32 %v1363, 0.0
        %v1724 = vmax.f32 %v1366, 0.0
        %v1725 = vmax.f32 %v1371, 0.0
        %v1726 = vmax.f32 %v1374, 0.0
        %v1727 = vmax.f32 %v1379, 0.0
        %v1728 = vmax.f32 %v1382, 0.0
        %v1729 = vmax.f32 %v1387, 0.0
        %v1730 = vmax.f32 %v1390, 0.0
        %v1731 = vmax.f32 %v1395, 0.0
        %v1732 = vmax.f32 %v1398, 0.0
        %v1733 = vmax.f32 %v1403, 0.0
        %v1734 = vmax.f32 %v1406, 0.0
        %v1735 = vmax.f32 %v1411, 0.0
        %v1736 = vmax.f32 %v1414, 0.0
        %v1737 = vmax.f32 %v1419, 0.0
        %v1738 = vmax.f32 %v1422, 0.0
        %v1739 = vmax.f32 %v1427, 0.0
        %v1740 = vmax.f32 %v1430, 0.0
        %v1741 = vmax.f32 %v1435, 0.0
        %v1742 = vmax.f32 %v1438, 0.0
        %v1743 = vmax.f32 %v1443, 0.0
        %v1744 = vmax.f32 %v1446, 0.0
        %v1745 = vmax.f32 %v1451, 0.0
        %v1746 = vmax.f32 %v1454, 0.0
        %v1747 = vmax.f32 %v1459, 0.0
        %v1748 = vmax.f32 %v1462, 0.0
        %v1749 = vmax.f32 %v1467, 0.0
        %v1750 = vmax.f32 %v1470, 0.0
        %v1751 = vmax.f32 %v1475, 0.0
        %v1752 = vmax.f32 %v1478, 0.0
        %v1753 = vmax.f32 %v1483, 0.0
        %v1754 = vmax.f32 %v1486, 0.0
        %v1755 = vmax.f32 %v1491, 0.0
        %v1756 = vmax.f32 %v1494, 0.0
        %v1757 = vmax.f32 %v1499, 0.0
        %v1758 = vmax.f32 %v1502, 0.0
        %v1759 = vmax.f32 %v1507, 0.0
        %v1760 = vmax.f32 %v1510, 0.0
        %v1761 = vmax.f32 %v1515, 0.0
        %v1762 = vmax.f32 %v1518, 0.0
        %v1763 = vmax.f32 %v1523, 0.0
        %v1764 = vmax.f32 %v1526, 0.0
        %v1765 = vmax.f32 %v1531, 0.0
        %v1766 = vmax.f32 %v1534, 0.0
        %v1767 = vmax.f32 %v1539, 0.0
        %v1768 = vmax.f32 %v1542, 0.0
        %v1769 = vmax.f32 %v1547, 0.0
        %v1770 = vmax.f32 %v1550, 0.0
        %v1771 = vmax.f32 %v1555, 0.0
        %v1772 = vmax.f32 %v1558, 0.0
        %v1773 = vmax.f32 %v1563, 0.0
        %v1774 = vmax.f32 %v1566, 0.0
        %v1775 = vmax.f32 %v1571, 0.0
        %v1776 = vmax.f32 %v1574, 0.0
        %v1777 = vmax.f32 %v1579, 0.0
        %v1778 = vmax.f32 %v1582, 0.0
        %v1779 = vmax.f32 %v1587, 0.0
        %v1780 = vmax.f32 %v1590, 0.0
        %v1781 = vmax.f32 %v1595, 0.0
        %v1782 = vmax.f32 %v1598, 0.0
        %v1783 = vmax.f32 %v1603, 0.0
        %v1784 = vmax.f32 %v1606, 0.0
        %v1785 = vmax.f32 %v1611, 0.0
        %v1786 = vmax.f32 %v1614, 0.0
        %v1787 = vmax.f32 %v1619, 0.0
        %v1788 = vmax.f32 %v1622, 0.0
        %v1789 = vmax.f32 %v1627, 0.0
        %v1790 = vmax.f32 %v1630, 0.0
        %v1791 = vmax.f32 %v1635, 0.0
        %v1792 = vmax.f32 %v1638, 0.0
        %v1793 = vmax.f32 %v1643, 0.0
        %v1794 = vmax.f32 %v1646, 0.0
        %v1795 = vmax.f32 %v1651, 0.0
        %v1796 = vmax.f32 %v1654, 0.0
        %v1797 = vmax.f32 %v1659, 0.0
        %v1798 = vmax.f32 %v1662, 0.0
        %v1799 = vmax.f32 %v1667, 0.0
        %v1800 = vmax.f32 %v1670, 0.0
        %v1801 = vpack.c.bf16 %v1674, %v1673
        %v1802 = vpack.c.bf16 %v1676, %v1675
        %v1803 = vpack.c.bf16 %v1678, %v1677
        %v1804 = vpack.c.bf16 %v1680, %v1679
        %v1805 = vpack.c.bf16 %v1682, %v1681
        %v1806 = vpack.c.bf16 %v1684, %v1683
        %v1807 = vpack.c.bf16 %v1686, %v1685
        %v1808 = vpack.c.bf16 %v1688, %v1687
        %v1809 = vpack.c.bf16 %v1690, %v1689
        %v1810 = vpack.c.bf16 %v1692, %v1691
        %v1811 = vpack.c.bf16 %v1694, %v1693
        %v1812 = vpack.c.bf16 %v1696, %v1695
        %v1813 = vpack.c.bf16 %v1698, %v1697
        %v1814 = vpack.c.bf16 %v1700, %v1699
        %v1815 = vpack.c.bf16 %v1702, %v1701
        %v1816 = vpack.c.bf16 %v1704, %v1703
        %v1817 = vpack.c.bf16 %v1706, %v1705
        %v1818 = vpack.c.bf16 %v1708, %v1707
        %v1819 = vpack.c.bf16 %v1710, %v1709
        %v1820 = vpack.c.bf16 %v1712, %v1711
        %v1821 = vpack.c.bf16 %v1714, %v1713
        %v1822 = vpack.c.bf16 %v1716, %v1715
        %v1823 = vpack.c.bf16 %v1718, %v1717
        %v1824 = vpack.c.bf16 %v1720, %v1719
        %v1825 = vpack.c.bf16 %v1722, %v1721
        %v1826 = vpack.c.bf16 %v1724, %v1723
        %v1827 = vpack.c.bf16 %v1726, %v1725
        %v1828 = vpack.c.bf16 %v1728, %v1727
        %v1829 = vpack.c.bf16 %v1730, %v1729
        %v1830 = vpack.c.bf16 %v1732, %v1731
        %v1831 = vpack.c.bf16 %v1734, %v1733
        %v1832 = vpack.c.bf16 %v1736, %v1735
        %v1833 = vpack.c.bf16 %v1738, %v1737
        %v1834 = vpack.c.bf16 %v1740, %v1739
        %v1835 = vpack.c.bf16 %v1742, %v1741
        %v1836 = vpack.c.bf16 %v1744, %v1743
        %v1837 = vpack.c.bf16 %v1746, %v1745
        %v1838 = vpack.c.bf16 %v1748, %v1747
        %v1839 = vpack.c.bf16 %v1750, %v1749
        %v1840 = vpack.c.bf16 %v1752, %v1751
        %v1841 = vpack.c.bf16 %v1754, %v1753
        %v1842 = vpack.c.bf16 %v1756, %v1755
        %v1843 = vpack.c.bf16 %v1758, %v1757
        %v1844 = vpack.c.bf16 %v1760, %v1759
        %v1845 = vpack.c.bf16 %v1762, %v1761
        %v1846 = vpack.c.bf16 %v1764, %v1763
        %v1847 = vpack.c.bf16 %v1766, %v1765
        %v1848 = vpack.c.bf16 %v1768, %v1767
        %v1849 = vpack.c.bf16 %v1770, %v1769
        %v1850 = vpack.c.bf16 %v1772, %v1771
        %v1851 = vpack.c.bf16 %v1774, %v1773
        %v1852 = vpack.c.bf16 %v1776, %v1775
        %v1853 = vpack.c.bf16 %v1778, %v1777
        %v1854 = vpack.c.bf16 %v1780, %v1779
        %v1855 = vpack.c.bf16 %v1782, %v1781
        %v1856 = vpack.c.bf16 %v1784, %v1783
        %v1857 = vpack.c.bf16 %v1786, %v1785
        %v1858 = vpack.c.bf16 %v1788, %v1787
        %v1859 = vpack.c.bf16 %v1790, %v1789
        %v1860 = vpack.c.bf16 %v1792, %v1791
        %v1861 = vpack.c.bf16 %v1794, %v1793
        %v1862 = vpack.c.bf16 %v1796, %v1795
        %v1863 = vpack.c.bf16 %v1798, %v1797
        %v1864 = vpack.c.bf16 %v1800, %v1799
        %v1865 = vld [vmem:[%s3] sm:$0xf]
        %v1866 = vld [vmem:[%s3 + $0x4] sm:$0xf]
        %v1867 = vld [vmem:[%s3 + $0x8] sm:$0xf]
        %v1868 = vld [vmem:[%s3 + $0xc] sm:$0xf]
        %v1869 = vld [vmem:[%s3 + $0x10] sm:$0xf]
        %v1870 = vld [vmem:[%s3 + $0x14] sm:$0xf]
        %v1871 = vld [vmem:[%s3 + $0x18] sm:$0xf]
        %v1872 = vld [vmem:[%s3 + $0x1c] sm:$0xf]
        %v1873 = vld [vmem:[%s4] sm:$0x1]
        %v1875 = vlaneseq
        %v1876 = vshrl.u32 %v1875, 7
        %v1877 = vsub.s32 0, %v1876
        %v1878 = vrot.slane %v1873, %v1877
        %v1888 = vunpack.c.l.b16 %v1865
        %v1889 = vunpack.c.l.b16 %v1866
        %v1890 = vunpack.c.l.b16 %v1867
        %v1891 = vunpack.c.l.b16 %v1868
        %v1892 = vunpack.c.l.b16 %v1869
        %v1893 = vunpack.c.l.b16 %v1870
        %v1894 = vunpack.c.l.b16 %v1871
        %v1895 = vunpack.c.l.b16 %v1872
        %v1896 = vpack.c.b16 %v1889, %v1888
        %v1897 = vpack.c.b16 %v1891, %v1890
        %v1898 = vpack.c.b16 %v1893, %v1892
        %v1899 = vpack.c.b16 %v1895, %v1894
        %vm1904 = vcmask 523264
        %v1906 = vsel %vm1904, %v1801, 0
        %v1909 = vsel %vm1904, %v1802, 0
        %v1912 = vsel %vm1904, %v1803, 0
        %v1915 = vsel %vm1904, %v1804, 0
        %v1918 = vsel %vm1904, %v1805, 0
        %v1921 = vsel %vm1904, %v1806, 0
        %v1924 = vsel %vm1904, %v1807, 0
        %v1927 = vsel %vm1904, %v1808, 0
        %v1930 = vsel %vm1904, %v1809, 0
        %v1933 = vsel %vm1904, %v1810, 0
        %v1936 = vsel %vm1904, %v1811, 0
        %v1939 = vsel %vm1904, %v1812, 0
        %v1942 = vsel %vm1904, %v1813, 0
        %v1945 = vsel %vm1904, %v1814, 0
        %v1948 = vsel %vm1904, %v1815, 0
        %v1951 = vsel %vm1904, %v1816, 0
        %v1954 = vsel %vm1904, %v1817, 0
        %v1957 = vsel %vm1904, %v1818, 0
        %v1960 = vsel %vm1904, %v1819, 0
        %v1963 = vsel %vm1904, %v1820, 0
        %v1966 = vsel %vm1904, %v1821, 0
        %v1969 = vsel %vm1904, %v1822, 0
        %v1972 = vsel %vm1904, %v1823, 0
        %v1975 = vsel %vm1904, %v1824, 0
        %v1978 = vsel %vm1904, %v1825, 0
        %v1981 = vsel %vm1904, %v1826, 0
        %v1984 = vsel %vm1904, %v1827, 0
        %v1987 = vsel %vm1904, %v1828, 0
        %v1990 = vsel %vm1904, %v1829, 0
        %v1993 = vsel %vm1904, %v1830, 0
        %v1996 = vsel %vm1904, %v1831, 0
        %v1999 = vsel %vm1904, %v1832, 0
        %v2002 = vsel %vm1904, %v1833, 0
        %v2005 = vsel %vm1904, %v1834, 0
        %v2008 = vsel %vm1904, %v1835, 0
        %v2011 = vsel %vm1904, %v1836, 0
        %v2014 = vsel %vm1904, %v1837, 0
        %v2017 = vsel %vm1904, %v1838, 0
        %v2020 = vsel %vm1904, %v1839, 0
        %v2023 = vsel %vm1904, %v1840, 0
        %v2026 = vsel %vm1904, %v1841, 0
        %v2029 = vsel %vm1904, %v1842, 0
        %v2032 = vsel %vm1904, %v1843, 0
        %v2035 = vsel %vm1904, %v1844, 0
        %v2038 = vsel %vm1904, %v1845, 0
        %v2041 = vsel %vm1904, %v1846, 0
        %v2044 = vsel %vm1904, %v1847, 0
        %v2047 = vsel %vm1904, %v1848, 0
        %v2050 = vsel %vm1904, %v1849, 0
        %v2053 = vsel %vm1904, %v1850, 0
        %v2056 = vsel %vm1904, %v1851, 0
        %v2059 = vsel %vm1904, %v1852, 0
        %v2062 = vsel %vm1904, %v1853, 0
        %v2065 = vsel %vm1904, %v1854, 0
        %v2068 = vsel %vm1904, %v1855, 0
        %v2071 = vsel %vm1904, %v1856, 0
        %v2074 = vsel %vm1904, %v1857, 0
        %v2077 = vsel %vm1904, %v1858, 0
        %v2080 = vsel %vm1904, %v1859, 0
        %v2083 = vsel %vm1904, %v1860, 0
        %v2086 = vsel %vm1904, %v1861, 0
        %v2089 = vsel %vm1904, %v1862, 0
        %v2092 = vsel %vm1904, %v1863, 0
        %v2095 = vsel %vm1904, %v1864, 0
        %2097 = vmatprep.subr.bf16.mxu0 0
        %2098 = vmatpush1.bf16.msra.mxu0 0
        %2099 = vmatprep.subr.bf16.mxu0 0
        %2100 = vmatpush1.bf16.msra.mxu0 0
        %2101 = vmatprep.subr.bf16.mxu0 0
        %2102 = vmatpush1.bf16.msra.mxu0 0
        %2103 = vmatprep.subr.bf16.mxu0 0
        %2104 = vmatpush1.bf16.msra.mxu0 0
        %2105 = vmatprep.subr.bf16.mxu0 0
        %2106 = vmatpush1.bf16.msra.mxu0 %v1899
        %2107 = vmatprep.subr.bf16.mxu0 0
        %2108 = vmatpush1.bf16.msra.mxu0 %v1898
        %2109 = vmatprep.subr.bf16.mxu0 0
        %2110 = vmatpush1.bf16.msra.mxu0 %v1897
        %2111 = vmatprep.subr.bf16.mxu0 0
        %2112 = vmatpush1.bf16.msra.mxu0 %v1896
        %2113 = vmatprep.subr.bf16.mxu0 0
        %2114 = vmatpush2.bf16.msra.mxu0 0
        %2115 = vmatprep.subr.bf16.mxu0 0
        %2116 = vmatpush2.bf16.msra.mxu0 0
        %2117 = vmatprep.subr.bf16.mxu0 0
        %2118 = vmatpush2.bf16.msra.mxu0 0
        %2119 = vmatprep.subr.bf16.mxu0 0
        %2120 = vmatpush2.bf16.msra.mxu0 0
        %2121 = vmatprep.subr.bf16.mxu0 0
        %2122 = vmatpush2.bf16.msra.mxu0 0
        %2123 = vmatprep.subr.bf16.mxu0 0
        %2124 = vmatpush2.bf16.msra.mxu0 0
        %2125 = vmatprep.subr.bf16.mxu0 0
        %2126 = vmatpush2.bf16.msra.mxu0 0
        %2127 = vmatprep.subr.bf16.mxu0 0
        %2128 = vmatpush2.bf16.msra.mxu0 0
        %2129 = vmatprep.mubr.bf16.mxu0 0
        %2130 = vmatmul.mubr.bf16.gmra.mxu0 %v1906
        %v2131 = vpop.f32.mrf.mxu0
        %v2132 = vadd.f32 %v1878, %v2131
        %v2133 = vpop.f32.mrf.mxu0
        %v2134 = vpop.f32.mrf.mxu0
        %v2135 = vadd.f32 %v1878, %v2134
        %v2136 = vpop.f32.mrf.mxu0
        %2137 = vmatprep.mubr.bf16.mxu0 0
        %2138 = vmatmul.mubr.bf16.gmra.mxu0 %v1909
        %v2139 = vpop.f32.mrf.mxu0
        %v2140 = vadd.f32 %v1878, %v2139
        %v2141 = vpop.f32.mrf.mxu0
        %v2142 = vpop.f32.mrf.mxu0
        %v2143 = vadd.f32 %v1878, %v2142
        %v2144 = vpop.f32.mrf.mxu0
        %2145 = vmatprep.mubr.bf16.mxu0 0
        %2146 = vmatmul.mubr.bf16.gmra.mxu0 %v1912
        %v2147 = vpop.f32.mrf.mxu0
        %v2148 = vadd.f32 %v1878, %v2147
        %v2149 = vpop.f32.mrf.mxu0
        %v2150 = vpop.f32.mrf.mxu0
        %v2151 = vadd.f32 %v1878, %v2150
        %v2152 = vpop.f32.mrf.mxu0
        %2153 = vmatprep.mubr.bf16.mxu0 0
        %2154 = vmatmul.mubr.bf16.gmra.mxu0 %v1915
        %v2155 = vpop.f32.mrf.mxu0
        %v2156 = vadd.f32 %v1878, %v2155
        %v2157 = vpop.f32.mrf.mxu0
        %v2158 = vpop.f32.mrf.mxu0
        %v2159 = vadd.f32 %v1878, %v2158
        %v2160 = vpop.f32.mrf.mxu0
        %2161 = vmatprep.mubr.bf16.mxu0 0
        %2162 = vmatmul.mubr.bf16.gmra.mxu0 %v1918
        %v2163 = vpop.f32.mrf.mxu0
        %v2164 = vadd.f32 %v1878, %v2163
        %v2165 = vpop.f32.mrf.mxu0
        %v2166 = vpop.f32.mrf.mxu0
        %v2167 = vadd.f32 %v1878, %v2166
        %v2168 = vpop.f32.mrf.mxu0
        %2169 = vmatprep.mubr.bf16.mxu0 0
        %2170 = vmatmul.mubr.bf16.gmra.mxu0 %v1921
        %v2171 = vpop.f32.mrf.mxu0
        %v2172 = vadd.f32 %v1878, %v2171
        %v2173 = vpop.f32.mrf.mxu0
        %v2174 = vpop.f32.mrf.mxu0
        %v2175 = vadd.f32 %v1878, %v2174
        %v2176 = vpop.f32.mrf.mxu0
        %2177 = vmatprep.mubr.bf16.mxu0 0
        %2178 = vmatmul.mubr.bf16.gmra.mxu0 %v1924
        %v2179 = vpop.f32.mrf.mxu0
        %v2180 = vadd.f32 %v1878, %v2179
        %v2181 = vpop.f32.mrf.mxu0
        %v2182 = vpop.f32.mrf.mxu0
        %v2183 = vadd.f32 %v1878, %v2182
        %v2184 = vpop.f32.mrf.mxu0
        %2185 = vmatprep.mubr.bf16.mxu0 0
        %2186 = vmatmul.mubr.bf16.gmra.mxu0 %v1927
        %v2187 = vpop.f32.mrf.mxu0
        %v2188 = vadd.f32 %v1878, %v2187
        %v2189 = vpop.f32.mrf.mxu0
        %v2190 = vpop.f32.mrf.mxu0
        %v2191 = vadd.f32 %v1878, %v2190
        %v2192 = vpop.f32.mrf.mxu0
        %2193 = vmatprep.mubr.bf16.mxu0 0
        %2194 = vmatmul.mubr.bf16.gmra.mxu0 %v1930
        %v2195 = vpop.f32.mrf.mxu0
        %v2196 = vadd.f32 %v1878, %v2195
        %v2197 = vpop.f32.mrf.mxu0
        %v2198 = vpop.f32.mrf.mxu0
        %v2199 = vadd.f32 %v1878, %v2198
        %v2200 = vpop.f32.mrf.mxu0
        %2201 = vmatprep.mubr.bf16.mxu0 0
        %2202 = vmatmul.mubr.bf16.gmra.mxu0 %v1933
        %v2203 = vpop.f32.mrf.mxu0
        %v2204 = vadd.f32 %v1878, %v2203
        %v2205 = vpop.f32.mrf.mxu0
        %v2206 = vpop.f32.mrf.mxu0
        %v2207 = vadd.f32 %v1878, %v2206
        %v2208 = vpop.f32.mrf.mxu0
        %2209 = vmatprep.mubr.bf16.mxu0 0
        %2210 = vmatmul.mubr.bf16.gmra.mxu0 %v1936
        %v2211 = vpop.f32.mrf.mxu0
        %v2212 = vadd.f32 %v1878, %v2211
        %v2213 = vpop.f32.mrf.mxu0
        %v2214 = vpop.f32.mrf.mxu0
        %v2215 = vadd.f32 %v1878, %v2214
        %v2216 = vpop.f32.mrf.mxu0
        %2217 = vmatprep.mubr.bf16.mxu0 0
        %2218 = vmatmul.mubr.bf16.gmra.mxu0 %v1939
        %v2219 = vpop.f32.mrf.mxu0
        %v2220 = vadd.f32 %v1878, %v2219
        %v2221 = vpop.f32.mrf.mxu0
        %v2222 = vpop.f32.mrf.mxu0
        %v2223 = vadd.f32 %v1878, %v2222
        %v2224 = vpop.f32.mrf.mxu0
        %2225 = vmatprep.mubr.bf16.mxu0 0
        %2226 = vmatmul.mubr.bf16.gmra.mxu0 %v1942
        %v2227 = vpop.f32.mrf.mxu0
        %v2228 = vadd.f32 %v1878, %v2227
        %v2229 = vpop.f32.mrf.mxu0
        %v2230 = vpop.f32.mrf.mxu0
        %v2231 = vadd.f32 %v1878, %v2230
        %v2232 = vpop.f32.mrf.mxu0
        %2233 = vmatprep.mubr.bf16.mxu0 0
        %2234 = vmatmul.mubr.bf16.gmra.mxu0 %v1945
        %v2235 = vpop.f32.mrf.mxu0
        %v2236 = vadd.f32 %v1878, %v2235
        %v2237 = vpop.f32.mrf.mxu0
        %v2238 = vpop.f32.mrf.mxu0
        %v2239 = vadd.f32 %v1878, %v2238
        %v2240 = vpop.f32.mrf.mxu0
        %2241 = vmatprep.mubr.bf16.mxu0 0
        %2242 = vmatmul.mubr.bf16.gmra.mxu0 %v1948
        %v2243 = vpop.f32.mrf.mxu0
        %v2244 = vadd.f32 %v1878, %v2243
        %v2245 = vpop.f32.mrf.mxu0
        %v2246 = vpop.f32.mrf.mxu0
        %v2247 = vadd.f32 %v1878, %v2246
        %v2248 = vpop.f32.mrf.mxu0
        %2249 = vmatprep.mubr.bf16.mxu0 0
        %2250 = vmatmul.mubr.bf16.gmra.mxu0 %v1951
        %v2251 = vpop.f32.mrf.mxu0
        %v2252 = vadd.f32 %v1878, %v2251
        %v2253 = vpop.f32.mrf.mxu0
        %v2254 = vpop.f32.mrf.mxu0
        %v2255 = vadd.f32 %v1878, %v2254
        %v2256 = vpop.f32.mrf.mxu0
        %2257 = vmatprep.mubr.bf16.mxu0 0
        %2258 = vmatmul.mubr.bf16.gmra.mxu0 %v1954
        %v2259 = vpop.f32.mrf.mxu0
        %v2260 = vadd.f32 %v1878, %v2259
        %v2261 = vpop.f32.mrf.mxu0
        %v2262 = vpop.f32.mrf.mxu0
        %v2263 = vadd.f32 %v1878, %v2262
        %v2264 = vpop.f32.mrf.mxu0
        %2265 = vmatprep.mubr.bf16.mxu0 0
        %2266 = vmatmul.mubr.bf16.gmra.mxu0 %v1957
        %v2267 = vpop.f32.mrf.mxu0
        %v2268 = vadd.f32 %v1878, %v2267
        %v2269 = vpop.f32.mrf.mxu0
        %v2270 = vpop.f32.mrf.mxu0
        %v2271 = vadd.f32 %v1878, %v2270
        %v2272 = vpop.f32.mrf.mxu0
        %2273 = vmatprep.mubr.bf16.mxu0 0
        %2274 = vmatmul.mubr.bf16.gmra.mxu0 %v1960
        %v2275 = vpop.f32.mrf.mxu0
        %v2276 = vadd.f32 %v1878, %v2275
        %v2277 = vpop.f32.mrf.mxu0
        %v2278 = vpop.f32.mrf.mxu0
        %v2279 = vadd.f32 %v1878, %v2278
        %v2280 = vpop.f32.mrf.mxu0
        %2281 = vmatprep.mubr.bf16.mxu0 0
        %2282 = vmatmul.mubr.bf16.gmra.mxu0 %v1963
        %v2283 = vpop.f32.mrf.mxu0
        %v2284 = vadd.f32 %v1878, %v2283
        %v2285 = vpop.f32.mrf.mxu0
        %v2286 = vpop.f32.mrf.mxu0
        %v2287 = vadd.f32 %v1878, %v2286
        %v2288 = vpop.f32.mrf.mxu0
        %2289 = vmatprep.mubr.bf16.mxu0 0
        %2290 = vmatmul.mubr.bf16.gmra.mxu0 %v1966
        %v2291 = vpop.f32.mrf.mxu0
        %v2292 = vadd.f32 %v1878, %v2291
        %v2293 = vpop.f32.mrf.mxu0
        %v2294 = vpop.f32.mrf.mxu0
        %v2295 = vadd.f32 %v1878, %v2294
        %v2296 = vpop.f32.mrf.mxu0
        %2297 = vmatprep.mubr.bf16.mxu0 0
        %2298 = vmatmul.mubr.bf16.gmra.mxu0 %v1969
        %v2299 = vpop.f32.mrf.mxu0
        %v2300 = vadd.f32 %v1878, %v2299
        %v2301 = vpop.f32.mrf.mxu0
        %v2302 = vpop.f32.mrf.mxu0
        %v2303 = vadd.f32 %v1878, %v2302
        %v2304 = vpop.f32.mrf.mxu0
        %2305 = vmatprep.mubr.bf16.mxu0 0
        %2306 = vmatmul.mubr.bf16.gmra.mxu0 %v1972
        %v2307 = vpop.f32.mrf.mxu0
        %v2308 = vadd.f32 %v1878, %v2307
        %v2309 = vpop.f32.mrf.mxu0
        %v2310 = vpop.f32.mrf.mxu0
        %v2311 = vadd.f32 %v1878, %v2310
        %v2312 = vpop.f32.mrf.mxu0
        %2313 = vmatprep.mubr.bf16.mxu0 0
        %2314 = vmatmul.mubr.bf16.gmra.mxu0 %v1975
        %v2315 = vpop.f32.mrf.mxu0
        %v2316 = vadd.f32 %v1878, %v2315
        %v2317 = vpop.f32.mrf.mxu0
        %v2318 = vpop.f32.mrf.mxu0
        %v2319 = vadd.f32 %v1878, %v2318
        %v2320 = vpop.f32.mrf.mxu0
        %2321 = vmatprep.mubr.bf16.mxu0 0
        %2322 = vmatmul.mubr.bf16.gmra.mxu0 %v1978
        %v2323 = vpop.f32.mrf.mxu0
        %v2324 = vadd.f32 %v1878, %v2323
        %v2325 = vpop.f32.mrf.mxu0
        %v2326 = vpop.f32.mrf.mxu0
        %v2327 = vadd.f32 %v1878, %v2326
        %v2328 = vpop.f32.mrf.mxu0
        %2329 = vmatprep.mubr.bf16.mxu0 0
        %2330 = vmatmul.mubr.bf16.gmra.mxu0 %v1981
        %v2331 = vpop.f32.mrf.mxu0
        %v2332 = vadd.f32 %v1878, %v2331
        %v2333 = vpop.f32.mrf.mxu0
        %v2334 = vpop.f32.mrf.mxu0
        %v2335 = vadd.f32 %v1878, %v2334
        %v2336 = vpop.f32.mrf.mxu0
        %2337 = vmatprep.mubr.bf16.mxu0 0
        %2338 = vmatmul.mubr.bf16.gmra.mxu0 %v1984
        %v2339 = vpop.f32.mrf.mxu0
        %v2340 = vadd.f32 %v1878, %v2339
        %v2341 = vpop.f32.mrf.mxu0
        %v2342 = vpop.f32.mrf.mxu0
        %v2343 = vadd.f32 %v1878, %v2342
        %v2344 = vpop.f32.mrf.mxu0
        %2345 = vmatprep.mubr.bf16.mxu0 0
        %2346 = vmatmul.mubr.bf16.gmra.mxu0 %v1987
        %v2347 = vpop.f32.mrf.mxu0
        %v2348 = vadd.f32 %v1878, %v2347
        %v2349 = vpop.f32.mrf.mxu0
        %v2350 = vpop.f32.mrf.mxu0
        %v2351 = vadd.f32 %v1878, %v2350
        %v2352 = vpop.f32.mrf.mxu0
        %2353 = vmatprep.mubr.bf16.mxu0 0
        %2354 = vmatmul.mubr.bf16.gmra.mxu0 %v1990
        %v2355 = vpop.f32.mrf.mxu0
        %v2356 = vadd.f32 %v1878, %v2355
        %v2357 = vpop.f32.mrf.mxu0
        %v2358 = vpop.f32.mrf.mxu0
        %v2359 = vadd.f32 %v1878, %v2358
        %v2360 = vpop.f32.mrf.mxu0
        %2361 = vmatprep.mubr.bf16.mxu0 0
        %2362 = vmatmul.mubr.bf16.gmra.mxu0 %v1993
        %v2363 = vpop.f32.mrf.mxu0
        %v2364 = vadd.f32 %v1878, %v2363
        %v2365 = vpop.f32.mrf.mxu0
        %v2366 = vpop.f32.mrf.mxu0
        %v2367 = vadd.f32 %v1878, %v2366
        %v2368 = vpop.f32.mrf.mxu0
        %2369 = vmatprep.mubr.bf16.mxu0 0
        %2370 = vmatmul.mubr.bf16.gmra.mxu0 %v1996
        %v2371 = vpop.f32.mrf.mxu0
        %v2372 = vadd.f32 %v1878, %v2371
        %v2373 = vpop.f32.mrf.mxu0
        %v2374 = vpop.f32.mrf.mxu0
        %v2375 = vadd.f32 %v1878, %v2374
        %v2376 = vpop.f32.mrf.mxu0
        %2377 = vmatprep.mubr.bf16.mxu0 0
        %2378 = vmatmul.mubr.bf16.gmra.mxu0 %v1999
        %v2379 = vpop.f32.mrf.mxu0
        %v2380 = vadd.f32 %v1878, %v2379
        %v2381 = vpop.f32.mrf.mxu0
        %v2382 = vpop.f32.mrf.mxu0
        %v2383 = vadd.f32 %v1878, %v2382
        %v2384 = vpop.f32.mrf.mxu0
        %2385 = vmatprep.mubr.bf16.mxu0 0
        %2386 = vmatmul.mubr.bf16.gmra.mxu0 %v2002
        %v2387 = vpop.f32.mrf.mxu0
        %v2388 = vadd.f32 %v1878, %v2387
        %v2389 = vpop.f32.mrf.mxu0
        %v2390 = vpop.f32.mrf.mxu0
        %v2391 = vadd.f32 %v1878, %v2390
        %v2392 = vpop.f32.mrf.mxu0
        %2393 = vmatprep.mubr.bf16.mxu0 0
        %2394 = vmatmul.mubr.bf16.gmra.mxu0 %v2005
        %v2395 = vpop.f32.mrf.mxu0
        %v2396 = vadd.f32 %v1878, %v2395
        %v2397 = vpop.f32.mrf.mxu0
        %v2398 = vpop.f32.mrf.mxu0
        %v2399 = vadd.f32 %v1878, %v2398
        %v2400 = vpop.f32.mrf.mxu0
        %2401 = vmatprep.mubr.bf16.mxu0 0
        %2402 = vmatmul.mubr.bf16.gmra.mxu0 %v2008
        %v2403 = vpop.f32.mrf.mxu0
        %v2404 = vadd.f32 %v1878, %v2403
        %v2405 = vpop.f32.mrf.mxu0
        %v2406 = vpop.f32.mrf.mxu0
        %v2407 = vadd.f32 %v1878, %v2406
        %v2408 = vpop.f32.mrf.mxu0
        %2409 = vmatprep.mubr.bf16.mxu0 0
        %2410 = vmatmul.mubr.bf16.gmra.mxu0 %v2011
        %v2411 = vpop.f32.mrf.mxu0
        %v2412 = vadd.f32 %v1878, %v2411
        %v2413 = vpop.f32.mrf.mxu0
        %v2414 = vpop.f32.mrf.mxu0
        %v2415 = vadd.f32 %v1878, %v2414
        %v2416 = vpop.f32.mrf.mxu0
        %2417 = vmatprep.mubr.bf16.mxu0 0
        %2418 = vmatmul.mubr.bf16.gmra.mxu0 %v2014
        %v2419 = vpop.f32.mrf.mxu0
        %v2420 = vadd.f32 %v1878, %v2419
        %v2421 = vpop.f32.mrf.mxu0
        %v2422 = vpop.f32.mrf.mxu0
        %v2423 = vadd.f32 %v1878, %v2422
        %v2424 = vpop.f32.mrf.mxu0
        %2425 = vmatprep.mubr.bf16.mxu0 0
        %2426 = vmatmul.mubr.bf16.gmra.mxu0 %v2017
        %v2427 = vpop.f32.mrf.mxu0
        %v2428 = vadd.f32 %v1878, %v2427
        %v2429 = vpop.f32.mrf.mxu0
        %v2430 = vpop.f32.mrf.mxu0
        %v2431 = vadd.f32 %v1878, %v2430
        %v2432 = vpop.f32.mrf.mxu0
        %2433 = vmatprep.mubr.bf16.mxu0 0
        %2434 = vmatmul.mubr.bf16.gmra.mxu0 %v2020
        %v2435 = vpop.f32.mrf.mxu0
        %v2436 = vadd.f32 %v1878, %v2435
        %v2437 = vpop.f32.mrf.mxu0
        %v2438 = vpop.f32.mrf.mxu0
        %v2439 = vadd.f32 %v1878, %v2438
        %v2440 = vpop.f32.mrf.mxu0
        %2441 = vmatprep.mubr.bf16.mxu0 0
        %2442 = vmatmul.mubr.bf16.gmra.mxu0 %v2023
        %v2443 = vpop.f32.mrf.mxu0
        %v2444 = vadd.f32 %v1878, %v2443
        %v2445 = vpop.f32.mrf.mxu0
        %v2446 = vpop.f32.mrf.mxu0
        %v2447 = vadd.f32 %v1878, %v2446
        %v2448 = vpop.f32.mrf.mxu0
        %2449 = vmatprep.mubr.bf16.mxu0 0
        %2450 = vmatmul.mubr.bf16.gmra.mxu0 %v2026
        %v2451 = vpop.f32.mrf.mxu0
        %v2452 = vadd.f32 %v1878, %v2451
        %v2453 = vpop.f32.mrf.mxu0
        %v2454 = vpop.f32.mrf.mxu0
        %v2455 = vadd.f32 %v1878, %v2454
        %v2456 = vpop.f32.mrf.mxu0
        %2457 = vmatprep.mubr.bf16.mxu0 0
        %2458 = vmatmul.mubr.bf16.gmra.mxu0 %v2029
        %v2459 = vpop.f32.mrf.mxu0
        %v2460 = vadd.f32 %v1878, %v2459
        %v2461 = vpop.f32.mrf.mxu0
        %v2462 = vpop.f32.mrf.mxu0
        %v2463 = vadd.f32 %v1878, %v2462
        %v2464 = vpop.f32.mrf.mxu0
        %2465 = vmatprep.mubr.bf16.mxu0 0
        %2466 = vmatmul.mubr.bf16.gmra.mxu0 %v2032
        %v2467 = vpop.f32.mrf.mxu0
        %v2468 = vadd.f32 %v1878, %v2467
        %v2469 = vpop.f32.mrf.mxu0
        %v2470 = vpop.f32.mrf.mxu0
        %v2471 = vadd.f32 %v1878, %v2470
        %v2472 = vpop.f32.mrf.mxu0
        %2473 = vmatprep.mubr.bf16.mxu0 0
        %2474 = vmatmul.mubr.bf16.gmra.mxu0 %v2035
        %v2475 = vpop.f32.mrf.mxu0
        %v2476 = vadd.f32 %v1878, %v2475
        %v2477 = vpop.f32.mrf.mxu0
        %v2478 = vpop.f32.mrf.mxu0
        %v2479 = vadd.f32 %v1878, %v2478
        %v2480 = vpop.f32.mrf.mxu0
        %2481 = vmatprep.mubr.bf16.mxu0 0
        %2482 = vmatmul.mubr.bf16.gmra.mxu0 %v2038
        %v2483 = vpop.f32.mrf.mxu0
        %v2484 = vadd.f32 %v1878, %v2483
        %v2485 = vpop.f32.mrf.mxu0
        %v2486 = vpop.f32.mrf.mxu0
        %v2487 = vadd.f32 %v1878, %v2486
        %v2488 = vpop.f32.mrf.mxu0
        %2489 = vmatprep.mubr.bf16.mxu0 0
        %2490 = vmatmul.mubr.bf16.gmra.mxu0 %v2041
        %v2491 = vpop.f32.mrf.mxu0
        %v2492 = vadd.f32 %v1878, %v2491
        %v2493 = vpop.f32.mrf.mxu0
        %v2494 = vpop.f32.mrf.mxu0
        %v2495 = vadd.f32 %v1878, %v2494
        %v2496 = vpop.f32.mrf.mxu0
        %2497 = vmatprep.mubr.bf16.mxu0 0
        %2498 = vmatmul.mubr.bf16.gmra.mxu0 %v2044
        %v2499 = vpop.f32.mrf.mxu0
        %v2500 = vadd.f32 %v1878, %v2499
        %v2501 = vpop.f32.mrf.mxu0
        %v2502 = vpop.f32.mrf.mxu0
        %v2503 = vadd.f32 %v1878, %v2502
        %v2504 = vpop.f32.mrf.mxu0
        %2505 = vmatprep.mubr.bf16.mxu0 0
        %2506 = vmatmul.mubr.bf16.gmra.mxu0 %v2047
        %v2507 = vpop.f32.mrf.mxu0
        %v2508 = vadd.f32 %v1878, %v2507
        %v2509 = vpop.f32.mrf.mxu0
        %v2510 = vpop.f32.mrf.mxu0
        %v2511 = vadd.f32 %v1878, %v2510
        %v2512 = vpop.f32.mrf.mxu0
        %2513 = vmatprep.mubr.bf16.mxu0 0
        %2514 = vmatmul.mubr.bf16.gmra.mxu0 %v2050
        %v2515 = vpop.f32.mrf.mxu0
        %v2516 = vadd.f32 %v1878, %v2515
        %v2517 = vpop.f32.mrf.mxu0
        %v2518 = vpop.f32.mrf.mxu0
        %v2519 = vadd.f32 %v1878, %v2518
        %v2520 = vpop.f32.mrf.mxu0
        %2521 = vmatprep.mubr.bf16.mxu0 0
        %2522 = vmatmul.mubr.bf16.gmra.mxu0 %v2053
        %v2523 = vpop.f32.mrf.mxu0
        %v2524 = vadd.f32 %v1878, %v2523
        %v2525 = vpop.f32.mrf.mxu0
        %v2526 = vpop.f32.mrf.mxu0
        %v2527 = vadd.f32 %v1878, %v2526
        %v2528 = vpop.f32.mrf.mxu0
        %2529 = vmatprep.mubr.bf16.mxu0 0
        %2530 = vmatmul.mubr.bf16.gmra.mxu0 %v2056
        %v2531 = vpop.f32.mrf.mxu0
        %v2532 = vadd.f32 %v1878, %v2531
        %v2533 = vpop.f32.mrf.mxu0
        %v2534 = vpop.f32.mrf.mxu0
        %v2535 = vadd.f32 %v1878, %v2534
        %v2536 = vpop.f32.mrf.mxu0
        %2537 = vmatprep.mubr.bf16.mxu0 0
        %2538 = vmatmul.mubr.bf16.gmra.mxu0 %v2059
        %v2539 = vpop.f32.mrf.mxu0
        %v2540 = vadd.f32 %v1878, %v2539
        %v2541 = vpop.f32.mrf.mxu0
        %v2542 = vpop.f32.mrf.mxu0
        %v2543 = vadd.f32 %v1878, %v2542
        %v2544 = vpop.f32.mrf.mxu0
        %2545 = vmatprep.mubr.bf16.mxu0 0
        %2546 = vmatmul.mubr.bf16.gmra.mxu0 %v2062
        %v2547 = vpop.f32.mrf.mxu0
        %v2548 = vadd.f32 %v1878, %v2547
        %v2549 = vpop.f32.mrf.mxu0
        %v2550 = vpop.f32.mrf.mxu0
        %v2551 = vadd.f32 %v1878, %v2550
        %v2552 = vpop.f32.mrf.mxu0
        %2553 = vmatprep.mubr.bf16.mxu0 0
        %2554 = vmatmul.mubr.bf16.gmra.mxu0 %v2065
        %v2555 = vpop.f32.mrf.mxu0
        %v2556 = vadd.f32 %v1878, %v2555
        %v2557 = vpop.f32.mrf.mxu0
        %v2558 = vpop.f32.mrf.mxu0
        %v2559 = vadd.f32 %v1878, %v2558
        %v2560 = vpop.f32.mrf.mxu0
        %2561 = vmatprep.mubr.bf16.mxu0 0
        %2562 = vmatmul.mubr.bf16.gmra.mxu0 %v2068
        %v2563 = vpop.f32.mrf.mxu0
        %v2564 = vadd.f32 %v1878, %v2563
        %v2565 = vpop.f32.mrf.mxu0
        %v2566 = vpop.f32.mrf.mxu0
        %v2567 = vadd.f32 %v1878, %v2566
        %v2568 = vpop.f32.mrf.mxu0
        %2569 = vmatprep.mubr.bf16.mxu0 0
        %2570 = vmatmul.mubr.bf16.gmra.mxu0 %v2071
        %v2571 = vpop.f32.mrf.mxu0
        %v2572 = vadd.f32 %v1878, %v2571
        %v2573 = vpop.f32.mrf.mxu0
        %v2574 = vpop.f32.mrf.mxu0
        %v2575 = vadd.f32 %v1878, %v2574
        %v2576 = vpop.f32.mrf.mxu0
        %2577 = vmatprep.mubr.bf16.mxu0 0
        %2578 = vmatmul.mubr.bf16.gmra.mxu0 %v2074
        %v2579 = vpop.f32.mrf.mxu0
        %v2580 = vadd.f32 %v1878, %v2579
        %v2581 = vpop.f32.mrf.mxu0
        %v2582 = vpop.f32.mrf.mxu0
        %v2583 = vadd.f32 %v1878, %v2582
        %v2584 = vpop.f32.mrf.mxu0
        %2585 = vmatprep.mubr.bf16.mxu0 0
        %2586 = vmatmul.mubr.bf16.gmra.mxu0 %v2077
        %v2587 = vpop.f32.mrf.mxu0
        %v2588 = vadd.f32 %v1878, %v2587
        %v2589 = vpop.f32.mrf.mxu0
        %v2590 = vpop.f32.mrf.mxu0
        %v2591 = vadd.f32 %v1878, %v2590
        %v2592 = vpop.f32.mrf.mxu0
        %2593 = vmatprep.mubr.bf16.mxu0 0
        %2594 = vmatmul.mubr.bf16.gmra.mxu0 %v2080
        %v2595 = vpop.f32.mrf.mxu0
        %v2596 = vadd.f32 %v1878, %v2595
        %v2597 = vpop.f32.mrf.mxu0
        %v2598 = vpop.f32.mrf.mxu0
        %v2599 = vadd.f32 %v1878, %v2598
        %v2600 = vpop.f32.mrf.mxu0
        %2601 = vmatprep.mubr.bf16.mxu0 0
        %2602 = vmatmul.mubr.bf16.gmra.mxu0 %v2083
        %v2603 = vpop.f32.mrf.mxu0
        %v2604 = vadd.f32 %v1878, %v2603
        %v2605 = vpop.f32.mrf.mxu0
        %v2606 = vpop.f32.mrf.mxu0
        %v2607 = vadd.f32 %v1878, %v2606
        %v2608 = vpop.f32.mrf.mxu0
        %2609 = vmatprep.mubr.bf16.mxu0 0
        %2610 = vmatmul.mubr.bf16.gmra.mxu0 %v2086
        %v2611 = vpop.f32.mrf.mxu0
        %v2612 = vadd.f32 %v1878, %v2611
        %v2613 = vpop.f32.mrf.mxu0
        %v2614 = vpop.f32.mrf.mxu0
        %v2615 = vadd.f32 %v1878, %v2614
        %v2616 = vpop.f32.mrf.mxu0
        %2617 = vmatprep.mubr.bf16.mxu0 0
        %2618 = vmatmul.mubr.bf16.gmra.mxu0 %v2089
        %v2619 = vpop.f32.mrf.mxu0
        %v2620 = vadd.f32 %v1878, %v2619
        %v2621 = vpop.f32.mrf.mxu0
        %v2622 = vpop.f32.mrf.mxu0
        %v2623 = vadd.f32 %v1878, %v2622
        %v2624 = vpop.f32.mrf.mxu0
        %2625 = vmatprep.mubr.bf16.mxu0 0
        %2626 = vmatmul.mubr.bf16.gmra.mxu0 %v2092
        %v2627 = vpop.f32.mrf.mxu0
        %v2628 = vadd.f32 %v1878, %v2627
        %v2629 = vpop.f32.mrf.mxu0
        %v2630 = vpop.f32.mrf.mxu0
        %v2631 = vadd.f32 %v1878, %v2630
        %v2632 = vpop.f32.mrf.mxu0
        %2633 = vmatprep.mubr.bf16.mxu0 0
        %2634 = vmatmul.mubr.bf16.gmra.mxu0 %v2095
        %v2635 = vpop.f32.mrf.mxu0
        %v2636 = vadd.f32 %v1878, %v2635
        %v2637 = vpop.f32.mrf.mxu0
        %v2638 = vpop.f32.mrf.mxu0
        %v2639 = vadd.f32 %v1878, %v2638
        %v2640 = vpop.f32.mrf.mxu0
        %2641 = vdwg.mxu0
        %v2642 = vmax.f32 %v2132, 0.0
        %v2643 = vmax.f32 %v2135, 0.0
        %v2644 = vmax.f32 %v2140, 0.0
        %v2645 = vmax.f32 %v2143, 0.0
        %v2646 = vmax.f32 %v2148, 0.0
        %v2647 = vmax.f32 %v2151, 0.0
        %v2648 = vmax.f32 %v2156, 0.0
        %v2649 = vmax.f32 %v2159, 0.0
        %v2650 = vmax.f32 %v2164, 0.0
        %v2651 = vmax.f32 %v2167, 0.0
        %v2652 = vmax.f32 %v2172, 0.0
        %v2653 = vmax.f32 %v2175, 0.0
        %v2654 = vmax.f32 %v2180, 0.0
        %v2655 = vmax.f32 %v2183, 0.0
        %v2656 = vmax.f32 %v2188, 0.0
        %v2657 = vmax.f32 %v2191, 0.0
        %v2658 = vmax.f32 %v2196, 0.0
        %v2659 = vmax.f32 %v2199, 0.0
        %v2660 = vmax.f32 %v2204, 0.0
        %v2661 = vmax.f32 %v2207, 0.0
        %v2662 = vmax.f32 %v2212, 0.0
        %v2663 = vmax.f32 %v2215, 0.0
        %v2664 = vmax.f32 %v2220, 0.0
        %v2665 = vmax.f32 %v2223, 0.0
        %v2666 = vmax.f32 %v2228, 0.0
        %v2667 = vmax.f32 %v2231, 0.0
        %v2668 = vmax.f32 %v2236, 0.0
        %v2669 = vmax.f32 %v2239, 0.0
        %v2670 = vmax.f32 %v2244, 0.0
        %v2671 = vmax.f32 %v2247, 0.0
        %v2672 = vmax.f32 %v2252, 0.0
        %v2673 = vmax.f32 %v2255, 0.0
        %v2674 = vmax.f32 %v2260, 0.0
        %v2675 = vmax.f32 %v2263, 0.0
        %v2676 = vmax.f32 %v2268, 0.0
        %v2677 = vmax.f32 %v2271, 0.0
        %v2678 = vmax.f32 %v2276, 0.0
        %v2679 = vmax.f32 %v2279, 0.0
        %v2680 = vmax.f32 %v2284, 0.0
        %v2681 = vmax.f32 %v2287, 0.0
        %v2682 = vmax.f32 %v2292, 0.0
        %v2683 = vmax.f32 %v2295, 0.0
        %v2684 = vmax.f32 %v2300, 0.0
        %v2685 = vmax.f32 %v2303, 0.0
        %v2686 = vmax.f32 %v2308, 0.0
        %v2687 = vmax.f32 %v2311, 0.0
        %v2688 = vmax.f32 %v2316, 0.0
        %v2689 = vmax.f32 %v2319, 0.0
        %v2690 = vmax.f32 %v2324, 0.0
        %v2691 = vmax.f32 %v2327, 0.0
        %v2692 = vmax.f32 %v2332, 0.0
        %v2693 = vmax.f32 %v2335, 0.0
        %v2694 = vmax.f32 %v2340, 0.0
        %v2695 = vmax.f32 %v2343, 0.0
        %v2696 = vmax.f32 %v2348, 0.0
        %v2697 = vmax.f32 %v2351, 0.0
        %v2698 = vmax.f32 %v2356, 0.0
        %v2699 = vmax.f32 %v2359, 0.0
        %v2700 = vmax.f32 %v2364, 0.0
        %v2701 = vmax.f32 %v2367, 0.0
        %v2702 = vmax.f32 %v2372, 0.0
        %v2703 = vmax.f32 %v2375, 0.0
        %v2704 = vmax.f32 %v2380, 0.0
        %v2705 = vmax.f32 %v2383, 0.0
        %v2706 = vmax.f32 %v2388, 0.0
        %v2707 = vmax.f32 %v2391, 0.0
        %v2708 = vmax.f32 %v2396, 0.0
        %v2709 = vmax.f32 %v2399, 0.0
        %v2710 = vmax.f32 %v2404, 0.0
        %v2711 = vmax.f32 %v2407, 0.0
        %v2712 = vmax.f32 %v2412, 0.0
        %v2713 = vmax.f32 %v2415, 0.0
        %v2714 = vmax.f32 %v2420, 0.0
        %v2715 = vmax.f32 %v2423, 0.0
        %v2716 = vmax.f32 %v2428, 0.0
        %v2717 = vmax.f32 %v2431, 0.0
        %v2718 = vmax.f32 %v2436, 0.0
        %v2719 = vmax.f32 %v2439, 0.0
        %v2720 = vmax.f32 %v2444, 0.0
        %v2721 = vmax.f32 %v2447, 0.0
        %v2722 = vmax.f32 %v2452, 0.0
        %v2723 = vmax.f32 %v2455, 0.0
        %v2724 = vmax.f32 %v2460, 0.0
        %v2725 = vmax.f32 %v2463, 0.0
        %v2726 = vmax.f32 %v2468, 0.0
        %v2727 = vmax.f32 %v2471, 0.0
        %v2728 = vmax.f32 %v2476, 0.0
        %v2729 = vmax.f32 %v2479, 0.0
        %v2730 = vmax.f32 %v2484, 0.0
        %v2731 = vmax.f32 %v2487, 0.0
        %v2732 = vmax.f32 %v2492, 0.0
        %v2733 = vmax.f32 %v2495, 0.0
        %v2734 = vmax.f32 %v2500, 0.0
        %v2735 = vmax.f32 %v2503, 0.0
        %v2736 = vmax.f32 %v2508, 0.0
        %v2737 = vmax.f32 %v2511, 0.0
        %v2738 = vmax.f32 %v2516, 0.0
        %v2739 = vmax.f32 %v2519, 0.0
        %v2740 = vmax.f32 %v2524, 0.0
        %v2741 = vmax.f32 %v2527, 0.0
        %v2742 = vmax.f32 %v2532, 0.0
        %v2743 = vmax.f32 %v2535, 0.0
        %v2744 = vmax.f32 %v2540, 0.0
        %v2745 = vmax.f32 %v2543, 0.0
        %v2746 = vmax.f32 %v2548, 0.0
        %v2747 = vmax.f32 %v2551, 0.0
        %v2748 = vmax.f32 %v2556, 0.0
        %v2749 = vmax.f32 %v2559, 0.0
        %v2750 = vmax.f32 %v2564, 0.0
        %v2751 = vmax.f32 %v2567, 0.0
        %v2752 = vmax.f32 %v2572, 0.0
        %v2753 = vmax.f32 %v2575, 0.0
        %v2754 = vmax.f32 %v2580, 0.0
        %v2755 = vmax.f32 %v2583, 0.0
        %v2756 = vmax.f32 %v2588, 0.0
        %v2757 = vmax.f32 %v2591, 0.0
        %v2758 = vmax.f32 %v2596, 0.0
        %v2759 = vmax.f32 %v2599, 0.0
        %v2760 = vmax.f32 %v2604, 0.0
        %v2761 = vmax.f32 %v2607, 0.0
        %v2762 = vmax.f32 %v2612, 0.0
        %v2763 = vmax.f32 %v2615, 0.0
        %v2764 = vmax.f32 %v2620, 0.0
        %v2765 = vmax.f32 %v2623, 0.0
        %v2766 = vmax.f32 %v2628, 0.0
        %v2767 = vmax.f32 %v2631, 0.0
        %v2768 = vmax.f32 %v2636, 0.0
        %v2769 = vmax.f32 %v2639, 0.0
        %v2770 = vpack.c.bf16 %v2643, %v2642
        %v2771 = vpack.c.bf16 %v2645, %v2644
        %v2772 = vpack.c.bf16 %v2647, %v2646
        %v2773 = vpack.c.bf16 %v2649, %v2648
        %v2774 = vpack.c.bf16 %v2651, %v2650
        %v2775 = vpack.c.bf16 %v2653, %v2652
        %v2776 = vpack.c.bf16 %v2655, %v2654
        %v2777 = vpack.c.bf16 %v2657, %v2656
        %v2778 = vpack.c.bf16 %v2659, %v2658
        %v2779 = vpack.c.bf16 %v2661, %v2660
        %v2780 = vpack.c.bf16 %v2663, %v2662
        %v2781 = vpack.c.bf16 %v2665, %v2664
        %v2782 = vpack.c.bf16 %v2667, %v2666
        %v2783 = vpack.c.bf16 %v2669, %v2668
        %v2784 = vpack.c.bf16 %v2671, %v2670
        %v2785 = vpack.c.bf16 %v2673, %v2672
        %v2786 = vpack.c.bf16 %v2675, %v2674
        %v2787 = vpack.c.bf16 %v2677, %v2676
        %v2788 = vpack.c.bf16 %v2679, %v2678
        %v2789 = vpack.c.bf16 %v2681, %v2680
        %v2790 = vpack.c.bf16 %v2683, %v2682
        %v2791 = vpack.c.bf16 %v2685, %v2684
        %v2792 = vpack.c.bf16 %v2687, %v2686
        %v2793 = vpack.c.bf16 %v2689, %v2688
        %v2794 = vpack.c.bf16 %v2691, %v2690
        %v2795 = vpack.c.bf16 %v2693, %v2692
        %v2796 = vpack.c.bf16 %v2695, %v2694
        %v2797 = vpack.c.bf16 %v2697, %v2696
        %v2798 = vpack.c.bf16 %v2699, %v2698
        %v2799 = vpack.c.bf16 %v2701, %v2700
        %v2800 = vpack.c.bf16 %v2703, %v2702
        %v2801 = vpack.c.bf16 %v2705, %v2704
        %v2802 = vpack.c.bf16 %v2707, %v2706
        %v2803 = vpack.c.bf16 %v2709, %v2708
        %v2804 = vpack.c.bf16 %v2711, %v2710
        %v2805 = vpack.c.bf16 %v2713, %v2712
        %v2806 = vpack.c.bf16 %v2715, %v2714
        %v2807 = vpack.c.bf16 %v2717, %v2716
        %v2808 = vpack.c.bf16 %v2719, %v2718
        %v2809 = vpack.c.bf16 %v2721, %v2720
        %v2810 = vpack.c.bf16 %v2723, %v2722
        %v2811 = vpack.c.bf16 %v2725, %v2724
        %v2812 = vpack.c.bf16 %v2727, %v2726
        %v2813 = vpack.c.bf16 %v2729, %v2728
        %v2814 = vpack.c.bf16 %v2731, %v2730
        %v2815 = vpack.c.bf16 %v2733, %v2732
        %v2816 = vpack.c.bf16 %v2735, %v2734
        %v2817 = vpack.c.bf16 %v2737, %v2736
        %v2818 = vpack.c.bf16 %v2739, %v2738
        %v2819 = vpack.c.bf16 %v2741, %v2740
        %v2820 = vpack.c.bf16 %v2743, %v2742
        %v2821 = vpack.c.bf16 %v2745, %v2744
        %v2822 = vpack.c.bf16 %v2747, %v2746
        %v2823 = vpack.c.bf16 %v2749, %v2748
        %v2824 = vpack.c.bf16 %v2751, %v2750
        %v2825 = vpack.c.bf16 %v2753, %v2752
        %v2826 = vpack.c.bf16 %v2755, %v2754
        %v2827 = vpack.c.bf16 %v2757, %v2756
        %v2828 = vpack.c.bf16 %v2759, %v2758
        %v2829 = vpack.c.bf16 %v2761, %v2760
        %v2830 = vpack.c.bf16 %v2763, %v2762
        %v2831 = vpack.c.bf16 %v2765, %v2764
        %v2832 = vpack.c.bf16 %v2767, %v2766
        %v2833 = vpack.c.bf16 %v2769, %v2768
        %v2834 = vld [vmem:[%s5] sm:$0xff]
        %v2835 = vld [vmem:[%s5 + $0x8] sm:$0xff]
        %v2836 = vld [vmem:[%s5 + $0x10] sm:$0xff]
        %v2837 = vld [vmem:[%s5 + $0x18] sm:$0xff]
        %v2838 = vld [vmem:[%s5 + $0x20] sm:$0xff]
        %v2839 = vld [vmem:[%s5 + $0x28] sm:$0xff]
        %v2840 = vld [vmem:[%s5 + $0x30] sm:$0xff]
        %v2841 = vld [vmem:[%s5 + $0x38] sm:$0xff]
        %v2842 = vld [vmem:[%s5 + $0x40] sm:$0xff]
        %v2843 = vld [vmem:[%s5 + $0x48] sm:$0xff]
        %v2844 = vld [vmem:[%s5 + $0x50] sm:$0xff]
        %v2845 = vld [vmem:[%s5 + $0x58] sm:$0xff]
        %v2846 = vld [vmem:[%s5 + $0x60] sm:$0xff]
        %v2847 = vld [vmem:[%s5 + $0x68] sm:$0xff]
        %v2848 = vld [vmem:[%s5 + $0x70] sm:$0xff]
        %v2849 = vld [vmem:[%s5 + $0x78] sm:$0xff]
        %v2850 = vld [vmem:[%s5 + $0x80] sm:$0xff]
        %v2851 = vld [vmem:[%s5 + $0x88] sm:$0xff]
        %v2852 = vld [vmem:[%s5 + $0x90] sm:$0xff]
        %v2853 = vld [vmem:[%s5 + $0x98] sm:$0xff]
        %v2854 = vld [vmem:[%s5 + $0xa0] sm:$0xff]
        %v2855 = vld [vmem:[%s5 + $0xa8] sm:$0xff]
        %v2856 = vld [vmem:[%s5 + $0xb0] sm:$0xff]
        %v2857 = vld [vmem:[%s5 + $0xb8] sm:$0xff]
        %v2858 = vld [vmem:[%s5 + $0xc0] sm:$0xff]
        %v2859 = vld [vmem:[%s5 + $0xc8] sm:$0xff]
        %v2860 = vld [vmem:[%s5 + $0xd0] sm:$0xff]
        %v2861 = vld [vmem:[%s5 + $0xd8] sm:$0xff]
        %v2862 = vld [vmem:[%s5 + $0xe0] sm:$0xff]
        %v2863 = vld [vmem:[%s5 + $0xe8] sm:$0xff]
        %v2864 = vld [vmem:[%s5 + $0xf0] sm:$0xff]
        %v2865 = vld [vmem:[%s5 + $0xf8] sm:$0xff]
        %v2866 = vld [vmem:[%s5 + $0x100] sm:$0xff]
        %v2867 = vld [vmem:[%s5 + $0x108] sm:$0xff]
        %v2868 = vld [vmem:[%s5 + $0x110] sm:$0xff]
        %v2869 = vld [vmem:[%s5 + $0x118] sm:$0xff]
        %v2870 = vld [vmem:[%s5 + $0x120] sm:$0xff]
        %v2871 = vld [vmem:[%s5 + $0x128] sm:$0xff]
        %v2872 = vld [vmem:[%s5 + $0x130] sm:$0xff]
        %v2873 = vld [vmem:[%s5 + $0x138] sm:$0xff]
        %v2874 = vld [vmem:[%s5 + $0x140] sm:$0xff]
        %v2875 = vld [vmem:[%s5 + $0x148] sm:$0xff]
        %v2876 = vld [vmem:[%s5 + $0x150] sm:$0xff]
        %v2877 = vld [vmem:[%s5 + $0x158] sm:$0xff]
        %v2878 = vld [vmem:[%s5 + $0x160] sm:$0xff]
        %v2879 = vld [vmem:[%s5 + $0x168] sm:$0xff]
        %v2880 = vld [vmem:[%s5 + $0x170] sm:$0xff]
        %v2881 = vld [vmem:[%s5 + $0x178] sm:$0xff]
        %v2882 = vld [vmem:[%s5 + $0x180] sm:$0xff]
        %v2883 = vld [vmem:[%s5 + $0x188] sm:$0xff]
        %v2884 = vld [vmem:[%s5 + $0x190] sm:$0xff]
        %v2885 = vld [vmem:[%s5 + $0x198] sm:$0xff]
        %v2886 = vld [vmem:[%s5 + $0x1a0] sm:$0xff]
        %v2887 = vld [vmem:[%s5 + $0x1a8] sm:$0xff]
        %v2888 = vld [vmem:[%s5 + $0x1b0] sm:$0xff]
        %v2889 = vld [vmem:[%s5 + $0x1b8] sm:$0xff]
        %v2890 = vld [vmem:[%s5 + $0x1c0] sm:$0xff]
        %v2891 = vld [vmem:[%s5 + $0x1c8] sm:$0xff]
        %v2892 = vld [vmem:[%s5 + $0x1d0] sm:$0xff]
        %v2893 = vld [vmem:[%s5 + $0x1d8] sm:$0xff]
        %v2894 = vld [vmem:[%s5 + $0x1e0] sm:$0xff]
        %v2895 = vld [vmem:[%s5 + $0x1e8] sm:$0xff]
        %v2896 = vld [vmem:[%s5 + $0x1f0] sm:$0xff]
        %v2897 = vld [vmem:[%s5 + $0x1f8] sm:$0xff]
        %v2898 = vld [vmem:[%s6] sm:$0xff]
        %v2900 = vlaneseq
        %v2901 = vshrl.u32 %v2900, 7
        %v2902 = vsub.s32 0, %v2901
        %v2903 = vrot.slane %v2898, %v2902
        %v2904 = vlaneseq
        %v2905 = vshrl.u32 %v2904, 7
        %v2906 = vsub.s32 1, %v2905
        %v2907 = vrot.slane %v2898, %v2906
        %v2908 = vlaneseq
        %v2909 = vshrl.u32 %v2908, 7
        %v2910 = vsub.s32 2, %v2909
        %v2911 = vrot.slane %v2898, %v2910
        %v2912 = vlaneseq
        %v2913 = vshrl.u32 %v2912, 7
        %v2914 = vsub.s32 3, %v2913
        %v2915 = vrot.slane %v2898, %v2914
        %v2916 = vlaneseq
        %v2917 = vshrl.u32 %v2916, 7
        %v2918 = vsub.s32 4, %v2917
        %v2919 = vrot.slane %v2898, %v2918
        %v2920 = vlaneseq
        %v2921 = vshrl.u32 %v2920, 7
        %v2922 = vsub.s32 5, %v2921
        %v2923 = vrot.slane %v2898, %v2922
        %v2924 = vlaneseq
        %v2925 = vshrl.u32 %v2924, 7
        %v2926 = vsub.s32 6, %v2925
        %v2927 = vrot.slane %v2898, %v2926
        %v2928 = vlaneseq
        %v2929 = vshrl.u32 %v2928, 7
        %v2930 = vsub.s32 7, %v2929
        %v2931 = vrot.slane %v2898, %v2930
        %v3004 = vunpack.c.l.b16 %v2834
        %v3005 = vunpack.c.h.b16 %v2834
        %v3006 = vunpack.c.l.b16 %v2835
        %v3007 = vunpack.c.h.b16 %v2835
        %v3008 = vunpack.c.l.b16 %v2836
        %v3009 = vunpack.c.h.b16 %v2836
        %v3010 = vunpack.c.l.b16 %v2837
        %v3011 = vunpack.c.h.b16 %v2837
        %v3012 = vunpack.c.l.b16 %v2838
        %v3013 = vunpack.c.h.b16 %v2838
        %v3014 = vunpack.c.l.b16 %v2839
        %v3015 = vunpack.c.h.b16 %v2839
        %v3016 = vunpack.c.l.b16 %v2840
        %v3017 = vunpack.c.h.b16 %v2840
        %v3018 = vunpack.c.l.b16 %v2841
        %v3019 = vunpack.c.h.b16 %v2841
        %v3020 = vunpack.c.l.b16 %v2842
        %v3021 = vunpack.c.h.b16 %v2842
        %v3022 = vunpack.c.l.b16 %v2843
        %v3023 = vunpack.c.h.b16 %v2843
        %v3024 = vunpack.c.l.b16 %v2844
        %v3025 = vunpack.c.h.b16 %v2844
        %v3026 = vunpack.c.l.b16 %v2845
        %v3027 = vunpack.c.h.b16 %v2845
        %v3028 = vunpack.c.l.b16 %v2846
        %v3029 = vunpack.c.h.b16 %v2846
        %v3030 = vunpack.c.l.b16 %v2847
        %v3031 = vunpack.c.h.b16 %v2847
        %v3032 = vunpack.c.l.b16 %v2848
        %v3033 = vunpack.c.h.b16 %v2848
        %v3034 = vunpack.c.l.b16 %v2849
        %v3035 = vunpack.c.h.b16 %v2849
        %v3036 = vunpack.c.l.b16 %v2850
        %v3037 = vunpack.c.h.b16 %v2850
        %v3038 = vunpack.c.l.b16 %v2851
        %v3039 = vunpack.c.h.b16 %v2851
        %v3040 = vunpack.c.l.b16 %v2852
        %v3041 = vunpack.c.h.b16 %v2852
        %v3042 = vunpack.c.l.b16 %v2853
        %v3043 = vunpack.c.h.b16 %v2853
        %v3044 = vunpack.c.l.b16 %v2854
        %v3045 = vunpack.c.h.b16 %v2854
        %v3046 = vunpack.c.l.b16 %v2855
        %v3047 = vunpack.c.h.b16 %v2855
        %v3048 = vunpack.c.l.b16 %v2856
        %v3049 = vunpack.c.h.b16 %v2856
        %v3050 = vunpack.c.l.b16 %v2857
        %v3051 = vunpack.c.h.b16 %v2857
        %v3052 = vunpack.c.l.b16 %v2858
        %v3053 = vunpack.c.h.b16 %v2858
        %v3054 = vunpack.c.l.b16 %v2859
        %v3055 = vunpack.c.h.b16 %v2859
        %v3056 = vunpack.c.l.b16 %v2860
        %v3057 = vunpack.c.h.b16 %v2860
        %v3058 = vunpack.c.l.b16 %v2861
        %v3059 = vunpack.c.h.b16 %v2861
        %v3060 = vunpack.c.l.b16 %v2862
        %v3061 = vunpack.c.h.b16 %v2862
        %v3062 = vunpack.c.l.b16 %v2863
        %v3063 = vunpack.c.h.b16 %v2863
        %v3064 = vunpack.c.l.b16 %v2864
        %v3065 = vunpack.c.h.b16 %v2864
        %v3066 = vunpack.c.l.b16 %v2865
        %v3067 = vunpack.c.h.b16 %v2865
        %v3068 = vunpack.c.l.b16 %v2866
        %v3069 = vunpack.c.h.b16 %v2866
        %v3070 = vunpack.c.l.b16 %v2867
        %v3071 = vunpack.c.h.b16 %v2867
        %v3072 = vunpack.c.l.b16 %v2868
        %v3073 = vunpack.c.h.b16 %v2868
        %v3074 = vunpack.c.l.b16 %v2869
        %v3075 = vunpack.c.h.b16 %v2869
        %v3076 = vunpack.c.l.b16 %v2870
        %v3077 = vunpack.c.h.b16 %v2870
        %v3078 = vunpack.c.l.b16 %v2871
        %v3079 = vunpack.c.h.b16 %v2871
        %v3080 = vunpack.c.l.b16 %v2872
        %v3081 = vunpack.c.h.b16 %v2872
        %v3082 = vunpack.c.l.b16 %v2873
        %v3083 = vunpack.c.h.b16 %v2873
        %v3084 = vunpack.c.l.b16 %v2874
        %v3085 = vunpack.c.h.b16 %v2874
        %v3086 = vunpack.c.l.b16 %v2875
        %v3087 = vunpack.c.h.b16 %v2875
        %v3088 = vunpack.c.l.b16 %v2876
        %v3089 = vunpack.c.h.b16 %v2876
        %v3090 = vunpack.c.l.b16 %v2877
        %v3091 = vunpack.c.h.b16 %v2877
        %v3092 = vunpack.c.l.b16 %v2878
        %v3093 = vunpack.c.h.b16 %v2878
        %v3094 = vunpack.c.l.b16 %v2879
        %v3095 = vunpack.c.h.b16 %v2879
        %v3096 = vunpack.c.l.b16 %v2880
        %v3097 = vunpack.c.h.b16 %v2880
        %v3098 = vunpack.c.l.b16 %v2881
        %v3099 = vunpack.c.h.b16 %v2881
        %v3100 = vunpack.c.l.b16 %v2882
        %v3101 = vunpack.c.h.b16 %v2882
        %v3102 = vunpack.c.l.b16 %v2883
        %v3103 = vunpack.c.h.b16 %v2883
        %v3104 = vunpack.c.l.b16 %v2884
        %v3105 = vunpack.c.h.b16 %v2884
        %v3106 = vunpack.c.l.b16 %v2885
        %v3107 = vunpack.c.h.b16 %v2885
        %v3108 = vunpack.c.l.b16 %v2886
        %v3109 = vunpack.c.h.b16 %v2886
        %v3110 = vunpack.c.l.b16 %v2887
        %v3111 = vunpack.c.h.b16 %v2887
        %v3112 = vunpack.c.l.b16 %v2888
        %v3113 = vunpack.c.h.b16 %v2888
        %v3114 = vunpack.c.l.b16 %v2889
        %v3115 = vunpack.c.h.b16 %v2889
        %v3116 = vunpack.c.l.b16 %v2890
        %v3117 = vunpack.c.h.b16 %v2890
        %v3118 = vunpack.c.l.b16 %v2891
        %v3119 = vunpack.c.h.b16 %v2891
        %v3120 = vunpack.c.l.b16 %v2892
        %v3121 = vunpack.c.h.b16 %v2892
        %v3122 = vunpack.c.l.b16 %v2893
        %v3123 = vunpack.c.h.b16 %v2893
        %v3124 = vunpack.c.l.b16 %v2894
        %v3125 = vunpack.c.h.b16 %v2894
        %v3126 = vunpack.c.l.b16 %v2895
        %v3127 = vunpack.c.h.b16 %v2895
        %v3128 = vunpack.c.l.b16 %v2896
        %v3129 = vunpack.c.h.b16 %v2896
        %v3130 = vunpack.c.l.b16 %v2897
        %v3131 = vunpack.c.h.b16 %v2897
        %v3132 = vpack.c.b16 %v3012, %v3004
        %v3133 = vpack.c.b16 %v3013, %v3005
        %v3134 = vpack.c.b16 %v3014, %v3006
        %v3135 = vpack.c.b16 %v3015, %v3007
        %v3136 = vpack.c.b16 %v3016, %v3008
        %v3137 = vpack.c.b16 %v3017, %v3009
        %v3138 = vpack.c.b16 %v3018, %v3010
        %v3139 = vpack.c.b16 %v3019, %v3011
        %v3140 = vpack.c.b16 %v3028, %v3020
        %v3141 = vpack.c.b16 %v3029, %v3021
        %v3142 = vpack.c.b16 %v3030, %v3022
        %v3143 = vpack.c.b16 %v3031, %v3023
        %v3144 = vpack.c.b16 %v3032, %v3024
        %v3145 = vpack.c.b16 %v3033, %v3025
        %v3146 = vpack.c.b16 %v3034, %v3026
        %v3147 = vpack.c.b16 %v3035, %v3027
        %v3148 = vpack.c.b16 %v3044, %v3036
        %v3149 = vpack.c.b16 %v3045, %v3037
        %v3150 = vpack.c.b16 %v3046, %v3038
        %v3151 = vpack.c.b16 %v3047, %v3039
        %v3152 = vpack.c.b16 %v3048, %v3040
        %v3153 = vpack.c.b16 %v3049, %v3041
        %v3154 = vpack.c.b16 %v3050, %v3042
        %v3155 = vpack.c.b16 %v3051, %v3043
        %v3156 = vpack.c.b16 %v3060, %v3052
        %v3157 = vpack.c.b16 %v3061, %v3053
        %v3158 = vpack.c.b16 %v3062, %v3054
        %v3159 = vpack.c.b16 %v3063, %v3055
        %v3160 = vpack.c.b16 %v3064, %v3056
        %v3161 = vpack.c.b16 %v3065, %v3057
        %v3162 = vpack.c.b16 %v3066, %v3058
        %v3163 = vpack.c.b16 %v3067, %v3059
        %v3164 = vpack.c.b16 %v3076, %v3068
        %v3165 = vpack.c.b16 %v3077, %v3069
        %v3166 = vpack.c.b16 %v3078, %v3070
        %v3167 = vpack.c.b16 %v3079, %v3071
        %v3168 = vpack.c.b16 %v3080, %v3072
        %v3169 = vpack.c.b16 %v3081, %v3073
        %v3170 = vpack.c.b16 %v3082, %v3074
        %v3171 = vpack.c.b16 %v3083, %v3075
        %v3172 = vpack.c.b16 %v3092, %v3084
        %v3173 = vpack.c.b16 %v3093, %v3085
        %v3174 = vpack.c.b16 %v3094, %v3086
        %v3175 = vpack.c.b16 %v3095, %v3087
        %v3176 = vpack.c.b16 %v3096, %v3088
        %v3177 = vpack.c.b16 %v3097, %v3089
        %v3178 = vpack.c.b16 %v3098, %v3090
        %v3179 = vpack.c.b16 %v3099, %v3091
        %v3180 = vpack.c.b16 %v3108, %v3100
        %v3181 = vpack.c.b16 %v3109, %v3101
        %v3182 = vpack.c.b16 %v3110, %v3102
        %v3183 = vpack.c.b16 %v3111, %v3103
        %v3184 = vpack.c.b16 %v3112, %v3104
        %v3185 = vpack.c.b16 %v3113, %v3105
        %v3186 = vpack.c.b16 %v3114, %v3106
        %v3187 = vpack.c.b16 %v3115, %v3107
        %v3188 = vpack.c.b16 %v3124, %v3116
        %v3189 = vpack.c.b16 %v3125, %v3117
        %v3190 = vpack.c.b16 %v3126, %v3118
        %v3191 = vpack.c.b16 %v3127, %v3119
        %v3192 = vpack.c.b16 %v3128, %v3120
        %v3193 = vpack.c.b16 %v3129, %v3121
        %v3194 = vpack.c.b16 %v3130, %v3122
        %v3195 = vpack.c.b16 %v3131, %v3123
        %3260 = vmatprep.subr.bf16.mxu0 %v3189
        %3261 = vmatpush1.bf16.msra.mxu0 %v3188
        %3262 = vmatprep.subr.bf16.mxu0 %v3181
        %3263 = vmatpush1.bf16.msra.mxu0 %v3180
        %3264 = vmatprep.subr.bf16.mxu0 %v3173
        %3265 = vmatpush1.bf16.msra.mxu0 %v3172
        %3266 = vmatprep.subr.bf16.mxu0 %v3165
        %3267 = vmatpush1.bf16.msra.mxu0 %v3164
        %3268 = vmatprep.subr.bf16.mxu0 %v3157
        %3269 = vmatpush1.bf16.msra.mxu0 %v3156
        %3270 = vmatprep.subr.bf16.mxu0 %v3149
        %3271 = vmatpush1.bf16.msra.mxu0 %v3148
        %3272 = vmatprep.subr.bf16.mxu0 %v3141
        %3273 = vmatpush1.bf16.msra.mxu0 %v3140
        %3274 = vmatprep.subr.bf16.mxu0 %v3133
        %3275 = vmatpush1.bf16.msra.mxu0 %v3132
        %3276 = vmatprep.subr.bf16.mxu0 0
        %3277 = vmatpush2.bf16.msra.mxu0 0
        %3278 = vmatprep.subr.bf16.mxu0 0
        %3279 = vmatpush2.bf16.msra.mxu0 0
        %3280 = vmatprep.subr.bf16.mxu0 0
        %3281 = vmatpush2.bf16.msra.mxu0 0
        %3282 = vmatprep.subr.bf16.mxu0 0
        %3283 = vmatpush2.bf16.msra.mxu0 0
        %3284 = vmatprep.subr.bf16.mxu0 0
        %3285 = vmatpush2.bf16.msra.mxu0 0
        %3286 = vmatprep.subr.bf16.mxu0 0
        %3287 = vmatpush2.bf16.msra.mxu0 0
        %3288 = vmatprep.subr.bf16.mxu0 0
        %3289 = vmatpush2.bf16.msra.mxu0 0
        %3290 = vmatprep.subr.bf16.mxu0 0
        %3291 = vmatpush2.bf16.msra.mxu0 0
        %3292 = vmatprep.mubr.bf16.mxu0 0
        %3293 = vmatmul.mubr.bf16.gmra.mxu0 %v2770
        %v3294 = vpop.f32.mrf.mxu0
        %v3295 = vadd.f32 %v2903, %v3294
        %v3296 = vpop.f32.mrf.mxu0
        %v3297 = vadd.f32 %v2907, %v3296
        %v3298 = vpop.f32.mrf.mxu0
        %v3299 = vadd.f32 %v2903, %v3298
        %v3300 = vpop.f32.mrf.mxu0
        %v3301 = vadd.f32 %v2907, %v3300
        %3302 = vmatprep.mubr.bf16.mxu0 0
        %3303 = vmatmul.mubr.bf16.gmra.mxu0 %v2771
        %v3304 = vpop.f32.mrf.mxu0
        %v3305 = vadd.f32 %v2903, %v3304
        %v3306 = vpop.f32.mrf.mxu0
        %v3307 = vadd.f32 %v2907, %v3306
        %v3308 = vpop.f32.mrf.mxu0
        %v3309 = vadd.f32 %v2903, %v3308
        %v3310 = vpop.f32.mrf.mxu0
        %v3311 = vadd.f32 %v2907, %v3310
        %3312 = vmatprep.mubr.bf16.mxu0 0
        %3313 = vmatmul.mubr.bf16.gmra.mxu0 %v2772
        %v3314 = vpop.f32.mrf.mxu0
        %v3315 = vadd.f32 %v2903, %v3314
        %v3316 = vpop.f32.mrf.mxu0
        %v3317 = vadd.f32 %v2907, %v3316
        %v3318 = vpop.f32.mrf.mxu0
        %v3319 = vadd.f32 %v2903, %v3318
        %v3320 = vpop.f32.mrf.mxu0
        %v3321 = vadd.f32 %v2907, %v3320
        %3322 = vmatprep.mubr.bf16.mxu0 0
        %3323 = vmatmul.mubr.bf16.gmra.mxu0 %v2773
        %v3324 = vpop.f32.mrf.mxu0
        %v3325 = vadd.f32 %v2903, %v3324
        %v3326 = vpop.f32.mrf.mxu0
        %v3327 = vadd.f32 %v2907, %v3326
        %v3328 = vpop.f32.mrf.mxu0
        %v3329 = vadd.f32 %v2903, %v3328
        %v3330 = vpop.f32.mrf.mxu0
        %v3331 = vadd.f32 %v2907, %v3330
        %3332 = vmatprep.mubr.bf16.mxu0 0
        %3333 = vmatmul.mubr.bf16.gmra.mxu0 %v2774
        %v3334 = vpop.f32.mrf.mxu0
        %v3335 = vadd.f32 %v2903, %v3334
        %v3336 = vpop.f32.mrf.mxu0
        %v3337 = vadd.f32 %v2907, %v3336
        %v3338 = vpop.f32.mrf.mxu0
        %v3339 = vadd.f32 %v2903, %v3338
        %v3340 = vpop.f32.mrf.mxu0
        %v3341 = vadd.f32 %v2907, %v3340
        %3342 = vmatprep.mubr.bf16.mxu0 0
        %3343 = vmatmul.mubr.bf16.gmra.mxu0 %v2775
        %v3344 = vpop.f32.mrf.mxu0
        %v3345 = vadd.f32 %v2903, %v3344
        %v3346 = vpop.f32.mrf.mxu0
        %v3347 = vadd.f32 %v2907, %v3346
        %v3348 = vpop.f32.mrf.mxu0
        %v3349 = vadd.f32 %v2903, %v3348
        %v3350 = vpop.f32.mrf.mxu0
        %v3351 = vadd.f32 %v2907, %v3350
        %3352 = vmatprep.mubr.bf16.mxu0 0
        %3353 = vmatmul.mubr.bf16.gmra.mxu0 %v2776
        %v3354 = vpop.f32.mrf.mxu0
        %v3355 = vadd.f32 %v2903, %v3354
        %v3356 = vpop.f32.mrf.mxu0
        %v3357 = vadd.f32 %v2907, %v3356
        %v3358 = vpop.f32.mrf.mxu0
        %v3359 = vadd.f32 %v2903, %v3358
        %v3360 = vpop.f32.mrf.mxu0
        %v3361 = vadd.f32 %v2907, %v3360
        %3362 = vmatprep.mubr.bf16.mxu0 0
        %3363 = vmatmul.mubr.bf16.gmra.mxu0 %v2777
        %v3364 = vpop.f32.mrf.mxu0
        %v3365 = vadd.f32 %v2903, %v3364
        %v3366 = vpop.f32.mrf.mxu0
        %v3367 = vadd.f32 %v2907, %v3366
        %v3368 = vpop.f32.mrf.mxu0
        %v3369 = vadd.f32 %v2903, %v3368
        %v3370 = vpop.f32.mrf.mxu0
        %v3371 = vadd.f32 %v2907, %v3370
        %3372 = vmatprep.mubr.bf16.mxu0 0
        %3373 = vmatmul.mubr.bf16.gmra.mxu0 %v2778
        %v3374 = vpop.f32.mrf.mxu0
        %v3375 = vadd.f32 %v2903, %v3374
        %v3376 = vpop.f32.mrf.mxu0
        %v3377 = vadd.f32 %v2907, %v3376
        %v3378 = vpop.f32.mrf.mxu0
        %v3379 = vadd.f32 %v2903, %v3378
        %v3380 = vpop.f32.mrf.mxu0
        %v3381 = vadd.f32 %v2907, %v3380
        %3382 = vmatprep.mubr.bf16.mxu0 0
        %3383 = vmatmul.mubr.bf16.gmra.mxu0 %v2779
        %v3384 = vpop.f32.mrf.mxu0
        %v3385 = vadd.f32 %v2903, %v3384
        %v3386 = vpop.f32.mrf.mxu0
        %v3387 = vadd.f32 %v2907, %v3386
        %v3388 = vpop.f32.mrf.mxu0
        %v3389 = vadd.f32 %v2903, %v3388
        %v3390 = vpop.f32.mrf.mxu0
        %v3391 = vadd.f32 %v2907, %v3390
        %3392 = vmatprep.mubr.bf16.mxu0 0
        %3393 = vmatmul.mubr.bf16.gmra.mxu0 %v2780
        %v3394 = vpop.f32.mrf.mxu0
        %v3395 = vadd.f32 %v2903, %v3394
        %v3396 = vpop.f32.mrf.mxu0
        %v3397 = vadd.f32 %v2907, %v3396
        %v3398 = vpop.f32.mrf.mxu0
        %v3399 = vadd.f32 %v2903, %v3398
        %v3400 = vpop.f32.mrf.mxu0
        %v3401 = vadd.f32 %v2907, %v3400
        %3402 = vmatprep.mubr.bf16.mxu0 0
        %3403 = vmatmul.mubr.bf16.gmra.mxu0 %v2781
        %v3404 = vpop.f32.mrf.mxu0
        %v3405 = vadd.f32 %v2903, %v3404
        %v3406 = vpop.f32.mrf.mxu0
        %v3407 = vadd.f32 %v2907, %v3406
        %v3408 = vpop.f32.mrf.mxu0
        %v3409 = vadd.f32 %v2903, %v3408
        %v3410 = vpop.f32.mrf.mxu0
        %v3411 = vadd.f32 %v2907, %v3410
        %3412 = vmatprep.mubr.bf16.mxu0 0
        %3413 = vmatmul.mubr.bf16.gmra.mxu0 %v2782
        %v3414 = vpop.f32.mrf.mxu0
        %v3415 = vadd.f32 %v2903, %v3414
        %v3416 = vpop.f32.mrf.mxu0
        %v3417 = vadd.f32 %v2907, %v3416
        %v3418 = vpop.f32.mrf.mxu0
        %v3419 = vadd.f32 %v2903, %v3418
        %v3420 = vpop.f32.mrf.mxu0
        %v3421 = vadd.f32 %v2907, %v3420
        %3422 = vmatprep.mubr.bf16.mxu0 0
        %3423 = vmatmul.mubr.bf16.gmra.mxu0 %v2783
        %v3424 = vpop.f32.mrf.mxu0
        %v3425 = vadd.f32 %v2903, %v3424
        %v3426 = vpop.f32.mrf.mxu0
        %v3427 = vadd.f32 %v2907, %v3426
        %v3428 = vpop.f32.mrf.mxu0
        %v3429 = vadd.f32 %v2903, %v3428
        %v3430 = vpop.f32.mrf.mxu0
        %v3431 = vadd.f32 %v2907, %v3430
        %3432 = vmatprep.mubr.bf16.mxu0 0
        %3433 = vmatmul.mubr.bf16.gmra.mxu0 %v2784
        %v3434 = vpop.f32.mrf.mxu0
        %v3435 = vadd.f32 %v2903, %v3434
        %v3436 = vpop.f32.mrf.mxu0
        %v3437 = vadd.f32 %v2907, %v3436
        %v3438 = vpop.f32.mrf.mxu0
        %v3439 = vadd.f32 %v2903, %v3438
        %v3440 = vpop.f32.mrf.mxu0
        %v3441 = vadd.f32 %v2907, %v3440
        %3442 = vmatprep.mubr.bf16.mxu0 0
        %3443 = vmatmul.mubr.bf16.gmra.mxu0 %v2785
        %v3444 = vpop.f32.mrf.mxu0
        %v3445 = vadd.f32 %v2903, %v3444
        %v3446 = vpop.f32.mrf.mxu0
        %v3447 = vadd.f32 %v2907, %v3446
        %v3448 = vpop.f32.mrf.mxu0
        %v3449 = vadd.f32 %v2903, %v3448
        %v3450 = vpop.f32.mrf.mxu0
        %v3451 = vadd.f32 %v2907, %v3450
        %3452 = vmatprep.mubr.bf16.mxu0 0
        %3453 = vmatmul.mubr.bf16.gmra.mxu0 %v2786
        %v3454 = vpop.f32.mrf.mxu0
        %v3455 = vadd.f32 %v2903, %v3454
        %v3456 = vpop.f32.mrf.mxu0
        %v3457 = vadd.f32 %v2907, %v3456
        %v3458 = vpop.f32.mrf.mxu0
        %v3459 = vadd.f32 %v2903, %v3458
        %v3460 = vpop.f32.mrf.mxu0
        %v3461 = vadd.f32 %v2907, %v3460
        %3462 = vmatprep.mubr.bf16.mxu0 0
        %3463 = vmatmul.mubr.bf16.gmra.mxu0 %v2787
        %v3464 = vpop.f32.mrf.mxu0
        %v3465 = vadd.f32 %v2903, %v3464
        %v3466 = vpop.f32.mrf.mxu0
        %v3467 = vadd.f32 %v2907, %v3466
        %v3468 = vpop.f32.mrf.mxu0
        %v3469 = vadd.f32 %v2903, %v3468
        %v3470 = vpop.f32.mrf.mxu0
        %v3471 = vadd.f32 %v2907, %v3470
        %3472 = vmatprep.mubr.bf16.mxu0 0
        %3473 = vmatmul.mubr.bf16.gmra.mxu0 %v2788
        %v3474 = vpop.f32.mrf.mxu0
        %v3475 = vadd.f32 %v2903, %v3474
        %v3476 = vpop.f32.mrf.mxu0
        %v3477 = vadd.f32 %v2907, %v3476
        %v3478 = vpop.f32.mrf.mxu0
        %v3479 = vadd.f32 %v2903, %v3478
        %v3480 = vpop.f32.mrf.mxu0
        %v3481 = vadd.f32 %v2907, %v3480
        %3482 = vmatprep.mubr.bf16.mxu0 0
        %3483 = vmatmul.mubr.bf16.gmra.mxu0 %v2789
        %v3484 = vpop.f32.mrf.mxu0
        %v3485 = vadd.f32 %v2903, %v3484
        %v3486 = vpop.f32.mrf.mxu0
        %v3487 = vadd.f32 %v2907, %v3486
        %v3488 = vpop.f32.mrf.mxu0
        %v3489 = vadd.f32 %v2903, %v3488
        %v3490 = vpop.f32.mrf.mxu0
        %v3491 = vadd.f32 %v2907, %v3490
        %3492 = vmatprep.mubr.bf16.mxu0 0
        %3493 = vmatmul.mubr.bf16.gmra.mxu0 %v2790
        %v3494 = vpop.f32.mrf.mxu0
        %v3495 = vadd.f32 %v2903, %v3494
        %v3496 = vpop.f32.mrf.mxu0
        %v3497 = vadd.f32 %v2907, %v3496
        %v3498 = vpop.f32.mrf.mxu0
        %v3499 = vadd.f32 %v2903, %v3498
        %v3500 = vpop.f32.mrf.mxu0
        %v3501 = vadd.f32 %v2907, %v3500
        %3502 = vmatprep.mubr.bf16.mxu0 0
        %3503 = vmatmul.mubr.bf16.gmra.mxu0 %v2791
        %v3504 = vpop.f32.mrf.mxu0
        %v3505 = vadd.f32 %v2903, %v3504
        %v3506 = vpop.f32.mrf.mxu0
        %v3507 = vadd.f32 %v2907, %v3506
        %v3508 = vpop.f32.mrf.mxu0
        %v3509 = vadd.f32 %v2903, %v3508
        %v3510 = vpop.f32.mrf.mxu0
        %v3511 = vadd.f32 %v2907, %v3510
        %3512 = vmatprep.mubr.bf16.mxu0 0
        %3513 = vmatmul.mubr.bf16.gmra.mxu0 %v2792
        %v3514 = vpop.f32.mrf.mxu0
        %v3515 = vadd.f32 %v2903, %v3514
        %v3516 = vpop.f32.mrf.mxu0
        %v3517 = vadd.f32 %v2907, %v3516
        %v3518 = vpop.f32.mrf.mxu0
        %v3519 = vadd.f32 %v2903, %v3518
        %v3520 = vpop.f32.mrf.mxu0
        %v3521 = vadd.f32 %v2907, %v3520
        %3522 = vmatprep.mubr.bf16.mxu0 0
        %3523 = vmatmul.mubr.bf16.gmra.mxu0 %v2793
        %v3524 = vpop.f32.mrf.mxu0
        %v3525 = vadd.f32 %v2903, %v3524
        %v3526 = vpop.f32.mrf.mxu0
        %v3527 = vadd.f32 %v2907, %v3526
        %v3528 = vpop.f32.mrf.mxu0
        %v3529 = vadd.f32 %v2903, %v3528
        %v3530 = vpop.f32.mrf.mxu0
        %v3531 = vadd.f32 %v2907, %v3530
        %3532 = vmatprep.mubr.bf16.mxu0 0
        %3533 = vmatmul.mubr.bf16.gmra.mxu0 %v2794
        %v3534 = vpop.f32.mrf.mxu0
        %v3535 = vadd.f32 %v2903, %v3534
        %v3536 = vpop.f32.mrf.mxu0
        %v3537 = vadd.f32 %v2907, %v3536
        %v3538 = vpop.f32.mrf.mxu0
        %v3539 = vadd.f32 %v2903, %v3538
        %v3540 = vpop.f32.mrf.mxu0
        %v3541 = vadd.f32 %v2907, %v3540
        %3542 = vmatprep.mubr.bf16.mxu0 0
        %3543 = vmatmul.mubr.bf16.gmra.mxu0 %v2795
        %v3544 = vpop.f32.mrf.mxu0
        %v3545 = vadd.f32 %v2903, %v3544
        %v3546 = vpop.f32.mrf.mxu0
        %v3547 = vadd.f32 %v2907, %v3546
        %v3548 = vpop.f32.mrf.mxu0
        %v3549 = vadd.f32 %v2903, %v3548
        %v3550 = vpop.f32.mrf.mxu0
        %v3551 = vadd.f32 %v2907, %v3550
        %3552 = vmatprep.mubr.bf16.mxu0 0
        %3553 = vmatmul.mubr.bf16.gmra.mxu0 %v2796
        %v3554 = vpop.f32.mrf.mxu0
        %v3555 = vadd.f32 %v2903, %v3554
        %v3556 = vpop.f32.mrf.mxu0
        %v3557 = vadd.f32 %v2907, %v3556
        %v3558 = vpop.f32.mrf.mxu0
        %v3559 = vadd.f32 %v2903, %v3558
        %v3560 = vpop.f32.mrf.mxu0
        %v3561 = vadd.f32 %v2907, %v3560
        %3562 = vmatprep.mubr.bf16.mxu0 0
        %3563 = vmatmul.mubr.bf16.gmra.mxu0 %v2797
        %v3564 = vpop.f32.mrf.mxu0
        %v3565 = vadd.f32 %v2903, %v3564
        %v3566 = vpop.f32.mrf.mxu0
        %v3567 = vadd.f32 %v2907, %v3566
        %v3568 = vpop.f32.mrf.mxu0
        %v3569 = vadd.f32 %v2903, %v3568
        %v3570 = vpop.f32.mrf.mxu0
        %v3571 = vadd.f32 %v2907, %v3570
        %3572 = vmatprep.mubr.bf16.mxu0 0
        %3573 = vmatmul.mubr.bf16.gmra.mxu0 %v2798
        %v3574 = vpop.f32.mrf.mxu0
        %v3575 = vadd.f32 %v2903, %v3574
        %v3576 = vpop.f32.mrf.mxu0
        %v3577 = vadd.f32 %v2907, %v3576
        %v3578 = vpop.f32.mrf.mxu0
        %v3579 = vadd.f32 %v2903, %v3578
        %v3580 = vpop.f32.mrf.mxu0
        %v3581 = vadd.f32 %v2907, %v3580
        %3582 = vmatprep.mubr.bf16.mxu0 0
        %3583 = vmatmul.mubr.bf16.gmra.mxu0 %v2799
        %v3584 = vpop.f32.mrf.mxu0
        %v3585 = vadd.f32 %v2903, %v3584
        %v3586 = vpop.f32.mrf.mxu0
        %v3587 = vadd.f32 %v2907, %v3586
        %v3588 = vpop.f32.mrf.mxu0
        %v3589 = vadd.f32 %v2903, %v3588
        %v3590 = vpop.f32.mrf.mxu0
        %v3591 = vadd.f32 %v2907, %v3590
        %3592 = vmatprep.mubr.bf16.mxu0 0
        %3593 = vmatmul.mubr.bf16.gmra.mxu0 %v2800
        %v3594 = vpop.f32.mrf.mxu0
        %v3595 = vadd.f32 %v2903, %v3594
        %v3596 = vpop.f32.mrf.mxu0
        %v3597 = vadd.f32 %v2907, %v3596
        %v3598 = vpop.f32.mrf.mxu0
        %v3599 = vadd.f32 %v2903, %v3598
        %v3600 = vpop.f32.mrf.mxu0
        %v3601 = vadd.f32 %v2907, %v3600
        %3602 = vmatprep.mubr.bf16.mxu0 0
        %3603 = vmatmul.mubr.bf16.gmra.mxu0 %v2801
        %v3604 = vpop.f32.mrf.mxu0
        %v3605 = vadd.f32 %v2903, %v3604
        %v3606 = vpop.f32.mrf.mxu0
        %v3607 = vadd.f32 %v2907, %v3606
        %v3608 = vpop.f32.mrf.mxu0
        %v3609 = vadd.f32 %v2903, %v3608
        %v3610 = vpop.f32.mrf.mxu0
        %v3611 = vadd.f32 %v2907, %v3610
        %3612 = vmatprep.mubr.bf16.mxu0 0
        %3613 = vmatmul.mubr.bf16.gmra.mxu0 %v2802
        %v3614 = vpop.f32.mrf.mxu0
        %v3615 = vadd.f32 %v2903, %v3614
        %v3616 = vpop.f32.mrf.mxu0
        %v3617 = vadd.f32 %v2907, %v3616
        %v3618 = vpop.f32.mrf.mxu0
        %v3619 = vadd.f32 %v2903, %v3618
        %v3620 = vpop.f32.mrf.mxu0
        %v3621 = vadd.f32 %v2907, %v3620
        %3622 = vmatprep.mubr.bf16.mxu0 0
        %3623 = vmatmul.mubr.bf16.gmra.mxu0 %v2803
        %v3624 = vpop.f32.mrf.mxu0
        %v3625 = vadd.f32 %v2903, %v3624
        %v3626 = vpop.f32.mrf.mxu0
        %v3627 = vadd.f32 %v2907, %v3626
        %v3628 = vpop.f32.mrf.mxu0
        %v3629 = vadd.f32 %v2903, %v3628
        %v3630 = vpop.f32.mrf.mxu0
        %v3631 = vadd.f32 %v2907, %v3630
        %3632 = vmatprep.mubr.bf16.mxu0 0
        %3633 = vmatmul.mubr.bf16.gmra.mxu0 %v2804
        %v3634 = vpop.f32.mrf.mxu0
        %v3635 = vadd.f32 %v2903, %v3634
        %v3636 = vpop.f32.mrf.mxu0
        %v3637 = vadd.f32 %v2907, %v3636
        %v3638 = vpop.f32.mrf.mxu0
        %v3639 = vadd.f32 %v2903, %v3638
        %v3640 = vpop.f32.mrf.mxu0
        %v3641 = vadd.f32 %v2907, %v3640
        %3642 = vmatprep.mubr.bf16.mxu0 0
        %3643 = vmatmul.mubr.bf16.gmra.mxu0 %v2805
        %v3644 = vpop.f32.mrf.mxu0
        %v3645 = vadd.f32 %v2903, %v3644
        %v3646 = vpop.f32.mrf.mxu0
        %v3647 = vadd.f32 %v2907, %v3646
        %v3648 = vpop.f32.mrf.mxu0
        %v3649 = vadd.f32 %v2903, %v3648
        %v3650 = vpop.f32.mrf.mxu0
        %v3651 = vadd.f32 %v2907, %v3650
        %3652 = vmatprep.mubr.bf16.mxu0 0
        %3653 = vmatmul.mubr.bf16.gmra.mxu0 %v2806
        %v3654 = vpop.f32.mrf.mxu0
        %v3655 = vadd.f32 %v2903, %v3654
        %v3656 = vpop.f32.mrf.mxu0
        %v3657 = vadd.f32 %v2907, %v3656
        %v3658 = vpop.f32.mrf.mxu0
        %v3659 = vadd.f32 %v2903, %v3658
        %v3660 = vpop.f32.mrf.mxu0
        %v3661 = vadd.f32 %v2907, %v3660
        %3662 = vmatprep.mubr.bf16.mxu0 0
        %3663 = vmatmul.mubr.bf16.gmra.mxu0 %v2807
        %v3664 = vpop.f32.mrf.mxu0
        %v3665 = vadd.f32 %v2903, %v3664
        %v3666 = vpop.f32.mrf.mxu0
        %v3667 = vadd.f32 %v2907, %v3666
        %v3668 = vpop.f32.mrf.mxu0
        %v3669 = vadd.f32 %v2903, %v3668
        %v3670 = vpop.f32.mrf.mxu0
        %v3671 = vadd.f32 %v2907, %v3670
        %3672 = vmatprep.mubr.bf16.mxu0 0
        %3673 = vmatmul.mubr.bf16.gmra.mxu0 %v2808
        %v3674 = vpop.f32.mrf.mxu0
        %v3675 = vadd.f32 %v2903, %v3674
        %v3676 = vpop.f32.mrf.mxu0
        %v3677 = vadd.f32 %v2907, %v3676
        %v3678 = vpop.f32.mrf.mxu0
        %v3679 = vadd.f32 %v2903, %v3678
        %v3680 = vpop.f32.mrf.mxu0
        %v3681 = vadd.f32 %v2907, %v3680
        %3682 = vmatprep.mubr.bf16.mxu0 0
        %3683 = vmatmul.mubr.bf16.gmra.mxu0 %v2809
        %v3684 = vpop.f32.mrf.mxu0
        %v3685 = vadd.f32 %v2903, %v3684
        %v3686 = vpop.f32.mrf.mxu0
        %v3687 = vadd.f32 %v2907, %v3686
        %v3688 = vpop.f32.mrf.mxu0
        %v3689 = vadd.f32 %v2903, %v3688
        %v3690 = vpop.f32.mrf.mxu0
        %v3691 = vadd.f32 %v2907, %v3690
        %3692 = vmatprep.mubr.bf16.mxu0 0
        %3693 = vmatmul.mubr.bf16.gmra.mxu0 %v2810
        %v3694 = vpop.f32.mrf.mxu0
        %v3695 = vadd.f32 %v2903, %v3694
        %v3696 = vpop.f32.mrf.mxu0
        %v3697 = vadd.f32 %v2907, %v3696
        %v3698 = vpop.f32.mrf.mxu0
        %v3699 = vadd.f32 %v2903, %v3698
        %v3700 = vpop.f32.mrf.mxu0
        %v3701 = vadd.f32 %v2907, %v3700
        %3702 = vmatprep.mubr.bf16.mxu0 0
        %3703 = vmatmul.mubr.bf16.gmra.mxu0 %v2811
        %v3704 = vpop.f32.mrf.mxu0
        %v3705 = vadd.f32 %v2903, %v3704
        %v3706 = vpop.f32.mrf.mxu0
        %v3707 = vadd.f32 %v2907, %v3706
        %v3708 = vpop.f32.mrf.mxu0
        %v3709 = vadd.f32 %v2903, %v3708
        %v3710 = vpop.f32.mrf.mxu0
        %v3711 = vadd.f32 %v2907, %v3710
        %3712 = vmatprep.mubr.bf16.mxu0 0
        %3713 = vmatmul.mubr.bf16.gmra.mxu0 %v2812
        %v3714 = vpop.f32.mrf.mxu0
        %v3715 = vadd.f32 %v2903, %v3714
        %v3716 = vpop.f32.mrf.mxu0
        %v3717 = vadd.f32 %v2907, %v3716
        %v3718 = vpop.f32.mrf.mxu0
        %v3719 = vadd.f32 %v2903, %v3718
        %v3720 = vpop.f32.mrf.mxu0
        %v3721 = vadd.f32 %v2907, %v3720
        %3722 = vmatprep.mubr.bf16.mxu0 0
        %3723 = vmatmul.mubr.bf16.gmra.mxu0 %v2813
        %v3724 = vpop.f32.mrf.mxu0
        %v3725 = vadd.f32 %v2903, %v3724
        %v3726 = vpop.f32.mrf.mxu0
        %v3727 = vadd.f32 %v2907, %v3726
        %v3728 = vpop.f32.mrf.mxu0
        %v3729 = vadd.f32 %v2903, %v3728
        %v3730 = vpop.f32.mrf.mxu0
        %v3731 = vadd.f32 %v2907, %v3730
        %3732 = vmatprep.mubr.bf16.mxu0 0
        %3733 = vmatmul.mubr.bf16.gmra.mxu0 %v2814
        %v3734 = vpop.f32.mrf.mxu0
        %v3735 = vadd.f32 %v2903, %v3734
        %v3736 = vpop.f32.mrf.mxu0
        %v3737 = vadd.f32 %v2907, %v3736
        %v3738 = vpop.f32.mrf.mxu0
        %v3739 = vadd.f32 %v2903, %v3738
        %v3740 = vpop.f32.mrf.mxu0
        %v3741 = vadd.f32 %v2907, %v3740
        %3742 = vmatprep.mubr.bf16.mxu0 0
        %3743 = vmatmul.mubr.bf16.gmra.mxu0 %v2815
        %v3744 = vpop.f32.mrf.mxu0
        %v3745 = vadd.f32 %v2903, %v3744
        %v3746 = vpop.f32.mrf.mxu0
        %v3747 = vadd.f32 %v2907, %v3746
        %v3748 = vpop.f32.mrf.mxu0
        %v3749 = vadd.f32 %v2903, %v3748
        %v3750 = vpop.f32.mrf.mxu0
        %v3751 = vadd.f32 %v2907, %v3750
        %3752 = vmatprep.mubr.bf16.mxu0 0
        %3753 = vmatmul.mubr.bf16.gmra.mxu0 %v2816
        %v3754 = vpop.f32.mrf.mxu0
        %v3755 = vadd.f32 %v2903, %v3754
        %v3756 = vpop.f32.mrf.mxu0
        %v3757 = vadd.f32 %v2907, %v3756
        %v3758 = vpop.f32.mrf.mxu0
        %v3759 = vadd.f32 %v2903, %v3758
        %v3760 = vpop.f32.mrf.mxu0
        %v3761 = vadd.f32 %v2907, %v3760
        %3762 = vmatprep.mubr.bf16.mxu0 0
        %3763 = vmatmul.mubr.bf16.gmra.mxu0 %v2817
        %v3764 = vpop.f32.mrf.mxu0
        %v3765 = vadd.f32 %v2903, %v3764
        %v3766 = vpop.f32.mrf.mxu0
        %v3767 = vadd.f32 %v2907, %v3766
        %v3768 = vpop.f32.mrf.mxu0
        %v3769 = vadd.f32 %v2903, %v3768
        %v3770 = vpop.f32.mrf.mxu0
        %v3771 = vadd.f32 %v2907, %v3770
        %3772 = vmatprep.mubr.bf16.mxu0 0
        %3773 = vmatmul.mubr.bf16.gmra.mxu0 %v2818
        %v3774 = vpop.f32.mrf.mxu0
        %v3775 = vadd.f32 %v2903, %v3774
        %v3776 = vpop.f32.mrf.mxu0
        %v3777 = vadd.f32 %v2907, %v3776
        %v3778 = vpop.f32.mrf.mxu0
        %v3779 = vadd.f32 %v2903, %v3778
        %v3780 = vpop.f32.mrf.mxu0
        %v3781 = vadd.f32 %v2907, %v3780
        %3782 = vmatprep.mubr.bf16.mxu0 0
        %3783 = vmatmul.mubr.bf16.gmra.mxu0 %v2819
        %v3784 = vpop.f32.mrf.mxu0
        %v3785 = vadd.f32 %v2903, %v3784
        %v3786 = vpop.f32.mrf.mxu0
        %v3787 = vadd.f32 %v2907, %v3786
        %v3788 = vpop.f32.mrf.mxu0
        %v3789 = vadd.f32 %v2903, %v3788
        %v3790 = vpop.f32.mrf.mxu0
        %v3791 = vadd.f32 %v2907, %v3790
        %3792 = vmatprep.mubr.bf16.mxu0 0
        %3793 = vmatmul.mubr.bf16.gmra.mxu0 %v2820
        %v3794 = vpop.f32.mrf.mxu0
        %v3795 = vadd.f32 %v2903, %v3794
        %v3796 = vpop.f32.mrf.mxu0
        %v3797 = vadd.f32 %v2907, %v3796
        %v3798 = vpop.f32.mrf.mxu0
        %v3799 = vadd.f32 %v2903, %v3798
        %v3800 = vpop.f32.mrf.mxu0
        %v3801 = vadd.f32 %v2907, %v3800
        %3802 = vmatprep.mubr.bf16.mxu0 0
        %3803 = vmatmul.mubr.bf16.gmra.mxu0 %v2821
        %v3804 = vpop.f32.mrf.mxu0
        %v3805 = vadd.f32 %v2903, %v3804
        %v3806 = vpop.f32.mrf.mxu0
        %v3807 = vadd.f32 %v2907, %v3806
        %v3808 = vpop.f32.mrf.mxu0
        %v3809 = vadd.f32 %v2903, %v3808
        %v3810 = vpop.f32.mrf.mxu0
        %v3811 = vadd.f32 %v2907, %v3810
        %3812 = vmatprep.mubr.bf16.mxu0 0
        %3813 = vmatmul.mubr.bf16.gmra.mxu0 %v2822
        %v3814 = vpop.f32.mrf.mxu0
        %v3815 = vadd.f32 %v2903, %v3814
        %v3816 = vpop.f32.mrf.mxu0
        %v3817 = vadd.f32 %v2907, %v3816
        %v3818 = vpop.f32.mrf.mxu0
        %v3819 = vadd.f32 %v2903, %v3818
        %v3820 = vpop.f32.mrf.mxu0
        %v3821 = vadd.f32 %v2907, %v3820
        %3822 = vmatprep.mubr.bf16.mxu0 0
        %3823 = vmatmul.mubr.bf16.gmra.mxu0 %v2823
        %v3824 = vpop.f32.mrf.mxu0
        %v3825 = vadd.f32 %v2903, %v3824
        %v3826 = vpop.f32.mrf.mxu0
        %v3827 = vadd.f32 %v2907, %v3826
        %v3828 = vpop.f32.mrf.mxu0
        %v3829 = vadd.f32 %v2903, %v3828
        %v3830 = vpop.f32.mrf.mxu0
        %v3831 = vadd.f32 %v2907, %v3830
        %3832 = vmatprep.mubr.bf16.mxu0 0
        %3833 = vmatmul.mubr.bf16.gmra.mxu0 %v2824
        %v3834 = vpop.f32.mrf.mxu0
        %v3835 = vadd.f32 %v2903, %v3834
        %v3836 = vpop.f32.mrf.mxu0
        %v3837 = vadd.f32 %v2907, %v3836
        %v3838 = vpop.f32.mrf.mxu0
        %v3839 = vadd.f32 %v2903, %v3838
        %v3840 = vpop.f32.mrf.mxu0
        %v3841 = vadd.f32 %v2907, %v3840
        %3842 = vmatprep.mubr.bf16.mxu0 0
        %3843 = vmatmul.mubr.bf16.gmra.mxu0 %v2825
        %v3844 = vpop.f32.mrf.mxu0
        %v3845 = vadd.f32 %v2903, %v3844
        %v3846 = vpop.f32.mrf.mxu0
        %v3847 = vadd.f32 %v2907, %v3846
        %v3848 = vpop.f32.mrf.mxu0
        %v3849 = vadd.f32 %v2903, %v3848
        %v3850 = vpop.f32.mrf.mxu0
        %v3851 = vadd.f32 %v2907, %v3850
        %3852 = vmatprep.mubr.bf16.mxu0 0
        %3853 = vmatmul.mubr.bf16.gmra.mxu0 %v2826
        %v3854 = vpop.f32.mrf.mxu0
        %v3855 = vadd.f32 %v2903, %v3854
        %v3856 = vpop.f32.mrf.mxu0
        %v3857 = vadd.f32 %v2907, %v3856
        %v3858 = vpop.f32.mrf.mxu0
        %v3859 = vadd.f32 %v2903, %v3858
        %v3860 = vpop.f32.mrf.mxu0
        %v3861 = vadd.f32 %v2907, %v3860
        %3862 = vmatprep.mubr.bf16.mxu0 0
        %3863 = vmatmul.mubr.bf16.gmra.mxu0 %v2827
        %v3864 = vpop.f32.mrf.mxu0
        %v3865 = vadd.f32 %v2903, %v3864
        %v3866 = vpop.f32.mrf.mxu0
        %v3867 = vadd.f32 %v2907, %v3866
        %v3868 = vpop.f32.mrf.mxu0
        %v3869 = vadd.f32 %v2903, %v3868
        %v3870 = vpop.f32.mrf.mxu0
        %v3871 = vadd.f32 %v2907, %v3870
        %3872 = vmatprep.mubr.bf16.mxu0 0
        %3873 = vmatmul.mubr.bf16.gmra.mxu0 %v2828
        %v3874 = vpop.f32.mrf.mxu0
        %v3875 = vadd.f32 %v2903, %v3874
        %v3876 = vpop.f32.mrf.mxu0
        %v3877 = vadd.f32 %v2907, %v3876
        %v3878 = vpop.f32.mrf.mxu0
        %v3879 = vadd.f32 %v2903, %v3878
        %v3880 = vpop.f32.mrf.mxu0
        %v3881 = vadd.f32 %v2907, %v3880
        %3882 = vmatprep.mubr.bf16.mxu0 0
        %3883 = vmatmul.mubr.bf16.gmra.mxu0 %v2829
        %v3884 = vpop.f32.mrf.mxu0
        %v3885 = vadd.f32 %v2903, %v3884
        %v3886 = vpop.f32.mrf.mxu0
        %v3887 = vadd.f32 %v2907, %v3886
        %v3888 = vpop.f32.mrf.mxu0
        %v3889 = vadd.f32 %v2903, %v3888
        %v3890 = vpop.f32.mrf.mxu0
        %v3891 = vadd.f32 %v2907, %v3890
        %3892 = vmatprep.mubr.bf16.mxu0 0
        %3893 = vmatmul.mubr.bf16.gmra.mxu0 %v2830
        %v3894 = vpop.f32.mrf.mxu0
        %v3895 = vadd.f32 %v2903, %v3894
        %v3896 = vpop.f32.mrf.mxu0
        %v3897 = vadd.f32 %v2907, %v3896
        %v3898 = vpop.f32.mrf.mxu0
        %v3899 = vadd.f32 %v2903, %v3898
        %v3900 = vpop.f32.mrf.mxu0
        %v3901 = vadd.f32 %v2907, %v3900
        %3902 = vmatprep.mubr.bf16.mxu0 0
        %3903 = vmatmul.mubr.bf16.gmra.mxu0 %v2831
        %v3904 = vpop.f32.mrf.mxu0
        %v3905 = vadd.f32 %v2903, %v3904
        %v3906 = vpop.f32.mrf.mxu0
        %v3907 = vadd.f32 %v2907, %v3906
        %v3908 = vpop.f32.mrf.mxu0
        %v3909 = vadd.f32 %v2903, %v3908
        %v3910 = vpop.f32.mrf.mxu0
        %v3911 = vadd.f32 %v2907, %v3910
        %3912 = vmatprep.mubr.bf16.mxu0 0
        %3913 = vmatmul.mubr.bf16.gmra.mxu0 %v2832
        %v3914 = vpop.f32.mrf.mxu0
        %v3915 = vadd.f32 %v2903, %v3914
        %v3916 = vpop.f32.mrf.mxu0
        %v3917 = vadd.f32 %v2907, %v3916
        %v3918 = vpop.f32.mrf.mxu0
        %v3919 = vadd.f32 %v2903, %v3918
        %v3920 = vpop.f32.mrf.mxu0
        %v3921 = vadd.f32 %v2907, %v3920
        %3922 = vmatprep.mubr.bf16.mxu0 0
        %3923 = vmatmul.mubr.bf16.gmra.mxu0 %v2833
        %v3924 = vpop.f32.mrf.mxu0
        %v3925 = vadd.f32 %v2903, %v3924
        %v3926 = vpop.f32.mrf.mxu0
        %v3927 = vadd.f32 %v2907, %v3926
        %v3928 = vpop.f32.mrf.mxu0
        %v3929 = vadd.f32 %v2903, %v3928
        %v3930 = vpop.f32.mrf.mxu0
        %v3931 = vadd.f32 %v2907, %v3930
        %3932 = vdwg.mxu0
        %3933 = vmatprep.subr.bf16.mxu0 %v3191
        %3934 = vmatpush1.bf16.msra.mxu0 %v3190
        %3935 = vmatprep.subr.bf16.mxu0 %v3183
        %3936 = vmatpush1.bf16.msra.mxu0 %v3182
        %3937 = vmatprep.subr.bf16.mxu0 %v3175
        %3938 = vmatpush1.bf16.msra.mxu0 %v3174
        %3939 = vmatprep.subr.bf16.mxu0 %v3167
        %3940 = vmatpush1.bf16.msra.mxu0 %v3166
        %3941 = vmatprep.subr.bf16.mxu0 %v3159
        %3942 = vmatpush1.bf16.msra.mxu0 %v3158
        %3943 = vmatprep.subr.bf16.mxu0 %v3151
        %3944 = vmatpush1.bf16.msra.mxu0 %v3150
        %3945 = vmatprep.subr.bf16.mxu0 %v3143
        %3946 = vmatpush1.bf16.msra.mxu0 %v3142
        %3947 = vmatprep.subr.bf16.mxu0 %v3135
        %3948 = vmatpush1.bf16.msra.mxu0 %v3134
        %3949 = vmatprep.subr.bf16.mxu0 0
        %3950 = vmatpush2.bf16.msra.mxu0 0
        %3951 = vmatprep.subr.bf16.mxu0 0
        %3952 = vmatpush2.bf16.msra.mxu0 0
        %3953 = vmatprep.subr.bf16.mxu0 0
        %3954 = vmatpush2.bf16.msra.mxu0 0
        %3955 = vmatprep.subr.bf16.mxu0 0
        %3956 = vmatpush2.bf16.msra.mxu0 0
        %3957 = vmatprep.subr.bf16.mxu0 0
        %3958 = vmatpush2.bf16.msra.mxu0 0
        %3959 = vmatprep.subr.bf16.mxu0 0
        %3960 = vmatpush2.bf16.msra.mxu0 0
        %3961 = vmatprep.subr.bf16.mxu0 0
        %3962 = vmatpush2.bf16.msra.mxu0 0
        %3963 = vmatprep.subr.bf16.mxu0 0
        %3964 = vmatpush2.bf16.msra.mxu0 0
        %3965 = vmatprep.mubr.bf16.mxu0 0
        %3966 = vmatmul.mubr.bf16.gmra.mxu0 %v2770
        %v3967 = vpop.f32.mrf.mxu0
        %v3968 = vadd.f32 %v2911, %v3967
        %v3969 = vpop.f32.mrf.mxu0
        %v3970 = vadd.f32 %v2915, %v3969
        %v3971 = vpop.f32.mrf.mxu0
        %v3972 = vadd.f32 %v2911, %v3971
        %v3973 = vpop.f32.mrf.mxu0
        %v3974 = vadd.f32 %v2915, %v3973
        %3975 = vmatprep.mubr.bf16.mxu0 0
        %3976 = vmatmul.mubr.bf16.gmra.mxu0 %v2771
        %v3977 = vpop.f32.mrf.mxu0
        %v3978 = vadd.f32 %v2911, %v3977
        %v3979 = vpop.f32.mrf.mxu0
        %v3980 = vadd.f32 %v2915, %v3979
        %v3981 = vpop.f32.mrf.mxu0
        %v3982 = vadd.f32 %v2911, %v3981
        %v3983 = vpop.f32.mrf.mxu0
        %v3984 = vadd.f32 %v2915, %v3983
        %3985 = vmatprep.mubr.bf16.mxu0 0
        %3986 = vmatmul.mubr.bf16.gmra.mxu0 %v2772
        %v3987 = vpop.f32.mrf.mxu0
        %v3988 = vadd.f32 %v2911, %v3987
        %v3989 = vpop.f32.mrf.mxu0
        %v3990 = vadd.f32 %v2915, %v3989
        %v3991 = vpop.f32.mrf.mxu0
        %v3992 = vadd.f32 %v2911, %v3991
        %v3993 = vpop.f32.mrf.mxu0
        %v3994 = vadd.f32 %v2915, %v3993
        %3995 = vmatprep.mubr.bf16.mxu0 0
        %3996 = vmatmul.mubr.bf16.gmra.mxu0 %v2773
        %v3997 = vpop.f32.mrf.mxu0
        %v3998 = vadd.f32 %v2911, %v3997
        %v3999 = vpop.f32.mrf.mxu0
        %v4000 = vadd.f32 %v2915, %v3999
        %v4001 = vpop.f32.mrf.mxu0
        %v4002 = vadd.f32 %v2911, %v4001
        %v4003 = vpop.f32.mrf.mxu0
        %v4004 = vadd.f32 %v2915, %v4003
        %4005 = vmatprep.mubr.bf16.mxu0 0
        %4006 = vmatmul.mubr.bf16.gmra.mxu0 %v2774
        %v4007 = vpop.f32.mrf.mxu0
        %v4008 = vadd.f32 %v2911, %v4007
        %v4009 = vpop.f32.mrf.mxu0
        %v4010 = vadd.f32 %v2915, %v4009
        %v4011 = vpop.f32.mrf.mxu0
        %v4012 = vadd.f32 %v2911, %v4011
        %v4013 = vpop.f32.mrf.mxu0
        %v4014 = vadd.f32 %v2915, %v4013
        %4015 = vmatprep.mubr.bf16.mxu0 0
        %4016 = vmatmul.mubr.bf16.gmra.mxu0 %v2775
        %v4017 = vpop.f32.mrf.mxu0
        %v4018 = vadd.f32 %v2911, %v4017
        %v4019 = vpop.f32.mrf.mxu0
        %v4020 = vadd.f32 %v2915, %v4019
        %v4021 = vpop.f32.mrf.mxu0
        %v4022 = vadd.f32 %v2911, %v4021
        %v4023 = vpop.f32.mrf.mxu0
        %v4024 = vadd.f32 %v2915, %v4023
        %4025 = vmatprep.mubr.bf16.mxu0 0
        %4026 = vmatmul.mubr.bf16.gmra.mxu0 %v2776
        %v4027 = vpop.f32.mrf.mxu0
        %v4028 = vadd.f32 %v2911, %v4027
        %v4029 = vpop.f32.mrf.mxu0
        %v4030 = vadd.f32 %v2915, %v4029
        %v4031 = vpop.f32.mrf.mxu0
        %v4032 = vadd.f32 %v2911, %v4031
        %v4033 = vpop.f32.mrf.mxu0
        %v4034 = vadd.f32 %v2915, %v4033
        %4035 = vmatprep.mubr.bf16.mxu0 0
        %4036 = vmatmul.mubr.bf16.gmra.mxu0 %v2777
        %v4037 = vpop.f32.mrf.mxu0
        %v4038 = vadd.f32 %v2911, %v4037
        %v4039 = vpop.f32.mrf.mxu0
        %v4040 = vadd.f32 %v2915, %v4039
        %v4041 = vpop.f32.mrf.mxu0
        %v4042 = vadd.f32 %v2911, %v4041
        %v4043 = vpop.f32.mrf.mxu0
        %v4044 = vadd.f32 %v2915, %v4043
        %4045 = vmatprep.mubr.bf16.mxu0 0
        %4046 = vmatmul.mubr.bf16.gmra.mxu0 %v2778
        %v4047 = vpop.f32.mrf.mxu0
        %v4048 = vadd.f32 %v2911, %v4047
        %v4049 = vpop.f32.mrf.mxu0
        %v4050 = vadd.f32 %v2915, %v4049
        %v4051 = vpop.f32.mrf.mxu0
        %v4052 = vadd.f32 %v2911, %v4051
        %v4053 = vpop.f32.mrf.mxu0
        %v4054 = vadd.f32 %v2915, %v4053
        %4055 = vmatprep.mubr.bf16.mxu0 0
        %4056 = vmatmul.mubr.bf16.gmra.mxu0 %v2779
        %v4057 = vpop.f32.mrf.mxu0
        %v4058 = vadd.f32 %v2911, %v4057
        %v4059 = vpop.f32.mrf.mxu0
        %v4060 = vadd.f32 %v2915, %v4059
        %v4061 = vpop.f32.mrf.mxu0
        %v4062 = vadd.f32 %v2911, %v4061
        %v4063 = vpop.f32.mrf.mxu0
        %v4064 = vadd.f32 %v2915, %v4063
        %4065 = vmatprep.mubr.bf16.mxu0 0
        %4066 = vmatmul.mubr.bf16.gmra.mxu0 %v2780
        %v4067 = vpop.f32.mrf.mxu0
        %v4068 = vadd.f32 %v2911, %v4067
        %v4069 = vpop.f32.mrf.mxu0
        %v4070 = vadd.f32 %v2915, %v4069
        %v4071 = vpop.f32.mrf.mxu0
        %v4072 = vadd.f32 %v2911, %v4071
        %v4073 = vpop.f32.mrf.mxu0
        %v4074 = vadd.f32 %v2915, %v4073
        %4075 = vmatprep.mubr.bf16.mxu0 0
        %4076 = vmatmul.mubr.bf16.gmra.mxu0 %v2781
        %v4077 = vpop.f32.mrf.mxu0
        %v4078 = vadd.f32 %v2911, %v4077
        %v4079 = vpop.f32.mrf.mxu0
        %v4080 = vadd.f32 %v2915, %v4079
        %v4081 = vpop.f32.mrf.mxu0
        %v4082 = vadd.f32 %v2911, %v4081
        %v4083 = vpop.f32.mrf.mxu0
        %v4084 = vadd.f32 %v2915, %v4083
        %4085 = vmatprep.mubr.bf16.mxu0 0
        %4086 = vmatmul.mubr.bf16.gmra.mxu0 %v2782
        %v4087 = vpop.f32.mrf.mxu0
        %v4088 = vadd.f32 %v2911, %v4087
        %v4089 = vpop.f32.mrf.mxu0
        %v4090 = vadd.f32 %v2915, %v4089
        %v4091 = vpop.f32.mrf.mxu0
        %v4092 = vadd.f32 %v2911, %v4091
        %v4093 = vpop.f32.mrf.mxu0
        %v4094 = vadd.f32 %v2915, %v4093
        %4095 = vmatprep.mubr.bf16.mxu0 0
        %4096 = vmatmul.mubr.bf16.gmra.mxu0 %v2783
        %v4097 = vpop.f32.mrf.mxu0
        %v4098 = vadd.f32 %v2911, %v4097
        %v4099 = vpop.f32.mrf.mxu0
        %v4100 = vadd.f32 %v2915, %v4099
        %v4101 = vpop.f32.mrf.mxu0
        %v4102 = vadd.f32 %v2911, %v4101
        %v4103 = vpop.f32.mrf.mxu0
        %v4104 = vadd.f32 %v2915, %v4103
        %4105 = vmatprep.mubr.bf16.mxu0 0
        %4106 = vmatmul.mubr.bf16.gmra.mxu0 %v2784
        %v4107 = vpop.f32.mrf.mxu0
        %v4108 = vadd.f32 %v2911, %v4107
        %v4109 = vpop.f32.mrf.mxu0
        %v4110 = vadd.f32 %v2915, %v4109
        %v4111 = vpop.f32.mrf.mxu0
        %v4112 = vadd.f32 %v2911, %v4111
        %v4113 = vpop.f32.mrf.mxu0
        %v4114 = vadd.f32 %v2915, %v4113
        %4115 = vmatprep.mubr.bf16.mxu0 0
        %4116 = vmatmul.mubr.bf16.gmra.mxu0 %v2785
        %v4117 = vpop.f32.mrf.mxu0
        %v4118 = vadd.f32 %v2911, %v4117
        %v4119 = vpop.f32.mrf.mxu0
        %v4120 = vadd.f32 %v2915, %v4119
        %v4121 = vpop.f32.mrf.mxu0
        %v4122 = vadd.f32 %v2911, %v4121
        %v4123 = vpop.f32.mrf.mxu0
        %v4124 = vadd.f32 %v2915, %v4123
        %4125 = vmatprep.mubr.bf16.mxu0 0
        %4126 = vmatmul.mubr.bf16.gmra.mxu0 %v2786
        %v4127 = vpop.f32.mrf.mxu0
        %v4128 = vadd.f32 %v2911, %v4127
        %v4129 = vpop.f32.mrf.mxu0
        %v4130 = vadd.f32 %v2915, %v4129
        %v4131 = vpop.f32.mrf.mxu0
        %v4132 = vadd.f32 %v2911, %v4131
        %v4133 = vpop.f32.mrf.mxu0
        %v4134 = vadd.f32 %v2915, %v4133
        %4135 = vmatprep.mubr.bf16.mxu0 0
        %4136 = vmatmul.mubr.bf16.gmra.mxu0 %v2787
        %v4137 = vpop.f32.mrf.mxu0
        %v4138 = vadd.f32 %v2911, %v4137
        %v4139 = vpop.f32.mrf.mxu0
        %v4140 = vadd.f32 %v2915, %v4139
        %v4141 = vpop.f32.mrf.mxu0
        %v4142 = vadd.f32 %v2911, %v4141
        %v4143 = vpop.f32.mrf.mxu0
        %v4144 = vadd.f32 %v2915, %v4143
        %4145 = vmatprep.mubr.bf16.mxu0 0
        %4146 = vmatmul.mubr.bf16.gmra.mxu0 %v2788
        %v4147 = vpop.f32.mrf.mxu0
        %v4148 = vadd.f32 %v2911, %v4147
        %v4149 = vpop.f32.mrf.mxu0
        %v4150 = vadd.f32 %v2915, %v4149
        %v4151 = vpop.f32.mrf.mxu0
        %v4152 = vadd.f32 %v2911, %v4151
        %v4153 = vpop.f32.mrf.mxu0
        %v4154 = vadd.f32 %v2915, %v4153
        %4155 = vmatprep.mubr.bf16.mxu0 0
        %4156 = vmatmul.mubr.bf16.gmra.mxu0 %v2789
        %v4157 = vpop.f32.mrf.mxu0
        %v4158 = vadd.f32 %v2911, %v4157
        %v4159 = vpop.f32.mrf.mxu0
        %v4160 = vadd.f32 %v2915, %v4159
        %v4161 = vpop.f32.mrf.mxu0
        %v4162 = vadd.f32 %v2911, %v4161
        %v4163 = vpop.f32.mrf.mxu0
        %v4164 = vadd.f32 %v2915, %v4163
        %4165 = vmatprep.mubr.bf16.mxu0 0
        %4166 = vmatmul.mubr.bf16.gmra.mxu0 %v2790
        %v4167 = vpop.f32.mrf.mxu0
        %v4168 = vadd.f32 %v2911, %v4167
        %v4169 = vpop.f32.mrf.mxu0
        %v4170 = vadd.f32 %v2915, %v4169
        %v4171 = vpop.f32.mrf.mxu0
        %v4172 = vadd.f32 %v2911, %v4171
        %v4173 = vpop.f32.mrf.mxu0
        %v4174 = vadd.f32 %v2915, %v4173
        %4175 = vmatprep.mubr.bf16.mxu0 0
        %4176 = vmatmul.mubr.bf16.gmra.mxu0 %v2791
        %v4177 = vpop.f32.mrf.mxu0
        %v4178 = vadd.f32 %v2911, %v4177
        %v4179 = vpop.f32.mrf.mxu0
        %v4180 = vadd.f32 %v2915, %v4179
        %v4181 = vpop.f32.mrf.mxu0
        %v4182 = vadd.f32 %v2911, %v4181
        %v4183 = vpop.f32.mrf.mxu0
        %v4184 = vadd.f32 %v2915, %v4183
        %4185 = vmatprep.mubr.bf16.mxu0 0
        %4186 = vmatmul.mubr.bf16.gmra.mxu0 %v2792
        %v4187 = vpop.f32.mrf.mxu0
        %v4188 = vadd.f32 %v2911, %v4187
        %v4189 = vpop.f32.mrf.mxu0
        %v4190 = vadd.f32 %v2915, %v4189
        %v4191 = vpop.f32.mrf.mxu0
        %v4192 = vadd.f32 %v2911, %v4191
        %v4193 = vpop.f32.mrf.mxu0
        %v4194 = vadd.f32 %v2915, %v4193
        %4195 = vmatprep.mubr.bf16.mxu0 0
        %4196 = vmatmul.mubr.bf16.gmra.mxu0 %v2793
        %v4197 = vpop.f32.mrf.mxu0
        %v4198 = vadd.f32 %v2911, %v4197
        %v4199 = vpop.f32.mrf.mxu0
        %v4200 = vadd.f32 %v2915, %v4199
        %v4201 = vpop.f32.mrf.mxu0
        %v4202 = vadd.f32 %v2911, %v4201
        %v4203 = vpop.f32.mrf.mxu0
        %v4204 = vadd.f32 %v2915, %v4203
        %4205 = vmatprep.mubr.bf16.mxu0 0
        %4206 = vmatmul.mubr.bf16.gmra.mxu0 %v2794
        %v4207 = vpop.f32.mrf.mxu0
        %v4208 = vadd.f32 %v2911, %v4207
        %v4209 = vpop.f32.mrf.mxu0
        %v4210 = vadd.f32 %v2915, %v4209
        %v4211 = vpop.f32.mrf.mxu0
        %v4212 = vadd.f32 %v2911, %v4211
        %v4213 = vpop.f32.mrf.mxu0
        %v4214 = vadd.f32 %v2915, %v4213
        %4215 = vmatprep.mubr.bf16.mxu0 0
        %4216 = vmatmul.mubr.bf16.gmra.mxu0 %v2795
        %v4217 = vpop.f32.mrf.mxu0
        %v4218 = vadd.f32 %v2911, %v4217
        %v4219 = vpop.f32.mrf.mxu0
        %v4220 = vadd.f32 %v2915, %v4219
        %v4221 = vpop.f32.mrf.mxu0
        %v4222 = vadd.f32 %v2911, %v4221
        %v4223 = vpop.f32.mrf.mxu0
        %v4224 = vadd.f32 %v2915, %v4223
        %4225 = vmatprep.mubr.bf16.mxu0 0
        %4226 = vmatmul.mubr.bf16.gmra.mxu0 %v2796
        %v4227 = vpop.f32.mrf.mxu0
        %v4228 = vadd.f32 %v2911, %v4227
        %v4229 = vpop.f32.mrf.mxu0
        %v4230 = vadd.f32 %v2915, %v4229
        %v4231 = vpop.f32.mrf.mxu0
        %v4232 = vadd.f32 %v2911, %v4231
        %v4233 = vpop.f32.mrf.mxu0
        %v4234 = vadd.f32 %v2915, %v4233
        %4235 = vmatprep.mubr.bf16.mxu0 0
        %4236 = vmatmul.mubr.bf16.gmra.mxu0 %v2797
        %v4237 = vpop.f32.mrf.mxu0
        %v4238 = vadd.f32 %v2911, %v4237
        %v4239 = vpop.f32.mrf.mxu0
        %v4240 = vadd.f32 %v2915, %v4239
        %v4241 = vpop.f32.mrf.mxu0
        %v4242 = vadd.f32 %v2911, %v4241
        %v4243 = vpop.f32.mrf.mxu0
        %v4244 = vadd.f32 %v2915, %v4243
        %4245 = vmatprep.mubr.bf16.mxu0 0
        %4246 = vmatmul.mubr.bf16.gmra.mxu0 %v2798
        %v4247 = vpop.f32.mrf.mxu0
        %v4248 = vadd.f32 %v2911, %v4247
        %v4249 = vpop.f32.mrf.mxu0
        %v4250 = vadd.f32 %v2915, %v4249
        %v4251 = vpop.f32.mrf.mxu0
        %v4252 = vadd.f32 %v2911, %v4251
        %v4253 = vpop.f32.mrf.mxu0
        %v4254 = vadd.f32 %v2915, %v4253
        %4255 = vmatprep.mubr.bf16.mxu0 0
        %4256 = vmatmul.mubr.bf16.gmra.mxu0 %v2799
        %v4257 = vpop.f32.mrf.mxu0
        %v4258 = vadd.f32 %v2911, %v4257
        %v4259 = vpop.f32.mrf.mxu0
        %v4260 = vadd.f32 %v2915, %v4259
        %v4261 = vpop.f32.mrf.mxu0
        %v4262 = vadd.f32 %v2911, %v4261
        %v4263 = vpop.f32.mrf.mxu0
        %v4264 = vadd.f32 %v2915, %v4263
        %4265 = vmatprep.mubr.bf16.mxu0 0
        %4266 = vmatmul.mubr.bf16.gmra.mxu0 %v2800
        %v4267 = vpop.f32.mrf.mxu0
        %v4268 = vadd.f32 %v2911, %v4267
        %v4269 = vpop.f32.mrf.mxu0
        %v4270 = vadd.f32 %v2915, %v4269
        %v4271 = vpop.f32.mrf.mxu0
        %v4272 = vadd.f32 %v2911, %v4271
        %v4273 = vpop.f32.mrf.mxu0
        %v4274 = vadd.f32 %v2915, %v4273
        %4275 = vmatprep.mubr.bf16.mxu0 0
        %4276 = vmatmul.mubr.bf16.gmra.mxu0 %v2801
        %v4277 = vpop.f32.mrf.mxu0
        %v4278 = vadd.f32 %v2911, %v4277
        %v4279 = vpop.f32.mrf.mxu0
        %v4280 = vadd.f32 %v2915, %v4279
        %v4281 = vpop.f32.mrf.mxu0
        %v4282 = vadd.f32 %v2911, %v4281
        %v4283 = vpop.f32.mrf.mxu0
        %v4284 = vadd.f32 %v2915, %v4283
        %4285 = vmatprep.mubr.bf16.mxu0 0
        %4286 = vmatmul.mubr.bf16.gmra.mxu0 %v2802
        %v4287 = vpop.f32.mrf.mxu0
        %v4288 = vadd.f32 %v2911, %v4287
        %v4289 = vpop.f32.mrf.mxu0
        %v4290 = vadd.f32 %v2915, %v4289
        %v4291 = vpop.f32.mrf.mxu0
        %v4292 = vadd.f32 %v2911, %v4291
        %v4293 = vpop.f32.mrf.mxu0
        %v4294 = vadd.f32 %v2915, %v4293
        %4295 = vmatprep.mubr.bf16.mxu0 0
        %4296 = vmatmul.mubr.bf16.gmra.mxu0 %v2803
        %v4297 = vpop.f32.mrf.mxu0
        %v4298 = vadd.f32 %v2911, %v4297
        %v4299 = vpop.f32.mrf.mxu0
        %v4300 = vadd.f32 %v2915, %v4299
        %v4301 = vpop.f32.mrf.mxu0
        %v4302 = vadd.f32 %v2911, %v4301
        %v4303 = vpop.f32.mrf.mxu0
        %v4304 = vadd.f32 %v2915, %v4303
        %4305 = vmatprep.mubr.bf16.mxu0 0
        %4306 = vmatmul.mubr.bf16.gmra.mxu0 %v2804
        %v4307 = vpop.f32.mrf.mxu0
        %v4308 = vadd.f32 %v2911, %v4307
        %v4309 = vpop.f32.mrf.mxu0
        %v4310 = vadd.f32 %v2915, %v4309
        %v4311 = vpop.f32.mrf.mxu0
        %v4312 = vadd.f32 %v2911, %v4311
        %v4313 = vpop.f32.mrf.mxu0
        %v4314 = vadd.f32 %v2915, %v4313
        %4315 = vmatprep.mubr.bf16.mxu0 0
        %4316 = vmatmul.mubr.bf16.gmra.mxu0 %v2805
        %v4317 = vpop.f32.mrf.mxu0
        %v4318 = vadd.f32 %v2911, %v4317
        %v4319 = vpop.f32.mrf.mxu0
        %v4320 = vadd.f32 %v2915, %v4319
        %v4321 = vpop.f32.mrf.mxu0
        %v4322 = vadd.f32 %v2911, %v4321
        %v4323 = vpop.f32.mrf.mxu0
        %v4324 = vadd.f32 %v2915, %v4323
        %4325 = vmatprep.mubr.bf16.mxu0 0
        %4326 = vmatmul.mubr.bf16.gmra.mxu0 %v2806
        %v4327 = vpop.f32.mrf.mxu0
        %v4328 = vadd.f32 %v2911, %v4327
        %v4329 = vpop.f32.mrf.mxu0
        %v4330 = vadd.f32 %v2915, %v4329
        %v4331 = vpop.f32.mrf.mxu0
        %v4332 = vadd.f32 %v2911, %v4331
        %v4333 = vpop.f32.mrf.mxu0
        %v4334 = vadd.f32 %v2915, %v4333
        %4335 = vmatprep.mubr.bf16.mxu0 0
        %4336 = vmatmul.mubr.bf16.gmra.mxu0 %v2807
        %v4337 = vpop.f32.mrf.mxu0
        %v4338 = vadd.f32 %v2911, %v4337
        %v4339 = vpop.f32.mrf.mxu0
        %v4340 = vadd.f32 %v2915, %v4339
        %v4341 = vpop.f32.mrf.mxu0
        %v4342 = vadd.f32 %v2911, %v4341
        %v4343 = vpop.f32.mrf.mxu0
        %v4344 = vadd.f32 %v2915, %v4343
        %4345 = vmatprep.mubr.bf16.mxu0 0
        %4346 = vmatmul.mubr.bf16.gmra.mxu0 %v2808
        %v4347 = vpop.f32.mrf.mxu0
        %v4348 = vadd.f32 %v2911, %v4347
        %v4349 = vpop.f32.mrf.mxu0
        %v4350 = vadd.f32 %v2915, %v4349
        %v4351 = vpop.f32.mrf.mxu0
        %v4352 = vadd.f32 %v2911, %v4351
        %v4353 = vpop.f32.mrf.mxu0
        %v4354 = vadd.f32 %v2915, %v4353
        %4355 = vmatprep.mubr.bf16.mxu0 0
        %4356 = vmatmul.mubr.bf16.gmra.mxu0 %v2809
        %v4357 = vpop.f32.mrf.mxu0
        %v4358 = vadd.f32 %v2911, %v4357
        %v4359 = vpop.f32.mrf.mxu0
        %v4360 = vadd.f32 %v2915, %v4359
        %v4361 = vpop.f32.mrf.mxu0
        %v4362 = vadd.f32 %v2911, %v4361
        %v4363 = vpop.f32.mrf.mxu0
        %v4364 = vadd.f32 %v2915, %v4363
        %4365 = vmatprep.mubr.bf16.mxu0 0
        %4366 = vmatmul.mubr.bf16.gmra.mxu0 %v2810
        %v4367 = vpop.f32.mrf.mxu0
        %v4368 = vadd.f32 %v2911, %v4367
        %v4369 = vpop.f32.mrf.mxu0
        %v4370 = vadd.f32 %v2915, %v4369
        %v4371 = vpop.f32.mrf.mxu0
        %v4372 = vadd.f32 %v2911, %v4371
        %v4373 = vpop.f32.mrf.mxu0
        %v4374 = vadd.f32 %v2915, %v4373
        %4375 = vmatprep.mubr.bf16.mxu0 0
        %4376 = vmatmul.mubr.bf16.gmra.mxu0 %v2811
        %v4377 = vpop.f32.mrf.mxu0
        %v4378 = vadd.f32 %v2911, %v4377
        %v4379 = vpop.f32.mrf.mxu0
        %v4380 = vadd.f32 %v2915, %v4379
        %v4381 = vpop.f32.mrf.mxu0
        %v4382 = vadd.f32 %v2911, %v4381
        %v4383 = vpop.f32.mrf.mxu0
        %v4384 = vadd.f32 %v2915, %v4383
        %4385 = vmatprep.mubr.bf16.mxu0 0
        %4386 = vmatmul.mubr.bf16.gmra.mxu0 %v2812
        %v4387 = vpop.f32.mrf.mxu0
        %v4388 = vadd.f32 %v2911, %v4387
        %v4389 = vpop.f32.mrf.mxu0
        %v4390 = vadd.f32 %v2915, %v4389
        %v4391 = vpop.f32.mrf.mxu0
        %v4392 = vadd.f32 %v2911, %v4391
        %v4393 = vpop.f32.mrf.mxu0
        %v4394 = vadd.f32 %v2915, %v4393
        %4395 = vmatprep.mubr.bf16.mxu0 0
        %4396 = vmatmul.mubr.bf16.gmra.mxu0 %v2813
        %v4397 = vpop.f32.mrf.mxu0
        %v4398 = vadd.f32 %v2911, %v4397
        %v4399 = vpop.f32.mrf.mxu0
        %v4400 = vadd.f32 %v2915, %v4399
        %v4401 = vpop.f32.mrf.mxu0
        %v4402 = vadd.f32 %v2911, %v4401
        %v4403 = vpop.f32.mrf.mxu0
        %v4404 = vadd.f32 %v2915, %v4403
        %4405 = vmatprep.mubr.bf16.mxu0 0
        %4406 = vmatmul.mubr.bf16.gmra.mxu0 %v2814
        %v4407 = vpop.f32.mrf.mxu0
        %v4408 = vadd.f32 %v2911, %v4407
        %v4409 = vpop.f32.mrf.mxu0
        %v4410 = vadd.f32 %v2915, %v4409
        %v4411 = vpop.f32.mrf.mxu0
        %v4412 = vadd.f32 %v2911, %v4411
        %v4413 = vpop.f32.mrf.mxu0
        %v4414 = vadd.f32 %v2915, %v4413
        %4415 = vmatprep.mubr.bf16.mxu0 0
        %4416 = vmatmul.mubr.bf16.gmra.mxu0 %v2815
        %v4417 = vpop.f32.mrf.mxu0
        %v4418 = vadd.f32 %v2911, %v4417
        %v4419 = vpop.f32.mrf.mxu0
        %v4420 = vadd.f32 %v2915, %v4419
        %v4421 = vpop.f32.mrf.mxu0
        %v4422 = vadd.f32 %v2911, %v4421
        %v4423 = vpop.f32.mrf.mxu0
        %v4424 = vadd.f32 %v2915, %v4423
        %4425 = vmatprep.mubr.bf16.mxu0 0
        %4426 = vmatmul.mubr.bf16.gmra.mxu0 %v2816
        %v4427 = vpop.f32.mrf.mxu0
        %v4428 = vadd.f32 %v2911, %v4427
        %v4429 = vpop.f32.mrf.mxu0
        %v4430 = vadd.f32 %v2915, %v4429
        %v4431 = vpop.f32.mrf.mxu0
        %v4432 = vadd.f32 %v2911, %v4431
        %v4433 = vpop.f32.mrf.mxu0
        %v4434 = vadd.f32 %v2915, %v4433
        %4435 = vmatprep.mubr.bf16.mxu0 0
        %4436 = vmatmul.mubr.bf16.gmra.mxu0 %v2817
        %v4437 = vpop.f32.mrf.mxu0
        %v4438 = vadd.f32 %v2911, %v4437
        %v4439 = vpop.f32.mrf.mxu0
        %v4440 = vadd.f32 %v2915, %v4439
        %v4441 = vpop.f32.mrf.mxu0
        %v4442 = vadd.f32 %v2911, %v4441
        %v4443 = vpop.f32.mrf.mxu0
        %v4444 = vadd.f32 %v2915, %v4443
        %4445 = vmatprep.mubr.bf16.mxu0 0
        %4446 = vmatmul.mubr.bf16.gmra.mxu0 %v2818
        %v4447 = vpop.f32.mrf.mxu0
        %v4448 = vadd.f32 %v2911, %v4447
        %v4449 = vpop.f32.mrf.mxu0
        %v4450 = vadd.f32 %v2915, %v4449
        %v4451 = vpop.f32.mrf.mxu0
        %v4452 = vadd.f32 %v2911, %v4451
        %v4453 = vpop.f32.mrf.mxu0
        %v4454 = vadd.f32 %v2915, %v4453
        %4455 = vmatprep.mubr.bf16.mxu0 0
        %4456 = vmatmul.mubr.bf16.gmra.mxu0 %v2819
        %v4457 = vpop.f32.mrf.mxu0
        %v4458 = vadd.f32 %v2911, %v4457
        %v4459 = vpop.f32.mrf.mxu0
        %v4460 = vadd.f32 %v2915, %v4459
        %v4461 = vpop.f32.mrf.mxu0
        %v4462 = vadd.f32 %v2911, %v4461
        %v4463 = vpop.f32.mrf.mxu0
        %v4464 = vadd.f32 %v2915, %v4463
        %4465 = vmatprep.mubr.bf16.mxu0 0
        %4466 = vmatmul.mubr.bf16.gmra.mxu0 %v2820
        %v4467 = vpop.f32.mrf.mxu0
        %v4468 = vadd.f32 %v2911, %v4467
        %v4469 = vpop.f32.mrf.mxu0
        %v4470 = vadd.f32 %v2915, %v4469
        %v4471 = vpop.f32.mrf.mxu0
        %v4472 = vadd.f32 %v2911, %v4471
        %v4473 = vpop.f32.mrf.mxu0
        %v4474 = vadd.f32 %v2915, %v4473
        %4475 = vmatprep.mubr.bf16.mxu0 0
        %4476 = vmatmul.mubr.bf16.gmra.mxu0 %v2821
        %v4477 = vpop.f32.mrf.mxu0
        %v4478 = vadd.f32 %v2911, %v4477
        %v4479 = vpop.f32.mrf.mxu0
        %v4480 = vadd.f32 %v2915, %v4479
        %v4481 = vpop.f32.mrf.mxu0
        %v4482 = vadd.f32 %v2911, %v4481
        %v4483 = vpop.f32.mrf.mxu0
        %v4484 = vadd.f32 %v2915, %v4483
        %4485 = vmatprep.mubr.bf16.mxu0 0
        %4486 = vmatmul.mubr.bf16.gmra.mxu0 %v2822
        %v4487 = vpop.f32.mrf.mxu0
        %v4488 = vadd.f32 %v2911, %v4487
        %v4489 = vpop.f32.mrf.mxu0
        %v4490 = vadd.f32 %v2915, %v4489
        %v4491 = vpop.f32.mrf.mxu0
        %v4492 = vadd.f32 %v2911, %v4491
        %v4493 = vpop.f32.mrf.mxu0
        %v4494 = vadd.f32 %v2915, %v4493
        %4495 = vmatprep.mubr.bf16.mxu0 0
        %4496 = vmatmul.mubr.bf16.gmra.mxu0 %v2823
        %v4497 = vpop.f32.mrf.mxu0
        %v4498 = vadd.f32 %v2911, %v4497
        %v4499 = vpop.f32.mrf.mxu0
        %v4500 = vadd.f32 %v2915, %v4499
        %v4501 = vpop.f32.mrf.mxu0
        %v4502 = vadd.f32 %v2911, %v4501
        %v4503 = vpop.f32.mrf.mxu0
        %v4504 = vadd.f32 %v2915, %v4503
        %4505 = vmatprep.mubr.bf16.mxu0 0
        %4506 = vmatmul.mubr.bf16.gmra.mxu0 %v2824
        %v4507 = vpop.f32.mrf.mxu0
        %v4508 = vadd.f32 %v2911, %v4507
        %v4509 = vpop.f32.mrf.mxu0
        %v4510 = vadd.f32 %v2915, %v4509
        %v4511 = vpop.f32.mrf.mxu0
        %v4512 = vadd.f32 %v2911, %v4511
        %v4513 = vpop.f32.mrf.mxu0
        %v4514 = vadd.f32 %v2915, %v4513
        %4515 = vmatprep.mubr.bf16.mxu0 0
        %4516 = vmatmul.mubr.bf16.gmra.mxu0 %v2825
        %v4517 = vpop.f32.mrf.mxu0
        %v4518 = vadd.f32 %v2911, %v4517
        %v4519 = vpop.f32.mrf.mxu0
        %v4520 = vadd.f32 %v2915, %v4519
        %v4521 = vpop.f32.mrf.mxu0
        %v4522 = vadd.f32 %v2911, %v4521
        %v4523 = vpop.f32.mrf.mxu0
        %v4524 = vadd.f32 %v2915, %v4523
        %4525 = vmatprep.mubr.bf16.mxu0 0
        %4526 = vmatmul.mubr.bf16.gmra.mxu0 %v2826
        %v4527 = vpop.f32.mrf.mxu0
        %v4528 = vadd.f32 %v2911, %v4527
        %v4529 = vpop.f32.mrf.mxu0
        %v4530 = vadd.f32 %v2915, %v4529
        %v4531 = vpop.f32.mrf.mxu0
        %v4532 = vadd.f32 %v2911, %v4531
        %v4533 = vpop.f32.mrf.mxu0
        %v4534 = vadd.f32 %v2915, %v4533
        %4535 = vmatprep.mubr.bf16.mxu0 0
        %4536 = vmatmul.mubr.bf16.gmra.mxu0 %v2827
        %v4537 = vpop.f32.mrf.mxu0
        %v4538 = vadd.f32 %v2911, %v4537
        %v4539 = vpop.f32.mrf.mxu0
        %v4540 = vadd.f32 %v2915, %v4539
        %v4541 = vpop.f32.mrf.mxu0
        %v4542 = vadd.f32 %v2911, %v4541
        %v4543 = vpop.f32.mrf.mxu0
        %v4544 = vadd.f32 %v2915, %v4543
        %4545 = vmatprep.mubr.bf16.mxu0 0
        %4546 = vmatmul.mubr.bf16.gmra.mxu0 %v2828
        %v4547 = vpop.f32.mrf.mxu0
        %v4548 = vadd.f32 %v2911, %v4547
        %v4549 = vpop.f32.mrf.mxu0
        %v4550 = vadd.f32 %v2915, %v4549
        %v4551 = vpop.f32.mrf.mxu0
        %v4552 = vadd.f32 %v2911, %v4551
        %v4553 = vpop.f32.mrf.mxu0
        %v4554 = vadd.f32 %v2915, %v4553
        %4555 = vmatprep.mubr.bf16.mxu0 0
        %4556 = vmatmul.mubr.bf16.gmra.mxu0 %v2829
        %v4557 = vpop.f32.mrf.mxu0
        %v4558 = vadd.f32 %v2911, %v4557
        %v4559 = vpop.f32.mrf.mxu0
        %v4560 = vadd.f32 %v2915, %v4559
        %v4561 = vpop.f32.mrf.mxu0
        %v4562 = vadd.f32 %v2911, %v4561
        %v4563 = vpop.f32.mrf.mxu0
        %v4564 = vadd.f32 %v2915, %v4563
        %4565 = vmatprep.mubr.bf16.mxu0 0
        %4566 = vmatmul.mubr.bf16.gmra.mxu0 %v2830
        %v4567 = vpop.f32.mrf.mxu0
        %v4568 = vadd.f32 %v2911, %v4567
        %v4569 = vpop.f32.mrf.mxu0
        %v4570 = vadd.f32 %v2915, %v4569
        %v4571 = vpop.f32.mrf.mxu0
        %v4572 = vadd.f32 %v2911, %v4571
        %v4573 = vpop.f32.mrf.mxu0
        %v4574 = vadd.f32 %v2915, %v4573
        %4575 = vmatprep.mubr.bf16.mxu0 0
        %4576 = vmatmul.mubr.bf16.gmra.mxu0 %v2831
        %v4577 = vpop.f32.mrf.mxu0
        %v4578 = vadd.f32 %v2911, %v4577
        %v4579 = vpop.f32.mrf.mxu0
        %v4580 = vadd.f32 %v2915, %v4579
        %v4581 = vpop.f32.mrf.mxu0
        %v4582 = vadd.f32 %v2911, %v4581
        %v4583 = vpop.f32.mrf.mxu0
        %v4584 = vadd.f32 %v2915, %v4583
        %4585 = vmatprep.mubr.bf16.mxu0 0
        %4586 = vmatmul.mubr.bf16.gmra.mxu0 %v2832
        %v4587 = vpop.f32.mrf.mxu0
        %v4588 = vadd.f32 %v2911, %v4587
        %v4589 = vpop.f32.mrf.mxu0
        %v4590 = vadd.f32 %v2915, %v4589
        %v4591 = vpop.f32.mrf.mxu0
        %v4592 = vadd.f32 %v2911, %v4591
        %v4593 = vpop.f32.mrf.mxu0
        %v4594 = vadd.f32 %v2915, %v4593
        %4595 = vmatprep.mubr.bf16.mxu0 0
        %4596 = vmatmul.mubr.bf16.gmra.mxu0 %v2833
        %v4597 = vpop.f32.mrf.mxu0
        %v4598 = vadd.f32 %v2911, %v4597
        %v4599 = vpop.f32.mrf.mxu0
        %v4600 = vadd.f32 %v2915, %v4599
        %v4601 = vpop.f32.mrf.mxu0
        %v4602 = vadd.f32 %v2911, %v4601
        %v4603 = vpop.f32.mrf.mxu0
        %v4604 = vadd.f32 %v2915, %v4603
        %4605 = vdwg.mxu0
        %4606 = vmatprep.subr.bf16.mxu0 %v3193
        %4607 = vmatpush1.bf16.msra.mxu0 %v3192
        %4608 = vmatprep.subr.bf16.mxu0 %v3185
        %4609 = vmatpush1.bf16.msra.mxu0 %v3184
        %4610 = vmatprep.subr.bf16.mxu0 %v3177
        %4611 = vmatpush1.bf16.msra.mxu0 %v3176
        %4612 = vmatprep.subr.bf16.mxu0 %v3169
        %4613 = vmatpush1.bf16.msra.mxu0 %v3168
        %4614 = vmatprep.subr.bf16.mxu0 %v3161
        %4615 = vmatpush1.bf16.msra.mxu0 %v3160
        %4616 = vmatprep.subr.bf16.mxu0 %v3153
        %4617 = vmatpush1.bf16.msra.mxu0 %v3152
        %4618 = vmatprep.subr.bf16.mxu0 %v3145
        %4619 = vmatpush1.bf16.msra.mxu0 %v3144
        %4620 = vmatprep.subr.bf16.mxu0 %v3137
        %4621 = vmatpush1.bf16.msra.mxu0 %v3136
        %4622 = vmatprep.subr.bf16.mxu0 0
        %4623 = vmatpush2.bf16.msra.mxu0 0
        %4624 = vmatprep.subr.bf16.mxu0 0
        %4625 = vmatpush2.bf16.msra.mxu0 0
        %4626 = vmatprep.subr.bf16.mxu0 0
        %4627 = vmatpush2.bf16.msra.mxu0 0
        %4628 = vmatprep.subr.bf16.mxu0 0
        %4629 = vmatpush2.bf16.msra.mxu0 0
        %4630 = vmatprep.subr.bf16.mxu0 0
        %4631 = vmatpush2.bf16.msra.mxu0 0
        %4632 = vmatprep.subr.bf16.mxu0 0
        %4633 = vmatpush2.bf16.msra.mxu0 0
        %4634 = vmatprep.subr.bf16.mxu0 0
        %4635 = vmatpush2.bf16.msra.mxu0 0
        %4636 = vmatprep.subr.bf16.mxu0 0
        %4637 = vmatpush2.bf16.msra.mxu0 0
        %4638 = vmatprep.mubr.bf16.mxu0 0
        %4639 = vmatmul.mubr.bf16.gmra.mxu0 %v2770
        %v4640 = vpop.f32.mrf.mxu0
        %v4641 = vadd.f32 %v2919, %v4640
        %v4642 = vpop.f32.mrf.mxu0
        %v4643 = vadd.f32 %v2923, %v4642
        %v4644 = vpop.f32.mrf.mxu0
        %v4645 = vadd.f32 %v2919, %v4644
        %v4646 = vpop.f32.mrf.mxu0
        %v4647 = vadd.f32 %v2923, %v4646
        %4648 = vmatprep.mubr.bf16.mxu0 0
        %4649 = vmatmul.mubr.bf16.gmra.mxu0 %v2771
        %v4650 = vpop.f32.mrf.mxu0
        %v4651 = vadd.f32 %v2919, %v4650
        %v4652 = vpop.f32.mrf.mxu0
        %v4653 = vadd.f32 %v2923, %v4652
        %v4654 = vpop.f32.mrf.mxu0
        %v4655 = vadd.f32 %v2919, %v4654
        %v4656 = vpop.f32.mrf.mxu0
        %v4657 = vadd.f32 %v2923, %v4656
        %4658 = vmatprep.mubr.bf16.mxu0 0
        %4659 = vmatmul.mubr.bf16.gmra.mxu0 %v2772
        %v4660 = vpop.f32.mrf.mxu0
        %v4661 = vadd.f32 %v2919, %v4660
        %v4662 = vpop.f32.mrf.mxu0
        %v4663 = vadd.f32 %v2923, %v4662
        %v4664 = vpop.f32.mrf.mxu0
        %v4665 = vadd.f32 %v2919, %v4664
        %v4666 = vpop.f32.mrf.mxu0
        %v4667 = vadd.f32 %v2923, %v4666
        %4668 = vmatprep.mubr.bf16.mxu0 0
        %4669 = vmatmul.mubr.bf16.gmra.mxu0 %v2773
        %v4670 = vpop.f32.mrf.mxu0
        %v4671 = vadd.f32 %v2919, %v4670
        %v4672 = vpop.f32.mrf.mxu0
        %v4673 = vadd.f32 %v2923, %v4672
        %v4674 = vpop.f32.mrf.mxu0
        %v4675 = vadd.f32 %v2919, %v4674
        %v4676 = vpop.f32.mrf.mxu0
        %v4677 = vadd.f32 %v2923, %v4676
        %4678 = vmatprep.mubr.bf16.mxu0 0
        %4679 = vmatmul.mubr.bf16.gmra.mxu0 %v2774
        %v4680 = vpop.f32.mrf.mxu0
        %v4681 = vadd.f32 %v2919, %v4680
        %v4682 = vpop.f32.mrf.mxu0
        %v4683 = vadd.f32 %v2923, %v4682
        %v4684 = vpop.f32.mrf.mxu0
        %v4685 = vadd.f32 %v2919, %v4684
        %v4686 = vpop.f32.mrf.mxu0
        %v4687 = vadd.f32 %v2923, %v4686
        %4688 = vmatprep.mubr.bf16.mxu0 0
        %4689 = vmatmul.mubr.bf16.gmra.mxu0 %v2775
        %v4690 = vpop.f32.mrf.mxu0
        %v4691 = vadd.f32 %v2919, %v4690
        %v4692 = vpop.f32.mrf.mxu0
        %v4693 = vadd.f32 %v2923, %v4692
        %v4694 = vpop.f32.mrf.mxu0
        %v4695 = vadd.f32 %v2919, %v4694
        %v4696 = vpop.f32.mrf.mxu0
        %v4697 = vadd.f32 %v2923, %v4696
        %4698 = vmatprep.mubr.bf16.mxu0 0
        %4699 = vmatmul.mubr.bf16.gmra.mxu0 %v2776
        %v4700 = vpop.f32.mrf.mxu0
        %v4701 = vadd.f32 %v2919, %v4700
        %v4702 = vpop.f32.mrf.mxu0
        %v4703 = vadd.f32 %v2923, %v4702
        %v4704 = vpop.f32.mrf.mxu0
        %v4705 = vadd.f32 %v2919, %v4704
        %v4706 = vpop.f32.mrf.mxu0
        %v4707 = vadd.f32 %v2923, %v4706
        %4708 = vmatprep.mubr.bf16.mxu0 0
        %4709 = vmatmul.mubr.bf16.gmra.mxu0 %v2777
        %v4710 = vpop.f32.mrf.mxu0
        %v4711 = vadd.f32 %v2919, %v4710
        %v4712 = vpop.f32.mrf.mxu0
        %v4713 = vadd.f32 %v2923, %v4712
        %v4714 = vpop.f32.mrf.mxu0
        %v4715 = vadd.f32 %v2919, %v4714
        %v4716 = vpop.f32.mrf.mxu0
        %v4717 = vadd.f32 %v2923, %v4716
        %4718 = vmatprep.mubr.bf16.mxu0 0
        %4719 = vmatmul.mubr.bf16.gmra.mxu0 %v2778
        %v4720 = vpop.f32.mrf.mxu0
        %v4721 = vadd.f32 %v2919, %v4720
        %v4722 = vpop.f32.mrf.mxu0
        %v4723 = vadd.f32 %v2923, %v4722
        %v4724 = vpop.f32.mrf.mxu0
        %v4725 = vadd.f32 %v2919, %v4724
        %v4726 = vpop.f32.mrf.mxu0
        %v4727 = vadd.f32 %v2923, %v4726
        %4728 = vmatprep.mubr.bf16.mxu0 0
        %4729 = vmatmul.mubr.bf16.gmra.mxu0 %v2779
        %v4730 = vpop.f32.mrf.mxu0
        %v4731 = vadd.f32 %v2919, %v4730
        %v4732 = vpop.f32.mrf.mxu0
        %v4733 = vadd.f32 %v2923, %v4732
        %v4734 = vpop.f32.mrf.mxu0
        %v4735 = vadd.f32 %v2919, %v4734
        %v4736 = vpop.f32.mrf.mxu0
        %v4737 = vadd.f32 %v2923, %v4736
        %4738 = vmatprep.mubr.bf16.mxu0 0
        %4739 = vmatmul.mubr.bf16.gmra.mxu0 %v2780
        %v4740 = vpop.f32.mrf.mxu0
        %v4741 = vadd.f32 %v2919, %v4740
        %v4742 = vpop.f32.mrf.mxu0
        %v4743 = vadd.f32 %v2923, %v4742
        %v4744 = vpop.f32.mrf.mxu0
        %v4745 = vadd.f32 %v2919, %v4744
        %v4746 = vpop.f32.mrf.mxu0
        %v4747 = vadd.f32 %v2923, %v4746
        %4748 = vmatprep.mubr.bf16.mxu0 0
        %4749 = vmatmul.mubr.bf16.gmra.mxu0 %v2781
        %v4750 = vpop.f32.mrf.mxu0
        %v4751 = vadd.f32 %v2919, %v4750
        %v4752 = vpop.f32.mrf.mxu0
        %v4753 = vadd.f32 %v2923, %v4752
        %v4754 = vpop.f32.mrf.mxu0
        %v4755 = vadd.f32 %v2919, %v4754
        %v4756 = vpop.f32.mrf.mxu0
        %v4757 = vadd.f32 %v2923, %v4756
        %4758 = vmatprep.mubr.bf16.mxu0 0
        %4759 = vmatmul.mubr.bf16.gmra.mxu0 %v2782
        %v4760 = vpop.f32.mrf.mxu0
        %v4761 = vadd.f32 %v2919, %v4760
        %v4762 = vpop.f32.mrf.mxu0
        %v4763 = vadd.f32 %v2923, %v4762
        %v4764 = vpop.f32.mrf.mxu0
        %v4765 = vadd.f32 %v2919, %v4764
        %v4766 = vpop.f32.mrf.mxu0
        %v4767 = vadd.f32 %v2923, %v4766
        %4768 = vmatprep.mubr.bf16.mxu0 0
        %4769 = vmatmul.mubr.bf16.gmra.mxu0 %v2783
        %v4770 = vpop.f32.mrf.mxu0
        %v4771 = vadd.f32 %v2919, %v4770
        %v4772 = vpop.f32.mrf.mxu0
        %v4773 = vadd.f32 %v2923, %v4772
        %v4774 = vpop.f32.mrf.mxu0
        %v4775 = vadd.f32 %v2919, %v4774
        %v4776 = vpop.f32.mrf.mxu0
        %v4777 = vadd.f32 %v2923, %v4776
        %4778 = vmatprep.mubr.bf16.mxu0 0
        %4779 = vmatmul.mubr.bf16.gmra.mxu0 %v2784
        %v4780 = vpop.f32.mrf.mxu0
        %v4781 = vadd.f32 %v2919, %v4780
        %v4782 = vpop.f32.mrf.mxu0
        %v4783 = vadd.f32 %v2923, %v4782
        %v4784 = vpop.f32.mrf.mxu0
        %v4785 = vadd.f32 %v2919, %v4784
        %v4786 = vpop.f32.mrf.mxu0
        %v4787 = vadd.f32 %v2923, %v4786
        %4788 = vmatprep.mubr.bf16.mxu0 0
        %4789 = vmatmul.mubr.bf16.gmra.mxu0 %v2785
        %v4790 = vpop.f32.mrf.mxu0
        %v4791 = vadd.f32 %v2919, %v4790
        %v4792 = vpop.f32.mrf.mxu0
        %v4793 = vadd.f32 %v2923, %v4792
        %v4794 = vpop.f32.mrf.mxu0
        %v4795 = vadd.f32 %v2919, %v4794
        %v4796 = vpop.f32.mrf.mxu0
        %v4797 = vadd.f32 %v2923, %v4796
        %4798 = vmatprep.mubr.bf16.mxu0 0
        %4799 = vmatmul.mubr.bf16.gmra.mxu0 %v2786
        %v4800 = vpop.f32.mrf.mxu0
        %v4801 = vadd.f32 %v2919, %v4800
        %v4802 = vpop.f32.mrf.mxu0
        %v4803 = vadd.f32 %v2923, %v4802
        %v4804 = vpop.f32.mrf.mxu0
        %v4805 = vadd.f32 %v2919, %v4804
        %v4806 = vpop.f32.mrf.mxu0
        %v4807 = vadd.f32 %v2923, %v4806
        %4808 = vmatprep.mubr.bf16.mxu0 0
        %4809 = vmatmul.mubr.bf16.gmra.mxu0 %v2787
        %v4810 = vpop.f32.mrf.mxu0
        %v4811 = vadd.f32 %v2919, %v4810
        %v4812 = vpop.f32.mrf.mxu0
        %v4813 = vadd.f32 %v2923, %v4812
        %v4814 = vpop.f32.mrf.mxu0
        %v4815 = vadd.f32 %v2919, %v4814
        %v4816 = vpop.f32.mrf.mxu0
        %v4817 = vadd.f32 %v2923, %v4816
        %4818 = vmatprep.mubr.bf16.mxu0 0
        %4819 = vmatmul.mubr.bf16.gmra.mxu0 %v2788
        %v4820 = vpop.f32.mrf.mxu0
        %v4821 = vadd.f32 %v2919, %v4820
        %v4822 = vpop.f32.mrf.mxu0
        %v4823 = vadd.f32 %v2923, %v4822
        %v4824 = vpop.f32.mrf.mxu0
        %v4825 = vadd.f32 %v2919, %v4824
        %v4826 = vpop.f32.mrf.mxu0
        %v4827 = vadd.f32 %v2923, %v4826
        %4828 = vmatprep.mubr.bf16.mxu0 0
        %4829 = vmatmul.mubr.bf16.gmra.mxu0 %v2789
        %v4830 = vpop.f32.mrf.mxu0
        %v4831 = vadd.f32 %v2919, %v4830
        %v4832 = vpop.f32.mrf.mxu0
        %v4833 = vadd.f32 %v2923, %v4832
        %v4834 = vpop.f32.mrf.mxu0
        %v4835 = vadd.f32 %v2919, %v4834
        %v4836 = vpop.f32.mrf.mxu0
        %v4837 = vadd.f32 %v2923, %v4836
        %4838 = vmatprep.mubr.bf16.mxu0 0
        %4839 = vmatmul.mubr.bf16.gmra.mxu0 %v2790
        %v4840 = vpop.f32.mrf.mxu0
        %v4841 = vadd.f32 %v2919, %v4840
        %v4842 = vpop.f32.mrf.mxu0
        %v4843 = vadd.f32 %v2923, %v4842
        %v4844 = vpop.f32.mrf.mxu0
        %v4845 = vadd.f32 %v2919, %v4844
        %v4846 = vpop.f32.mrf.mxu0
        %v4847 = vadd.f32 %v2923, %v4846
        %4848 = vmatprep.mubr.bf16.mxu0 0
        %4849 = vmatmul.mubr.bf16.gmra.mxu0 %v2791
        %v4850 = vpop.f32.mrf.mxu0
        %v4851 = vadd.f32 %v2919, %v4850
        %v4852 = vpop.f32.mrf.mxu0
        %v4853 = vadd.f32 %v2923, %v4852
        %v4854 = vpop.f32.mrf.mxu0
        %v4855 = vadd.f32 %v2919, %v4854
        %v4856 = vpop.f32.mrf.mxu0
        %v4857 = vadd.f32 %v2923, %v4856
        %4858 = vmatprep.mubr.bf16.mxu0 0
        %4859 = vmatmul.mubr.bf16.gmra.mxu0 %v2792
        %v4860 = vpop.f32.mrf.mxu0
        %v4861 = vadd.f32 %v2919, %v4860
        %v4862 = vpop.f32.mrf.mxu0
        %v4863 = vadd.f32 %v2923, %v4862
        %v4864 = vpop.f32.mrf.mxu0
        %v4865 = vadd.f32 %v2919, %v4864
        %v4866 = vpop.f32.mrf.mxu0
        %v4867 = vadd.f32 %v2923, %v4866
        %4868 = vmatprep.mubr.bf16.mxu0 0
        %4869 = vmatmul.mubr.bf16.gmra.mxu0 %v2793
        %v4870 = vpop.f32.mrf.mxu0
        %v4871 = vadd.f32 %v2919, %v4870
        %v4872 = vpop.f32.mrf.mxu0
        %v4873 = vadd.f32 %v2923, %v4872
        %v4874 = vpop.f32.mrf.mxu0
        %v4875 = vadd.f32 %v2919, %v4874
        %v4876 = vpop.f32.mrf.mxu0
        %v4877 = vadd.f32 %v2923, %v4876
        %4878 = vmatprep.mubr.bf16.mxu0 0
        %4879 = vmatmul.mubr.bf16.gmra.mxu0 %v2794
        %v4880 = vpop.f32.mrf.mxu0
        %v4881 = vadd.f32 %v2919, %v4880
        %v4882 = vpop.f32.mrf.mxu0
        %v4883 = vadd.f32 %v2923, %v4882
        %v4884 = vpop.f32.mrf.mxu0
        %v4885 = vadd.f32 %v2919, %v4884
        %v4886 = vpop.f32.mrf.mxu0
        %v4887 = vadd.f32 %v2923, %v4886
        %4888 = vmatprep.mubr.bf16.mxu0 0
        %4889 = vmatmul.mubr.bf16.gmra.mxu0 %v2795
        %v4890 = vpop.f32.mrf.mxu0
        %v4891 = vadd.f32 %v2919, %v4890
        %v4892 = vpop.f32.mrf.mxu0
        %v4893 = vadd.f32 %v2923, %v4892
        %v4894 = vpop.f32.mrf.mxu0
        %v4895 = vadd.f32 %v2919, %v4894
        %v4896 = vpop.f32.mrf.mxu0
        %v4897 = vadd.f32 %v2923, %v4896
        %4898 = vmatprep.mubr.bf16.mxu0 0
        %4899 = vmatmul.mubr.bf16.gmra.mxu0 %v2796
        %v4900 = vpop.f32.mrf.mxu0
        %v4901 = vadd.f32 %v2919, %v4900
        %v4902 = vpop.f32.mrf.mxu0
        %v4903 = vadd.f32 %v2923, %v4902
        %v4904 = vpop.f32.mrf.mxu0
        %v4905 = vadd.f32 %v2919, %v4904
        %v4906 = vpop.f32.mrf.mxu0
        %v4907 = vadd.f32 %v2923, %v4906
        %4908 = vmatprep.mubr.bf16.mxu0 0
        %4909 = vmatmul.mubr.bf16.gmra.mxu0 %v2797
        %v4910 = vpop.f32.mrf.mxu0
        %v4911 = vadd.f32 %v2919, %v4910
        %v4912 = vpop.f32.mrf.mxu0
        %v4913 = vadd.f32 %v2923, %v4912
        %v4914 = vpop.f32.mrf.mxu0
        %v4915 = vadd.f32 %v2919, %v4914
        %v4916 = vpop.f32.mrf.mxu0
        %v4917 = vadd.f32 %v2923, %v4916
        %4918 = vmatprep.mubr.bf16.mxu0 0
        %4919 = vmatmul.mubr.bf16.gmra.mxu0 %v2798
        %v4920 = vpop.f32.mrf.mxu0
        %v4921 = vadd.f32 %v2919, %v4920
        %v4922 = vpop.f32.mrf.mxu0
        %v4923 = vadd.f32 %v2923, %v4922
        %v4924 = vpop.f32.mrf.mxu0
        %v4925 = vadd.f32 %v2919, %v4924
        %v4926 = vpop.f32.mrf.mxu0
        %v4927 = vadd.f32 %v2923, %v4926
        %4928 = vmatprep.mubr.bf16.mxu0 0
        %4929 = vmatmul.mubr.bf16.gmra.mxu0 %v2799
        %v4930 = vpop.f32.mrf.mxu0
        %v4931 = vadd.f32 %v2919, %v4930
        %v4932 = vpop.f32.mrf.mxu0
        %v4933 = vadd.f32 %v2923, %v4932
        %v4934 = vpop.f32.mrf.mxu0
        %v4935 = vadd.f32 %v2919, %v4934
        %v4936 = vpop.f32.mrf.mxu0
        %v4937 = vadd.f32 %v2923, %v4936
        %4938 = vmatprep.mubr.bf16.mxu0 0
        %4939 = vmatmul.mubr.bf16.gmra.mxu0 %v2800
        %v4940 = vpop.f32.mrf.mxu0
        %v4941 = vadd.f32 %v2919, %v4940
        %v4942 = vpop.f32.mrf.mxu0
        %v4943 = vadd.f32 %v2923, %v4942
        %v4944 = vpop.f32.mrf.mxu0
        %v4945 = vadd.f32 %v2919, %v4944
        %v4946 = vpop.f32.mrf.mxu0
        %v4947 = vadd.f32 %v2923, %v4946
        %4948 = vmatprep.mubr.bf16.mxu0 0
        %4949 = vmatmul.mubr.bf16.gmra.mxu0 %v2801
        %v4950 = vpop.f32.mrf.mxu0
        %v4951 = vadd.f32 %v2919, %v4950
        %v4952 = vpop.f32.mrf.mxu0
        %v4953 = vadd.f32 %v2923, %v4952
        %v4954 = vpop.f32.mrf.mxu0
        %v4955 = vadd.f32 %v2919, %v4954
        %v4956 = vpop.f32.mrf.mxu0
        %v4957 = vadd.f32 %v2923, %v4956
        %4958 = vmatprep.mubr.bf16.mxu0 0
        %4959 = vmatmul.mubr.bf16.gmra.mxu0 %v2802
        %v4960 = vpop.f32.mrf.mxu0
        %v4961 = vadd.f32 %v2919, %v4960
        %v4962 = vpop.f32.mrf.mxu0
        %v4963 = vadd.f32 %v2923, %v4962
        %v4964 = vpop.f32.mrf.mxu0
        %v4965 = vadd.f32 %v2919, %v4964
        %v4966 = vpop.f32.mrf.mxu0
        %v4967 = vadd.f32 %v2923, %v4966
        %4968 = vmatprep.mubr.bf16.mxu0 0
        %4969 = vmatmul.mubr.bf16.gmra.mxu0 %v2803
        %v4970 = vpop.f32.mrf.mxu0
        %v4971 = vadd.f32 %v2919, %v4970
        %v4972 = vpop.f32.mrf.mxu0
        %v4973 = vadd.f32 %v2923, %v4972
        %v4974 = vpop.f32.mrf.mxu0
        %v4975 = vadd.f32 %v2919, %v4974
        %v4976 = vpop.f32.mrf.mxu0
        %v4977 = vadd.f32 %v2923, %v4976
        %4978 = vmatprep.mubr.bf16.mxu0 0
        %4979 = vmatmul.mubr.bf16.gmra.mxu0 %v2804
        %v4980 = vpop.f32.mrf.mxu0
        %v4981 = vadd.f32 %v2919, %v4980
        %v4982 = vpop.f32.mrf.mxu0
        %v4983 = vadd.f32 %v2923, %v4982
        %v4984 = vpop.f32.mrf.mxu0
        %v4985 = vadd.f32 %v2919, %v4984
        %v4986 = vpop.f32.mrf.mxu0
        %v4987 = vadd.f32 %v2923, %v4986
        %4988 = vmatprep.mubr.bf16.mxu0 0
        %4989 = vmatmul.mubr.bf16.gmra.mxu0 %v2805
        %v4990 = vpop.f32.mrf.mxu0
        %v4991 = vadd.f32 %v2919, %v4990
        %v4992 = vpop.f32.mrf.mxu0
        %v4993 = vadd.f32 %v2923, %v4992
        %v4994 = vpop.f32.mrf.mxu0
        %v4995 = vadd.f32 %v2919, %v4994
        %v4996 = vpop.f32.mrf.mxu0
        %v4997 = vadd.f32 %v2923, %v4996
        %4998 = vmatprep.mubr.bf16.mxu0 0
        %4999 = vmatmul.mubr.bf16.gmra.mxu0 %v2806
        %v5000 = vpop.f32.mrf.mxu0
        %v5001 = vadd.f32 %v2919, %v5000
        %v5002 = vpop.f32.mrf.mxu0
        %v5003 = vadd.f32 %v2923, %v5002
        %v5004 = vpop.f32.mrf.mxu0
        %v5005 = vadd.f32 %v2919, %v5004
        %v5006 = vpop.f32.mrf.mxu0
        %v5007 = vadd.f32 %v2923, %v5006
        %5008 = vmatprep.mubr.bf16.mxu0 0
        %5009 = vmatmul.mubr.bf16.gmra.mxu0 %v2807
        %v5010 = vpop.f32.mrf.mxu0
        %v5011 = vadd.f32 %v2919, %v5010
        %v5012 = vpop.f32.mrf.mxu0
        %v5013 = vadd.f32 %v2923, %v5012
        %v5014 = vpop.f32.mrf.mxu0
        %v5015 = vadd.f32 %v2919, %v5014
        %v5016 = vpop.f32.mrf.mxu0
        %v5017 = vadd.f32 %v2923, %v5016
        %5018 = vmatprep.mubr.bf16.mxu0 0
        %5019 = vmatmul.mubr.bf16.gmra.mxu0 %v2808
        %v5020 = vpop.f32.mrf.mxu0
        %v5021 = vadd.f32 %v2919, %v5020
        %v5022 = vpop.f32.mrf.mxu0
        %v5023 = vadd.f32 %v2923, %v5022
        %v5024 = vpop.f32.mrf.mxu0
        %v5025 = vadd.f32 %v2919, %v5024
        %v5026 = vpop.f32.mrf.mxu0
        %v5027 = vadd.f32 %v2923, %v5026
        %5028 = vmatprep.mubr.bf16.mxu0 0
        %5029 = vmatmul.mubr.bf16.gmra.mxu0 %v2809
        %v5030 = vpop.f32.mrf.mxu0
        %v5031 = vadd.f32 %v2919, %v5030
        %v5032 = vpop.f32.mrf.mxu0
        %v5033 = vadd.f32 %v2923, %v5032
        %v5034 = vpop.f32.mrf.mxu0
        %v5035 = vadd.f32 %v2919, %v5034
        %v5036 = vpop.f32.mrf.mxu0
        %v5037 = vadd.f32 %v2923, %v5036
        %5038 = vmatprep.mubr.bf16.mxu0 0
        %5039 = vmatmul.mubr.bf16.gmra.mxu0 %v2810
        %v5040 = vpop.f32.mrf.mxu0
        %v5041 = vadd.f32 %v2919, %v5040
        %v5042 = vpop.f32.mrf.mxu0
        %v5043 = vadd.f32 %v2923, %v5042
        %v5044 = vpop.f32.mrf.mxu0
        %v5045 = vadd.f32 %v2919, %v5044
        %v5046 = vpop.f32.mrf.mxu0
        %v5047 = vadd.f32 %v2923, %v5046
        %5048 = vmatprep.mubr.bf16.mxu0 0
        %5049 = vmatmul.mubr.bf16.gmra.mxu0 %v2811
        %v5050 = vpop.f32.mrf.mxu0
        %v5051 = vadd.f32 %v2919, %v5050
        %v5052 = vpop.f32.mrf.mxu0
        %v5053 = vadd.f32 %v2923, %v5052
        %v5054 = vpop.f32.mrf.mxu0
        %v5055 = vadd.f32 %v2919, %v5054
        %v5056 = vpop.f32.mrf.mxu0
        %v5057 = vadd.f32 %v2923, %v5056
        %5058 = vmatprep.mubr.bf16.mxu0 0
        %5059 = vmatmul.mubr.bf16.gmra.mxu0 %v2812
        %v5060 = vpop.f32.mrf.mxu0
        %v5061 = vadd.f32 %v2919, %v5060
        %v5062 = vpop.f32.mrf.mxu0
        %v5063 = vadd.f32 %v2923, %v5062
        %v5064 = vpop.f32.mrf.mxu0
        %v5065 = vadd.f32 %v2919, %v5064
        %v5066 = vpop.f32.mrf.mxu0
        %v5067 = vadd.f32 %v2923, %v5066
        %5068 = vmatprep.mubr.bf16.mxu0 0
        %5069 = vmatmul.mubr.bf16.gmra.mxu0 %v2813
        %v5070 = vpop.f32.mrf.mxu0
        %v5071 = vadd.f32 %v2919, %v5070
        %v5072 = vpop.f32.mrf.mxu0
        %v5073 = vadd.f32 %v2923, %v5072
        %v5074 = vpop.f32.mrf.mxu0
        %v5075 = vadd.f32 %v2919, %v5074
        %v5076 = vpop.f32.mrf.mxu0
        %v5077 = vadd.f32 %v2923, %v5076
        %5078 = vmatprep.mubr.bf16.mxu0 0
        %5079 = vmatmul.mubr.bf16.gmra.mxu0 %v2814
        %v5080 = vpop.f32.mrf.mxu0
        %v5081 = vadd.f32 %v2919, %v5080
        %v5082 = vpop.f32.mrf.mxu0
        %v5083 = vadd.f32 %v2923, %v5082
        %v5084 = vpop.f32.mrf.mxu0
        %v5085 = vadd.f32 %v2919, %v5084
        %v5086 = vpop.f32.mrf.mxu0
        %v5087 = vadd.f32 %v2923, %v5086
        %5088 = vmatprep.mubr.bf16.mxu0 0
        %5089 = vmatmul.mubr.bf16.gmra.mxu0 %v2815
        %v5090 = vpop.f32.mrf.mxu0
        %v5091 = vadd.f32 %v2919, %v5090
        %v5092 = vpop.f32.mrf.mxu0
        %v5093 = vadd.f32 %v2923, %v5092
        %v5094 = vpop.f32.mrf.mxu0
        %v5095 = vadd.f32 %v2919, %v5094
        %v5096 = vpop.f32.mrf.mxu0
        %v5097 = vadd.f32 %v2923, %v5096
        %5098 = vmatprep.mubr.bf16.mxu0 0
        %5099 = vmatmul.mubr.bf16.gmra.mxu0 %v2816
        %v5100 = vpop.f32.mrf.mxu0
        %v5101 = vadd.f32 %v2919, %v5100
        %v5102 = vpop.f32.mrf.mxu0
        %v5103 = vadd.f32 %v2923, %v5102
        %v5104 = vpop.f32.mrf.mxu0
        %v5105 = vadd.f32 %v2919, %v5104
        %v5106 = vpop.f32.mrf.mxu0
        %v5107 = vadd.f32 %v2923, %v5106
        %5108 = vmatprep.mubr.bf16.mxu0 0
        %5109 = vmatmul.mubr.bf16.gmra.mxu0 %v2817
        %v5110 = vpop.f32.mrf.mxu0
        %v5111 = vadd.f32 %v2919, %v5110
        %v5112 = vpop.f32.mrf.mxu0
        %v5113 = vadd.f32 %v2923, %v5112
        %v5114 = vpop.f32.mrf.mxu0
        %v5115 = vadd.f32 %v2919, %v5114
        %v5116 = vpop.f32.mrf.mxu0
        %v5117 = vadd.f32 %v2923, %v5116
        %5118 = vmatprep.mubr.bf16.mxu0 0
        %5119 = vmatmul.mubr.bf16.gmra.mxu0 %v2818
        %v5120 = vpop.f32.mrf.mxu0
        %v5121 = vadd.f32 %v2919, %v5120
        %v5122 = vpop.f32.mrf.mxu0
        %v5123 = vadd.f32 %v2923, %v5122
        %v5124 = vpop.f32.mrf.mxu0
        %v5125 = vadd.f32 %v2919, %v5124
        %v5126 = vpop.f32.mrf.mxu0
        %v5127 = vadd.f32 %v2923, %v5126
        %5128 = vmatprep.mubr.bf16.mxu0 0
        %5129 = vmatmul.mubr.bf16.gmra.mxu0 %v2819
        %v5130 = vpop.f32.mrf.mxu0
        %v5131 = vadd.f32 %v2919, %v5130
        %v5132 = vpop.f32.mrf.mxu0
        %v5133 = vadd.f32 %v2923, %v5132
        %v5134 = vpop.f32.mrf.mxu0
        %v5135 = vadd.f32 %v2919, %v5134
        %v5136 = vpop.f32.mrf.mxu0
        %v5137 = vadd.f32 %v2923, %v5136
        %5138 = vmatprep.mubr.bf16.mxu0 0
        %5139 = vmatmul.mubr.bf16.gmra.mxu0 %v2820
        %v5140 = vpop.f32.mrf.mxu0
        %v5141 = vadd.f32 %v2919, %v5140
        %v5142 = vpop.f32.mrf.mxu0
        %v5143 = vadd.f32 %v2923, %v5142
        %v5144 = vpop.f32.mrf.mxu0
        %v5145 = vadd.f32 %v2919, %v5144
        %v5146 = vpop.f32.mrf.mxu0
        %v5147 = vadd.f32 %v2923, %v5146
        %5148 = vmatprep.mubr.bf16.mxu0 0
        %5149 = vmatmul.mubr.bf16.gmra.mxu0 %v2821
        %v5150 = vpop.f32.mrf.mxu0
        %v5151 = vadd.f32 %v2919, %v5150
        %v5152 = vpop.f32.mrf.mxu0
        %v5153 = vadd.f32 %v2923, %v5152
        %v5154 = vpop.f32.mrf.mxu0
        %v5155 = vadd.f32 %v2919, %v5154
        %v5156 = vpop.f32.mrf.mxu0
        %v5157 = vadd.f32 %v2923, %v5156
        %5158 = vmatprep.mubr.bf16.mxu0 0
        %5159 = vmatmul.mubr.bf16.gmra.mxu0 %v2822
        %v5160 = vpop.f32.mrf.mxu0
        %v5161 = vadd.f32 %v2919, %v5160
        %v5162 = vpop.f32.mrf.mxu0
        %v5163 = vadd.f32 %v2923, %v5162
        %v5164 = vpop.f32.mrf.mxu0
        %v5165 = vadd.f32 %v2919, %v5164
        %v5166 = vpop.f32.mrf.mxu0
        %v5167 = vadd.f32 %v2923, %v5166
        %5168 = vmatprep.mubr.bf16.mxu0 0
        %5169 = vmatmul.mubr.bf16.gmra.mxu0 %v2823
        %v5170 = vpop.f32.mrf.mxu0
        %v5171 = vadd.f32 %v2919, %v5170
        %v5172 = vpop.f32.mrf.mxu0
        %v5173 = vadd.f32 %v2923, %v5172
        %v5174 = vpop.f32.mrf.mxu0
        %v5175 = vadd.f32 %v2919, %v5174
        %v5176 = vpop.f32.mrf.mxu0
        %v5177 = vadd.f32 %v2923, %v5176
        %5178 = vmatprep.mubr.bf16.mxu0 0
        %5179 = vmatmul.mubr.bf16.gmra.mxu0 %v2824
        %v5180 = vpop.f32.mrf.mxu0
        %v5181 = vadd.f32 %v2919, %v5180
        %v5182 = vpop.f32.mrf.mxu0
        %v5183 = vadd.f32 %v2923, %v5182
        %v5184 = vpop.f32.mrf.mxu0
        %v5185 = vadd.f32 %v2919, %v5184
        %v5186 = vpop.f32.mrf.mxu0
        %v5187 = vadd.f32 %v2923, %v5186
        %5188 = vmatprep.mubr.bf16.mxu0 0
        %5189 = vmatmul.mubr.bf16.gmra.mxu0 %v2825
        %v5190 = vpop.f32.mrf.mxu0
        %v5191 = vadd.f32 %v2919, %v5190
        %v5192 = vpop.f32.mrf.mxu0
        %v5193 = vadd.f32 %v2923, %v5192
        %v5194 = vpop.f32.mrf.mxu0
        %v5195 = vadd.f32 %v2919, %v5194
        %v5196 = vpop.f32.mrf.mxu0
        %v5197 = vadd.f32 %v2923, %v5196
        %5198 = vmatprep.mubr.bf16.mxu0 0
        %5199 = vmatmul.mubr.bf16.gmra.mxu0 %v2826
        %v5200 = vpop.f32.mrf.mxu0
        %v5201 = vadd.f32 %v2919, %v5200
        %v5202 = vpop.f32.mrf.mxu0
        %v5203 = vadd.f32 %v2923, %v5202
        %v5204 = vpop.f32.mrf.mxu0
        %v5205 = vadd.f32 %v2919, %v5204
        %v5206 = vpop.f32.mrf.mxu0
        %v5207 = vadd.f32 %v2923, %v5206
        %5208 = vmatprep.mubr.bf16.mxu0 0
        %5209 = vmatmul.mubr.bf16.gmra.mxu0 %v2827
        %v5210 = vpop.f32.mrf.mxu0
        %v5211 = vadd.f32 %v2919, %v5210
        %v5212 = vpop.f32.mrf.mxu0
        %v5213 = vadd.f32 %v2923, %v5212
        %v5214 = vpop.f32.mrf.mxu0
        %v5215 = vadd.f32 %v2919, %v5214
        %v5216 = vpop.f32.mrf.mxu0
        %v5217 = vadd.f32 %v2923, %v5216
        %5218 = vmatprep.mubr.bf16.mxu0 0
        %5219 = vmatmul.mubr.bf16.gmra.mxu0 %v2828
        %v5220 = vpop.f32.mrf.mxu0
        %v5221 = vadd.f32 %v2919, %v5220
        %v5222 = vpop.f32.mrf.mxu0
        %v5223 = vadd.f32 %v2923, %v5222
        %v5224 = vpop.f32.mrf.mxu0
        %v5225 = vadd.f32 %v2919, %v5224
        %v5226 = vpop.f32.mrf.mxu0
        %v5227 = vadd.f32 %v2923, %v5226
        %5228 = vmatprep.mubr.bf16.mxu0 0
        %5229 = vmatmul.mubr.bf16.gmra.mxu0 %v2829
        %v5230 = vpop.f32.mrf.mxu0
        %v5231 = vadd.f32 %v2919, %v5230
        %v5232 = vpop.f32.mrf.mxu0
        %v5233 = vadd.f32 %v2923, %v5232
        %v5234 = vpop.f32.mrf.mxu0
        %v5235 = vadd.f32 %v2919, %v5234
        %v5236 = vpop.f32.mrf.mxu0
        %v5237 = vadd.f32 %v2923, %v5236
        %5238 = vmatprep.mubr.bf16.mxu0 0
        %5239 = vmatmul.mubr.bf16.gmra.mxu0 %v2830
        %v5240 = vpop.f32.mrf.mxu0
        %v5241 = vadd.f32 %v2919, %v5240
        %v5242 = vpop.f32.mrf.mxu0
        %v5243 = vadd.f32 %v2923, %v5242
        %v5244 = vpop.f32.mrf.mxu0
        %v5245 = vadd.f32 %v2919, %v5244
        %v5246 = vpop.f32.mrf.mxu0
        %v5247 = vadd.f32 %v2923, %v5246
        %5248 = vmatprep.mubr.bf16.mxu0 0
        %5249 = vmatmul.mubr.bf16.gmra.mxu0 %v2831
        %v5250 = vpop.f32.mrf.mxu0
        %v5251 = vadd.f32 %v2919, %v5250
        %v5252 = vpop.f32.mrf.mxu0
        %v5253 = vadd.f32 %v2923, %v5252
        %v5254 = vpop.f32.mrf.mxu0
        %v5255 = vadd.f32 %v2919, %v5254
        %v5256 = vpop.f32.mrf.mxu0
        %v5257 = vadd.f32 %v2923, %v5256
        %5258 = vmatprep.mubr.bf16.mxu0 0
        %5259 = vmatmul.mubr.bf16.gmra.mxu0 %v2832
        %v5260 = vpop.f32.mrf.mxu0
        %v5261 = vadd.f32 %v2919, %v5260
        %v5262 = vpop.f32.mrf.mxu0
        %v5263 = vadd.f32 %v2923, %v5262
        %v5264 = vpop.f32.mrf.mxu0
        %v5265 = vadd.f32 %v2919, %v5264
        %v5266 = vpop.f32.mrf.mxu0
        %v5267 = vadd.f32 %v2923, %v5266
        %5268 = vmatprep.mubr.bf16.mxu0 0
        %5269 = vmatmul.mubr.bf16.gmra.mxu0 %v2833
        %v5270 = vpop.f32.mrf.mxu0
        %v5271 = vadd.f32 %v2919, %v5270
        %v5272 = vpop.f32.mrf.mxu0
        %v5273 = vadd.f32 %v2923, %v5272
        %v5274 = vpop.f32.mrf.mxu0
        %v5275 = vadd.f32 %v2919, %v5274
        %v5276 = vpop.f32.mrf.mxu0
        %v5277 = vadd.f32 %v2923, %v5276
        %5278 = vdwg.mxu0
        %5279 = vmatprep.subr.bf16.mxu0 %v3195
        %5280 = vmatpush1.bf16.msra.mxu0 %v3194
        %5281 = vmatprep.subr.bf16.mxu0 %v3187
        %5282 = vmatpush1.bf16.msra.mxu0 %v3186
        %5283 = vmatprep.subr.bf16.mxu0 %v3179
        %5284 = vmatpush1.bf16.msra.mxu0 %v3178
        %5285 = vmatprep.subr.bf16.mxu0 %v3171
        %5286 = vmatpush1.bf16.msra.mxu0 %v3170
        %5287 = vmatprep.subr.bf16.mxu0 %v3163
        %5288 = vmatpush1.bf16.msra.mxu0 %v3162
        %5289 = vmatprep.subr.bf16.mxu0 %v3155
        %5290 = vmatpush1.bf16.msra.mxu0 %v3154
        %5291 = vmatprep.subr.bf16.mxu0 %v3147
        %5292 = vmatpush1.bf16.msra.mxu0 %v3146
        %5293 = vmatprep.subr.bf16.mxu0 %v3139
        %5294 = vmatpush1.bf16.msra.mxu0 %v3138
        %5295 = vmatprep.subr.bf16.mxu0 0
        %5296 = vmatpush2.bf16.msra.mxu0 0
        %5297 = vmatprep.subr.bf16.mxu0 0
        %5298 = vmatpush2.bf16.msra.mxu0 0
        %5299 = vmatprep.subr.bf16.mxu0 0
        %5300 = vmatpush2.bf16.msra.mxu0 0
        %5301 = vmatprep.subr.bf16.mxu0 0
        %5302 = vmatpush2.bf16.msra.mxu0 0
        %5303 = vmatprep.subr.bf16.mxu0 0
        %5304 = vmatpush2.bf16.msra.mxu0 0
        %5305 = vmatprep.subr.bf16.mxu0 0
        %5306 = vmatpush2.bf16.msra.mxu0 0
        %5307 = vmatprep.subr.bf16.mxu0 0
        %5308 = vmatpush2.bf16.msra.mxu0 0
        %5309 = vmatprep.subr.bf16.mxu0 0
        %5310 = vmatpush2.bf16.msra.mxu0 0
        %5311 = vmatprep.mubr.bf16.mxu0 0
        %5312 = vmatmul.mubr.bf16.gmra.mxu0 %v2770
        %v5313 = vpop.f32.mrf.mxu0
        %v5314 = vadd.f32 %v2927, %v5313
        %v5315 = vpop.f32.mrf.mxu0
        %v5316 = vadd.f32 %v2931, %v5315
        %v5317 = vpop.f32.mrf.mxu0
        %v5318 = vadd.f32 %v2927, %v5317
        %v5319 = vpop.f32.mrf.mxu0
        %v5320 = vadd.f32 %v2931, %v5319
        %5321 = vmatprep.mubr.bf16.mxu0 0
        %5322 = vmatmul.mubr.bf16.gmra.mxu0 %v2771
        %v5323 = vpop.f32.mrf.mxu0
        %v5324 = vadd.f32 %v2927, %v5323
        %v5325 = vpop.f32.mrf.mxu0
        %v5326 = vadd.f32 %v2931, %v5325
        %v5327 = vpop.f32.mrf.mxu0
        %v5328 = vadd.f32 %v2927, %v5327
        %v5329 = vpop.f32.mrf.mxu0
        %v5330 = vadd.f32 %v2931, %v5329
        %5331 = vmatprep.mubr.bf16.mxu0 0
        %5332 = vmatmul.mubr.bf16.gmra.mxu0 %v2772
        %v5333 = vpop.f32.mrf.mxu0
        %v5334 = vadd.f32 %v2927, %v5333
        %v5335 = vpop.f32.mrf.mxu0
        %v5336 = vadd.f32 %v2931, %v5335
        %v5337 = vpop.f32.mrf.mxu0
        %v5338 = vadd.f32 %v2927, %v5337
        %v5339 = vpop.f32.mrf.mxu0
        %v5340 = vadd.f32 %v2931, %v5339
        %5341 = vmatprep.mubr.bf16.mxu0 0
        %5342 = vmatmul.mubr.bf16.gmra.mxu0 %v2773
        %v5343 = vpop.f32.mrf.mxu0
        %v5344 = vadd.f32 %v2927, %v5343
        %v5345 = vpop.f32.mrf.mxu0
        %v5346 = vadd.f32 %v2931, %v5345
        %v5347 = vpop.f32.mrf.mxu0
        %v5348 = vadd.f32 %v2927, %v5347
        %v5349 = vpop.f32.mrf.mxu0
        %v5350 = vadd.f32 %v2931, %v5349
        %5351 = vmatprep.mubr.bf16.mxu0 0
        %5352 = vmatmul.mubr.bf16.gmra.mxu0 %v2774
        %v5353 = vpop.f32.mrf.mxu0
        %v5354 = vadd.f32 %v2927, %v5353
        %v5355 = vpop.f32.mrf.mxu0
        %v5356 = vadd.f32 %v2931, %v5355
        %v5357 = vpop.f32.mrf.mxu0
        %v5358 = vadd.f32 %v2927, %v5357
        %v5359 = vpop.f32.mrf.mxu0
        %v5360 = vadd.f32 %v2931, %v5359
        %5361 = vmatprep.mubr.bf16.mxu0 0
        %5362 = vmatmul.mubr.bf16.gmra.mxu0 %v2775
        %v5363 = vpop.f32.mrf.mxu0
        %v5364 = vadd.f32 %v2927, %v5363
        %v5365 = vpop.f32.mrf.mxu0
        %v5366 = vadd.f32 %v2931, %v5365
        %v5367 = vpop.f32.mrf.mxu0
        %v5368 = vadd.f32 %v2927, %v5367
        %v5369 = vpop.f32.mrf.mxu0
        %v5370 = vadd.f32 %v2931, %v5369
        %5371 = vmatprep.mubr.bf16.mxu0 0
        %5372 = vmatmul.mubr.bf16.gmra.mxu0 %v2776
        %v5373 = vpop.f32.mrf.mxu0
        %v5374 = vadd.f32 %v2927, %v5373
        %v5375 = vpop.f32.mrf.mxu0
        %v5376 = vadd.f32 %v2931, %v5375
        %v5377 = vpop.f32.mrf.mxu0
        %v5378 = vadd.f32 %v2927, %v5377
        %v5379 = vpop.f32.mrf.mxu0
        %v5380 = vadd.f32 %v2931, %v5379
        %5381 = vmatprep.mubr.bf16.mxu0 0
        %5382 = vmatmul.mubr.bf16.gmra.mxu0 %v2777
        %v5383 = vpop.f32.mrf.mxu0
        %v5384 = vadd.f32 %v2927, %v5383
        %v5385 = vpop.f32.mrf.mxu0
        %v5386 = vadd.f32 %v2931, %v5385
        %v5387 = vpop.f32.mrf.mxu0
        %v5388 = vadd.f32 %v2927, %v5387
        %v5389 = vpop.f32.mrf.mxu0
        %v5390 = vadd.f32 %v2931, %v5389
        %5391 = vmatprep.mubr.bf16.mxu0 0
        %5392 = vmatmul.mubr.bf16.gmra.mxu0 %v2778
        %v5393 = vpop.f32.mrf.mxu0
        %v5394 = vadd.f32 %v2927, %v5393
        %v5395 = vpop.f32.mrf.mxu0
        %v5396 = vadd.f32 %v2931, %v5395
        %v5397 = vpop.f32.mrf.mxu0
        %v5398 = vadd.f32 %v2927, %v5397
        %v5399 = vpop.f32.mrf.mxu0
        %v5400 = vadd.f32 %v2931, %v5399
        %5401 = vmatprep.mubr.bf16.mxu0 0
        %5402 = vmatmul.mubr.bf16.gmra.mxu0 %v2779
        %v5403 = vpop.f32.mrf.mxu0
        %v5404 = vadd.f32 %v2927, %v5403
        %v5405 = vpop.f32.mrf.mxu0
        %v5406 = vadd.f32 %v2931, %v5405
        %v5407 = vpop.f32.mrf.mxu0
        %v5408 = vadd.f32 %v2927, %v5407
        %v5409 = vpop.f32.mrf.mxu0
        %v5410 = vadd.f32 %v2931, %v5409
        %5411 = vmatprep.mubr.bf16.mxu0 0
        %5412 = vmatmul.mubr.bf16.gmra.mxu0 %v2780
        %v5413 = vpop.f32.mrf.mxu0
        %v5414 = vadd.f32 %v2927, %v5413
        %v5415 = vpop.f32.mrf.mxu0
        %v5416 = vadd.f32 %v2931, %v5415
        %v5417 = vpop.f32.mrf.mxu0
        %v5418 = vadd.f32 %v2927, %v5417
        %v5419 = vpop.f32.mrf.mxu0
        %v5420 = vadd.f32 %v2931, %v5419
        %5421 = vmatprep.mubr.bf16.mxu0 0
        %5422 = vmatmul.mubr.bf16.gmra.mxu0 %v2781
        %v5423 = vpop.f32.mrf.mxu0
        %v5424 = vadd.f32 %v2927, %v5423
        %v5425 = vpop.f32.mrf.mxu0
        %v5426 = vadd.f32 %v2931, %v5425
        %v5427 = vpop.f32.mrf.mxu0
        %v5428 = vadd.f32 %v2927, %v5427
        %v5429 = vpop.f32.mrf.mxu0
        %v5430 = vadd.f32 %v2931, %v5429
        %5431 = vmatprep.mubr.bf16.mxu0 0
        %5432 = vmatmul.mubr.bf16.gmra.mxu0 %v2782
        %v5433 = vpop.f32.mrf.mxu0
        %v5434 = vadd.f32 %v2927, %v5433
        %v5435 = vpop.f32.mrf.mxu0
        %v5436 = vadd.f32 %v2931, %v5435
        %v5437 = vpop.f32.mrf.mxu0
        %v5438 = vadd.f32 %v2927, %v5437
        %v5439 = vpop.f32.mrf.mxu0
        %v5440 = vadd.f32 %v2931, %v5439
        %5441 = vmatprep.mubr.bf16.mxu0 0
        %5442 = vmatmul.mubr.bf16.gmra.mxu0 %v2783
        %v5443 = vpop.f32.mrf.mxu0
        %v5444 = vadd.f32 %v2927, %v5443
        %v5445 = vpop.f32.mrf.mxu0
        %v5446 = vadd.f32 %v2931, %v5445
        %v5447 = vpop.f32.mrf.mxu0
        %v5448 = vadd.f32 %v2927, %v5447
        %v5449 = vpop.f32.mrf.mxu0
        %v5450 = vadd.f32 %v2931, %v5449
        %5451 = vmatprep.mubr.bf16.mxu0 0
        %5452 = vmatmul.mubr.bf16.gmra.mxu0 %v2784
        %v5453 = vpop.f32.mrf.mxu0
        %v5454 = vadd.f32 %v2927, %v5453
        %v5455 = vpop.f32.mrf.mxu0
        %v5456 = vadd.f32 %v2931, %v5455
        %v5457 = vpop.f32.mrf.mxu0
        %v5458 = vadd.f32 %v2927, %v5457
        %v5459 = vpop.f32.mrf.mxu0
        %v5460 = vadd.f32 %v2931, %v5459
        %5461 = vmatprep.mubr.bf16.mxu0 0
        %5462 = vmatmul.mubr.bf16.gmra.mxu0 %v2785
        %v5463 = vpop.f32.mrf.mxu0
        %v5464 = vadd.f32 %v2927, %v5463
        %v5465 = vpop.f32.mrf.mxu0
        %v5466 = vadd.f32 %v2931, %v5465
        %v5467 = vpop.f32.mrf.mxu0
        %v5468 = vadd.f32 %v2927, %v5467
        %v5469 = vpop.f32.mrf.mxu0
        %v5470 = vadd.f32 %v2931, %v5469
        %5471 = vmatprep.mubr.bf16.mxu0 0
        %5472 = vmatmul.mubr.bf16.gmra.mxu0 %v2786
        %v5473 = vpop.f32.mrf.mxu0
        %v5474 = vadd.f32 %v2927, %v5473
        %v5475 = vpop.f32.mrf.mxu0
        %v5476 = vadd.f32 %v2931, %v5475
        %v5477 = vpop.f32.mrf.mxu0
        %v5478 = vadd.f32 %v2927, %v5477
        %v5479 = vpop.f32.mrf.mxu0
        %v5480 = vadd.f32 %v2931, %v5479
        %5481 = vmatprep.mubr.bf16.mxu0 0
        %5482 = vmatmul.mubr.bf16.gmra.mxu0 %v2787
        %v5483 = vpop.f32.mrf.mxu0
        %v5484 = vadd.f32 %v2927, %v5483
        %v5485 = vpop.f32.mrf.mxu0
        %v5486 = vadd.f32 %v2931, %v5485
        %v5487 = vpop.f32.mrf.mxu0
        %v5488 = vadd.f32 %v2927, %v5487
        %v5489 = vpop.f32.mrf.mxu0
        %v5490 = vadd.f32 %v2931, %v5489
        %5491 = vmatprep.mubr.bf16.mxu0 0
        %5492 = vmatmul.mubr.bf16.gmra.mxu0 %v2788
        %v5493 = vpop.f32.mrf.mxu0
        %v5494 = vadd.f32 %v2927, %v5493
        %v5495 = vpop.f32.mrf.mxu0
        %v5496 = vadd.f32 %v2931, %v5495
        %v5497 = vpop.f32.mrf.mxu0
        %v5498 = vadd.f32 %v2927, %v5497
        %v5499 = vpop.f32.mrf.mxu0
        %v5500 = vadd.f32 %v2931, %v5499
        %5501 = vmatprep.mubr.bf16.mxu0 0
        %5502 = vmatmul.mubr.bf16.gmra.mxu0 %v2789
        %v5503 = vpop.f32.mrf.mxu0
        %v5504 = vadd.f32 %v2927, %v5503
        %v5505 = vpop.f32.mrf.mxu0
        %v5506 = vadd.f32 %v2931, %v5505
        %v5507 = vpop.f32.mrf.mxu0
        %v5508 = vadd.f32 %v2927, %v5507
        %v5509 = vpop.f32.mrf.mxu0
        %v5510 = vadd.f32 %v2931, %v5509
        %5511 = vmatprep.mubr.bf16.mxu0 0
        %5512 = vmatmul.mubr.bf16.gmra.mxu0 %v2790
        %v5513 = vpop.f32.mrf.mxu0
        %v5514 = vadd.f32 %v2927, %v5513
        %v5515 = vpop.f32.mrf.mxu0
        %v5516 = vadd.f32 %v2931, %v5515
        %v5517 = vpop.f32.mrf.mxu0
        %v5518 = vadd.f32 %v2927, %v5517
        %v5519 = vpop.f32.mrf.mxu0
        %v5520 = vadd.f32 %v2931, %v5519
        %5521 = vmatprep.mubr.bf16.mxu0 0
        %5522 = vmatmul.mubr.bf16.gmra.mxu0 %v2791
        %v5523 = vpop.f32.mrf.mxu0
        %v5524 = vadd.f32 %v2927, %v5523
        %v5525 = vpop.f32.mrf.mxu0
        %v5526 = vadd.f32 %v2931, %v5525
        %v5527 = vpop.f32.mrf.mxu0
        %v5528 = vadd.f32 %v2927, %v5527
        %v5529 = vpop.f32.mrf.mxu0
        %v5530 = vadd.f32 %v2931, %v5529
        %5531 = vmatprep.mubr.bf16.mxu0 0
        %5532 = vmatmul.mubr.bf16.gmra.mxu0 %v2792
        %v5533 = vpop.f32.mrf.mxu0
        %v5534 = vadd.f32 %v2927, %v5533
        %v5535 = vpop.f32.mrf.mxu0
        %v5536 = vadd.f32 %v2931, %v5535
        %v5537 = vpop.f32.mrf.mxu0
        %v5538 = vadd.f32 %v2927, %v5537
        %v5539 = vpop.f32.mrf.mxu0
        %v5540 = vadd.f32 %v2931, %v5539
        %5541 = vmatprep.mubr.bf16.mxu0 0
        %5542 = vmatmul.mubr.bf16.gmra.mxu0 %v2793
        %v5543 = vpop.f32.mrf.mxu0
        %v5544 = vadd.f32 %v2927, %v5543
        %v5545 = vpop.f32.mrf.mxu0
        %v5546 = vadd.f32 %v2931, %v5545
        %v5547 = vpop.f32.mrf.mxu0
        %v5548 = vadd.f32 %v2927, %v5547
        %v5549 = vpop.f32.mrf.mxu0
        %v5550 = vadd.f32 %v2931, %v5549
        %5551 = vmatprep.mubr.bf16.mxu0 0
        %5552 = vmatmul.mubr.bf16.gmra.mxu0 %v2794
        %v5553 = vpop.f32.mrf.mxu0
        %v5554 = vadd.f32 %v2927, %v5553
        %v5555 = vpop.f32.mrf.mxu0
        %v5556 = vadd.f32 %v2931, %v5555
        %v5557 = vpop.f32.mrf.mxu0
        %v5558 = vadd.f32 %v2927, %v5557
        %v5559 = vpop.f32.mrf.mxu0
        %v5560 = vadd.f32 %v2931, %v5559
        %5561 = vmatprep.mubr.bf16.mxu0 0
        %5562 = vmatmul.mubr.bf16.gmra.mxu0 %v2795
        %v5563 = vpop.f32.mrf.mxu0
        %v5564 = vadd.f32 %v2927, %v5563
        %v5565 = vpop.f32.mrf.mxu0
        %v5566 = vadd.f32 %v2931, %v5565
        %v5567 = vpop.f32.mrf.mxu0
        %v5568 = vadd.f32 %v2927, %v5567
        %v5569 = vpop.f32.mrf.mxu0
        %v5570 = vadd.f32 %v2931, %v5569
        %5571 = vmatprep.mubr.bf16.mxu0 0
        %5572 = vmatmul.mubr.bf16.gmra.mxu0 %v2796
        %v5573 = vpop.f32.mrf.mxu0
        %v5574 = vadd.f32 %v2927, %v5573
        %v5575 = vpop.f32.mrf.mxu0
        %v5576 = vadd.f32 %v2931, %v5575
        %v5577 = vpop.f32.mrf.mxu0
        %v5578 = vadd.f32 %v2927, %v5577
        %v5579 = vpop.f32.mrf.mxu0
        %v5580 = vadd.f32 %v2931, %v5579
        %5581 = vmatprep.mubr.bf16.mxu0 0
        %5582 = vmatmul.mubr.bf16.gmra.mxu0 %v2797
        %v5583 = vpop.f32.mrf.mxu0
        %v5584 = vadd.f32 %v2927, %v5583
        %v5585 = vpop.f32.mrf.mxu0
        %v5586 = vadd.f32 %v2931, %v5585
        %v5587 = vpop.f32.mrf.mxu0
        %v5588 = vadd.f32 %v2927, %v5587
        %v5589 = vpop.f32.mrf.mxu0
        %v5590 = vadd.f32 %v2931, %v5589
        %5591 = vmatprep.mubr.bf16.mxu0 0
        %5592 = vmatmul.mubr.bf16.gmra.mxu0 %v2798
        %v5593 = vpop.f32.mrf.mxu0
        %v5594 = vadd.f32 %v2927, %v5593
        %v5595 = vpop.f32.mrf.mxu0
        %v5596 = vadd.f32 %v2931, %v5595
        %v5597 = vpop.f32.mrf.mxu0
        %v5598 = vadd.f32 %v2927, %v5597
        %v5599 = vpop.f32.mrf.mxu0
        %v5600 = vadd.f32 %v2931, %v5599
        %5601 = vmatprep.mubr.bf16.mxu0 0
        %5602 = vmatmul.mubr.bf16.gmra.mxu0 %v2799
        %v5603 = vpop.f32.mrf.mxu0
        %v5604 = vadd.f32 %v2927, %v5603
        %v5605 = vpop.f32.mrf.mxu0
        %v5606 = vadd.f32 %v2931, %v5605
        %v5607 = vpop.f32.mrf.mxu0
        %v5608 = vadd.f32 %v2927, %v5607
        %v5609 = vpop.f32.mrf.mxu0
        %v5610 = vadd.f32 %v2931, %v5609
        %5611 = vmatprep.mubr.bf16.mxu0 0
        %5612 = vmatmul.mubr.bf16.gmra.mxu0 %v2800
        %v5613 = vpop.f32.mrf.mxu0
        %v5614 = vadd.f32 %v2927, %v5613
        %v5615 = vpop.f32.mrf.mxu0
        %v5616 = vadd.f32 %v2931, %v5615
        %v5617 = vpop.f32.mrf.mxu0
        %v5618 = vadd.f32 %v2927, %v5617
        %v5619 = vpop.f32.mrf.mxu0
        %v5620 = vadd.f32 %v2931, %v5619
        %5621 = vmatprep.mubr.bf16.mxu0 0
        %5622 = vmatmul.mubr.bf16.gmra.mxu0 %v2801
        %v5623 = vpop.f32.mrf.mxu0
        %v5624 = vadd.f32 %v2927, %v5623
        %v5625 = vpop.f32.mrf.mxu0
        %v5626 = vadd.f32 %v2931, %v5625
        %v5627 = vpop.f32.mrf.mxu0
        %v5628 = vadd.f32 %v2927, %v5627
        %v5629 = vpop.f32.mrf.mxu0
        %v5630 = vadd.f32 %v2931, %v5629
        %5631 = vmatprep.mubr.bf16.mxu0 0
        %5632 = vmatmul.mubr.bf16.gmra.mxu0 %v2802
        %v5633 = vpop.f32.mrf.mxu0
        %v5634 = vadd.f32 %v2927, %v5633
        %v5635 = vpop.f32.mrf.mxu0
        %v5636 = vadd.f32 %v2931, %v5635
        %v5637 = vpop.f32.mrf.mxu0
        %v5638 = vadd.f32 %v2927, %v5637
        %v5639 = vpop.f32.mrf.mxu0
        %v5640 = vadd.f32 %v2931, %v5639
        %5641 = vmatprep.mubr.bf16.mxu0 0
        %5642 = vmatmul.mubr.bf16.gmra.mxu0 %v2803
        %v5643 = vpop.f32.mrf.mxu0
        %v5644 = vadd.f32 %v2927, %v5643
        %v5645 = vpop.f32.mrf.mxu0
        %v5646 = vadd.f32 %v2931, %v5645
        %v5647 = vpop.f32.mrf.mxu0
        %v5648 = vadd.f32 %v2927, %v5647
        %v5649 = vpop.f32.mrf.mxu0
        %v5650 = vadd.f32 %v2931, %v5649
        %5651 = vmatprep.mubr.bf16.mxu0 0
        %5652 = vmatmul.mubr.bf16.gmra.mxu0 %v2804
        %v5653 = vpop.f32.mrf.mxu0
        %v5654 = vadd.f32 %v2927, %v5653
        %v5655 = vpop.f32.mrf.mxu0
        %v5656 = vadd.f32 %v2931, %v5655
        %v5657 = vpop.f32.mrf.mxu0
        %v5658 = vadd.f32 %v2927, %v5657
        %v5659 = vpop.f32.mrf.mxu0
        %v5660 = vadd.f32 %v2931, %v5659
        %5661 = vmatprep.mubr.bf16.mxu0 0
        %5662 = vmatmul.mubr.bf16.gmra.mxu0 %v2805
        %v5663 = vpop.f32.mrf.mxu0
        %v5664 = vadd.f32 %v2927, %v5663
        %v5665 = vpop.f32.mrf.mxu0
        %v5666 = vadd.f32 %v2931, %v5665
        %v5667 = vpop.f32.mrf.mxu0
        %v5668 = vadd.f32 %v2927, %v5667
        %v5669 = vpop.f32.mrf.mxu0
        %v5670 = vadd.f32 %v2931, %v5669
        %5671 = vmatprep.mubr.bf16.mxu0 0
        %5672 = vmatmul.mubr.bf16.gmra.mxu0 %v2806
        %v5673 = vpop.f32.mrf.mxu0
        %v5674 = vadd.f32 %v2927, %v5673
        %v5675 = vpop.f32.mrf.mxu0
        %v5676 = vadd.f32 %v2931, %v5675
        %v5677 = vpop.f32.mrf.mxu0
        %v5678 = vadd.f32 %v2927, %v5677
        %v5679 = vpop.f32.mrf.mxu0
        %v5680 = vadd.f32 %v2931, %v5679
        %5681 = vmatprep.mubr.bf16.mxu0 0
        %5682 = vmatmul.mubr.bf16.gmra.mxu0 %v2807
        %v5683 = vpop.f32.mrf.mxu0
        %v5684 = vadd.f32 %v2927, %v5683
        %v5685 = vpop.f32.mrf.mxu0
        %v5686 = vadd.f32 %v2931, %v5685
        %v5687 = vpop.f32.mrf.mxu0
        %v5688 = vadd.f32 %v2927, %v5687
        %v5689 = vpop.f32.mrf.mxu0
        %v5690 = vadd.f32 %v2931, %v5689
        %5691 = vmatprep.mubr.bf16.mxu0 0
        %5692 = vmatmul.mubr.bf16.gmra.mxu0 %v2808
        %v5693 = vpop.f32.mrf.mxu0
        %v5694 = vadd.f32 %v2927, %v5693
        %v5695 = vpop.f32.mrf.mxu0
        %v5696 = vadd.f32 %v2931, %v5695
        %v5697 = vpop.f32.mrf.mxu0
        %v5698 = vadd.f32 %v2927, %v5697
        %v5699 = vpop.f32.mrf.mxu0
        %v5700 = vadd.f32 %v2931, %v5699
        %5701 = vmatprep.mubr.bf16.mxu0 0
        %5702 = vmatmul.mubr.bf16.gmra.mxu0 %v2809
        %v5703 = vpop.f32.mrf.mxu0
        %v5704 = vadd.f32 %v2927, %v5703
        %v5705 = vpop.f32.mrf.mxu0
        %v5706 = vadd.f32 %v2931, %v5705
        %v5707 = vpop.f32.mrf.mxu0
        %v5708 = vadd.f32 %v2927, %v5707
        %v5709 = vpop.f32.mrf.mxu0
        %v5710 = vadd.f32 %v2931, %v5709
        %5711 = vmatprep.mubr.bf16.mxu0 0
        %5712 = vmatmul.mubr.bf16.gmra.mxu0 %v2810
        %v5713 = vpop.f32.mrf.mxu0
        %v5714 = vadd.f32 %v2927, %v5713
        %v5715 = vpop.f32.mrf.mxu0
        %v5716 = vadd.f32 %v2931, %v5715
        %v5717 = vpop.f32.mrf.mxu0
        %v5718 = vadd.f32 %v2927, %v5717
        %v5719 = vpop.f32.mrf.mxu0
        %v5720 = vadd.f32 %v2931, %v5719
        %5721 = vmatprep.mubr.bf16.mxu0 0
        %5722 = vmatmul.mubr.bf16.gmra.mxu0 %v2811
        %v5723 = vpop.f32.mrf.mxu0
        %v5724 = vadd.f32 %v2927, %v5723
        %v5725 = vpop.f32.mrf.mxu0
        %v5726 = vadd.f32 %v2931, %v5725
        %v5727 = vpop.f32.mrf.mxu0
        %v5728 = vadd.f32 %v2927, %v5727
        %v5729 = vpop.f32.mrf.mxu0
        %v5730 = vadd.f32 %v2931, %v5729
        %5731 = vmatprep.mubr.bf16.mxu0 0
        %5732 = vmatmul.mubr.bf16.gmra.mxu0 %v2812
        %v5733 = vpop.f32.mrf.mxu0
        %v5734 = vadd.f32 %v2927, %v5733
        %v5735 = vpop.f32.mrf.mxu0
        %v5736 = vadd.f32 %v2931, %v5735
        %v5737 = vpop.f32.mrf.mxu0
        %v5738 = vadd.f32 %v2927, %v5737
        %v5739 = vpop.f32.mrf.mxu0
        %v5740 = vadd.f32 %v2931, %v5739
        %5741 = vmatprep.mubr.bf16.mxu0 0
        %5742 = vmatmul.mubr.bf16.gmra.mxu0 %v2813
        %v5743 = vpop.f32.mrf.mxu0
        %v5744 = vadd.f32 %v2927, %v5743
        %v5745 = vpop.f32.mrf.mxu0
        %v5746 = vadd.f32 %v2931, %v5745
        %v5747 = vpop.f32.mrf.mxu0
        %v5748 = vadd.f32 %v2927, %v5747
        %v5749 = vpop.f32.mrf.mxu0
        %v5750 = vadd.f32 %v2931, %v5749
        %5751 = vmatprep.mubr.bf16.mxu0 0
        %5752 = vmatmul.mubr.bf16.gmra.mxu0 %v2814
        %v5753 = vpop.f32.mrf.mxu0
        %v5754 = vadd.f32 %v2927, %v5753
        %v5755 = vpop.f32.mrf.mxu0
        %v5756 = vadd.f32 %v2931, %v5755
        %v5757 = vpop.f32.mrf.mxu0
        %v5758 = vadd.f32 %v2927, %v5757
        %v5759 = vpop.f32.mrf.mxu0
        %v5760 = vadd.f32 %v2931, %v5759
        %5761 = vmatprep.mubr.bf16.mxu0 0
        %5762 = vmatmul.mubr.bf16.gmra.mxu0 %v2815
        %v5763 = vpop.f32.mrf.mxu0
        %v5764 = vadd.f32 %v2927, %v5763
        %v5765 = vpop.f32.mrf.mxu0
        %v5766 = vadd.f32 %v2931, %v5765
        %v5767 = vpop.f32.mrf.mxu0
        %v5768 = vadd.f32 %v2927, %v5767
        %v5769 = vpop.f32.mrf.mxu0
        %v5770 = vadd.f32 %v2931, %v5769
        %5771 = vmatprep.mubr.bf16.mxu0 0
        %5772 = vmatmul.mubr.bf16.gmra.mxu0 %v2816
        %v5773 = vpop.f32.mrf.mxu0
        %v5774 = vadd.f32 %v2927, %v5773
        %v5775 = vpop.f32.mrf.mxu0
        %v5776 = vadd.f32 %v2931, %v5775
        %v5777 = vpop.f32.mrf.mxu0
        %v5778 = vadd.f32 %v2927, %v5777
        %v5779 = vpop.f32.mrf.mxu0
        %v5780 = vadd.f32 %v2931, %v5779
        %5781 = vmatprep.mubr.bf16.mxu0 0
        %5782 = vmatmul.mubr.bf16.gmra.mxu0 %v2817
        %v5783 = vpop.f32.mrf.mxu0
        %v5784 = vadd.f32 %v2927, %v5783
        %v5785 = vpop.f32.mrf.mxu0
        %v5786 = vadd.f32 %v2931, %v5785
        %v5787 = vpop.f32.mrf.mxu0
        %v5788 = vadd.f32 %v2927, %v5787
        %v5789 = vpop.f32.mrf.mxu0
        %v5790 = vadd.f32 %v2931, %v5789
        %5791 = vmatprep.mubr.bf16.mxu0 0
        %5792 = vmatmul.mubr.bf16.gmra.mxu0 %v2818
        %v5793 = vpop.f32.mrf.mxu0
        %v5794 = vadd.f32 %v2927, %v5793
        %v5795 = vpop.f32.mrf.mxu0
        %v5796 = vadd.f32 %v2931, %v5795
        %v5797 = vpop.f32.mrf.mxu0
        %v5798 = vadd.f32 %v2927, %v5797
        %v5799 = vpop.f32.mrf.mxu0
        %v5800 = vadd.f32 %v2931, %v5799
        %5801 = vmatprep.mubr.bf16.mxu0 0
        %5802 = vmatmul.mubr.bf16.gmra.mxu0 %v2819
        %v5803 = vpop.f32.mrf.mxu0
        %v5804 = vadd.f32 %v2927, %v5803
        %v5805 = vpop.f32.mrf.mxu0
        %v5806 = vadd.f32 %v2931, %v5805
        %v5807 = vpop.f32.mrf.mxu0
        %v5808 = vadd.f32 %v2927, %v5807
        %v5809 = vpop.f32.mrf.mxu0
        %v5810 = vadd.f32 %v2931, %v5809
        %5811 = vmatprep.mubr.bf16.mxu0 0
        %5812 = vmatmul.mubr.bf16.gmra.mxu0 %v2820
        %v5813 = vpop.f32.mrf.mxu0
        %v5814 = vadd.f32 %v2927, %v5813
        %v5815 = vpop.f32.mrf.mxu0
        %v5816 = vadd.f32 %v2931, %v5815
        %v5817 = vpop.f32.mrf.mxu0
        %v5818 = vadd.f32 %v2927, %v5817
        %v5819 = vpop.f32.mrf.mxu0
        %v5820 = vadd.f32 %v2931, %v5819
        %5821 = vmatprep.mubr.bf16.mxu0 0
        %5822 = vmatmul.mubr.bf16.gmra.mxu0 %v2821
        %v5823 = vpop.f32.mrf.mxu0
        %v5824 = vadd.f32 %v2927, %v5823
        %v5825 = vpop.f32.mrf.mxu0
        %v5826 = vadd.f32 %v2931, %v5825
        %v5827 = vpop.f32.mrf.mxu0
        %v5828 = vadd.f32 %v2927, %v5827
        %v5829 = vpop.f32.mrf.mxu0
        %v5830 = vadd.f32 %v2931, %v5829
        %5831 = vmatprep.mubr.bf16.mxu0 0
        %5832 = vmatmul.mubr.bf16.gmra.mxu0 %v2822
        %v5833 = vpop.f32.mrf.mxu0
        %v5834 = vadd.f32 %v2927, %v5833
        %v5835 = vpop.f32.mrf.mxu0
        %v5836 = vadd.f32 %v2931, %v5835
        %v5837 = vpop.f32.mrf.mxu0
        %v5838 = vadd.f32 %v2927, %v5837
        %v5839 = vpop.f32.mrf.mxu0
        %v5840 = vadd.f32 %v2931, %v5839
        %5841 = vmatprep.mubr.bf16.mxu0 0
        %5842 = vmatmul.mubr.bf16.gmra.mxu0 %v2823
        %v5843 = vpop.f32.mrf.mxu0
        %v5844 = vadd.f32 %v2927, %v5843
        %v5845 = vpop.f32.mrf.mxu0
        %v5846 = vadd.f32 %v2931, %v5845
        %v5847 = vpop.f32.mrf.mxu0
        %v5848 = vadd.f32 %v2927, %v5847
        %v5849 = vpop.f32.mrf.mxu0
        %v5850 = vadd.f32 %v2931, %v5849
        %5851 = vmatprep.mubr.bf16.mxu0 0
        %5852 = vmatmul.mubr.bf16.gmra.mxu0 %v2824
        %v5853 = vpop.f32.mrf.mxu0
        %v5854 = vadd.f32 %v2927, %v5853
        %v5855 = vpop.f32.mrf.mxu0
        %v5856 = vadd.f32 %v2931, %v5855
        %v5857 = vpop.f32.mrf.mxu0
        %v5858 = vadd.f32 %v2927, %v5857
        %v5859 = vpop.f32.mrf.mxu0
        %v5860 = vadd.f32 %v2931, %v5859
        %5861 = vmatprep.mubr.bf16.mxu0 0
        %5862 = vmatmul.mubr.bf16.gmra.mxu0 %v2825
        %v5863 = vpop.f32.mrf.mxu0
        %v5864 = vadd.f32 %v2927, %v5863
        %v5865 = vpop.f32.mrf.mxu0
        %v5866 = vadd.f32 %v2931, %v5865
        %v5867 = vpop.f32.mrf.mxu0
        %v5868 = vadd.f32 %v2927, %v5867
        %v5869 = vpop.f32.mrf.mxu0
        %v5870 = vadd.f32 %v2931, %v5869
        %5871 = vmatprep.mubr.bf16.mxu0 0
        %5872 = vmatmul.mubr.bf16.gmra.mxu0 %v2826
        %v5873 = vpop.f32.mrf.mxu0
        %v5874 = vadd.f32 %v2927, %v5873
        %v5875 = vpop.f32.mrf.mxu0
        %v5876 = vadd.f32 %v2931, %v5875
        %v5877 = vpop.f32.mrf.mxu0
        %v5878 = vadd.f32 %v2927, %v5877
        %v5879 = vpop.f32.mrf.mxu0
        %v5880 = vadd.f32 %v2931, %v5879
        %5881 = vmatprep.mubr.bf16.mxu0 0
        %5882 = vmatmul.mubr.bf16.gmra.mxu0 %v2827
        %v5883 = vpop.f32.mrf.mxu0
        %v5884 = vadd.f32 %v2927, %v5883
        %v5885 = vpop.f32.mrf.mxu0
        %v5886 = vadd.f32 %v2931, %v5885
        %v5887 = vpop.f32.mrf.mxu0
        %v5888 = vadd.f32 %v2927, %v5887
        %v5889 = vpop.f32.mrf.mxu0
        %v5890 = vadd.f32 %v2931, %v5889
        %5891 = vmatprep.mubr.bf16.mxu0 0
        %5892 = vmatmul.mubr.bf16.gmra.mxu0 %v2828
        %v5893 = vpop.f32.mrf.mxu0
        %v5894 = vadd.f32 %v2927, %v5893
        %v5895 = vpop.f32.mrf.mxu0
        %v5896 = vadd.f32 %v2931, %v5895
        %v5897 = vpop.f32.mrf.mxu0
        %v5898 = vadd.f32 %v2927, %v5897
        %v5899 = vpop.f32.mrf.mxu0
        %v5900 = vadd.f32 %v2931, %v5899
        %5901 = vmatprep.mubr.bf16.mxu0 0
        %5902 = vmatmul.mubr.bf16.gmra.mxu0 %v2829
        %v5903 = vpop.f32.mrf.mxu0
        %v5904 = vadd.f32 %v2927, %v5903
        %v5905 = vpop.f32.mrf.mxu0
        %v5906 = vadd.f32 %v2931, %v5905
        %v5907 = vpop.f32.mrf.mxu0
        %v5908 = vadd.f32 %v2927, %v5907
        %v5909 = vpop.f32.mrf.mxu0
        %v5910 = vadd.f32 %v2931, %v5909
        %5911 = vmatprep.mubr.bf16.mxu0 0
        %5912 = vmatmul.mubr.bf16.gmra.mxu0 %v2830
        %v5913 = vpop.f32.mrf.mxu0
        %v5914 = vadd.f32 %v2927, %v5913
        %v5915 = vpop.f32.mrf.mxu0
        %v5916 = vadd.f32 %v2931, %v5915
        %v5917 = vpop.f32.mrf.mxu0
        %v5918 = vadd.f32 %v2927, %v5917
        %v5919 = vpop.f32.mrf.mxu0
        %v5920 = vadd.f32 %v2931, %v5919
        %5921 = vmatprep.mubr.bf16.mxu0 0
        %5922 = vmatmul.mubr.bf16.gmra.mxu0 %v2831
        %v5923 = vpop.f32.mrf.mxu0
        %v5924 = vadd.f32 %v2927, %v5923
        %v5925 = vpop.f32.mrf.mxu0
        %v5926 = vadd.f32 %v2931, %v5925
        %v5927 = vpop.f32.mrf.mxu0
        %v5928 = vadd.f32 %v2927, %v5927
        %v5929 = vpop.f32.mrf.mxu0
        %v5930 = vadd.f32 %v2931, %v5929
        %5931 = vmatprep.mubr.bf16.mxu0 0
        %5932 = vmatmul.mubr.bf16.gmra.mxu0 %v2832
        %v5933 = vpop.f32.mrf.mxu0
        %v5934 = vadd.f32 %v2927, %v5933
        %v5935 = vpop.f32.mrf.mxu0
        %v5936 = vadd.f32 %v2931, %v5935
        %v5937 = vpop.f32.mrf.mxu0
        %v5938 = vadd.f32 %v2927, %v5937
        %v5939 = vpop.f32.mrf.mxu0
        %v5940 = vadd.f32 %v2931, %v5939
        %5941 = vmatprep.mubr.bf16.mxu0 0
        %5942 = vmatmul.mubr.bf16.gmra.mxu0 %v2833
        %v5943 = vpop.f32.mrf.mxu0
        %v5944 = vadd.f32 %v2927, %v5943
        %v5945 = vpop.f32.mrf.mxu0
        %v5946 = vadd.f32 %v2931, %v5945
        %v5947 = vpop.f32.mrf.mxu0
        %v5948 = vadd.f32 %v2927, %v5947
        %v5949 = vpop.f32.mrf.mxu0
        %v5950 = vadd.f32 %v2931, %v5949
        %5951 = vdwg.mxu0
        %v5952 = vmax.f32 %v3295, 0.0
        %v5953 = vmax.f32 %v3297, 0.0
        %v5954 = vmax.f32 %v3968, 0.0
        %v5955 = vmax.f32 %v3970, 0.0
        %v5956 = vmax.f32 %v4641, 0.0
        %v5957 = vmax.f32 %v4643, 0.0
        %v5958 = vmax.f32 %v5314, 0.0
        %v5959 = vmax.f32 %v5316, 0.0
        %v5960 = vmax.f32 %v3299, 0.0
        %v5961 = vmax.f32 %v3301, 0.0
        %v5962 = vmax.f32 %v3972, 0.0
        %v5963 = vmax.f32 %v3974, 0.0
        %v5964 = vmax.f32 %v4645, 0.0
        %v5965 = vmax.f32 %v4647, 0.0
        %v5966 = vmax.f32 %v5318, 0.0
        %v5967 = vmax.f32 %v5320, 0.0
        %v5968 = vmax.f32 %v3305, 0.0
        %v5969 = vmax.f32 %v3307, 0.0
        %v5970 = vmax.f32 %v3978, 0.0
        %v5971 = vmax.f32 %v3980, 0.0
        %v5972 = vmax.f32 %v4651, 0.0
        %v5973 = vmax.f32 %v4653, 0.0
        %v5974 = vmax.f32 %v5324, 0.0
        %v5975 = vmax.f32 %v5326, 0.0
        %v5976 = vmax.f32 %v3309, 0.0
        %v5977 = vmax.f32 %v3311, 0.0
        %v5978 = vmax.f32 %v3982, 0.0
        %v5979 = vmax.f32 %v3984, 0.0
        %v5980 = vmax.f32 %v4655, 0.0
        %v5981 = vmax.f32 %v4657, 0.0
        %v5982 = vmax.f32 %v5328, 0.0
        %v5983 = vmax.f32 %v5330, 0.0
        %v5984 = vmax.f32 %v3315, 0.0
        %v5985 = vmax.f32 %v3317, 0.0
        %v5986 = vmax.f32 %v3988, 0.0
        %v5987 = vmax.f32 %v3990, 0.0
        %v5988 = vmax.f32 %v4661, 0.0
        %v5989 = vmax.f32 %v4663, 0.0
        %v5990 = vmax.f32 %v5334, 0.0
        %v5991 = vmax.f32 %v5336, 0.0
        %v5992 = vmax.f32 %v3319, 0.0
        %v5993 = vmax.f32 %v3321, 0.0
        %v5994 = vmax.f32 %v3992, 0.0
        %v5995 = vmax.f32 %v3994, 0.0
        %v5996 = vmax.f32 %v4665, 0.0
        %v5997 = vmax.f32 %v4667, 0.0
        %v5998 = vmax.f32 %v5338, 0.0
        %v5999 = vmax.f32 %v5340, 0.0
        %v6000 = vmax.f32 %v3325, 0.0
        %v6001 = vmax.f32 %v3327, 0.0
        %v6002 = vmax.f32 %v3998, 0.0
        %v6003 = vmax.f32 %v4000, 0.0
        %v6004 = vmax.f32 %v4671, 0.0
        %v6005 = vmax.f32 %v4673, 0.0
        %v6006 = vmax.f32 %v5344, 0.0
        %v6007 = vmax.f32 %v5346, 0.0
        %v6008 = vmax.f32 %v3329, 0.0
        %v6009 = vmax.f32 %v3331, 0.0
        %v6010 = vmax.f32 %v4002, 0.0
        %v6011 = vmax.f32 %v4004, 0.0
        %v6012 = vmax.f32 %v4675, 0.0
        %v6013 = vmax.f32 %v4677, 0.0
        %v6014 = vmax.f32 %v5348, 0.0
        %v6015 = vmax.f32 %v5350, 0.0
        %v6016 = vmax.f32 %v3335, 0.0
        %v6017 = vmax.f32 %v3337, 0.0
        %v6018 = vmax.f32 %v4008, 0.0
        %v6019 = vmax.f32 %v4010, 0.0
        %v6020 = vmax.f32 %v4681, 0.0
        %v6021 = vmax.f32 %v4683, 0.0
        %v6022 = vmax.f32 %v5354, 0.0
        %v6023 = vmax.f32 %v5356, 0.0
        %v6024 = vmax.f32 %v3339, 0.0
        %v6025 = vmax.f32 %v3341, 0.0
        %v6026 = vmax.f32 %v4012, 0.0
        %v6027 = vmax.f32 %v4014, 0.0
        %v6028 = vmax.f32 %v4685, 0.0
        %v6029 = vmax.f32 %v4687, 0.0
        %v6030 = vmax.f32 %v5358, 0.0
        %v6031 = vmax.f32 %v5360, 0.0
        %v6032 = vmax.f32 %v3345, 0.0
        %v6033 = vmax.f32 %v3347, 0.0
        %v6034 = vmax.f32 %v4018, 0.0
        %v6035 = vmax.f32 %v4020, 0.0
        %v6036 = vmax.f32 %v4691, 0.0
        %v6037 = vmax.f32 %v4693, 0.0
        %v6038 = vmax.f32 %v5364, 0.0
        %v6039 = vmax.f32 %v5366, 0.0
        %v6040 = vmax.f32 %v3349, 0.0
        %v6041 = vmax.f32 %v3351, 0.0
        %v6042 = vmax.f32 %v4022, 0.0
        %v6043 = vmax.f32 %v4024, 0.0
        %v6044 = vmax.f32 %v4695, 0.0
        %v6045 = vmax.f32 %v4697, 0.0
        %v6046 = vmax.f32 %v5368, 0.0
        %v6047 = vmax.f32 %v5370, 0.0
        %v6048 = vmax.f32 %v3355, 0.0
        %v6049 = vmax.f32 %v3357, 0.0
        %v6050 = vmax.f32 %v4028, 0.0
        %v6051 = vmax.f32 %v4030, 0.0
        %v6052 = vmax.f32 %v4701, 0.0
        %v6053 = vmax.f32 %v4703, 0.0
        %v6054 = vmax.f32 %v5374, 0.0
        %v6055 = vmax.f32 %v5376, 0.0
        %v6056 = vmax.f32 %v3359, 0.0
        %v6057 = vmax.f32 %v3361, 0.0
        %v6058 = vmax.f32 %v4032, 0.0
        %v6059 = vmax.f32 %v4034, 0.0
        %v6060 = vmax.f32 %v4705, 0.0
        %v6061 = vmax.f32 %v4707, 0.0
        %v6062 = vmax.f32 %v5378, 0.0
        %v6063 = vmax.f32 %v5380, 0.0
        %v6064 = vmax.f32 %v3365, 0.0
        %v6065 = vmax.f32 %v3367, 0.0
        %v6066 = vmax.f32 %v4038, 0.0
        %v6067 = vmax.f32 %v4040, 0.0
        %v6068 = vmax.f32 %v4711, 0.0
        %v6069 = vmax.f32 %v4713, 0.0
        %v6070 = vmax.f32 %v5384, 0.0
        %v6071 = vmax.f32 %v5386, 0.0
        %v6072 = vmax.f32 %v3369, 0.0
        %v6073 = vmax.f32 %v3371, 0.0
        %v6074 = vmax.f32 %v4042, 0.0
        %v6075 = vmax.f32 %v4044, 0.0
        %v6076 = vmax.f32 %v4715, 0.0
        %v6077 = vmax.f32 %v4717, 0.0
        %v6078 = vmax.f32 %v5388, 0.0
        %v6079 = vmax.f32 %v5390, 0.0
        %v6080 = vmax.f32 %v3375, 0.0
        %v6081 = vmax.f32 %v3377, 0.0
        %v6082 = vmax.f32 %v4048, 0.0
        %v6083 = vmax.f32 %v4050, 0.0
        %v6084 = vmax.f32 %v4721, 0.0
        %v6085 = vmax.f32 %v4723, 0.0
        %v6086 = vmax.f32 %v5394, 0.0
        %v6087 = vmax.f32 %v5396, 0.0
        %v6088 = vmax.f32 %v3379, 0.0
        %v6089 = vmax.f32 %v3381, 0.0
        %v6090 = vmax.f32 %v4052, 0.0
        %v6091 = vmax.f32 %v4054, 0.0
        %v6092 = vmax.f32 %v4725, 0.0
        %v6093 = vmax.f32 %v4727, 0.0
        %v6094 = vmax.f32 %v5398, 0.0
        %v6095 = vmax.f32 %v5400, 0.0
        %v6096 = vmax.f32 %v3385, 0.0
        %v6097 = vmax.f32 %v3387, 0.0
        %v6098 = vmax.f32 %v4058, 0.0
        %v6099 = vmax.f32 %v4060, 0.0
        %v6100 = vmax.f32 %v4731, 0.0
        %v6101 = vmax.f32 %v4733, 0.0
        %v6102 = vmax.f32 %v5404, 0.0
        %v6103 = vmax.f32 %v5406, 0.0
        %v6104 = vmax.f32 %v3389, 0.0
        %v6105 = vmax.f32 %v3391, 0.0
        %v6106 = vmax.f32 %v4062, 0.0
        %v6107 = vmax.f32 %v4064, 0.0
        %v6108 = vmax.f32 %v4735, 0.0
        %v6109 = vmax.f32 %v4737, 0.0
        %v6110 = vmax.f32 %v5408, 0.0
        %v6111 = vmax.f32 %v5410, 0.0
        %v6112 = vmax.f32 %v3395, 0.0
        %v6113 = vmax.f32 %v3397, 0.0
        %v6114 = vmax.f32 %v4068, 0.0
        %v6115 = vmax.f32 %v4070, 0.0
        %v6116 = vmax.f32 %v4741, 0.0
        %v6117 = vmax.f32 %v4743, 0.0
        %v6118 = vmax.f32 %v5414, 0.0
        %v6119 = vmax.f32 %v5416, 0.0
        %v6120 = vmax.f32 %v3399, 0.0
        %v6121 = vmax.f32 %v3401, 0.0
        %v6122 = vmax.f32 %v4072, 0.0
        %v6123 = vmax.f32 %v4074, 0.0
        %v6124 = vmax.f32 %v4745, 0.0
        %v6125 = vmax.f32 %v4747, 0.0
        %v6126 = vmax.f32 %v5418, 0.0
        %v6127 = vmax.f32 %v5420, 0.0
        %v6128 = vmax.f32 %v3405, 0.0
        %v6129 = vmax.f32 %v3407, 0.0
        %v6130 = vmax.f32 %v4078, 0.0
        %v6131 = vmax.f32 %v4080, 0.0
        %v6132 = vmax.f32 %v4751, 0.0
        %v6133 = vmax.f32 %v4753, 0.0
        %v6134 = vmax.f32 %v5424, 0.0
        %v6135 = vmax.f32 %v5426, 0.0
        %v6136 = vmax.f32 %v3409, 0.0
        %v6137 = vmax.f32 %v3411, 0.0
        %v6138 = vmax.f32 %v4082, 0.0
        %v6139 = vmax.f32 %v4084, 0.0
        %v6140 = vmax.f32 %v4755, 0.0
        %v6141 = vmax.f32 %v4757, 0.0
        %v6142 = vmax.f32 %v5428, 0.0
        %v6143 = vmax.f32 %v5430, 0.0
        %v6144 = vmax.f32 %v3415, 0.0
        %v6145 = vmax.f32 %v3417, 0.0
        %v6146 = vmax.f32 %v4088, 0.0
        %v6147 = vmax.f32 %v4090, 0.0
        %v6148 = vmax.f32 %v4761, 0.0
        %v6149 = vmax.f32 %v4763, 0.0
        %v6150 = vmax.f32 %v5434, 0.0
        %v6151 = vmax.f32 %v5436, 0.0
        %v6152 = vmax.f32 %v3419, 0.0
        %v6153 = vmax.f32 %v3421, 0.0
        %v6154 = vmax.f32 %v4092, 0.0
        %v6155 = vmax.f32 %v4094, 0.0
        %v6156 = vmax.f32 %v4765, 0.0
        %v6157 = vmax.f32 %v4767, 0.0
        %v6158 = vmax.f32 %v5438, 0.0
        %v6159 = vmax.f32 %v5440, 0.0
        %v6160 = vmax.f32 %v3425, 0.0
        %v6161 = vmax.f32 %v3427, 0.0
        %v6162 = vmax.f32 %v4098, 0.0
        %v6163 = vmax.f32 %v4100, 0.0
        %v6164 = vmax.f32 %v4771, 0.0
        %v6165 = vmax.f32 %v4773, 0.0
        %v6166 = vmax.f32 %v5444, 0.0
        %v6167 = vmax.f32 %v5446, 0.0
        %v6168 = vmax.f32 %v3429, 0.0
        %v6169 = vmax.f32 %v3431, 0.0
        %v6170 = vmax.f32 %v4102, 0.0
        %v6171 = vmax.f32 %v4104, 0.0
        %v6172 = vmax.f32 %v4775, 0.0
        %v6173 = vmax.f32 %v4777, 0.0
        %v6174 = vmax.f32 %v5448, 0.0
        %v6175 = vmax.f32 %v5450, 0.0
        %v6176 = vmax.f32 %v3435, 0.0
        %v6177 = vmax.f32 %v3437, 0.0
        %v6178 = vmax.f32 %v4108, 0.0
        %v6179 = vmax.f32 %v4110, 0.0
        %v6180 = vmax.f32 %v4781, 0.0
        %v6181 = vmax.f32 %v4783, 0.0
        %v6182 = vmax.f32 %v5454, 0.0
        %v6183 = vmax.f32 %v5456, 0.0
        %v6184 = vmax.f32 %v3439, 0.0
        %v6185 = vmax.f32 %v3441, 0.0
        %v6186 = vmax.f32 %v4112, 0.0
        %v6187 = vmax.f32 %v4114, 0.0
        %v6188 = vmax.f32 %v4785, 0.0
        %v6189 = vmax.f32 %v4787, 0.0
        %v6190 = vmax.f32 %v5458, 0.0
        %v6191 = vmax.f32 %v5460, 0.0
        %v6192 = vmax.f32 %v3445, 0.0
        %v6193 = vmax.f32 %v3447, 0.0
        %v6194 = vmax.f32 %v4118, 0.0
        %v6195 = vmax.f32 %v4120, 0.0
        %v6196 = vmax.f32 %v4791, 0.0
        %v6197 = vmax.f32 %v4793, 0.0
        %v6198 = vmax.f32 %v5464, 0.0
        %v6199 = vmax.f32 %v5466, 0.0
        %v6200 = vmax.f32 %v3449, 0.0
        %v6201 = vmax.f32 %v3451, 0.0
        %v6202 = vmax.f32 %v4122, 0.0
        %v6203 = vmax.f32 %v4124, 0.0
        %v6204 = vmax.f32 %v4795, 0.0
        %v6205 = vmax.f32 %v4797, 0.0
        %v6206 = vmax.f32 %v5468, 0.0
        %v6207 = vmax.f32 %v5470, 0.0
        %v6208 = vmax.f32 %v3455, 0.0
        %v6209 = vmax.f32 %v3457, 0.0
        %v6210 = vmax.f32 %v4128, 0.0
        %v6211 = vmax.f32 %v4130, 0.0
        %v6212 = vmax.f32 %v4801, 0.0
        %v6213 = vmax.f32 %v4803, 0.0
        %v6214 = vmax.f32 %v5474, 0.0
        %v6215 = vmax.f32 %v5476, 0.0
        %v6216 = vmax.f32 %v3459, 0.0
        %v6217 = vmax.f32 %v3461, 0.0
        %v6218 = vmax.f32 %v4132, 0.0
        %v6219 = vmax.f32 %v4134, 0.0
        %v6220 = vmax.f32 %v4805, 0.0
        %v6221 = vmax.f32 %v4807, 0.0
        %v6222 = vmax.f32 %v5478, 0.0
        %v6223 = vmax.f32 %v5480, 0.0
        %v6224 = vmax.f32 %v3465, 0.0
        %v6225 = vmax.f32 %v3467, 0.0
        %v6226 = vmax.f32 %v4138, 0.0
        %v6227 = vmax.f32 %v4140, 0.0
        %v6228 = vmax.f32 %v4811, 0.0
        %v6229 = vmax.f32 %v4813, 0.0
        %v6230 = vmax.f32 %v5484, 0.0
        %v6231 = vmax.f32 %v5486, 0.0
        %v6232 = vmax.f32 %v3469, 0.0
        %v6233 = vmax.f32 %v3471, 0.0
        %v6234 = vmax.f32 %v4142, 0.0
        %v6235 = vmax.f32 %v4144, 0.0
        %v6236 = vmax.f32 %v4815, 0.0
        %v6237 = vmax.f32 %v4817, 0.0
        %v6238 = vmax.f32 %v5488, 0.0
        %v6239 = vmax.f32 %v5490, 0.0
        %v6240 = vmax.f32 %v3475, 0.0
        %v6241 = vmax.f32 %v3477, 0.0
        %v6242 = vmax.f32 %v4148, 0.0
        %v6243 = vmax.f32 %v4150, 0.0
        %v6244 = vmax.f32 %v4821, 0.0
        %v6245 = vmax.f32 %v4823, 0.0
        %v6246 = vmax.f32 %v5494, 0.0
        %v6247 = vmax.f32 %v5496, 0.0
        %v6248 = vmax.f32 %v3479, 0.0
        %v6249 = vmax.f32 %v3481, 0.0
        %v6250 = vmax.f32 %v4152, 0.0
        %v6251 = vmax.f32 %v4154, 0.0
        %v6252 = vmax.f32 %v4825, 0.0
        %v6253 = vmax.f32 %v4827, 0.0
        %v6254 = vmax.f32 %v5498, 0.0
        %v6255 = vmax.f32 %v5500, 0.0
        %v6256 = vmax.f32 %v3485, 0.0
        %v6257 = vmax.f32 %v3487, 0.0
        %v6258 = vmax.f32 %v4158, 0.0
        %v6259 = vmax.f32 %v4160, 0.0
        %v6260 = vmax.f32 %v4831, 0.0
        %v6261 = vmax.f32 %v4833, 0.0
        %v6262 = vmax.f32 %v5504, 0.0
        %v6263 = vmax.f32 %v5506, 0.0
        %v6264 = vmax.f32 %v3489, 0.0
        %v6265 = vmax.f32 %v3491, 0.0
        %v6266 = vmax.f32 %v4162, 0.0
        %v6267 = vmax.f32 %v4164, 0.0
        %v6268 = vmax.f32 %v4835, 0.0
        %v6269 = vmax.f32 %v4837, 0.0
        %v6270 = vmax.f32 %v5508, 0.0
        %v6271 = vmax.f32 %v5510, 0.0
        %v6272 = vmax.f32 %v3495, 0.0
        %v6273 = vmax.f32 %v3497, 0.0
        %v6274 = vmax.f32 %v4168, 0.0
        %v6275 = vmax.f32 %v4170, 0.0
        %v6276 = vmax.f32 %v4841, 0.0
        %v6277 = vmax.f32 %v4843, 0.0
        %v6278 = vmax.f32 %v5514, 0.0
        %v6279 = vmax.f32 %v5516, 0.0
        %v6280 = vmax.f32 %v3499, 0.0
        %v6281 = vmax.f32 %v3501, 0.0
        %v6282 = vmax.f32 %v4172, 0.0
        %v6283 = vmax.f32 %v4174, 0.0
        %v6284 = vmax.f32 %v4845, 0.0
        %v6285 = vmax.f32 %v4847, 0.0
        %v6286 = vmax.f32 %v5518, 0.0
        %v6287 = vmax.f32 %v5520, 0.0
        %v6288 = vmax.f32 %v3505, 0.0
        %v6289 = vmax.f32 %v3507, 0.0
        %v6290 = vmax.f32 %v4178, 0.0
        %v6291 = vmax.f32 %v4180, 0.0
        %v6292 = vmax.f32 %v4851, 0.0
        %v6293 = vmax.f32 %v4853, 0.0
        %v6294 = vmax.f32 %v5524, 0.0
        %v6295 = vmax.f32 %v5526, 0.0
        %v6296 = vmax.f32 %v3509, 0.0
        %v6297 = vmax.f32 %v3511, 0.0
        %v6298 = vmax.f32 %v4182, 0.0
        %v6299 = vmax.f32 %v4184, 0.0
        %v6300 = vmax.f32 %v4855, 0.0
        %v6301 = vmax.f32 %v4857, 0.0
        %v6302 = vmax.f32 %v5528, 0.0
        %v6303 = vmax.f32 %v5530, 0.0
        %v6304 = vmax.f32 %v3515, 0.0
        %v6305 = vmax.f32 %v3517, 0.0
        %v6306 = vmax.f32 %v4188, 0.0
        %v6307 = vmax.f32 %v4190, 0.0
        %v6308 = vmax.f32 %v4861, 0.0
        %v6309 = vmax.f32 %v4863, 0.0
        %v6310 = vmax.f32 %v5534, 0.0
        %v6311 = vmax.f32 %v5536, 0.0
        %v6312 = vmax.f32 %v3519, 0.0
        %v6313 = vmax.f32 %v3521, 0.0
        %v6314 = vmax.f32 %v4192, 0.0
        %v6315 = vmax.f32 %v4194, 0.0
        %v6316 = vmax.f32 %v4865, 0.0
        %v6317 = vmax.f32 %v4867, 0.0
        %v6318 = vmax.f32 %v5538, 0.0
        %v6319 = vmax.f32 %v5540, 0.0
        %v6320 = vmax.f32 %v3525, 0.0
        %v6321 = vmax.f32 %v3527, 0.0
        %v6322 = vmax.f32 %v4198, 0.0
        %v6323 = vmax.f32 %v4200, 0.0
        %v6324 = vmax.f32 %v4871, 0.0
        %v6325 = vmax.f32 %v4873, 0.0
        %v6326 = vmax.f32 %v5544, 0.0
        %v6327 = vmax.f32 %v5546, 0.0
        %v6328 = vmax.f32 %v3529, 0.0
        %v6329 = vmax.f32 %v3531, 0.0
        %v6330 = vmax.f32 %v4202, 0.0
        %v6331 = vmax.f32 %v4204, 0.0
        %v6332 = vmax.f32 %v4875, 0.0
        %v6333 = vmax.f32 %v4877, 0.0
        %v6334 = vmax.f32 %v5548, 0.0
        %v6335 = vmax.f32 %v5550, 0.0
        %v6336 = vmax.f32 %v3535, 0.0
        %v6337 = vmax.f32 %v3537, 0.0
        %v6338 = vmax.f32 %v4208, 0.0
        %v6339 = vmax.f32 %v4210, 0.0
        %v6340 = vmax.f32 %v4881, 0.0
        %v6341 = vmax.f32 %v4883, 0.0
        %v6342 = vmax.f32 %v5554, 0.0
        %v6343 = vmax.f32 %v5556, 0.0
        %v6344 = vmax.f32 %v3539, 0.0
        %v6345 = vmax.f32 %v3541, 0.0
        %v6346 = vmax.f32 %v4212, 0.0
        %v6347 = vmax.f32 %v4214, 0.0
        %v6348 = vmax.f32 %v4885, 0.0
        %v6349 = vmax.f32 %v4887, 0.0
        %v6350 = vmax.f32 %v5558, 0.0
        %v6351 = vmax.f32 %v5560, 0.0
        %v6352 = vmax.f32 %v3545, 0.0
        %v6353 = vmax.f32 %v3547, 0.0
        %v6354 = vmax.f32 %v4218, 0.0
        %v6355 = vmax.f32 %v4220, 0.0
        %v6356 = vmax.f32 %v4891, 0.0
        %v6357 = vmax.f32 %v4893, 0.0
        %v6358 = vmax.f32 %v5564, 0.0
        %v6359 = vmax.f32 %v5566, 0.0
        %v6360 = vmax.f32 %v3549, 0.0
        %v6361 = vmax.f32 %v3551, 0.0
        %v6362 = vmax.f32 %v4222, 0.0
        %v6363 = vmax.f32 %v4224, 0.0
        %v6364 = vmax.f32 %v4895, 0.0
        %v6365 = vmax.f32 %v4897, 0.0
        %v6366 = vmax.f32 %v5568, 0.0
        %v6367 = vmax.f32 %v5570, 0.0
        %v6368 = vmax.f32 %v3555, 0.0
        %v6369 = vmax.f32 %v3557, 0.0
        %v6370 = vmax.f32 %v4228, 0.0
        %v6371 = vmax.f32 %v4230, 0.0
        %v6372 = vmax.f32 %v4901, 0.0
        %v6373 = vmax.f32 %v4903, 0.0
        %v6374 = vmax.f32 %v5574, 0.0
        %v6375 = vmax.f32 %v5576, 0.0
        %v6376 = vmax.f32 %v3559, 0.0
        %v6377 = vmax.f32 %v3561, 0.0
        %v6378 = vmax.f32 %v4232, 0.0
        %v6379 = vmax.f32 %v4234, 0.0
        %v6380 = vmax.f32 %v4905, 0.0
        %v6381 = vmax.f32 %v4907, 0.0
        %v6382 = vmax.f32 %v5578, 0.0
        %v6383 = vmax.f32 %v5580, 0.0
        %v6384 = vmax.f32 %v3565, 0.0
        %v6385 = vmax.f32 %v3567, 0.0
        %v6386 = vmax.f32 %v4238, 0.0
        %v6387 = vmax.f32 %v4240, 0.0
        %v6388 = vmax.f32 %v4911, 0.0
        %v6389 = vmax.f32 %v4913, 0.0
        %v6390 = vmax.f32 %v5584, 0.0
        %v6391 = vmax.f32 %v5586, 0.0
        %v6392 = vmax.f32 %v3569, 0.0
        %v6393 = vmax.f32 %v3571, 0.0
        %v6394 = vmax.f32 %v4242, 0.0
        %v6395 = vmax.f32 %v4244, 0.0
        %v6396 = vmax.f32 %v4915, 0.0
        %v6397 = vmax.f32 %v4917, 0.0
        %v6398 = vmax.f32 %v5588, 0.0
        %v6399 = vmax.f32 %v5590, 0.0
        %v6400 = vmax.f32 %v3575, 0.0
        %v6401 = vmax.f32 %v3577, 0.0
        %v6402 = vmax.f32 %v4248, 0.0
        %v6403 = vmax.f32 %v4250, 0.0
        %v6404 = vmax.f32 %v4921, 0.0
        %v6405 = vmax.f32 %v4923, 0.0
        %v6406 = vmax.f32 %v5594, 0.0
        %v6407 = vmax.f32 %v5596, 0.0
        %v6408 = vmax.f32 %v3579, 0.0
        %v6409 = vmax.f32 %v3581, 0.0
        %v6410 = vmax.f32 %v4252, 0.0
        %v6411 = vmax.f32 %v4254, 0.0
        %v6412 = vmax.f32 %v4925, 0.0
        %v6413 = vmax.f32 %v4927, 0.0
        %v6414 = vmax.f32 %v5598, 0.0
        %v6415 = vmax.f32 %v5600, 0.0
        %v6416 = vmax.f32 %v3585, 0.0
        %v6417 = vmax.f32 %v3587, 0.0
        %v6418 = vmax.f32 %v4258, 0.0
        %v6419 = vmax.f32 %v4260, 0.0
        %v6420 = vmax.f32 %v4931, 0.0
        %v6421 = vmax.f32 %v4933, 0.0
        %v6422 = vmax.f32 %v5604, 0.0
        %v6423 = vmax.f32 %v5606, 0.0
        %v6424 = vmax.f32 %v3589, 0.0
        %v6425 = vmax.f32 %v3591, 0.0
        %v6426 = vmax.f32 %v4262, 0.0
        %v6427 = vmax.f32 %v4264, 0.0
        %v6428 = vmax.f32 %v4935, 0.0
        %v6429 = vmax.f32 %v4937, 0.0
        %v6430 = vmax.f32 %v5608, 0.0
        %v6431 = vmax.f32 %v5610, 0.0
        %v6432 = vmax.f32 %v3595, 0.0
        %v6433 = vmax.f32 %v3597, 0.0
        %v6434 = vmax.f32 %v4268, 0.0
        %v6435 = vmax.f32 %v4270, 0.0
        %v6436 = vmax.f32 %v4941, 0.0
        %v6437 = vmax.f32 %v4943, 0.0
        %v6438 = vmax.f32 %v5614, 0.0
        %v6439 = vmax.f32 %v5616, 0.0
        %v6440 = vmax.f32 %v3599, 0.0
        %v6441 = vmax.f32 %v3601, 0.0
        %v6442 = vmax.f32 %v4272, 0.0
        %v6443 = vmax.f32 %v4274, 0.0
        %v6444 = vmax.f32 %v4945, 0.0
        %v6445 = vmax.f32 %v4947, 0.0
        %v6446 = vmax.f32 %v5618, 0.0
        %v6447 = vmax.f32 %v5620, 0.0
        %v6448 = vmax.f32 %v3605, 0.0
        %v6449 = vmax.f32 %v3607, 0.0
        %v6450 = vmax.f32 %v4278, 0.0
        %v6451 = vmax.f32 %v4280, 0.0
        %v6452 = vmax.f32 %v4951, 0.0
        %v6453 = vmax.f32 %v4953, 0.0
        %v6454 = vmax.f32 %v5624, 0.0
        %v6455 = vmax.f32 %v5626, 0.0
        %v6456 = vmax.f32 %v3609, 0.0
        %v6457 = vmax.f32 %v3611, 0.0
        %v6458 = vmax.f32 %v4282, 0.0
        %v6459 = vmax.f32 %v4284, 0.0
        %v6460 = vmax.f32 %v4955, 0.0
        %v6461 = vmax.f32 %v4957, 0.0
        %v6462 = vmax.f32 %v5628, 0.0
        %v6463 = vmax.f32 %v5630, 0.0
        %v6464 = vmax.f32 %v3615, 0.0
        %v6465 = vmax.f32 %v3617, 0.0
        %v6466 = vmax.f32 %v4288, 0.0
        %v6467 = vmax.f32 %v4290, 0.0
        %v6468 = vmax.f32 %v4961, 0.0
        %v6469 = vmax.f32 %v4963, 0.0
        %v6470 = vmax.f32 %v5634, 0.0
        %v6471 = vmax.f32 %v5636, 0.0
        %v6472 = vmax.f32 %v3619, 0.0
        %v6473 = vmax.f32 %v3621, 0.0
        %v6474 = vmax.f32 %v4292, 0.0
        %v6475 = vmax.f32 %v4294, 0.0
        %v6476 = vmax.f32 %v4965, 0.0
        %v6477 = vmax.f32 %v4967, 0.0
        %v6478 = vmax.f32 %v5638, 0.0
        %v6479 = vmax.f32 %v5640, 0.0
        %v6480 = vmax.f32 %v3625, 0.0
        %v6481 = vmax.f32 %v3627, 0.0
        %v6482 = vmax.f32 %v4298, 0.0
        %v6483 = vmax.f32 %v4300, 0.0
        %v6484 = vmax.f32 %v4971, 0.0
        %v6485 = vmax.f32 %v4973, 0.0
        %v6486 = vmax.f32 %v5644, 0.0
        %v6487 = vmax.f32 %v5646, 0.0
        %v6488 = vmax.f32 %v3629, 0.0
        %v6489 = vmax.f32 %v3631, 0.0
        %v6490 = vmax.f32 %v4302, 0.0
        %v6491 = vmax.f32 %v4304, 0.0
        %v6492 = vmax.f32 %v4975, 0.0
        %v6493 = vmax.f32 %v4977, 0.0
        %v6494 = vmax.f32 %v5648, 0.0
        %v6495 = vmax.f32 %v5650, 0.0
        %v6496 = vmax.f32 %v3635, 0.0
        %v6497 = vmax.f32 %v3637, 0.0
        %v6498 = vmax.f32 %v4308, 0.0
        %v6499 = vmax.f32 %v4310, 0.0
        %v6500 = vmax.f32 %v4981, 0.0
        %v6501 = vmax.f32 %v4983, 0.0
        %v6502 = vmax.f32 %v5654, 0.0
        %v6503 = vmax.f32 %v5656, 0.0
        %v6504 = vmax.f32 %v3639, 0.0
        %v6505 = vmax.f32 %v3641, 0.0
        %v6506 = vmax.f32 %v4312, 0.0
        %v6507 = vmax.f32 %v4314, 0.0
        %v6508 = vmax.f32 %v4985, 0.0
        %v6509 = vmax.f32 %v4987, 0.0
        %v6510 = vmax.f32 %v5658, 0.0
        %v6511 = vmax.f32 %v5660, 0.0
        %v6512 = vmax.f32 %v3645, 0.0
        %v6513 = vmax.f32 %v3647, 0.0
        %v6514 = vmax.f32 %v4318, 0.0
        %v6515 = vmax.f32 %v4320, 0.0
        %v6516 = vmax.f32 %v4991, 0.0
        %v6517 = vmax.f32 %v4993, 0.0
        %v6518 = vmax.f32 %v5664, 0.0
        %v6519 = vmax.f32 %v5666, 0.0
        %v6520 = vmax.f32 %v3649, 0.0
        %v6521 = vmax.f32 %v3651, 0.0
        %v6522 = vmax.f32 %v4322, 0.0
        %v6523 = vmax.f32 %v4324, 0.0
        %v6524 = vmax.f32 %v4995, 0.0
        %v6525 = vmax.f32 %v4997, 0.0
        %v6526 = vmax.f32 %v5668, 0.0
        %v6527 = vmax.f32 %v5670, 0.0
        %v6528 = vmax.f32 %v3655, 0.0
        %v6529 = vmax.f32 %v3657, 0.0
        %v6530 = vmax.f32 %v4328, 0.0
        %v6531 = vmax.f32 %v4330, 0.0
        %v6532 = vmax.f32 %v5001, 0.0
        %v6533 = vmax.f32 %v5003, 0.0
        %v6534 = vmax.f32 %v5674, 0.0
        %v6535 = vmax.f32 %v5676, 0.0
        %v6536 = vmax.f32 %v3659, 0.0
        %v6537 = vmax.f32 %v3661, 0.0
        %v6538 = vmax.f32 %v4332, 0.0
        %v6539 = vmax.f32 %v4334, 0.0
        %v6540 = vmax.f32 %v5005, 0.0
        %v6541 = vmax.f32 %v5007, 0.0
        %v6542 = vmax.f32 %v5678, 0.0
        %v6543 = vmax.f32 %v5680, 0.0
        %v6544 = vmax.f32 %v3665, 0.0
        %v6545 = vmax.f32 %v3667, 0.0
        %v6546 = vmax.f32 %v4338, 0.0
        %v6547 = vmax.f32 %v4340, 0.0
        %v6548 = vmax.f32 %v5011, 0.0
        %v6549 = vmax.f32 %v5013, 0.0
        %v6550 = vmax.f32 %v5684, 0.0
        %v6551 = vmax.f32 %v5686, 0.0
        %v6552 = vmax.f32 %v3669, 0.0
        %v6553 = vmax.f32 %v3671, 0.0
        %v6554 = vmax.f32 %v4342, 0.0
        %v6555 = vmax.f32 %v4344, 0.0
        %v6556 = vmax.f32 %v5015, 0.0
        %v6557 = vmax.f32 %v5017, 0.0
        %v6558 = vmax.f32 %v5688, 0.0
        %v6559 = vmax.f32 %v5690, 0.0
        %v6560 = vmax.f32 %v3675, 0.0
        %v6561 = vmax.f32 %v3677, 0.0
        %v6562 = vmax.f32 %v4348, 0.0
        %v6563 = vmax.f32 %v4350, 0.0
        %v6564 = vmax.f32 %v5021, 0.0
        %v6565 = vmax.f32 %v5023, 0.0
        %v6566 = vmax.f32 %v5694, 0.0
        %v6567 = vmax.f32 %v5696, 0.0
        %v6568 = vmax.f32 %v3679, 0.0
        %v6569 = vmax.f32 %v3681, 0.0
        %v6570 = vmax.f32 %v4352, 0.0
        %v6571 = vmax.f32 %v4354, 0.0
        %v6572 = vmax.f32 %v5025, 0.0
        %v6573 = vmax.f32 %v5027, 0.0
        %v6574 = vmax.f32 %v5698, 0.0
        %v6575 = vmax.f32 %v5700, 0.0
        %v6576 = vmax.f32 %v3685, 0.0
        %v6577 = vmax.f32 %v3687, 0.0
        %v6578 = vmax.f32 %v4358, 0.0
        %v6579 = vmax.f32 %v4360, 0.0
        %v6580 = vmax.f32 %v5031, 0.0
        %v6581 = vmax.f32 %v5033, 0.0
        %v6582 = vmax.f32 %v5704, 0.0
        %v6583 = vmax.f32 %v5706, 0.0
        %v6584 = vmax.f32 %v3689, 0.0
        %v6585 = vmax.f32 %v3691, 0.0
        %v6586 = vmax.f32 %v4362, 0.0
        %v6587 = vmax.f32 %v4364, 0.0
        %v6588 = vmax.f32 %v5035, 0.0
        %v6589 = vmax.f32 %v5037, 0.0
        %v6590 = vmax.f32 %v5708, 0.0
        %v6591 = vmax.f32 %v5710, 0.0
        %v6592 = vmax.f32 %v3695, 0.0
        %v6593 = vmax.f32 %v3697, 0.0
        %v6594 = vmax.f32 %v4368, 0.0
        %v6595 = vmax.f32 %v4370, 0.0
        %v6596 = vmax.f32 %v5041, 0.0
        %v6597 = vmax.f32 %v5043, 0.0
        %v6598 = vmax.f32 %v5714, 0.0
        %v6599 = vmax.f32 %v5716, 0.0
        %v6600 = vmax.f32 %v3699, 0.0
        %v6601 = vmax.f32 %v3701, 0.0
        %v6602 = vmax.f32 %v4372, 0.0
        %v6603 = vmax.f32 %v4374, 0.0
        %v6604 = vmax.f32 %v5045, 0.0
        %v6605 = vmax.f32 %v5047, 0.0
        %v6606 = vmax.f32 %v5718, 0.0
        %v6607 = vmax.f32 %v5720, 0.0
        %v6608 = vmax.f32 %v3705, 0.0
        %v6609 = vmax.f32 %v3707, 0.0
        %v6610 = vmax.f32 %v4378, 0.0
        %v6611 = vmax.f32 %v4380, 0.0
        %v6612 = vmax.f32 %v5051, 0.0
        %v6613 = vmax.f32 %v5053, 0.0
        %v6614 = vmax.f32 %v5724, 0.0
        %v6615 = vmax.f32 %v5726, 0.0
        %v6616 = vmax.f32 %v3709, 0.0
        %v6617 = vmax.f32 %v3711, 0.0
        %v6618 = vmax.f32 %v4382, 0.0
        %v6619 = vmax.f32 %v4384, 0.0
        %v6620 = vmax.f32 %v5055, 0.0
        %v6621 = vmax.f32 %v5057, 0.0
        %v6622 = vmax.f32 %v5728, 0.0
        %v6623 = vmax.f32 %v5730, 0.0
        %v6624 = vmax.f32 %v3715, 0.0
        %v6625 = vmax.f32 %v3717, 0.0
        %v6626 = vmax.f32 %v4388, 0.0
        %v6627 = vmax.f32 %v4390, 0.0
        %v6628 = vmax.f32 %v5061, 0.0
        %v6629 = vmax.f32 %v5063, 0.0
        %v6630 = vmax.f32 %v5734, 0.0
        %v6631 = vmax.f32 %v5736, 0.0
        %v6632 = vmax.f32 %v3719, 0.0
        %v6633 = vmax.f32 %v3721, 0.0
        %v6634 = vmax.f32 %v4392, 0.0
        %v6635 = vmax.f32 %v4394, 0.0
        %v6636 = vmax.f32 %v5065, 0.0
        %v6637 = vmax.f32 %v5067, 0.0
        %v6638 = vmax.f32 %v5738, 0.0
        %v6639 = vmax.f32 %v5740, 0.0
        %v6640 = vmax.f32 %v3725, 0.0
        %v6641 = vmax.f32 %v3727, 0.0
        %v6642 = vmax.f32 %v4398, 0.0
        %v6643 = vmax.f32 %v4400, 0.0
        %v6644 = vmax.f32 %v5071, 0.0
        %v6645 = vmax.f32 %v5073, 0.0
        %v6646 = vmax.f32 %v5744, 0.0
        %v6647 = vmax.f32 %v5746, 0.0
        %v6648 = vmax.f32 %v3729, 0.0
        %v6649 = vmax.f32 %v3731, 0.0
        %v6650 = vmax.f32 %v4402, 0.0
        %v6651 = vmax.f32 %v4404, 0.0
        %v6652 = vmax.f32 %v5075, 0.0
        %v6653 = vmax.f32 %v5077, 0.0
        %v6654 = vmax.f32 %v5748, 0.0
        %v6655 = vmax.f32 %v5750, 0.0
        %v6656 = vmax.f32 %v3735, 0.0
        %v6657 = vmax.f32 %v3737, 0.0
        %v6658 = vmax.f32 %v4408, 0.0
        %v6659 = vmax.f32 %v4410, 0.0
        %v6660 = vmax.f32 %v5081, 0.0
        %v6661 = vmax.f32 %v5083, 0.0
        %v6662 = vmax.f32 %v5754, 0.0
        %v6663 = vmax.f32 %v5756, 0.0
        %v6664 = vmax.f32 %v3739, 0.0
        %v6665 = vmax.f32 %v3741, 0.0
        %v6666 = vmax.f32 %v4412, 0.0
        %v6667 = vmax.f32 %v4414, 0.0
        %v6668 = vmax.f32 %v5085, 0.0
        %v6669 = vmax.f32 %v5087, 0.0
        %v6670 = vmax.f32 %v5758, 0.0
        %v6671 = vmax.f32 %v5760, 0.0
        %v6672 = vmax.f32 %v3745, 0.0
        %v6673 = vmax.f32 %v3747, 0.0
        %v6674 = vmax.f32 %v4418, 0.0
        %v6675 = vmax.f32 %v4420, 0.0
        %v6676 = vmax.f32 %v5091, 0.0
        %v6677 = vmax.f32 %v5093, 0.0
        %v6678 = vmax.f32 %v5764, 0.0
        %v6679 = vmax.f32 %v5766, 0.0
        %v6680 = vmax.f32 %v3749, 0.0
        %v6681 = vmax.f32 %v3751, 0.0
        %v6682 = vmax.f32 %v4422, 0.0
        %v6683 = vmax.f32 %v4424, 0.0
        %v6684 = vmax.f32 %v5095, 0.0
        %v6685 = vmax.f32 %v5097, 0.0
        %v6686 = vmax.f32 %v5768, 0.0
        %v6687 = vmax.f32 %v5770, 0.0
        %v6688 = vmax.f32 %v3755, 0.0
        %v6689 = vmax.f32 %v3757, 0.0
        %v6690 = vmax.f32 %v4428, 0.0
        %v6691 = vmax.f32 %v4430, 0.0
        %v6692 = vmax.f32 %v5101, 0.0
        %v6693 = vmax.f32 %v5103, 0.0
        %v6694 = vmax.f32 %v5774, 0.0
        %v6695 = vmax.f32 %v5776, 0.0
        %v6696 = vmax.f32 %v3759, 0.0
        %v6697 = vmax.f32 %v3761, 0.0
        %v6698 = vmax.f32 %v4432, 0.0
        %v6699 = vmax.f32 %v4434, 0.0
        %v6700 = vmax.f32 %v5105, 0.0
        %v6701 = vmax.f32 %v5107, 0.0
        %v6702 = vmax.f32 %v5778, 0.0
        %v6703 = vmax.f32 %v5780, 0.0
        %v6704 = vmax.f32 %v3765, 0.0
        %v6705 = vmax.f32 %v3767, 0.0
        %v6706 = vmax.f32 %v4438, 0.0
        %v6707 = vmax.f32 %v4440, 0.0
        %v6708 = vmax.f32 %v5111, 0.0
        %v6709 = vmax.f32 %v5113, 0.0
        %v6710 = vmax.f32 %v5784, 0.0
        %v6711 = vmax.f32 %v5786, 0.0
        %v6712 = vmax.f32 %v3769, 0.0
        %v6713 = vmax.f32 %v3771, 0.0
        %v6714 = vmax.f32 %v4442, 0.0
        %v6715 = vmax.f32 %v4444, 0.0
        %v6716 = vmax.f32 %v5115, 0.0
        %v6717 = vmax.f32 %v5117, 0.0
        %v6718 = vmax.f32 %v5788, 0.0
        %v6719 = vmax.f32 %v5790, 0.0
        %v6720 = vmax.f32 %v3775, 0.0
        %v6721 = vmax.f32 %v3777, 0.0
        %v6722 = vmax.f32 %v4448, 0.0
        %v6723 = vmax.f32 %v4450, 0.0
        %v6724 = vmax.f32 %v5121, 0.0
        %v6725 = vmax.f32 %v5123, 0.0
        %v6726 = vmax.f32 %v5794, 0.0
        %v6727 = vmax.f32 %v5796, 0.0
        %v6728 = vmax.f32 %v3779, 0.0
        %v6729 = vmax.f32 %v3781, 0.0
        %v6730 = vmax.f32 %v4452, 0.0
        %v6731 = vmax.f32 %v4454, 0.0
        %v6732 = vmax.f32 %v5125, 0.0
        %v6733 = vmax.f32 %v5127, 0.0
        %v6734 = vmax.f32 %v5798, 0.0
        %v6735 = vmax.f32 %v5800, 0.0
        %v6736 = vmax.f32 %v3785, 0.0
        %v6737 = vmax.f32 %v3787, 0.0
        %v6738 = vmax.f32 %v4458, 0.0
        %v6739 = vmax.f32 %v4460, 0.0
        %v6740 = vmax.f32 %v5131, 0.0
        %v6741 = vmax.f32 %v5133, 0.0
        %v6742 = vmax.f32 %v5804, 0.0
        %v6743 = vmax.f32 %v5806, 0.0
        %v6744 = vmax.f32 %v3789, 0.0
        %v6745 = vmax.f32 %v3791, 0.0
        %v6746 = vmax.f32 %v4462, 0.0
        %v6747 = vmax.f32 %v4464, 0.0
        %v6748 = vmax.f32 %v5135, 0.0
        %v6749 = vmax.f32 %v5137, 0.0
        %v6750 = vmax.f32 %v5808, 0.0
        %v6751 = vmax.f32 %v5810, 0.0
        %v6752 = vmax.f32 %v3795, 0.0
        %v6753 = vmax.f32 %v3797, 0.0
        %v6754 = vmax.f32 %v4468, 0.0
        %v6755 = vmax.f32 %v4470, 0.0
        %v6756 = vmax.f32 %v5141, 0.0
        %v6757 = vmax.f32 %v5143, 0.0
        %v6758 = vmax.f32 %v5814, 0.0
        %v6759 = vmax.f32 %v5816, 0.0
        %v6760 = vmax.f32 %v3799, 0.0
        %v6761 = vmax.f32 %v3801, 0.0
        %v6762 = vmax.f32 %v4472, 0.0
        %v6763 = vmax.f32 %v4474, 0.0
        %v6764 = vmax.f32 %v5145, 0.0
        %v6765 = vmax.f32 %v5147, 0.0
        %v6766 = vmax.f32 %v5818, 0.0
        %v6767 = vmax.f32 %v5820, 0.0
        %v6768 = vmax.f32 %v3805, 0.0
        %v6769 = vmax.f32 %v3807, 0.0
        %v6770 = vmax.f32 %v4478, 0.0
        %v6771 = vmax.f32 %v4480, 0.0
        %v6772 = vmax.f32 %v5151, 0.0
        %v6773 = vmax.f32 %v5153, 0.0
        %v6774 = vmax.f32 %v5824, 0.0
        %v6775 = vmax.f32 %v5826, 0.0
        %v6776 = vmax.f32 %v3809, 0.0
        %v6777 = vmax.f32 %v3811, 0.0
        %v6778 = vmax.f32 %v4482, 0.0
        %v6779 = vmax.f32 %v4484, 0.0
        %v6780 = vmax.f32 %v5155, 0.0
        %v6781 = vmax.f32 %v5157, 0.0
        %v6782 = vmax.f32 %v5828, 0.0
        %v6783 = vmax.f32 %v5830, 0.0
        %v6784 = vmax.f32 %v3815, 0.0
        %v6785 = vmax.f32 %v3817, 0.0
        %v6786 = vmax.f32 %v4488, 0.0
        %v6787 = vmax.f32 %v4490, 0.0
        %v6788 = vmax.f32 %v5161, 0.0
        %v6789 = vmax.f32 %v5163, 0.0
        %v6790 = vmax.f32 %v5834, 0.0
        %v6791 = vmax.f32 %v5836, 0.0
        %v6792 = vmax.f32 %v3819, 0.0
        %v6793 = vmax.f32 %v3821, 0.0
        %v6794 = vmax.f32 %v4492, 0.0
        %v6795 = vmax.f32 %v4494, 0.0
        %v6796 = vmax.f32 %v5165, 0.0
        %v6797 = vmax.f32 %v5167, 0.0
        %v6798 = vmax.f32 %v5838, 0.0
        %v6799 = vmax.f32 %v5840, 0.0
        %v6800 = vmax.f32 %v3825, 0.0
        %v6801 = vmax.f32 %v3827, 0.0
        %v6802 = vmax.f32 %v4498, 0.0
        %v6803 = vmax.f32 %v4500, 0.0
        %v6804 = vmax.f32 %v5171, 0.0
        %v6805 = vmax.f32 %v5173, 0.0
        %v6806 = vmax.f32 %v5844, 0.0
        %v6807 = vmax.f32 %v5846, 0.0
        %v6808 = vmax.f32 %v3829, 0.0
        %v6809 = vmax.f32 %v3831, 0.0
        %v6810 = vmax.f32 %v4502, 0.0
        %v6811 = vmax.f32 %v4504, 0.0
        %v6812 = vmax.f32 %v5175, 0.0
        %v6813 = vmax.f32 %v5177, 0.0
        %v6814 = vmax.f32 %v5848, 0.0
        %v6815 = vmax.f32 %v5850, 0.0
        %v6816 = vmax.f32 %v3835, 0.0
        %v6817 = vmax.f32 %v3837, 0.0
        %v6818 = vmax.f32 %v4508, 0.0
        %v6819 = vmax.f32 %v4510, 0.0
        %v6820 = vmax.f32 %v5181, 0.0
        %v6821 = vmax.f32 %v5183, 0.0
        %v6822 = vmax.f32 %v5854, 0.0
        %v6823 = vmax.f32 %v5856, 0.0
        %v6824 = vmax.f32 %v3839, 0.0
        %v6825 = vmax.f32 %v3841, 0.0
        %v6826 = vmax.f32 %v4512, 0.0
        %v6827 = vmax.f32 %v4514, 0.0
        %v6828 = vmax.f32 %v5185, 0.0
        %v6829 = vmax.f32 %v5187, 0.0
        %v6830 = vmax.f32 %v5858, 0.0
        %v6831 = vmax.f32 %v5860, 0.0
        %v6832 = vmax.f32 %v3845, 0.0
        %v6833 = vmax.f32 %v3847, 0.0
        %v6834 = vmax.f32 %v4518, 0.0
        %v6835 = vmax.f32 %v4520, 0.0
        %v6836 = vmax.f32 %v5191, 0.0
        %v6837 = vmax.f32 %v5193, 0.0
        %v6838 = vmax.f32 %v5864, 0.0
        %v6839 = vmax.f32 %v5866, 0.0
        %v6840 = vmax.f32 %v3849, 0.0
        %v6841 = vmax.f32 %v3851, 0.0
        %v6842 = vmax.f32 %v4522, 0.0
        %v6843 = vmax.f32 %v4524, 0.0
        %v6844 = vmax.f32 %v5195, 0.0
        %v6845 = vmax.f32 %v5197, 0.0
        %v6846 = vmax.f32 %v5868, 0.0
        %v6847 = vmax.f32 %v5870, 0.0
        %v6848 = vmax.f32 %v3855, 0.0
        %v6849 = vmax.f32 %v3857, 0.0
        %v6850 = vmax.f32 %v4528, 0.0
        %v6851 = vmax.f32 %v4530, 0.0
        %v6852 = vmax.f32 %v5201, 0.0
        %v6853 = vmax.f32 %v5203, 0.0
        %v6854 = vmax.f32 %v5874, 0.0
        %v6855 = vmax.f32 %v5876, 0.0
        %v6856 = vmax.f32 %v3859, 0.0
        %v6857 = vmax.f32 %v3861, 0.0
        %v6858 = vmax.f32 %v4532, 0.0
        %v6859 = vmax.f32 %v4534, 0.0
        %v6860 = vmax.f32 %v5205, 0.0
        %v6861 = vmax.f32 %v5207, 0.0
        %v6862 = vmax.f32 %v5878, 0.0
        %v6863 = vmax.f32 %v5880, 0.0
        %v6864 = vmax.f32 %v3865, 0.0
        %v6865 = vmax.f32 %v3867, 0.0
        %v6866 = vmax.f32 %v4538, 0.0
        %v6867 = vmax.f32 %v4540, 0.0
        %v6868 = vmax.f32 %v5211, 0.0
        %v6869 = vmax.f32 %v5213, 0.0
        %v6870 = vmax.f32 %v5884, 0.0
        %v6871 = vmax.f32 %v5886, 0.0
        %v6872 = vmax.f32 %v3869, 0.0
        %v6873 = vmax.f32 %v3871, 0.0
        %v6874 = vmax.f32 %v4542, 0.0
        %v6875 = vmax.f32 %v4544, 0.0
        %v6876 = vmax.f32 %v5215, 0.0
        %v6877 = vmax.f32 %v5217, 0.0
        %v6878 = vmax.f32 %v5888, 0.0
        %v6879 = vmax.f32 %v5890, 0.0
        %v6880 = vmax.f32 %v3875, 0.0
        %v6881 = vmax.f32 %v3877, 0.0
        %v6882 = vmax.f32 %v4548, 0.0
        %v6883 = vmax.f32 %v4550, 0.0
        %v6884 = vmax.f32 %v5221, 0.0
        %v6885 = vmax.f32 %v5223, 0.0
        %v6886 = vmax.f32 %v5894, 0.0
        %v6887 = vmax.f32 %v5896, 0.0
        %v6888 = vmax.f32 %v3879, 0.0
        %v6889 = vmax.f32 %v3881, 0.0
        %v6890 = vmax.f32 %v4552, 0.0
        %v6891 = vmax.f32 %v4554, 0.0
        %v6892 = vmax.f32 %v5225, 0.0
        %v6893 = vmax.f32 %v5227, 0.0
        %v6894 = vmax.f32 %v5898, 0.0
        %v6895 = vmax.f32 %v5900, 0.0
        %v6896 = vmax.f32 %v3885, 0.0
        %v6897 = vmax.f32 %v3887, 0.0
        %v6898 = vmax.f32 %v4558, 0.0
        %v6899 = vmax.f32 %v4560, 0.0
        %v6900 = vmax.f32 %v5231, 0.0
        %v6901 = vmax.f32 %v5233, 0.0
        %v6902 = vmax.f32 %v5904, 0.0
        %v6903 = vmax.f32 %v5906, 0.0
        %v6904 = vmax.f32 %v3889, 0.0
        %v6905 = vmax.f32 %v3891, 0.0
        %v6906 = vmax.f32 %v4562, 0.0
        %v6907 = vmax.f32 %v4564, 0.0
        %v6908 = vmax.f32 %v5235, 0.0
        %v6909 = vmax.f32 %v5237, 0.0
        %v6910 = vmax.f32 %v5908, 0.0
        %v6911 = vmax.f32 %v5910, 0.0
        %v6912 = vmax.f32 %v3895, 0.0
        %v6913 = vmax.f32 %v3897, 0.0
        %v6914 = vmax.f32 %v4568, 0.0
        %v6915 = vmax.f32 %v4570, 0.0
        %v6916 = vmax.f32 %v5241, 0.0
        %v6917 = vmax.f32 %v5243, 0.0
        %v6918 = vmax.f32 %v5914, 0.0
        %v6919 = vmax.f32 %v5916, 0.0
        %v6920 = vmax.f32 %v3899, 0.0
        %v6921 = vmax.f32 %v3901, 0.0
        %v6922 = vmax.f32 %v4572, 0.0
        %v6923 = vmax.f32 %v4574, 0.0
        %v6924 = vmax.f32 %v5245, 0.0
        %v6925 = vmax.f32 %v5247, 0.0
        %v6926 = vmax.f32 %v5918, 0.0
        %v6927 = vmax.f32 %v5920, 0.0
        %v6928 = vmax.f32 %v3905, 0.0
        %v6929 = vmax.f32 %v3907, 0.0
        %v6930 = vmax.f32 %v4578, 0.0
        %v6931 = vmax.f32 %v4580, 0.0
        %v6932 = vmax.f32 %v5251, 0.0
        %v6933 = vmax.f32 %v5253, 0.0
        %v6934 = vmax.f32 %v5924, 0.0
        %v6935 = vmax.f32 %v5926, 0.0
        %v6936 = vmax.f32 %v3909, 0.0
        %v6937 = vmax.f32 %v3911, 0.0
        %v6938 = vmax.f32 %v4582, 0.0
        %v6939 = vmax.f32 %v4584, 0.0
        %v6940 = vmax.f32 %v5255, 0.0
        %v6941 = vmax.f32 %v5257, 0.0
        %v6942 = vmax.f32 %v5928, 0.0
        %v6943 = vmax.f32 %v5930, 0.0
        %v6944 = vmax.f32 %v3915, 0.0
        %v6945 = vmax.f32 %v3917, 0.0
        %v6946 = vmax.f32 %v4588, 0.0
        %v6947 = vmax.f32 %v4590, 0.0
        %v6948 = vmax.f32 %v5261, 0.0
        %v6949 = vmax.f32 %v5263, 0.0
        %v6950 = vmax.f32 %v5934, 0.0
        %v6951 = vmax.f32 %v5936, 0.0
        %v6952 = vmax.f32 %v3919, 0.0
        %v6953 = vmax.f32 %v3921, 0.0
        %v6954 = vmax.f32 %v4592, 0.0
        %v6955 = vmax.f32 %v4594, 0.0
        %v6956 = vmax.f32 %v5265, 0.0
        %v6957 = vmax.f32 %v5267, 0.0
        %v6958 = vmax.f32 %v5938, 0.0
        %v6959 = vmax.f32 %v5940, 0.0
        %v6960 = vmax.f32 %v3925, 0.0
        %v6961 = vmax.f32 %v3927, 0.0
        %v6962 = vmax.f32 %v4598, 0.0
        %v6963 = vmax.f32 %v4600, 0.0
        %v6964 = vmax.f32 %v5271, 0.0
        %v6965 = vmax.f32 %v5273, 0.0
        %v6966 = vmax.f32 %v5944, 0.0
        %v6967 = vmax.f32 %v5946, 0.0
        %v6968 = vmax.f32 %v3929, 0.0
        %v6969 = vmax.f32 %v3931, 0.0
        %v6970 = vmax.f32 %v4602, 0.0
        %v6971 = vmax.f32 %v4604, 0.0
        %v6972 = vmax.f32 %v5275, 0.0
        %v6973 = vmax.f32 %v5277, 0.0
        %v6974 = vmax.f32 %v5948, 0.0
        %v6975 = vmax.f32 %v5950, 0.0
        %v6976 = vpack.c.bf16 %v5960, %v5952
        %v6977 = vpack.c.bf16 %v5961, %v5953
        %v6978 = vpack.c.bf16 %v5962, %v5954
        %v6979 = vpack.c.bf16 %v5963, %v5955
        %v6980 = vpack.c.bf16 %v5964, %v5956
        %v6981 = vpack.c.bf16 %v5965, %v5957
        %v6982 = vpack.c.bf16 %v5966, %v5958
        %v6983 = vpack.c.bf16 %v5967, %v5959
        %v6984 = vpack.c.bf16 %v5976, %v5968
        %v6985 = vpack.c.bf16 %v5977, %v5969
        %v6986 = vpack.c.bf16 %v5978, %v5970
        %v6987 = vpack.c.bf16 %v5979, %v5971
        %v6988 = vpack.c.bf16 %v5980, %v5972
        %v6989 = vpack.c.bf16 %v5981, %v5973
        %v6990 = vpack.c.bf16 %v5982, %v5974
        %v6991 = vpack.c.bf16 %v5983, %v5975
        %v6992 = vpack.c.bf16 %v5992, %v5984
        %v6993 = vpack.c.bf16 %v5993, %v5985
        %v6994 = vpack.c.bf16 %v5994, %v5986
        %v6995 = vpack.c.bf16 %v5995, %v5987
        %v6996 = vpack.c.bf16 %v5996, %v5988
        %v6997 = vpack.c.bf16 %v5997, %v5989
        %v6998 = vpack.c.bf16 %v5998, %v5990
        %v6999 = vpack.c.bf16 %v5999, %v5991
        %v7000 = vpack.c.bf16 %v6008, %v6000
        %v7001 = vpack.c.bf16 %v6009, %v6001
        %v7002 = vpack.c.bf16 %v6010, %v6002
        %v7003 = vpack.c.bf16 %v6011, %v6003
        %v7004 = vpack.c.bf16 %v6012, %v6004
        %v7005 = vpack.c.bf16 %v6013, %v6005
        %v7006 = vpack.c.bf16 %v6014, %v6006
        %v7007 = vpack.c.bf16 %v6015, %v6007
        %v7008 = vpack.c.bf16 %v6024, %v6016
        %v7009 = vpack.c.bf16 %v6025, %v6017
        %v7010 = vpack.c.bf16 %v6026, %v6018
        %v7011 = vpack.c.bf16 %v6027, %v6019
        %v7012 = vpack.c.bf16 %v6028, %v6020
        %v7013 = vpack.c.bf16 %v6029, %v6021
        %v7014 = vpack.c.bf16 %v6030, %v6022
        %v7015 = vpack.c.bf16 %v6031, %v6023
        %v7016 = vpack.c.bf16 %v6040, %v6032
        %v7017 = vpack.c.bf16 %v6041, %v6033
        %v7018 = vpack.c.bf16 %v6042, %v6034
        %v7019 = vpack.c.bf16 %v6043, %v6035
        %v7020 = vpack.c.bf16 %v6044, %v6036
        %v7021 = vpack.c.bf16 %v6045, %v6037
        %v7022 = vpack.c.bf16 %v6046, %v6038
        %v7023 = vpack.c.bf16 %v6047, %v6039
        %v7024 = vpack.c.bf16 %v6056, %v6048
        %v7025 = vpack.c.bf16 %v6057, %v6049
        %v7026 = vpack.c.bf16 %v6058, %v6050
        %v7027 = vpack.c.bf16 %v6059, %v6051
        %v7028 = vpack.c.bf16 %v6060, %v6052
        %v7029 = vpack.c.bf16 %v6061, %v6053
        %v7030 = vpack.c.bf16 %v6062, %v6054
        %v7031 = vpack.c.bf16 %v6063, %v6055
        %v7032 = vpack.c.bf16 %v6072, %v6064
        %v7033 = vpack.c.bf16 %v6073, %v6065
        %v7034 = vpack.c.bf16 %v6074, %v6066
        %v7035 = vpack.c.bf16 %v6075, %v6067
        %v7036 = vpack.c.bf16 %v6076, %v6068
        %v7037 = vpack.c.bf16 %v6077, %v6069
        %v7038 = vpack.c.bf16 %v6078, %v6070
        %v7039 = vpack.c.bf16 %v6079, %v6071
        %v7040 = vpack.c.bf16 %v6088, %v6080
        %v7041 = vpack.c.bf16 %v6089, %v6081
        %v7042 = vpack.c.bf16 %v6090, %v6082
        %v7043 = vpack.c.bf16 %v6091, %v6083
        %v7044 = vpack.c.bf16 %v6092, %v6084
        %v7045 = vpack.c.bf16 %v6093, %v6085
        %v7046 = vpack.c.bf16 %v6094, %v6086
        %v7047 = vpack.c.bf16 %v6095, %v6087
        %v7048 = vpack.c.bf16 %v6104, %v6096
        %v7049 = vpack.c.bf16 %v6105, %v6097
        %v7050 = vpack.c.bf16 %v6106, %v6098
        %v7051 = vpack.c.bf16 %v6107, %v6099
        %v7052 = vpack.c.bf16 %v6108, %v6100
        %v7053 = vpack.c.bf16 %v6109, %v6101
        %v7054 = vpack.c.bf16 %v6110, %v6102
        %v7055 = vpack.c.bf16 %v6111, %v6103
        %v7056 = vpack.c.bf16 %v6120, %v6112
        %v7057 = vpack.c.bf16 %v6121, %v6113
        %v7058 = vpack.c.bf16 %v6122, %v6114
        %v7059 = vpack.c.bf16 %v6123, %v6115
        %v7060 = vpack.c.bf16 %v6124, %v6116
        %v7061 = vpack.c.bf16 %v6125, %v6117
        %v7062 = vpack.c.bf16 %v6126, %v6118
        %v7063 = vpack.c.bf16 %v6127, %v6119
        %v7064 = vpack.c.bf16 %v6136, %v6128
        %v7065 = vpack.c.bf16 %v6137, %v6129
        %v7066 = vpack.c.bf16 %v6138, %v6130
        %v7067 = vpack.c.bf16 %v6139, %v6131
        %v7068 = vpack.c.bf16 %v6140, %v6132
        %v7069 = vpack.c.bf16 %v6141, %v6133
        %v7070 = vpack.c.bf16 %v6142, %v6134
        %v7071 = vpack.c.bf16 %v6143, %v6135
        %v7072 = vpack.c.bf16 %v6152, %v6144
        %v7073 = vpack.c.bf16 %v6153, %v6145
        %v7074 = vpack.c.bf16 %v6154, %v6146
        %v7075 = vpack.c.bf16 %v6155, %v6147
        %v7076 = vpack.c.bf16 %v6156, %v6148
        %v7077 = vpack.c.bf16 %v6157, %v6149
        %v7078 = vpack.c.bf16 %v6158, %v6150
        %v7079 = vpack.c.bf16 %v6159, %v6151
        %v7080 = vpack.c.bf16 %v6168, %v6160
        %v7081 = vpack.c.bf16 %v6169, %v6161
        %v7082 = vpack.c.bf16 %v6170, %v6162
        %v7083 = vpack.c.bf16 %v6171, %v6163
        %v7084 = vpack.c.bf16 %v6172, %v6164
        %v7085 = vpack.c.bf16 %v6173, %v6165
        %v7086 = vpack.c.bf16 %v6174, %v6166
        %v7087 = vpack.c.bf16 %v6175, %v6167
        %v7088 = vpack.c.bf16 %v6184, %v6176
        %v7089 = vpack.c.bf16 %v6185, %v6177
        %v7090 = vpack.c.bf16 %v6186, %v6178
        %v7091 = vpack.c.bf16 %v6187, %v6179
        %v7092 = vpack.c.bf16 %v6188, %v6180
        %v7093 = vpack.c.bf16 %v6189, %v6181
        %v7094 = vpack.c.bf16 %v6190, %v6182
        %v7095 = vpack.c.bf16 %v6191, %v6183
        %v7096 = vpack.c.bf16 %v6200, %v6192
        %v7097 = vpack.c.bf16 %v6201, %v6193
        %v7098 = vpack.c.bf16 %v6202, %v6194
        %v7099 = vpack.c.bf16 %v6203, %v6195
        %v7100 = vpack.c.bf16 %v6204, %v6196
        %v7101 = vpack.c.bf16 %v6205, %v6197
        %v7102 = vpack.c.bf16 %v6206, %v6198
        %v7103 = vpack.c.bf16 %v6207, %v6199
        %v7104 = vpack.c.bf16 %v6216, %v6208
        %v7105 = vpack.c.bf16 %v6217, %v6209
        %v7106 = vpack.c.bf16 %v6218, %v6210
        %v7107 = vpack.c.bf16 %v6219, %v6211
        %v7108 = vpack.c.bf16 %v6220, %v6212
        %v7109 = vpack.c.bf16 %v6221, %v6213
        %v7110 = vpack.c.bf16 %v6222, %v6214
        %v7111 = vpack.c.bf16 %v6223, %v6215
        %v7112 = vpack.c.bf16 %v6232, %v6224
        %v7113 = vpack.c.bf16 %v6233, %v6225
        %v7114 = vpack.c.bf16 %v6234, %v6226
        %v7115 = vpack.c.bf16 %v6235, %v6227
        %v7116 = vpack.c.bf16 %v6236, %v6228
        %v7117 = vpack.c.bf16 %v6237, %v6229
        %v7118 = vpack.c.bf16 %v6238, %v6230
        %v7119 = vpack.c.bf16 %v6239, %v6231
        %v7120 = vpack.c.bf16 %v6248, %v6240
        %v7121 = vpack.c.bf16 %v6249, %v6241
        %v7122 = vpack.c.bf16 %v6250, %v6242
        %v7123 = vpack.c.bf16 %v6251, %v6243
        %v7124 = vpack.c.bf16 %v6252, %v6244
        %v7125 = vpack.c.bf16 %v6253, %v6245
        %v7126 = vpack.c.bf16 %v6254, %v6246
        %v7127 = vpack.c.bf16 %v6255, %v6247
        %v7128 = vpack.c.bf16 %v6264, %v6256
        %v7129 = vpack.c.bf16 %v6265, %v6257
        %v7130 = vpack.c.bf16 %v6266, %v6258
        %v7131 = vpack.c.bf16 %v6267, %v6259
        %v7132 = vpack.c.bf16 %v6268, %v6260
        %v7133 = vpack.c.bf16 %v6269, %v6261
        %v7134 = vpack.c.bf16 %v6270, %v6262
        %v7135 = vpack.c.bf16 %v6271, %v6263
        %v7136 = vpack.c.bf16 %v6280, %v6272
        %v7137 = vpack.c.bf16 %v6281, %v6273
        %v7138 = vpack.c.bf16 %v6282, %v6274
        %v7139 = vpack.c.bf16 %v6283, %v6275
        %v7140 = vpack.c.bf16 %v6284, %v6276
        %v7141 = vpack.c.bf16 %v6285, %v6277
        %v7142 = vpack.c.bf16 %v6286, %v6278
        %v7143 = vpack.c.bf16 %v6287, %v6279
        %v7144 = vpack.c.bf16 %v6296, %v6288
        %v7145 = vpack.c.bf16 %v6297, %v6289
        %v7146 = vpack.c.bf16 %v6298, %v6290
        %v7147 = vpack.c.bf16 %v6299, %v6291
        %v7148 = vpack.c.bf16 %v6300, %v6292
        %v7149 = vpack.c.bf16 %v6301, %v6293
        %v7150 = vpack.c.bf16 %v6302, %v6294
        %v7151 = vpack.c.bf16 %v6303, %v6295
        %v7152 = vpack.c.bf16 %v6312, %v6304
        %v7153 = vpack.c.bf16 %v6313, %v6305
        %v7154 = vpack.c.bf16 %v6314, %v6306
        %v7155 = vpack.c.bf16 %v6315, %v6307
        %v7156 = vpack.c.bf16 %v6316, %v6308
        %v7157 = vpack.c.bf16 %v6317, %v6309
        %v7158 = vpack.c.bf16 %v6318, %v6310
        %v7159 = vpack.c.bf16 %v6319, %v6311
        %v7160 = vpack.c.bf16 %v6328, %v6320
        %v7161 = vpack.c.bf16 %v6329, %v6321
        %v7162 = vpack.c.bf16 %v6330, %v6322
        %v7163 = vpack.c.bf16 %v6331, %v6323
        %v7164 = vpack.c.bf16 %v6332, %v6324
        %v7165 = vpack.c.bf16 %v6333, %v6325
        %v7166 = vpack.c.bf16 %v6334, %v6326
        %v7167 = vpack.c.bf16 %v6335, %v6327
        %v7168 = vpack.c.bf16 %v6344, %v6336
        %v7169 = vpack.c.bf16 %v6345, %v6337
        %v7170 = vpack.c.bf16 %v6346, %v6338
        %v7171 = vpack.c.bf16 %v6347, %v6339
        %v7172 = vpack.c.bf16 %v6348, %v6340
        %v7173 = vpack.c.bf16 %v6349, %v6341
        %v7174 = vpack.c.bf16 %v6350, %v6342
        %v7175 = vpack.c.bf16 %v6351, %v6343
        %v7176 = vpack.c.bf16 %v6360, %v6352
        %v7177 = vpack.c.bf16 %v6361, %v6353
        %v7178 = vpack.c.bf16 %v6362, %v6354
        %v7179 = vpack.c.bf16 %v6363, %v6355
        %v7180 = vpack.c.bf16 %v6364, %v6356
        %v7181 = vpack.c.bf16 %v6365, %v6357
        %v7182 = vpack.c.bf16 %v6366, %v6358
        %v7183 = vpack.c.bf16 %v6367, %v6359
        %v7184 = vpack.c.bf16 %v6376, %v6368
        %v7185 = vpack.c.bf16 %v6377, %v6369
        %v7186 = vpack.c.bf16 %v6378, %v6370
        %v7187 = vpack.c.bf16 %v6379, %v6371
        %v7188 = vpack.c.bf16 %v6380, %v6372
        %v7189 = vpack.c.bf16 %v6381, %v6373
        %v7190 = vpack.c.bf16 %v6382, %v6374
        %v7191 = vpack.c.bf16 %v6383, %v6375
        %v7192 = vpack.c.bf16 %v6392, %v6384
        %v7193 = vpack.c.bf16 %v6393, %v6385
        %v7194 = vpack.c.bf16 %v6394, %v6386
        %v7195 = vpack.c.bf16 %v6395, %v6387
        %v7196 = vpack.c.bf16 %v6396, %v6388
        %v7197 = vpack.c.bf16 %v6397, %v6389
        %v7198 = vpack.c.bf16 %v6398, %v6390
        %v7199 = vpack.c.bf16 %v6399, %v6391
        %v7200 = vpack.c.bf16 %v6408, %v6400
        %v7201 = vpack.c.bf16 %v6409, %v6401
        %v7202 = vpack.c.bf16 %v6410, %v6402
        %v7203 = vpack.c.bf16 %v6411, %v6403
        %v7204 = vpack.c.bf16 %v6412, %v6404
        %v7205 = vpack.c.bf16 %v6413, %v6405
        %v7206 = vpack.c.bf16 %v6414, %v6406
        %v7207 = vpack.c.bf16 %v6415, %v6407
        %v7208 = vpack.c.bf16 %v6424, %v6416
        %v7209 = vpack.c.bf16 %v6425, %v6417
        %v7210 = vpack.c.bf16 %v6426, %v6418
        %v7211 = vpack.c.bf16 %v6427, %v6419
        %v7212 = vpack.c.bf16 %v6428, %v6420
        %v7213 = vpack.c.bf16 %v6429, %v6421
        %v7214 = vpack.c.bf16 %v6430, %v6422
        %v7215 = vpack.c.bf16 %v6431, %v6423
        %v7216 = vpack.c.bf16 %v6440, %v6432
        %v7217 = vpack.c.bf16 %v6441, %v6433
        %v7218 = vpack.c.bf16 %v6442, %v6434
        %v7219 = vpack.c.bf16 %v6443, %v6435
        %v7220 = vpack.c.bf16 %v6444, %v6436
        %v7221 = vpack.c.bf16 %v6445, %v6437
        %v7222 = vpack.c.bf16 %v6446, %v6438
        %v7223 = vpack.c.bf16 %v6447, %v6439
        %v7224 = vpack.c.bf16 %v6456, %v6448
        %v7225 = vpack.c.bf16 %v6457, %v6449
        %v7226 = vpack.c.bf16 %v6458, %v6450
        %v7227 = vpack.c.bf16 %v6459, %v6451
        %v7228 = vpack.c.bf16 %v6460, %v6452
        %v7229 = vpack.c.bf16 %v6461, %v6453
        %v7230 = vpack.c.bf16 %v6462, %v6454
        %v7231 = vpack.c.bf16 %v6463, %v6455
        %v7232 = vpack.c.bf16 %v6472, %v6464
        %v7233 = vpack.c.bf16 %v6473, %v6465
        %v7234 = vpack.c.bf16 %v6474, %v6466
        %v7235 = vpack.c.bf16 %v6475, %v6467
        %v7236 = vpack.c.bf16 %v6476, %v6468
        %v7237 = vpack.c.bf16 %v6477, %v6469
        %v7238 = vpack.c.bf16 %v6478, %v6470
        %v7239 = vpack.c.bf16 %v6479, %v6471
        %v7240 = vpack.c.bf16 %v6488, %v6480
        %v7241 = vpack.c.bf16 %v6489, %v6481
        %v7242 = vpack.c.bf16 %v6490, %v6482
        %v7243 = vpack.c.bf16 %v6491, %v6483
        %v7244 = vpack.c.bf16 %v6492, %v6484
        %v7245 = vpack.c.bf16 %v6493, %v6485
        %v7246 = vpack.c.bf16 %v6494, %v6486
        %v7247 = vpack.c.bf16 %v6495, %v6487
        %v7248 = vpack.c.bf16 %v6504, %v6496
        %v7249 = vpack.c.bf16 %v6505, %v6497
        %v7250 = vpack.c.bf16 %v6506, %v6498
        %v7251 = vpack.c.bf16 %v6507, %v6499
        %v7252 = vpack.c.bf16 %v6508, %v6500
        %v7253 = vpack.c.bf16 %v6509, %v6501
        %v7254 = vpack.c.bf16 %v6510, %v6502
        %v7255 = vpack.c.bf16 %v6511, %v6503
        %v7256 = vpack.c.bf16 %v6520, %v6512
        %v7257 = vpack.c.bf16 %v6521, %v6513
        %v7258 = vpack.c.bf16 %v6522, %v6514
        %v7259 = vpack.c.bf16 %v6523, %v6515
        %v7260 = vpack.c.bf16 %v6524, %v6516
        %v7261 = vpack.c.bf16 %v6525, %v6517
        %v7262 = vpack.c.bf16 %v6526, %v6518
        %v7263 = vpack.c.bf16 %v6527, %v6519
        %v7264 = vpack.c.bf16 %v6536, %v6528
        %v7265 = vpack.c.bf16 %v6537, %v6529
        %v7266 = vpack.c.bf16 %v6538, %v6530
        %v7267 = vpack.c.bf16 %v6539, %v6531
        %v7268 = vpack.c.bf16 %v6540, %v6532
        %v7269 = vpack.c.bf16 %v6541, %v6533
        %v7270 = vpack.c.bf16 %v6542, %v6534
        %v7271 = vpack.c.bf16 %v6543, %v6535
        %v7272 = vpack.c.bf16 %v6552, %v6544
        %v7273 = vpack.c.bf16 %v6553, %v6545
        %v7274 = vpack.c.bf16 %v6554, %v6546
        %v7275 = vpack.c.bf16 %v6555, %v6547
        %v7276 = vpack.c.bf16 %v6556, %v6548
        %v7277 = vpack.c.bf16 %v6557, %v6549
        %v7278 = vpack.c.bf16 %v6558, %v6550
        %v7279 = vpack.c.bf16 %v6559, %v6551
        %v7280 = vpack.c.bf16 %v6568, %v6560
        %v7281 = vpack.c.bf16 %v6569, %v6561
        %v7282 = vpack.c.bf16 %v6570, %v6562
        %v7283 = vpack.c.bf16 %v6571, %v6563
        %v7284 = vpack.c.bf16 %v6572, %v6564
        %v7285 = vpack.c.bf16 %v6573, %v6565
        %v7286 = vpack.c.bf16 %v6574, %v6566
        %v7287 = vpack.c.bf16 %v6575, %v6567
        %v7288 = vpack.c.bf16 %v6584, %v6576
        %v7289 = vpack.c.bf16 %v6585, %v6577
        %v7290 = vpack.c.bf16 %v6586, %v6578
        %v7291 = vpack.c.bf16 %v6587, %v6579
        %v7292 = vpack.c.bf16 %v6588, %v6580
        %v7293 = vpack.c.bf16 %v6589, %v6581
        %v7294 = vpack.c.bf16 %v6590, %v6582
        %v7295 = vpack.c.bf16 %v6591, %v6583
        %v7296 = vpack.c.bf16 %v6600, %v6592
        %v7297 = vpack.c.bf16 %v6601, %v6593
        %v7298 = vpack.c.bf16 %v6602, %v6594
        %v7299 = vpack.c.bf16 %v6603, %v6595
        %v7300 = vpack.c.bf16 %v6604, %v6596
        %v7301 = vpack.c.bf16 %v6605, %v6597
        %v7302 = vpack.c.bf16 %v6606, %v6598
        %v7303 = vpack.c.bf16 %v6607, %v6599
        %v7304 = vpack.c.bf16 %v6616, %v6608
        %v7305 = vpack.c.bf16 %v6617, %v6609
        %v7306 = vpack.c.bf16 %v6618, %v6610
        %v7307 = vpack.c.bf16 %v6619, %v6611
        %v7308 = vpack.c.bf16 %v6620, %v6612
        %v7309 = vpack.c.bf16 %v6621, %v6613
        %v7310 = vpack.c.bf16 %v6622, %v6614
        %v7311 = vpack.c.bf16 %v6623, %v6615
        %v7312 = vpack.c.bf16 %v6632, %v6624
        %v7313 = vpack.c.bf16 %v6633, %v6625
        %v7314 = vpack.c.bf16 %v6634, %v6626
        %v7315 = vpack.c.bf16 %v6635, %v6627
        %v7316 = vpack.c.bf16 %v6636, %v6628
        %v7317 = vpack.c.bf16 %v6637, %v6629
        %v7318 = vpack.c.bf16 %v6638, %v6630
        %v7319 = vpack.c.bf16 %v6639, %v6631
        %v7320 = vpack.c.bf16 %v6648, %v6640
        %v7321 = vpack.c.bf16 %v6649, %v6641
        %v7322 = vpack.c.bf16 %v6650, %v6642
        %v7323 = vpack.c.bf16 %v6651, %v6643
        %v7324 = vpack.c.bf16 %v6652, %v6644
        %v7325 = vpack.c.bf16 %v6653, %v6645
        %v7326 = vpack.c.bf16 %v6654, %v6646
        %v7327 = vpack.c.bf16 %v6655, %v6647
        %v7328 = vpack.c.bf16 %v6664, %v6656
        %v7329 = vpack.c.bf16 %v6665, %v6657
        %v7330 = vpack.c.bf16 %v6666, %v6658
        %v7331 = vpack.c.bf16 %v6667, %v6659
        %v7332 = vpack.c.bf16 %v6668, %v6660
        %v7333 = vpack.c.bf16 %v6669, %v6661
        %v7334 = vpack.c.bf16 %v6670, %v6662
        %v7335 = vpack.c.bf16 %v6671, %v6663
        %v7336 = vpack.c.bf16 %v6680, %v6672
        %v7337 = vpack.c.bf16 %v6681, %v6673
        %v7338 = vpack.c.bf16 %v6682, %v6674
        %v7339 = vpack.c.bf16 %v6683, %v6675
        %v7340 = vpack.c.bf16 %v6684, %v6676
        %v7341 = vpack.c.bf16 %v6685, %v6677
        %v7342 = vpack.c.bf16 %v6686, %v6678
        %v7343 = vpack.c.bf16 %v6687, %v6679
        %v7344 = vpack.c.bf16 %v6696, %v6688
        %v7345 = vpack.c.bf16 %v6697, %v6689
        %v7346 = vpack.c.bf16 %v6698, %v6690
        %v7347 = vpack.c.bf16 %v6699, %v6691
        %v7348 = vpack.c.bf16 %v6700, %v6692
        %v7349 = vpack.c.bf16 %v6701, %v6693
        %v7350 = vpack.c.bf16 %v6702, %v6694
        %v7351 = vpack.c.bf16 %v6703, %v6695
        %v7352 = vpack.c.bf16 %v6712, %v6704
        %v7353 = vpack.c.bf16 %v6713, %v6705
        %v7354 = vpack.c.bf16 %v6714, %v6706
        %v7355 = vpack.c.bf16 %v6715, %v6707
        %v7356 = vpack.c.bf16 %v6716, %v6708
        %v7357 = vpack.c.bf16 %v6717, %v6709
        %v7358 = vpack.c.bf16 %v6718, %v6710
        %v7359 = vpack.c.bf16 %v6719, %v6711
        %v7360 = vpack.c.bf16 %v6728, %v6720
        %v7361 = vpack.c.bf16 %v6729, %v6721
        %v7362 = vpack.c.bf16 %v6730, %v6722
        %v7363 = vpack.c.bf16 %v6731, %v6723
        %v7364 = vpack.c.bf16 %v6732, %v6724
        %v7365 = vpack.c.bf16 %v6733, %v6725
        %v7366 = vpack.c.bf16 %v6734, %v6726
        %v7367 = vpack.c.bf16 %v6735, %v6727
        %v7368 = vpack.c.bf16 %v6744, %v6736
        %v7369 = vpack.c.bf16 %v6745, %v6737
        %v7370 = vpack.c.bf16 %v6746, %v6738
        %v7371 = vpack.c.bf16 %v6747, %v6739
        %v7372 = vpack.c.bf16 %v6748, %v6740
        %v7373 = vpack.c.bf16 %v6749, %v6741
        %v7374 = vpack.c.bf16 %v6750, %v6742
        %v7375 = vpack.c.bf16 %v6751, %v6743
        %v7376 = vpack.c.bf16 %v6760, %v6752
        %v7377 = vpack.c.bf16 %v6761, %v6753
        %v7378 = vpack.c.bf16 %v6762, %v6754
        %v7379 = vpack.c.bf16 %v6763, %v6755
        %v7380 = vpack.c.bf16 %v6764, %v6756
        %v7381 = vpack.c.bf16 %v6765, %v6757
        %v7382 = vpack.c.bf16 %v6766, %v6758
        %v7383 = vpack.c.bf16 %v6767, %v6759
        %v7384 = vpack.c.bf16 %v6776, %v6768
        %v7385 = vpack.c.bf16 %v6777, %v6769
        %v7386 = vpack.c.bf16 %v6778, %v6770
        %v7387 = vpack.c.bf16 %v6779, %v6771
        %v7388 = vpack.c.bf16 %v6780, %v6772
        %v7389 = vpack.c.bf16 %v6781, %v6773
        %v7390 = vpack.c.bf16 %v6782, %v6774
        %v7391 = vpack.c.bf16 %v6783, %v6775
        %v7392 = vpack.c.bf16 %v6792, %v6784
        %v7393 = vpack.c.bf16 %v6793, %v6785
        %v7394 = vpack.c.bf16 %v6794, %v6786
        %v7395 = vpack.c.bf16 %v6795, %v6787
        %v7396 = vpack.c.bf16 %v6796, %v6788
        %v7397 = vpack.c.bf16 %v6797, %v6789
        %v7398 = vpack.c.bf16 %v6798, %v6790
        %v7399 = vpack.c.bf16 %v6799, %v6791
        %v7400 = vpack.c.bf16 %v6808, %v6800
        %v7401 = vpack.c.bf16 %v6809, %v6801
        %v7402 = vpack.c.bf16 %v6810, %v6802
        %v7403 = vpack.c.bf16 %v6811, %v6803
        %v7404 = vpack.c.bf16 %v6812, %v6804
        %v7405 = vpack.c.bf16 %v6813, %v6805
        %v7406 = vpack.c.bf16 %v6814, %v6806
        %v7407 = vpack.c.bf16 %v6815, %v6807
        %v7408 = vpack.c.bf16 %v6824, %v6816
        %v7409 = vpack.c.bf16 %v6825, %v6817
        %v7410 = vpack.c.bf16 %v6826, %v6818
        %v7411 = vpack.c.bf16 %v6827, %v6819
        %v7412 = vpack.c.bf16 %v6828, %v6820
        %v7413 = vpack.c.bf16 %v6829, %v6821
        %v7414 = vpack.c.bf16 %v6830, %v6822
        %v7415 = vpack.c.bf16 %v6831, %v6823
        %v7416 = vpack.c.bf16 %v6840, %v6832
        %v7417 = vpack.c.bf16 %v6841, %v6833
        %v7418 = vpack.c.bf16 %v6842, %v6834
        %v7419 = vpack.c.bf16 %v6843, %v6835
        %v7420 = vpack.c.bf16 %v6844, %v6836
        %v7421 = vpack.c.bf16 %v6845, %v6837
        %v7422 = vpack.c.bf16 %v6846, %v6838
        %v7423 = vpack.c.bf16 %v6847, %v6839
        %v7424 = vpack.c.bf16 %v6856, %v6848
        %v7425 = vpack.c.bf16 %v6857, %v6849
        %v7426 = vpack.c.bf16 %v6858, %v6850
        %v7427 = vpack.c.bf16 %v6859, %v6851
        %v7428 = vpack.c.bf16 %v6860, %v6852
        %v7429 = vpack.c.bf16 %v6861, %v6853
        %v7430 = vpack.c.bf16 %v6862, %v6854
        %v7431 = vpack.c.bf16 %v6863, %v6855
        %v7432 = vpack.c.bf16 %v6872, %v6864
        %v7433 = vpack.c.bf16 %v6873, %v6865
        %v7434 = vpack.c.bf16 %v6874, %v6866
        %v7435 = vpack.c.bf16 %v6875, %v6867
        %v7436 = vpack.c.bf16 %v6876, %v6868
        %v7437 = vpack.c.bf16 %v6877, %v6869
        %v7438 = vpack.c.bf16 %v6878, %v6870
        %v7439 = vpack.c.bf16 %v6879, %v6871
        %v7440 = vpack.c.bf16 %v6888, %v6880
        %v7441 = vpack.c.bf16 %v6889, %v6881
        %v7442 = vpack.c.bf16 %v6890, %v6882
        %v7443 = vpack.c.bf16 %v6891, %v6883
        %v7444 = vpack.c.bf16 %v6892, %v6884
        %v7445 = vpack.c.bf16 %v6893, %v6885
        %v7446 = vpack.c.bf16 %v6894, %v6886
        %v7447 = vpack.c.bf16 %v6895, %v6887
        %v7448 = vpack.c.bf16 %v6904, %v6896
        %v7449 = vpack.c.bf16 %v6905, %v6897
        %v7450 = vpack.c.bf16 %v6906, %v6898
        %v7451 = vpack.c.bf16 %v6907, %v6899
        %v7452 = vpack.c.bf16 %v6908, %v6900
        %v7453 = vpack.c.bf16 %v6909, %v6901
        %v7454 = vpack.c.bf16 %v6910, %v6902
        %v7455 = vpack.c.bf16 %v6911, %v6903
        %v7456 = vpack.c.bf16 %v6920, %v6912
        %v7457 = vpack.c.bf16 %v6921, %v6913
        %v7458 = vpack.c.bf16 %v6922, %v6914
        %v7459 = vpack.c.bf16 %v6923, %v6915
        %v7460 = vpack.c.bf16 %v6924, %v6916
        %v7461 = vpack.c.bf16 %v6925, %v6917
        %v7462 = vpack.c.bf16 %v6926, %v6918
        %v7463 = vpack.c.bf16 %v6927, %v6919
        %v7464 = vpack.c.bf16 %v6936, %v6928
        %v7465 = vpack.c.bf16 %v6937, %v6929
        %v7466 = vpack.c.bf16 %v6938, %v6930
        %v7467 = vpack.c.bf16 %v6939, %v6931
        %v7468 = vpack.c.bf16 %v6940, %v6932
        %v7469 = vpack.c.bf16 %v6941, %v6933
        %v7470 = vpack.c.bf16 %v6942, %v6934
        %v7471 = vpack.c.bf16 %v6943, %v6935
        %v7472 = vpack.c.bf16 %v6952, %v6944
        %v7473 = vpack.c.bf16 %v6953, %v6945
        %v7474 = vpack.c.bf16 %v6954, %v6946
        %v7475 = vpack.c.bf16 %v6955, %v6947
        %v7476 = vpack.c.bf16 %v6956, %v6948
        %v7477 = vpack.c.bf16 %v6957, %v6949
        %v7478 = vpack.c.bf16 %v6958, %v6950
        %v7479 = vpack.c.bf16 %v6959, %v6951
        %v7480 = vpack.c.bf16 %v6968, %v6960
        %v7481 = vpack.c.bf16 %v6969, %v6961
        %v7482 = vpack.c.bf16 %v6970, %v6962
        %v7483 = vpack.c.bf16 %v6971, %v6963
        %v7484 = vpack.c.bf16 %v6972, %v6964
        %v7485 = vpack.c.bf16 %v6973, %v6965
        %v7486 = vpack.c.bf16 %v6974, %v6966
        %v7487 = vpack.c.bf16 %v6975, %v6967
        %v7488 = vmax.bf16 %v6976, %v6984
        %v7489 = vmax.bf16 %v7488, %v6992
        %v7490 = vmax.bf16 %v7489, %v7000
        %v7491 = vmax.bf16 %v7490, %v7008
        %v7492 = vmax.bf16 %v7491, %v7016
        %v7493 = vmax.bf16 %v7492, %v7024
        %v7494 = vmax.bf16 %v7493, %v7032
        %v7495 = vunpack.i.l.bf16 %v7494
        %v7496 = vunpack.i.h.bf16 %v7494
        %v7497 = vmax.f32 %v7495, %v7496
        %v7498 = vrot.slane %v7497, 4
        %v7499 = vmax.f32 %v7497, %v7498
        %v7500 = vrot.slane %v7499, 2
        %v7501 = vmax.f32 %v7499, %v7500
        %v7502 = vrot.slane %v7501, 1
        %v7503 = vmax.f32 %v7501, %v7502
        %v7504 = vpack.i.bf16 %v7503, %v7503
        %v7505 = vmax.bf16 %v6977, %v6985
        %v7506 = vmax.bf16 %v7505, %v6993
        %v7507 = vmax.bf16 %v7506, %v7001
        %v7508 = vmax.bf16 %v7507, %v7009
        %v7509 = vmax.bf16 %v7508, %v7017
        %v7510 = vmax.bf16 %v7509, %v7025
        %v7511 = vmax.bf16 %v7510, %v7033
        %v7512 = vunpack.i.l.bf16 %v7511
        %v7513 = vunpack.i.h.bf16 %v7511
        %v7514 = vmax.f32 %v7512, %v7513
        %v7515 = vrot.slane %v7514, 4
        %v7516 = vmax.f32 %v7514, %v7515
        %v7517 = vrot.slane %v7516, 2
        %v7518 = vmax.f32 %v7516, %v7517
        %v7519 = vrot.slane %v7518, 1
        %v7520 = vmax.f32 %v7518, %v7519
        %v7521 = vpack.i.bf16 %v7520, %v7520
        %v7522 = vmax.bf16 %v6978, %v6986
        %v7523 = vmax.bf16 %v7522, %v6994
        %v7524 = vmax.bf16 %v7523, %v7002
        %v7525 = vmax.bf16 %v7524, %v7010
        %v7526 = vmax.bf16 %v7525, %v7018
        %v7527 = vmax.bf16 %v7526, %v7026
        %v7528 = vmax.bf16 %v7527, %v7034
        %v7529 = vunpack.i.l.bf16 %v7528
        %v7530 = vunpack.i.h.bf16 %v7528
        %v7531 = vmax.f32 %v7529, %v7530
        %v7532 = vrot.slane %v7531, 4
        %v7533 = vmax.f32 %v7531, %v7532
        %v7534 = vrot.slane %v7533, 2
        %v7535 = vmax.f32 %v7533, %v7534
        %v7536 = vrot.slane %v7535, 1
        %v7537 = vmax.f32 %v7535, %v7536
        %v7538 = vpack.i.bf16 %v7537, %v7537
        %v7539 = vmax.bf16 %v6979, %v6987
        %v7540 = vmax.bf16 %v7539, %v6995
        %v7541 = vmax.bf16 %v7540, %v7003
        %v7542 = vmax.bf16 %v7541, %v7011
        %v7543 = vmax.bf16 %v7542, %v7019
        %v7544 = vmax.bf16 %v7543, %v7027
        %v7545 = vmax.bf16 %v7544, %v7035
        %v7546 = vunpack.i.l.bf16 %v7545
        %v7547 = vunpack.i.h.bf16 %v7545
        %v7548 = vmax.f32 %v7546, %v7547
        %v7549 = vrot.slane %v7548, 4
        %v7550 = vmax.f32 %v7548, %v7549
        %v7551 = vrot.slane %v7550, 2
        %v7552 = vmax.f32 %v7550, %v7551
        %v7553 = vrot.slane %v7552, 1
        %v7554 = vmax.f32 %v7552, %v7553
        %v7555 = vpack.i.bf16 %v7554, %v7554
        %v7556 = vmax.bf16 %v6980, %v6988
        %v7557 = vmax.bf16 %v7556, %v6996
        %v7558 = vmax.bf16 %v7557, %v7004
        %v7559 = vmax.bf16 %v7558, %v7012
        %v7560 = vmax.bf16 %v7559, %v7020
        %v7561 = vmax.bf16 %v7560, %v7028
        %v7562 = vmax.bf16 %v7561, %v7036
        %v7563 = vunpack.i.l.bf16 %v7562
        %v7564 = vunpack.i.h.bf16 %v7562
        %v7565 = vmax.f32 %v7563, %v7564
        %v7566 = vrot.slane %v7565, 4
        %v7567 = vmax.f32 %v7565, %v7566
        %v7568 = vrot.slane %v7567, 2
        %v7569 = vmax.f32 %v7567, %v7568
        %v7570 = vrot.slane %v7569, 1
        %v7571 = vmax.f32 %v7569, %v7570
        %v7572 = vpack.i.bf16 %v7571, %v7571
        %v7573 = vmax.bf16 %v6981, %v6989
        %v7574 = vmax.bf16 %v7573, %v6997
        %v7575 = vmax.bf16 %v7574, %v7005
        %v7576 = vmax.bf16 %v7575, %v7013
        %v7577 = vmax.bf16 %v7576, %v7021
        %v7578 = vmax.bf16 %v7577, %v7029
        %v7579 = vmax.bf16 %v7578, %v7037
        %v7580 = vunpack.i.l.bf16 %v7579
        %v7581 = vunpack.i.h.bf16 %v7579
        %v7582 = vmax.f32 %v7580, %v7581
        %v7583 = vrot.slane %v7582, 4
        %v7584 = vmax.f32 %v7582, %v7583
        %v7585 = vrot.slane %v7584, 2
        %v7586 = vmax.f32 %v7584, %v7585
        %v7587 = vrot.slane %v7586, 1
        %v7588 = vmax.f32 %v7586, %v7587
        %v7589 = vpack.i.bf16 %v7588, %v7588
        %v7590 = vmax.bf16 %v6982, %v6990
        %v7591 = vmax.bf16 %v7590, %v6998
        %v7592 = vmax.bf16 %v7591, %v7006
        %v7593 = vmax.bf16 %v7592, %v7014
        %v7594 = vmax.bf16 %v7593, %v7022
        %v7595 = vmax.bf16 %v7594, %v7030
        %v7596 = vmax.bf16 %v7595, %v7038
        %v7597 = vunpack.i.l.bf16 %v7596
        %v7598 = vunpack.i.h.bf16 %v7596
        %v7599 = vmax.f32 %v7597, %v7598
        %v7600 = vrot.slane %v7599, 4
        %v7601 = vmax.f32 %v7599, %v7600
        %v7602 = vrot.slane %v7601, 2
        %v7603 = vmax.f32 %v7601, %v7602
        %v7604 = vrot.slane %v7603, 1
        %v7605 = vmax.f32 %v7603, %v7604
        %v7606 = vpack.i.bf16 %v7605, %v7605
        %v7607 = vmax.bf16 %v6983, %v6991
        %v7608 = vmax.bf16 %v7607, %v6999
        %v7609 = vmax.bf16 %v7608, %v7007
        %v7610 = vmax.bf16 %v7609, %v7015
        %v7611 = vmax.bf16 %v7610, %v7023
        %v7612 = vmax.bf16 %v7611, %v7031
        %v7613 = vmax.bf16 %v7612, %v7039
        %v7614 = vunpack.i.l.bf16 %v7613
        %v7615 = vunpack.i.h.bf16 %v7613
        %v7616 = vmax.f32 %v7614, %v7615
        %v7617 = vrot.slane %v7616, 4
        %v7618 = vmax.f32 %v7616, %v7617
        %v7619 = vrot.slane %v7618, 2
        %v7620 = vmax.f32 %v7618, %v7619
        %v7621 = vrot.slane %v7620, 1
        %v7622 = vmax.f32 %v7620, %v7621
        %v7623 = vpack.i.bf16 %v7622, %v7622
        %v7624 = vmax.bf16 %v7040, %v7048
        %v7625 = vmax.bf16 %v7624, %v7056
        %v7626 = vmax.bf16 %v7625, %v7064
        %v7627 = vmax.bf16 %v7626, %v7072
        %v7628 = vmax.bf16 %v7627, %v7080
        %v7629 = vmax.bf16 %v7628, %v7088
        %v7630 = vmax.bf16 %v7629, %v7096
        %v7631 = vunpack.i.l.bf16 %v7630
        %v7632 = vunpack.i.h.bf16 %v7630
        %v7633 = vmax.f32 %v7631, %v7632
        %v7634 = vrot.slane %v7633, 4
        %v7635 = vmax.f32 %v7633, %v7634
        %v7636 = vrot.slane %v7635, 2
        %v7637 = vmax.f32 %v7635, %v7636
        %v7638 = vrot.slane %v7637, 1
        %v7639 = vmax.f32 %v7637, %v7638
        %v7640 = vpack.i.bf16 %v7639, %v7639
        %v7641 = vmax.bf16 %v7041, %v7049
        %v7642 = vmax.bf16 %v7641, %v7057
        %v7643 = vmax.bf16 %v7642, %v7065
        %v7644 = vmax.bf16 %v7643, %v7073
        %v7645 = vmax.bf16 %v7644, %v7081
        %v7646 = vmax.bf16 %v7645, %v7089
        %v7647 = vmax.bf16 %v7646, %v7097
        %v7648 = vunpack.i.l.bf16 %v7647
        %v7649 = vunpack.i.h.bf16 %v7647
        %v7650 = vmax.f32 %v7648, %v7649
        %v7651 = vrot.slane %v7650, 4
        %v7652 = vmax.f32 %v7650, %v7651
        %v7653 = vrot.slane %v7652, 2
        %v7654 = vmax.f32 %v7652, %v7653
        %v7655 = vrot.slane %v7654, 1
        %v7656 = vmax.f32 %v7654, %v7655
        %v7657 = vpack.i.bf16 %v7656, %v7656
        %v7658 = vmax.bf16 %v7042, %v7050
        %v7659 = vmax.bf16 %v7658, %v7058
        %v7660 = vmax.bf16 %v7659, %v7066
        %v7661 = vmax.bf16 %v7660, %v7074
        %v7662 = vmax.bf16 %v7661, %v7082
        %v7663 = vmax.bf16 %v7662, %v7090
        %v7664 = vmax.bf16 %v7663, %v7098
        %v7665 = vunpack.i.l.bf16 %v7664
        %v7666 = vunpack.i.h.bf16 %v7664
        %v7667 = vmax.f32 %v7665, %v7666
        %v7668 = vrot.slane %v7667, 4
        %v7669 = vmax.f32 %v7667, %v7668
        %v7670 = vrot.slane %v7669, 2
        %v7671 = vmax.f32 %v7669, %v7670
        %v7672 = vrot.slane %v7671, 1
        %v7673 = vmax.f32 %v7671, %v7672
        %v7674 = vpack.i.bf16 %v7673, %v7673
        %v7675 = vmax.bf16 %v7043, %v7051
        %v7676 = vmax.bf16 %v7675, %v7059
        %v7677 = vmax.bf16 %v7676, %v7067
        %v7678 = vmax.bf16 %v7677, %v7075
        %v7679 = vmax.bf16 %v7678, %v7083
        %v7680 = vmax.bf16 %v7679, %v7091
        %v7681 = vmax.bf16 %v7680, %v7099
        %v7682 = vunpack.i.l.bf16 %v7681
        %v7683 = vunpack.i.h.bf16 %v7681
        %v7684 = vmax.f32 %v7682, %v7683
        %v7685 = vrot.slane %v7684, 4
        %v7686 = vmax.f32 %v7684, %v7685
        %v7687 = vrot.slane %v7686, 2
        %v7688 = vmax.f32 %v7686, %v7687
        %v7689 = vrot.slane %v7688, 1
        %v7690 = vmax.f32 %v7688, %v7689
        %v7691 = vpack.i.bf16 %v7690, %v7690
        %v7692 = vmax.bf16 %v7044, %v7052
        %v7693 = vmax.bf16 %v7692, %v7060
        %v7694 = vmax.bf16 %v7693, %v7068
        %v7695 = vmax.bf16 %v7694, %v7076
        %v7696 = vmax.bf16 %v7695, %v7084
        %v7697 = vmax.bf16 %v7696, %v7092
        %v7698 = vmax.bf16 %v7697, %v7100
        %v7699 = vunpack.i.l.bf16 %v7698
        %v7700 = vunpack.i.h.bf16 %v7698
        %v7701 = vmax.f32 %v7699, %v7700
        %v7702 = vrot.slane %v7701, 4
        %v7703 = vmax.f32 %v7701, %v7702
        %v7704 = vrot.slane %v7703, 2
        %v7705 = vmax.f32 %v7703, %v7704
        %v7706 = vrot.slane %v7705, 1
        %v7707 = vmax.f32 %v7705, %v7706
        %v7708 = vpack.i.bf16 %v7707, %v7707
        %v7709 = vmax.bf16 %v7045, %v7053
        %v7710 = vmax.bf16 %v7709, %v7061
        %v7711 = vmax.bf16 %v7710, %v7069
        %v7712 = vmax.bf16 %v7711, %v7077
        %v7713 = vmax.bf16 %v7712, %v7085
        %v7714 = vmax.bf16 %v7713, %v7093
        %v7715 = vmax.bf16 %v7714, %v7101
        %v7716 = vunpack.i.l.bf16 %v7715
        %v7717 = vunpack.i.h.bf16 %v7715
        %v7718 = vmax.f32 %v7716, %v7717
        %v7719 = vrot.slane %v7718, 4
        %v7720 = vmax.f32 %v7718, %v7719
        %v7721 = vrot.slane %v7720, 2
        %v7722 = vmax.f32 %v7720, %v7721
        %v7723 = vrot.slane %v7722, 1
        %v7724 = vmax.f32 %v7722, %v7723
        %v7725 = vpack.i.bf16 %v7724, %v7724
        %v7726 = vmax.bf16 %v7046, %v7054
        %v7727 = vmax.bf16 %v7726, %v7062
        %v7728 = vmax.bf16 %v7727, %v7070
        %v7729 = vmax.bf16 %v7728, %v7078
        %v7730 = vmax.bf16 %v7729, %v7086
        %v7731 = vmax.bf16 %v7730, %v7094
        %v7732 = vmax.bf16 %v7731, %v7102
        %v7733 = vunpack.i.l.bf16 %v7732
        %v7734 = vunpack.i.h.bf16 %v7732
        %v7735 = vmax.f32 %v7733, %v7734
        %v7736 = vrot.slane %v7735, 4
        %v7737 = vmax.f32 %v7735, %v7736
        %v7738 = vrot.slane %v7737, 2
        %v7739 = vmax.f32 %v7737, %v7738
        %v7740 = vrot.slane %v7739, 1
        %v7741 = vmax.f32 %v7739, %v7740
        %v7742 = vpack.i.bf16 %v7741, %v7741
        %v7743 = vmax.bf16 %v7047, %v7055
        %v7744 = vmax.bf16 %v7743, %v7063
        %v7745 = vmax.bf16 %v7744, %v7071
        %v7746 = vmax.bf16 %v7745, %v7079
        %v7747 = vmax.bf16 %v7746, %v7087
        %v7748 = vmax.bf16 %v7747, %v7095
        %v7749 = vmax.bf16 %v7748, %v7103
        %v7750 = vunpack.i.l.bf16 %v7749
        %v7751 = vunpack.i.h.bf16 %v7749
        %v7752 = vmax.f32 %v7750, %v7751
        %v7753 = vrot.slane %v7752, 4
        %v7754 = vmax.f32 %v7752, %v7753
        %v7755 = vrot.slane %v7754, 2
        %v7756 = vmax.f32 %v7754, %v7755
        %v7757 = vrot.slane %v7756, 1
        %v7758 = vmax.f32 %v7756, %v7757
        %v7759 = vpack.i.bf16 %v7758, %v7758
        %v7760 = vmax.bf16 %v7104, %v7112
        %v7761 = vmax.bf16 %v7760, %v7120
        %v7762 = vmax.bf16 %v7761, %v7128
        %v7763 = vmax.bf16 %v7762, %v7136
        %v7764 = vmax.bf16 %v7763, %v7144
        %v7765 = vmax.bf16 %v7764, %v7152
        %v7766 = vmax.bf16 %v7765, %v7160
        %v7767 = vunpack.i.l.bf16 %v7766
        %v7768 = vunpack.i.h.bf16 %v7766
        %v7769 = vmax.f32 %v7767, %v7768
        %v7770 = vrot.slane %v7769, 4
        %v7771 = vmax.f32 %v7769, %v7770
        %v7772 = vrot.slane %v7771, 2
        %v7773 = vmax.f32 %v7771, %v7772
        %v7774 = vrot.slane %v7773, 1
        %v7775 = vmax.f32 %v7773, %v7774
        %v7776 = vpack.i.bf16 %v7775, %v7775
        %v7777 = vmax.bf16 %v7105, %v7113
        %v7778 = vmax.bf16 %v7777, %v7121
        %v7779 = vmax.bf16 %v7778, %v7129
        %v7780 = vmax.bf16 %v7779, %v7137
        %v7781 = vmax.bf16 %v7780, %v7145
        %v7782 = vmax.bf16 %v7781, %v7153
        %v7783 = vmax.bf16 %v7782, %v7161
        %v7784 = vunpack.i.l.bf16 %v7783
        %v7785 = vunpack.i.h.bf16 %v7783
        %v7786 = vmax.f32 %v7784, %v7785
        %v7787 = vrot.slane %v7786, 4
        %v7788 = vmax.f32 %v7786, %v7787
        %v7789 = vrot.slane %v7788, 2
        %v7790 = vmax.f32 %v7788, %v7789
        %v7791 = vrot.slane %v7790, 1
        %v7792 = vmax.f32 %v7790, %v7791
        %v7793 = vpack.i.bf16 %v7792, %v7792
        %v7794 = vmax.bf16 %v7106, %v7114
        %v7795 = vmax.bf16 %v7794, %v7122
        %v7796 = vmax.bf16 %v7795, %v7130
        %v7797 = vmax.bf16 %v7796, %v7138
        %v7798 = vmax.bf16 %v7797, %v7146
        %v7799 = vmax.bf16 %v7798, %v7154
        %v7800 = vmax.bf16 %v7799, %v7162
        %v7801 = vunpack.i.l.bf16 %v7800
        %v7802 = vunpack.i.h.bf16 %v7800
        %v7803 = vmax.f32 %v7801, %v7802
        %v7804 = vrot.slane %v7803, 4
        %v7805 = vmax.f32 %v7803, %v7804
        %v7806 = vrot.slane %v7805, 2
        %v7807 = vmax.f32 %v7805, %v7806
        %v7808 = vrot.slane %v7807, 1
        %v7809 = vmax.f32 %v7807, %v7808
        %v7810 = vpack.i.bf16 %v7809, %v7809
        %v7811 = vmax.bf16 %v7107, %v7115
        %v7812 = vmax.bf16 %v7811, %v7123
        %v7813 = vmax.bf16 %v7812, %v7131
        %v7814 = vmax.bf16 %v7813, %v7139
        %v7815 = vmax.bf16 %v7814, %v7147
        %v7816 = vmax.bf16 %v7815, %v7155
        %v7817 = vmax.bf16 %v7816, %v7163
        %v7818 = vunpack.i.l.bf16 %v7817
        %v7819 = vunpack.i.h.bf16 %v7817
        %v7820 = vmax.f32 %v7818, %v7819
        %v7821 = vrot.slane %v7820, 4
        %v7822 = vmax.f32 %v7820, %v7821
        %v7823 = vrot.slane %v7822, 2
        %v7824 = vmax.f32 %v7822, %v7823
        %v7825 = vrot.slane %v7824, 1
        %v7826 = vmax.f32 %v7824, %v7825
        %v7827 = vpack.i.bf16 %v7826, %v7826
        %v7828 = vmax.bf16 %v7108, %v7116
        %v7829 = vmax.bf16 %v7828, %v7124
        %v7830 = vmax.bf16 %v7829, %v7132
        %v7831 = vmax.bf16 %v7830, %v7140
        %v7832 = vmax.bf16 %v7831, %v7148
        %v7833 = vmax.bf16 %v7832, %v7156
        %v7834 = vmax.bf16 %v7833, %v7164
        %v7835 = vunpack.i.l.bf16 %v7834
        %v7836 = vunpack.i.h.bf16 %v7834
        %v7837 = vmax.f32 %v7835, %v7836
        %v7838 = vrot.slane %v7837, 4
        %v7839 = vmax.f32 %v7837, %v7838
        %v7840 = vrot.slane %v7839, 2
        %v7841 = vmax.f32 %v7839, %v7840
        %v7842 = vrot.slane %v7841, 1
        %v7843 = vmax.f32 %v7841, %v7842
        %v7844 = vpack.i.bf16 %v7843, %v7843
        %v7845 = vmax.bf16 %v7109, %v7117
        %v7846 = vmax.bf16 %v7845, %v7125
        %v7847 = vmax.bf16 %v7846, %v7133
        %v7848 = vmax.bf16 %v7847, %v7141
        %v7849 = vmax.bf16 %v7848, %v7149
        %v7850 = vmax.bf16 %v7849, %v7157
        %v7851 = vmax.bf16 %v7850, %v7165
        %v7852 = vunpack.i.l.bf16 %v7851
        %v7853 = vunpack.i.h.bf16 %v7851
        %v7854 = vmax.f32 %v7852, %v7853
        %v7855 = vrot.slane %v7854, 4
        %v7856 = vmax.f32 %v7854, %v7855
        %v7857 = vrot.slane %v7856, 2
        %v7858 = vmax.f32 %v7856, %v7857
        %v7859 = vrot.slane %v7858, 1
        %v7860 = vmax.f32 %v7858, %v7859
        %v7861 = vpack.i.bf16 %v7860, %v7860
        %v7862 = vmax.bf16 %v7110, %v7118
        %v7863 = vmax.bf16 %v7862, %v7126
        %v7864 = vmax.bf16 %v7863, %v7134
        %v7865 = vmax.bf16 %v7864, %v7142
        %v7866 = vmax.bf16 %v7865, %v7150
        %v7867 = vmax.bf16 %v7866, %v7158
        %v7868 = vmax.bf16 %v7867, %v7166
        %v7869 = vunpack.i.l.bf16 %v7868
        %v7870 = vunpack.i.h.bf16 %v7868
        %v7871 = vmax.f32 %v7869, %v7870
        %v7872 = vrot.slane %v7871, 4
        %v7873 = vmax.f32 %v7871, %v7872
        %v7874 = vrot.slane %v7873, 2
        %v7875 = vmax.f32 %v7873, %v7874
        %v7876 = vrot.slane %v7875, 1
        %v7877 = vmax.f32 %v7875, %v7876
        %v7878 = vpack.i.bf16 %v7877, %v7877
        %v7879 = vmax.bf16 %v7111, %v7119
        %v7880 = vmax.bf16 %v7879, %v7127
        %v7881 = vmax.bf16 %v7880, %v7135
        %v7882 = vmax.bf16 %v7881, %v7143
        %v7883 = vmax.bf16 %v7882, %v7151
        %v7884 = vmax.bf16 %v7883, %v7159
        %v7885 = vmax.bf16 %v7884, %v7167
        %v7886 = vunpack.i.l.bf16 %v7885
        %v7887 = vunpack.i.h.bf16 %v7885
        %v7888 = vmax.f32 %v7886, %v7887
        %v7889 = vrot.slane %v7888, 4
        %v7890 = vmax.f32 %v7888, %v7889
        %v7891 = vrot.slane %v7890, 2
        %v7892 = vmax.f32 %v7890, %v7891
        %v7893 = vrot.slane %v7892, 1
        %v7894 = vmax.f32 %v7892, %v7893
        %v7895 = vpack.i.bf16 %v7894, %v7894
        %v7896 = vmax.bf16 %v7168, %v7176
        %v7897 = vmax.bf16 %v7896, %v7184
        %v7898 = vmax.bf16 %v7897, %v7192
        %v7899 = vmax.bf16 %v7898, %v7200
        %v7900 = vmax.bf16 %v7899, %v7208
        %v7901 = vmax.bf16 %v7900, %v7216
        %v7902 = vmax.bf16 %v7901, %v7224
        %v7903 = vunpack.i.l.bf16 %v7902
        %v7904 = vunpack.i.h.bf16 %v7902
        %v7905 = vmax.f32 %v7903, %v7904
        %v7906 = vrot.slane %v7905, 4
        %v7907 = vmax.f32 %v7905, %v7906
        %v7908 = vrot.slane %v7907, 2
        %v7909 = vmax.f32 %v7907, %v7908
        %v7910 = vrot.slane %v7909, 1
        %v7911 = vmax.f32 %v7909, %v7910
        %v7912 = vpack.i.bf16 %v7911, %v7911
        %v7913 = vmax.bf16 %v7169, %v7177
        %v7914 = vmax.bf16 %v7913, %v7185
        %v7915 = vmax.bf16 %v7914, %v7193
        %v7916 = vmax.bf16 %v7915, %v7201
        %v7917 = vmax.bf16 %v7916, %v7209
        %v7918 = vmax.bf16 %v7917, %v7217
        %v7919 = vmax.bf16 %v7918, %v7225
        %v7920 = vunpack.i.l.bf16 %v7919
        %v7921 = vunpack.i.h.bf16 %v7919
        %v7922 = vmax.f32 %v7920, %v7921
        %v7923 = vrot.slane %v7922, 4
        %v7924 = vmax.f32 %v7922, %v7923
        %v7925 = vrot.slane %v7924, 2
        %v7926 = vmax.f32 %v7924, %v7925
        %v7927 = vrot.slane %v7926, 1
        %v7928 = vmax.f32 %v7926, %v7927
        %v7929 = vpack.i.bf16 %v7928, %v7928
        %v7930 = vmax.bf16 %v7170, %v7178
        %v7931 = vmax.bf16 %v7930, %v7186
        %v7932 = vmax.bf16 %v7931, %v7194
        %v7933 = vmax.bf16 %v7932, %v7202
        %v7934 = vmax.bf16 %v7933, %v7210
        %v7935 = vmax.bf16 %v7934, %v7218
        %v7936 = vmax.bf16 %v7935, %v7226
        %v7937 = vunpack.i.l.bf16 %v7936
        %v7938 = vunpack.i.h.bf16 %v7936
        %v7939 = vmax.f32 %v7937, %v7938
        %v7940 = vrot.slane %v7939, 4
        %v7941 = vmax.f32 %v7939, %v7940
        %v7942 = vrot.slane %v7941, 2
        %v7943 = vmax.f32 %v7941, %v7942
        %v7944 = vrot.slane %v7943, 1
        %v7945 = vmax.f32 %v7943, %v7944
        %v7946 = vpack.i.bf16 %v7945, %v7945
        %v7947 = vmax.bf16 %v7171, %v7179
        %v7948 = vmax.bf16 %v7947, %v7187
        %v7949 = vmax.bf16 %v7948, %v7195
        %v7950 = vmax.bf16 %v7949, %v7203
        %v7951 = vmax.bf16 %v7950, %v7211
        %v7952 = vmax.bf16 %v7951, %v7219
        %v7953 = vmax.bf16 %v7952, %v7227
        %v7954 = vunpack.i.l.bf16 %v7953
        %v7955 = vunpack.i.h.bf16 %v7953
        %v7956 = vmax.f32 %v7954, %v7955
        %v7957 = vrot.slane %v7956, 4
        %v7958 = vmax.f32 %v7956, %v7957
        %v7959 = vrot.slane %v7958, 2
        %v7960 = vmax.f32 %v7958, %v7959
        %v7961 = vrot.slane %v7960, 1
        %v7962 = vmax.f32 %v7960, %v7961
        %v7963 = vpack.i.bf16 %v7962, %v7962
        %v7964 = vmax.bf16 %v7172, %v7180
        %v7965 = vmax.bf16 %v7964, %v7188
        %v7966 = vmax.bf16 %v7965, %v7196
        %v7967 = vmax.bf16 %v7966, %v7204
        %v7968 = vmax.bf16 %v7967, %v7212
        %v7969 = vmax.bf16 %v7968, %v7220
        %v7970 = vmax.bf16 %v7969, %v7228
        %v7971 = vunpack.i.l.bf16 %v7970
        %v7972 = vunpack.i.h.bf16 %v7970
        %v7973 = vmax.f32 %v7971, %v7972
        %v7974 = vrot.slane %v7973, 4
        %v7975 = vmax.f32 %v7973, %v7974
        %v7976 = vrot.slane %v7975, 2
        %v7977 = vmax.f32 %v7975, %v7976
        %v7978 = vrot.slane %v7977, 1
        %v7979 = vmax.f32 %v7977, %v7978
        %v7980 = vpack.i.bf16 %v7979, %v7979
        %v7981 = vmax.bf16 %v7173, %v7181
        %v7982 = vmax.bf16 %v7981, %v7189
        %v7983 = vmax.bf16 %v7982, %v7197
        %v7984 = vmax.bf16 %v7983, %v7205
        %v7985 = vmax.bf16 %v7984, %v7213
        %v7986 = vmax.bf16 %v7985, %v7221
        %v7987 = vmax.bf16 %v7986, %v7229
        %v7988 = vunpack.i.l.bf16 %v7987
        %v7989 = vunpack.i.h.bf16 %v7987
        %v7990 = vmax.f32 %v7988, %v7989
        %v7991 = vrot.slane %v7990, 4
        %v7992 = vmax.f32 %v7990, %v7991
        %v7993 = vrot.slane %v7992, 2
        %v7994 = vmax.f32 %v7992, %v7993
        %v7995 = vrot.slane %v7994, 1
        %v7996 = vmax.f32 %v7994, %v7995
        %v7997 = vpack.i.bf16 %v7996, %v7996
        %v7998 = vmax.bf16 %v7174, %v7182
        %v7999 = vmax.bf16 %v7998, %v7190
        %v8000 = vmax.bf16 %v7999, %v7198
        %v8001 = vmax.bf16 %v8000, %v7206
        %v8002 = vmax.bf16 %v8001, %v7214
        %v8003 = vmax.bf16 %v8002, %v7222
        %v8004 = vmax.bf16 %v8003, %v7230
        %v8005 = vunpack.i.l.bf16 %v8004
        %v8006 = vunpack.i.h.bf16 %v8004
        %v8007 = vmax.f32 %v8005, %v8006
        %v8008 = vrot.slane %v8007, 4
        %v8009 = vmax.f32 %v8007, %v8008
        %v8010 = vrot.slane %v8009, 2
        %v8011 = vmax.f32 %v8009, %v8010
        %v8012 = vrot.slane %v8011, 1
        %v8013 = vmax.f32 %v8011, %v8012
        %v8014 = vpack.i.bf16 %v8013, %v8013
        %v8015 = vmax.bf16 %v7175, %v7183
        %v8016 = vmax.bf16 %v8015, %v7191
        %v8017 = vmax.bf16 %v8016, %v7199
        %v8018 = vmax.bf16 %v8017, %v7207
        %v8019 = vmax.bf16 %v8018, %v7215
        %v8020 = vmax.bf16 %v8019, %v7223
        %v8021 = vmax.bf16 %v8020, %v7231
        %v8022 = vunpack.i.l.bf16 %v8021
        %v8023 = vunpack.i.h.bf16 %v8021
        %v8024 = vmax.f32 %v8022, %v8023
        %v8025 = vrot.slane %v8024, 4
        %v8026 = vmax.f32 %v8024, %v8025
        %v8027 = vrot.slane %v8026, 2
        %v8028 = vmax.f32 %v8026, %v8027
        %v8029 = vrot.slane %v8028, 1
        %v8030 = vmax.f32 %v8028, %v8029
        %v8031 = vpack.i.bf16 %v8030, %v8030
        %v8032 = vmax.bf16 %v7232, %v7240
        %v8033 = vmax.bf16 %v8032, %v7248
        %v8034 = vmax.bf16 %v8033, %v7256
        %v8035 = vmax.bf16 %v8034, %v7264
        %v8036 = vmax.bf16 %v8035, %v7272
        %v8037 = vmax.bf16 %v8036, %v7280
        %v8038 = vmax.bf16 %v8037, %v7288
        %v8039 = vunpack.i.l.bf16 %v8038
        %v8040 = vunpack.i.h.bf16 %v8038
        %v8041 = vmax.f32 %v8039, %v8040
        %v8042 = vrot.slane %v8041, 4
        %v8043 = vmax.f32 %v8041, %v8042
        %v8044 = vrot.slane %v8043, 2
        %v8045 = vmax.f32 %v8043, %v8044
        %v8046 = vrot.slane %v8045, 1
        %v8047 = vmax.f32 %v8045, %v8046
        %v8048 = vpack.i.bf16 %v8047, %v8047
        %v8049 = vmax.bf16 %v7233, %v7241
        %v8050 = vmax.bf16 %v8049, %v7249
        %v8051 = vmax.bf16 %v8050, %v7257
        %v8052 = vmax.bf16 %v8051, %v7265
        %v8053 = vmax.bf16 %v8052, %v7273
        %v8054 = vmax.bf16 %v8053, %v7281
        %v8055 = vmax.bf16 %v8054, %v7289
        %v8056 = vunpack.i.l.bf16 %v8055
        %v8057 = vunpack.i.h.bf16 %v8055
        %v8058 = vmax.f32 %v8056, %v8057
        %v8059 = vrot.slane %v8058, 4
        %v8060 = vmax.f32 %v8058, %v8059
        %v8061 = vrot.slane %v8060, 2
        %v8062 = vmax.f32 %v8060, %v8061
        %v8063 = vrot.slane %v8062, 1
        %v8064 = vmax.f32 %v8062, %v8063
        %v8065 = vpack.i.bf16 %v8064, %v8064
        %v8066 = vmax.bf16 %v7234, %v7242
        %v8067 = vmax.bf16 %v8066, %v7250
        %v8068 = vmax.bf16 %v8067, %v7258
        %v8069 = vmax.bf16 %v8068, %v7266
        %v8070 = vmax.bf16 %v8069, %v7274
        %v8071 = vmax.bf16 %v8070, %v7282
        %v8072 = vmax.bf16 %v8071, %v7290
        %v8073 = vunpack.i.l.bf16 %v8072
        %v8074 = vunpack.i.h.bf16 %v8072
        %v8075 = vmax.f32 %v8073, %v8074
        %v8076 = vrot.slane %v8075, 4
        %v8077 = vmax.f32 %v8075, %v8076
        %v8078 = vrot.slane %v8077, 2
        %v8079 = vmax.f32 %v8077, %v8078
        %v8080 = vrot.slane %v8079, 1
        %v8081 = vmax.f32 %v8079, %v8080
        %v8082 = vpack.i.bf16 %v8081, %v8081
        %v8083 = vmax.bf16 %v7235, %v7243
        %v8084 = vmax.bf16 %v8083, %v7251
        %v8085 = vmax.bf16 %v8084, %v7259
        %v8086 = vmax.bf16 %v8085, %v7267
        %v8087 = vmax.bf16 %v8086, %v7275
        %v8088 = vmax.bf16 %v8087, %v7283
        %v8089 = vmax.bf16 %v8088, %v7291
        %v8090 = vunpack.i.l.bf16 %v8089
        %v8091 = vunpack.i.h.bf16 %v8089
        %v8092 = vmax.f32 %v8090, %v8091
        %v8093 = vrot.slane %v8092, 4
        %v8094 = vmax.f32 %v8092, %v8093
        %v8095 = vrot.slane %v8094, 2
        %v8096 = vmax.f32 %v8094, %v8095
        %v8097 = vrot.slane %v8096, 1
        %v8098 = vmax.f32 %v8096, %v8097
        %v8099 = vpack.i.bf16 %v8098, %v8098
        %v8100 = vmax.bf16 %v7236, %v7244
        %v8101 = vmax.bf16 %v8100, %v7252
        %v8102 = vmax.bf16 %v8101, %v7260
        %v8103 = vmax.bf16 %v8102, %v7268
        %v8104 = vmax.bf16 %v8103, %v7276
        %v8105 = vmax.bf16 %v8104, %v7284
        %v8106 = vmax.bf16 %v8105, %v7292
        %v8107 = vunpack.i.l.bf16 %v8106
        %v8108 = vunpack.i.h.bf16 %v8106
        %v8109 = vmax.f32 %v8107, %v8108
        %v8110 = vrot.slane %v8109, 4
        %v8111 = vmax.f32 %v8109, %v8110
        %v8112 = vrot.slane %v8111, 2
        %v8113 = vmax.f32 %v8111, %v8112
        %v8114 = vrot.slane %v8113, 1
        %v8115 = vmax.f32 %v8113, %v8114
        %v8116 = vpack.i.bf16 %v8115, %v8115
        %v8117 = vmax.bf16 %v7237, %v7245
        %v8118 = vmax.bf16 %v8117, %v7253
        %v8119 = vmax.bf16 %v8118, %v7261
        %v8120 = vmax.bf16 %v8119, %v7269
        %v8121 = vmax.bf16 %v8120, %v7277
        %v8122 = vmax.bf16 %v8121, %v7285
        %v8123 = vmax.bf16 %v8122, %v7293
        %v8124 = vunpack.i.l.bf16 %v8123
        %v8125 = vunpack.i.h.bf16 %v8123
        %v8126 = vmax.f32 %v8124, %v8125
        %v8127 = vrot.slane %v8126, 4
        %v8128 = vmax.f32 %v8126, %v8127
        %v8129 = vrot.slane %v8128, 2
        %v8130 = vmax.f32 %v8128, %v8129
        %v8131 = vrot.slane %v8130, 1
        %v8132 = vmax.f32 %v8130, %v8131
        %v8133 = vpack.i.bf16 %v8132, %v8132
        %v8134 = vmax.bf16 %v7238, %v7246
        %v8135 = vmax.bf16 %v8134, %v7254
        %v8136 = vmax.bf16 %v8135, %v7262
        %v8137 = vmax.bf16 %v8136, %v7270
        %v8138 = vmax.bf16 %v8137, %v7278
        %v8139 = vmax.bf16 %v8138, %v7286
        %v8140 = vmax.bf16 %v8139, %v7294
        %v8141 = vunpack.i.l.bf16 %v8140
        %v8142 = vunpack.i.h.bf16 %v8140
        %v8143 = vmax.f32 %v8141, %v8142
        %v8144 = vrot.slane %v8143, 4
        %v8145 = vmax.f32 %v8143, %v8144
        %v8146 = vrot.slane %v8145, 2
        %v8147 = vmax.f32 %v8145, %v8146
        %v8148 = vrot.slane %v8147, 1
        %v8149 = vmax.f32 %v8147, %v8148
        %v8150 = vpack.i.bf16 %v8149, %v8149
        %v8151 = vmax.bf16 %v7239, %v7247
        %v8152 = vmax.bf16 %v8151, %v7255
        %v8153 = vmax.bf16 %v8152, %v7263
        %v8154 = vmax.bf16 %v8153, %v7271
        %v8155 = vmax.bf16 %v8154, %v7279
        %v8156 = vmax.bf16 %v8155, %v7287
        %v8157 = vmax.bf16 %v8156, %v7295
        %v8158 = vunpack.i.l.bf16 %v8157
        %v8159 = vunpack.i.h.bf16 %v8157
        %v8160 = vmax.f32 %v8158, %v8159
        %v8161 = vrot.slane %v8160, 4
        %v8162 = vmax.f32 %v8160, %v8161
        %v8163 = vrot.slane %v8162, 2
        %v8164 = vmax.f32 %v8162, %v8163
        %v8165 = vrot.slane %v8164, 1
        %v8166 = vmax.f32 %v8164, %v8165
        %v8167 = vpack.i.bf16 %v8166, %v8166
        %v8168 = vmax.bf16 %v7296, %v7304
        %v8169 = vmax.bf16 %v8168, %v7312
        %v8170 = vmax.bf16 %v8169, %v7320
        %v8171 = vmax.bf16 %v8170, %v7328
        %v8172 = vmax.bf16 %v8171, %v7336
        %v8173 = vmax.bf16 %v8172, %v7344
        %v8174 = vmax.bf16 %v8173, %v7352
        %v8175 = vunpack.i.l.bf16 %v8174
        %v8176 = vunpack.i.h.bf16 %v8174
        %v8177 = vmax.f32 %v8175, %v8176
        %v8178 = vrot.slane %v8177, 4
        %v8179 = vmax.f32 %v8177, %v8178
        %v8180 = vrot.slane %v8179, 2
        %v8181 = vmax.f32 %v8179, %v8180
        %v8182 = vrot.slane %v8181, 1
        %v8183 = vmax.f32 %v8181, %v8182
        %v8184 = vpack.i.bf16 %v8183, %v8183
        %v8185 = vmax.bf16 %v7297, %v7305
        %v8186 = vmax.bf16 %v8185, %v7313
        %v8187 = vmax.bf16 %v8186, %v7321
        %v8188 = vmax.bf16 %v8187, %v7329
        %v8189 = vmax.bf16 %v8188, %v7337
        %v8190 = vmax.bf16 %v8189, %v7345
        %v8191 = vmax.bf16 %v8190, %v7353
        %v8192 = vunpack.i.l.bf16 %v8191
        %v8193 = vunpack.i.h.bf16 %v8191
        %v8194 = vmax.f32 %v8192, %v8193
        %v8195 = vrot.slane %v8194, 4
        %v8196 = vmax.f32 %v8194, %v8195
        %v8197 = vrot.slane %v8196, 2
        %v8198 = vmax.f32 %v8196, %v8197
        %v8199 = vrot.slane %v8198, 1
        %v8200 = vmax.f32 %v8198, %v8199
        %v8201 = vpack.i.bf16 %v8200, %v8200
        %v8202 = vmax.bf16 %v7298, %v7306
        %v8203 = vmax.bf16 %v8202, %v7314
        %v8204 = vmax.bf16 %v8203, %v7322
        %v8205 = vmax.bf16 %v8204, %v7330
        %v8206 = vmax.bf16 %v8205, %v7338
        %v8207 = vmax.bf16 %v8206, %v7346
        %v8208 = vmax.bf16 %v8207, %v7354
        %v8209 = vunpack.i.l.bf16 %v8208
        %v8210 = vunpack.i.h.bf16 %v8208
        %v8211 = vmax.f32 %v8209, %v8210
        %v8212 = vrot.slane %v8211, 4
        %v8213 = vmax.f32 %v8211, %v8212
        %v8214 = vrot.slane %v8213, 2
        %v8215 = vmax.f32 %v8213, %v8214
        %v8216 = vrot.slane %v8215, 1
        %v8217 = vmax.f32 %v8215, %v8216
        %v8218 = vpack.i.bf16 %v8217, %v8217
        %v8219 = vmax.bf16 %v7299, %v7307
        %v8220 = vmax.bf16 %v8219, %v7315
        %v8221 = vmax.bf16 %v8220, %v7323
        %v8222 = vmax.bf16 %v8221, %v7331
        %v8223 = vmax.bf16 %v8222, %v7339
        %v8224 = vmax.bf16 %v8223, %v7347
        %v8225 = vmax.bf16 %v8224, %v7355
        %v8226 = vunpack.i.l.bf16 %v8225
        %v8227 = vunpack.i.h.bf16 %v8225
        %v8228 = vmax.f32 %v8226, %v8227
        %v8229 = vrot.slane %v8228, 4
        %v8230 = vmax.f32 %v8228, %v8229
        %v8231 = vrot.slane %v8230, 2
        %v8232 = vmax.f32 %v8230, %v8231
        %v8233 = vrot.slane %v8232, 1
        %v8234 = vmax.f32 %v8232, %v8233
        %v8235 = vpack.i.bf16 %v8234, %v8234
        %v8236 = vmax.bf16 %v7300, %v7308
        %v8237 = vmax.bf16 %v8236, %v7316
        %v8238 = vmax.bf16 %v8237, %v7324
        %v8239 = vmax.bf16 %v8238, %v7332
        %v8240 = vmax.bf16 %v8239, %v7340
        %v8241 = vmax.bf16 %v8240, %v7348
        %v8242 = vmax.bf16 %v8241, %v7356
        %v8243 = vunpack.i.l.bf16 %v8242
        %v8244 = vunpack.i.h.bf16 %v8242
        %v8245 = vmax.f32 %v8243, %v8244
        %v8246 = vrot.slane %v8245, 4
        %v8247 = vmax.f32 %v8245, %v8246
        %v8248 = vrot.slane %v8247, 2
        %v8249 = vmax.f32 %v8247, %v8248
        %v8250 = vrot.slane %v8249, 1
        %v8251 = vmax.f32 %v8249, %v8250
        %v8252 = vpack.i.bf16 %v8251, %v8251
        %v8253 = vmax.bf16 %v7301, %v7309
        %v8254 = vmax.bf16 %v8253, %v7317
        %v8255 = vmax.bf16 %v8254, %v7325
        %v8256 = vmax.bf16 %v8255, %v7333
        %v8257 = vmax.bf16 %v8256, %v7341
        %v8258 = vmax.bf16 %v8257, %v7349
        %v8259 = vmax.bf16 %v8258, %v7357
        %v8260 = vunpack.i.l.bf16 %v8259
        %v8261 = vunpack.i.h.bf16 %v8259
        %v8262 = vmax.f32 %v8260, %v8261
        %v8263 = vrot.slane %v8262, 4
        %v8264 = vmax.f32 %v8262, %v8263
        %v8265 = vrot.slane %v8264, 2
        %v8266 = vmax.f32 %v8264, %v8265
        %v8267 = vrot.slane %v8266, 1
        %v8268 = vmax.f32 %v8266, %v8267
        %v8269 = vpack.i.bf16 %v8268, %v8268
        %v8270 = vmax.bf16 %v7302, %v7310
        %v8271 = vmax.bf16 %v8270, %v7318
        %v8272 = vmax.bf16 %v8271, %v7326
        %v8273 = vmax.bf16 %v8272, %v7334
        %v8274 = vmax.bf16 %v8273, %v7342
        %v8275 = vmax.bf16 %v8274, %v7350
        %v8276 = vmax.bf16 %v8275, %v7358
        %v8277 = vunpack.i.l.bf16 %v8276
        %v8278 = vunpack.i.h.bf16 %v8276
        %v8279 = vmax.f32 %v8277, %v8278
        %v8280 = vrot.slane %v8279, 4
        %v8281 = vmax.f32 %v8279, %v8280
        %v8282 = vrot.slane %v8281, 2
        %v8283 = vmax.f32 %v8281, %v8282
        %v8284 = vrot.slane %v8283, 1
        %v8285 = vmax.f32 %v8283, %v8284
        %v8286 = vpack.i.bf16 %v8285, %v8285
        %v8287 = vmax.bf16 %v7303, %v7311
        %v8288 = vmax.bf16 %v8287, %v7319
        %v8289 = vmax.bf16 %v8288, %v7327
        %v8290 = vmax.bf16 %v8289, %v7335
        %v8291 = vmax.bf16 %v8290, %v7343
        %v8292 = vmax.bf16 %v8291, %v7351
        %v8293 = vmax.bf16 %v8292, %v7359
        %v8294 = vunpack.i.l.bf16 %v8293
        %v8295 = vunpack.i.h.bf16 %v8293
        %v8296 = vmax.f32 %v8294, %v8295
        %v8297 = vrot.slane %v8296, 4
        %v8298 = vmax.f32 %v8296, %v8297
        %v8299 = vrot.slane %v8298, 2
        %v8300 = vmax.f32 %v8298, %v8299
        %v8301 = vrot.slane %v8300, 1
        %v8302 = vmax.f32 %v8300, %v8301
        %v8303 = vpack.i.bf16 %v8302, %v8302
        %v8304 = vmax.bf16 %v7360, %v7368
        %v8305 = vmax.bf16 %v8304, %v7376
        %v8306 = vmax.bf16 %v8305, %v7384
        %v8307 = vmax.bf16 %v8306, %v7392
        %v8308 = vmax.bf16 %v8307, %v7400
        %v8309 = vmax.bf16 %v8308, %v7408
        %v8310 = vmax.bf16 %v8309, %v7416
        %v8311 = vunpack.i.l.bf16 %v8310
        %v8312 = vunpack.i.h.bf16 %v8310
        %v8313 = vmax.f32 %v8311, %v8312
        %v8314 = vrot.slane %v8313, 4
        %v8315 = vmax.f32 %v8313, %v8314
        %v8316 = vrot.slane %v8315, 2
        %v8317 = vmax.f32 %v8315, %v8316
        %v8318 = vrot.slane %v8317, 1
        %v8319 = vmax.f32 %v8317, %v8318
        %v8320 = vpack.i.bf16 %v8319, %v8319
        %v8321 = vmax.bf16 %v7361, %v7369
        %v8322 = vmax.bf16 %v8321, %v7377
        %v8323 = vmax.bf16 %v8322, %v7385
        %v8324 = vmax.bf16 %v8323, %v7393
        %v8325 = vmax.bf16 %v8324, %v7401
        %v8326 = vmax.bf16 %v8325, %v7409
        %v8327 = vmax.bf16 %v8326, %v7417
        %v8328 = vunpack.i.l.bf16 %v8327
        %v8329 = vunpack.i.h.bf16 %v8327
        %v8330 = vmax.f32 %v8328, %v8329
        %v8331 = vrot.slane %v8330, 4
        %v8332 = vmax.f32 %v8330, %v8331
        %v8333 = vrot.slane %v8332, 2
        %v8334 = vmax.f32 %v8332, %v8333
        %v8335 = vrot.slane %v8334, 1
        %v8336 = vmax.f32 %v8334, %v8335
        %v8337 = vpack.i.bf16 %v8336, %v8336
        %v8338 = vmax.bf16 %v7362, %v7370
        %v8339 = vmax.bf16 %v8338, %v7378
        %v8340 = vmax.bf16 %v8339, %v7386
        %v8341 = vmax.bf16 %v8340, %v7394
        %v8342 = vmax.bf16 %v8341, %v7402
        %v8343 = vmax.bf16 %v8342, %v7410
        %v8344 = vmax.bf16 %v8343, %v7418
        %v8345 = vunpack.i.l.bf16 %v8344
        %v8346 = vunpack.i.h.bf16 %v8344
        %v8347 = vmax.f32 %v8345, %v8346
        %v8348 = vrot.slane %v8347, 4
        %v8349 = vmax.f32 %v8347, %v8348
        %v8350 = vrot.slane %v8349, 2
        %v8351 = vmax.f32 %v8349, %v8350
        %v8352 = vrot.slane %v8351, 1
        %v8353 = vmax.f32 %v8351, %v8352
        %v8354 = vpack.i.bf16 %v8353, %v8353
        %v8355 = vmax.bf16 %v7363, %v7371
        %v8356 = vmax.bf16 %v8355, %v7379
        %v8357 = vmax.bf16 %v8356, %v7387
        %v8358 = vmax.bf16 %v8357, %v7395
        %v8359 = vmax.bf16 %v8358, %v7403
        %v8360 = vmax.bf16 %v8359, %v7411
        %v8361 = vmax.bf16 %v8360, %v7419
        %v8362 = vunpack.i.l.bf16 %v8361
        %v8363 = vunpack.i.h.bf16 %v8361
        %v8364 = vmax.f32 %v8362, %v8363
        %v8365 = vrot.slane %v8364, 4
        %v8366 = vmax.f32 %v8364, %v8365
        %v8367 = vrot.slane %v8366, 2
        %v8368 = vmax.f32 %v8366, %v8367
        %v8369 = vrot.slane %v8368, 1
        %v8370 = vmax.f32 %v8368, %v8369
        %v8371 = vpack.i.bf16 %v8370, %v8370
        %v8372 = vmax.bf16 %v7364, %v7372
        %v8373 = vmax.bf16 %v8372, %v7380
        %v8374 = vmax.bf16 %v8373, %v7388
        %v8375 = vmax.bf16 %v8374, %v7396
        %v8376 = vmax.bf16 %v8375, %v7404
        %v8377 = vmax.bf16 %v8376, %v7412
        %v8378 = vmax.bf16 %v8377, %v7420
        %v8379 = vunpack.i.l.bf16 %v8378
        %v8380 = vunpack.i.h.bf16 %v8378
        %v8381 = vmax.f32 %v8379, %v8380
        %v8382 = vrot.slane %v8381, 4
        %v8383 = vmax.f32 %v8381, %v8382
        %v8384 = vrot.slane %v8383, 2
        %v8385 = vmax.f32 %v8383, %v8384
        %v8386 = vrot.slane %v8385, 1
        %v8387 = vmax.f32 %v8385, %v8386
        %v8388 = vpack.i.bf16 %v8387, %v8387
        %v8389 = vmax.bf16 %v7365, %v7373
        %v8390 = vmax.bf16 %v8389, %v7381
        %v8391 = vmax.bf16 %v8390, %v7389
        %v8392 = vmax.bf16 %v8391, %v7397
        %v8393 = vmax.bf16 %v8392, %v7405
        %v8394 = vmax.bf16 %v8393, %v7413
        %v8395 = vmax.bf16 %v8394, %v7421
        %v8396 = vunpack.i.l.bf16 %v8395
        %v8397 = vunpack.i.h.bf16 %v8395
        %v8398 = vmax.f32 %v8396, %v8397
        %v8399 = vrot.slane %v8398, 4
        %v8400 = vmax.f32 %v8398, %v8399
        %v8401 = vrot.slane %v8400, 2
        %v8402 = vmax.f32 %v8400, %v8401
        %v8403 = vrot.slane %v8402, 1
        %v8404 = vmax.f32 %v8402, %v8403
        %v8405 = vpack.i.bf16 %v8404, %v8404
        %v8406 = vmax.bf16 %v7366, %v7374
        %v8407 = vmax.bf16 %v8406, %v7382
        %v8408 = vmax.bf16 %v8407, %v7390
        %v8409 = vmax.bf16 %v8408, %v7398
        %v8410 = vmax.bf16 %v8409, %v7406
        %v8411 = vmax.bf16 %v8410, %v7414
        %v8412 = vmax.bf16 %v8411, %v7422
        %v8413 = vunpack.i.l.bf16 %v8412
        %v8414 = vunpack.i.h.bf16 %v8412
        %v8415 = vmax.f32 %v8413, %v8414
        %v8416 = vrot.slane %v8415, 4
        %v8417 = vmax.f32 %v8415, %v8416
        %v8418 = vrot.slane %v8417, 2
        %v8419 = vmax.f32 %v8417, %v8418
        %v8420 = vrot.slane %v8419, 1
        %v8421 = vmax.f32 %v8419, %v8420
        %v8422 = vpack.i.bf16 %v8421, %v8421
        %v8423 = vmax.bf16 %v7367, %v7375
        %v8424 = vmax.bf16 %v8423, %v7383
        %v8425 = vmax.bf16 %v8424, %v7391
        %v8426 = vmax.bf16 %v8425, %v7399
        %v8427 = vmax.bf16 %v8426, %v7407
        %v8428 = vmax.bf16 %v8427, %v7415
        %v8429 = vmax.bf16 %v8428, %v7423
        %v8430 = vunpack.i.l.bf16 %v8429
        %v8431 = vunpack.i.h.bf16 %v8429
        %v8432 = vmax.f32 %v8430, %v8431
        %v8433 = vrot.slane %v8432, 4
        %v8434 = vmax.f32 %v8432, %v8433
        %v8435 = vrot.slane %v8434, 2
        %v8436 = vmax.f32 %v8434, %v8435
        %v8437 = vrot.slane %v8436, 1
        %v8438 = vmax.f32 %v8436, %v8437
        %v8439 = vpack.i.bf16 %v8438, %v8438
        %v8440 = vmax.bf16 %v7424, %v7432
        %v8441 = vmax.bf16 %v8440, %v7440
        %v8442 = vmax.bf16 %v8441, %v7448
        %v8443 = vmax.bf16 %v8442, %v7456
        %v8444 = vmax.bf16 %v8443, %v7464
        %v8445 = vmax.bf16 %v8444, %v7472
        %v8446 = vmax.bf16 %v8445, %v7480
        %v8447 = vunpack.i.l.bf16 %v8446
        %v8448 = vunpack.i.h.bf16 %v8446
        %v8449 = vmax.f32 %v8447, %v8448
        %v8450 = vrot.slane %v8449, 4
        %v8451 = vmax.f32 %v8449, %v8450
        %v8452 = vrot.slane %v8451, 2
        %v8453 = vmax.f32 %v8451, %v8452
        %v8454 = vrot.slane %v8453, 1
        %v8455 = vmax.f32 %v8453, %v8454
        %v8456 = vpack.i.bf16 %v8455, %v8455
        %v8457 = vmax.bf16 %v7425, %v7433
        %v8458 = vmax.bf16 %v8457, %v7441
        %v8459 = vmax.bf16 %v8458, %v7449
        %v8460 = vmax.bf16 %v8459, %v7457
        %v8461 = vmax.bf16 %v8460, %v7465
        %v8462 = vmax.bf16 %v8461, %v7473
        %v8463 = vmax.bf16 %v8462, %v7481
        %v8464 = vunpack.i.l.bf16 %v8463
        %v8465 = vunpack.i.h.bf16 %v8463
        %v8466 = vmax.f32 %v8464, %v8465
        %v8467 = vrot.slane %v8466, 4
        %v8468 = vmax.f32 %v8466, %v8467
        %v8469 = vrot.slane %v8468, 2
        %v8470 = vmax.f32 %v8468, %v8469
        %v8471 = vrot.slane %v8470, 1
        %v8472 = vmax.f32 %v8470, %v8471
        %v8473 = vpack.i.bf16 %v8472, %v8472
        %v8474 = vmax.bf16 %v7426, %v7434
        %v8475 = vmax.bf16 %v8474, %v7442
        %v8476 = vmax.bf16 %v8475, %v7450
        %v8477 = vmax.bf16 %v8476, %v7458
        %v8478 = vmax.bf16 %v8477, %v7466
        %v8479 = vmax.bf16 %v8478, %v7474
        %v8480 = vmax.bf16 %v8479, %v7482
        %v8481 = vunpack.i.l.bf16 %v8480
        %v8482 = vunpack.i.h.bf16 %v8480
        %v8483 = vmax.f32 %v8481, %v8482
        %v8484 = vrot.slane %v8483, 4
        %v8485 = vmax.f32 %v8483, %v8484
        %v8486 = vrot.slane %v8485, 2
        %v8487 = vmax.f32 %v8485, %v8486
        %v8488 = vrot.slane %v8487, 1
        %v8489 = vmax.f32 %v8487, %v8488
        %v8490 = vpack.i.bf16 %v8489, %v8489
        %v8491 = vmax.bf16 %v7427, %v7435
        %v8492 = vmax.bf16 %v8491, %v7443
        %v8493 = vmax.bf16 %v8492, %v7451
        %v8494 = vmax.bf16 %v8493, %v7459
        %v8495 = vmax.bf16 %v8494, %v7467
        %v8496 = vmax.bf16 %v8495, %v7475
        %v8497 = vmax.bf16 %v8496, %v7483
        %v8498 = vunpack.i.l.bf16 %v8497
        %v8499 = vunpack.i.h.bf16 %v8497
        %v8500 = vmax.f32 %v8498, %v8499
        %v8501 = vrot.slane %v8500, 4
        %v8502 = vmax.f32 %v8500, %v8501
        %v8503 = vrot.slane %v8502, 2
        %v8504 = vmax.f32 %v8502, %v8503
        %v8505 = vrot.slane %v8504, 1
        %v8506 = vmax.f32 %v8504, %v8505
        %v8507 = vpack.i.bf16 %v8506, %v8506
        %v8508 = vmax.bf16 %v7428, %v7436
        %v8509 = vmax.bf16 %v8508, %v7444
        %v8510 = vmax.bf16 %v8509, %v7452
        %v8511 = vmax.bf16 %v8510, %v7460
        %v8512 = vmax.bf16 %v8511, %v7468
        %v8513 = vmax.bf16 %v8512, %v7476
        %v8514 = vmax.bf16 %v8513, %v7484
        %v8515 = vunpack.i.l.bf16 %v8514
        %v8516 = vunpack.i.h.bf16 %v8514
        %v8517 = vmax.f32 %v8515, %v8516
        %v8518 = vrot.slane %v8517, 4
        %v8519 = vmax.f32 %v8517, %v8518
        %v8520 = vrot.slane %v8519, 2
        %v8521 = vmax.f32 %v8519, %v8520
        %v8522 = vrot.slane %v8521, 1
        %v8523 = vmax.f32 %v8521, %v8522
        %v8524 = vpack.i.bf16 %v8523, %v8523
        %v8525 = vmax.bf16 %v7429, %v7437
        %v8526 = vmax.bf16 %v8525, %v7445
        %v8527 = vmax.bf16 %v8526, %v7453
        %v8528 = vmax.bf16 %v8527, %v7461
        %v8529 = vmax.bf16 %v8528, %v7469
        %v8530 = vmax.bf16 %v8529, %v7477
        %v8531 = vmax.bf16 %v8530, %v7485
        %v8532 = vunpack.i.l.bf16 %v8531
        %v8533 = vunpack.i.h.bf16 %v8531
        %v8534 = vmax.f32 %v8532, %v8533
        %v8535 = vrot.slane %v8534, 4
        %v8536 = vmax.f32 %v8534, %v8535
        %v8537 = vrot.slane %v8536, 2
        %v8538 = vmax.f32 %v8536, %v8537
        %v8539 = vrot.slane %v8538, 1
        %v8540 = vmax.f32 %v8538, %v8539
        %v8541 = vpack.i.bf16 %v8540, %v8540
        %v8542 = vmax.bf16 %v7430, %v7438
        %v8543 = vmax.bf16 %v8542, %v7446
        %v8544 = vmax.bf16 %v8543, %v7454
        %v8545 = vmax.bf16 %v8544, %v7462
        %v8546 = vmax.bf16 %v8545, %v7470
        %v8547 = vmax.bf16 %v8546, %v7478
        %v8548 = vmax.bf16 %v8547, %v7486
        %v8549 = vunpack.i.l.bf16 %v8548
        %v8550 = vunpack.i.h.bf16 %v8548
        %v8551 = vmax.f32 %v8549, %v8550
        %v8552 = vrot.slane %v8551, 4
        %v8553 = vmax.f32 %v8551, %v8552
        %v8554 = vrot.slane %v8553, 2
        %v8555 = vmax.f32 %v8553, %v8554
        %v8556 = vrot.slane %v8555, 1
        %v8557 = vmax.f32 %v8555, %v8556
        %v8558 = vpack.i.bf16 %v8557, %v8557
        %v8559 = vmax.bf16 %v7431, %v7439
        %v8560 = vmax.bf16 %v8559, %v7447
        %v8561 = vmax.bf16 %v8560, %v7455
        %v8562 = vmax.bf16 %v8561, %v7463
        %v8563 = vmax.bf16 %v8562, %v7471
        %v8564 = vmax.bf16 %v8563, %v7479
        %v8565 = vmax.bf16 %v8564, %v7487
        %v8566 = vunpack.i.l.bf16 %v8565
        %v8567 = vunpack.i.h.bf16 %v8565
        %v8568 = vmax.f32 %v8566, %v8567
        %v8569 = vrot.slane %v8568, 4
        %v8570 = vmax.f32 %v8568, %v8569
        %v8571 = vrot.slane %v8570, 2
        %v8572 = vmax.f32 %v8570, %v8571
        %v8573 = vrot.slane %v8572, 1
        %v8574 = vmax.f32 %v8572, %v8573
        %v8575 = vpack.i.bf16 %v8574, %v8574
        %v8576 = vld [vmem:[#allocation2] sm:$0xff]
        %v8577 = vld [vmem:[#allocation2 + $0x8] sm:$0xff]
        %v8578 = vld [vmem:[#allocation2 + $0x10] sm:$0xff]
        %v8579 = vld [vmem:[#allocation2 + $0x18] sm:$0xff]
        %v8580 = vld [vmem:[#allocation2 + $0x20] sm:$0xff]
        %v8581 = vld [vmem:[#allocation2 + $0x28] sm:$0xff]
        %v8582 = vld [vmem:[#allocation2 + $0x30] sm:$0xff]
        %v8583 = vld [vmem:[#allocation2 + $0x38] sm:$0xff]
        %v8584 = vld [vmem:[#allocation2 + $0x40] sm:$0xff]
        %v8585 = vld [vmem:[#allocation2 + $0x48] sm:$0xff]
        %v8586 = vld [vmem:[#allocation2 + $0x50] sm:$0xff]
        %v8587 = vld [vmem:[#allocation2 + $0x58] sm:$0xff]
        %v8588 = vld [vmem:[#allocation2 + $0x60] sm:$0xff]
        %v8589 = vld [vmem:[#allocation2 + $0x68] sm:$0xff]
        %v8590 = vld [vmem:[#allocation2 + $0x70] sm:$0xff]
        %v8591 = vld [vmem:[#allocation2 + $0x78] sm:$0xff]
        %v8592 = vld [vmem:[#allocation2 + $0x80] sm:$0xff]
        %v8593 = vld [vmem:[#allocation2 + $0x88] sm:$0xff]
        %v8594 = vld [vmem:[#allocation2 + $0x90] sm:$0xff]
        %v8595 = vld [vmem:[#allocation2 + $0x98] sm:$0xff]
        %v8596 = vld [vmem:[#allocation2 + $0xa0] sm:$0xff]
        %v8597 = vld [vmem:[#allocation2 + $0xa8] sm:$0xff]
        %v8598 = vld [vmem:[#allocation2 + $0xb0] sm:$0xff]
        %v8599 = vld [vmem:[#allocation2 + $0xb8] sm:$0xff]
        %v8600 = vld [vmem:[#allocation2 + $0xc0] sm:$0xff]
        %v8601 = vld [vmem:[#allocation2 + $0xc8] sm:$0xff]
        %v8602 = vld [vmem:[#allocation2 + $0xd0] sm:$0xff]
        %v8603 = vld [vmem:[#allocation2 + $0xd8] sm:$0xff]
        %v8604 = vld [vmem:[#allocation2 + $0xe0] sm:$0xff]
        %v8605 = vld [vmem:[#allocation2 + $0xe8] sm:$0xff]
        %v8606 = vld [vmem:[#allocation2 + $0xf0] sm:$0xff]
        %v8607 = vld [vmem:[#allocation2 + $0xf8] sm:$0xff]
        %v8608 = vld [vmem:[#allocation2 + $0x100] sm:$0xff]
        %v8609 = vld [vmem:[#allocation2 + $0x108] sm:$0xff]
        %v8610 = vld [vmem:[#allocation2 + $0x110] sm:$0xff]
        %v8611 = vld [vmem:[#allocation2 + $0x118] sm:$0xff]
        %v8612 = vld [vmem:[#allocation2 + $0x120] sm:$0xff]
        %v8613 = vld [vmem:[#allocation2 + $0x128] sm:$0xff]
        %v8614 = vld [vmem:[#allocation2 + $0x130] sm:$0xff]
        %v8615 = vld [vmem:[#allocation2 + $0x138] sm:$0xff]
        %v8616 = vld [vmem:[#allocation2 + $0x140] sm:$0xff]
        %v8617 = vld [vmem:[#allocation2 + $0x148] sm:$0xff]
        %v8618 = vld [vmem:[#allocation2 + $0x150] sm:$0xff]
        %v8619 = vld [vmem:[#allocation2 + $0x158] sm:$0xff]
        %v8620 = vld [vmem:[#allocation2 + $0x160] sm:$0xff]
        %v8621 = vld [vmem:[#allocation2 + $0x168] sm:$0xff]
        %v8622 = vld [vmem:[#allocation2 + $0x170] sm:$0xff]
        %v8623 = vld [vmem:[#allocation2 + $0x178] sm:$0xff]
        %v8624 = vld [vmem:[#allocation2 + $0x180] sm:$0xff]
        %v8625 = vld [vmem:[#allocation2 + $0x188] sm:$0xff]
        %v8626 = vld [vmem:[#allocation2 + $0x190] sm:$0xff]
        %v8627 = vld [vmem:[#allocation2 + $0x198] sm:$0xff]
        %v8628 = vld [vmem:[#allocation2 + $0x1a0] sm:$0xff]
        %v8629 = vld [vmem:[#allocation2 + $0x1a8] sm:$0xff]
        %v8630 = vld [vmem:[#allocation2 + $0x1b0] sm:$0xff]
        %v8631 = vld [vmem:[#allocation2 + $0x1b8] sm:$0xff]
        %v8632 = vld [vmem:[#allocation2 + $0x1c0] sm:$0xff]
        %v8633 = vld [vmem:[#allocation2 + $0x1c8] sm:$0xff]
        %v8634 = vld [vmem:[#allocation2 + $0x1d0] sm:$0xff]
        %v8635 = vld [vmem:[#allocation2 + $0x1d8] sm:$0xff]
        %v8636 = vld [vmem:[#allocation2 + $0x1e0] sm:$0xff]
        %v8637 = vld [vmem:[#allocation2 + $0x1e8] sm:$0xff]
        %v8638 = vld [vmem:[#allocation2 + $0x1f0] sm:$0xff]
        %v8639 = vld [vmem:[#allocation2 + $0x1f8] sm:$0xff]
        %v8640 = vld [vmem:[#allocation2 + $0x200] sm:$0xff]
        %v8641 = vld [vmem:[#allocation2 + $0x208] sm:$0xff]
        %v8642 = vld [vmem:[#allocation2 + $0x210] sm:$0xff]
        %v8643 = vld [vmem:[#allocation2 + $0x218] sm:$0xff]
        %v8644 = vld [vmem:[#allocation2 + $0x220] sm:$0xff]
        %v8645 = vld [vmem:[#allocation2 + $0x228] sm:$0xff]
        %v8646 = vld [vmem:[#allocation2 + $0x230] sm:$0xff]
        %v8647 = vld [vmem:[#allocation2 + $0x238] sm:$0xff]
        %v8648 = vld [vmem:[#allocation2 + $0x240] sm:$0xff]
        %v8649 = vld [vmem:[#allocation2 + $0x248] sm:$0xff]
        %v8650 = vld [vmem:[#allocation2 + $0x250] sm:$0xff]
        %v8651 = vld [vmem:[#allocation2 + $0x258] sm:$0xff]
        %v8652 = vld [vmem:[#allocation2 + $0x260] sm:$0xff]
        %v8653 = vld [vmem:[#allocation2 + $0x268] sm:$0xff]
        %v8654 = vld [vmem:[#allocation2 + $0x270] sm:$0xff]
        %v8655 = vld [vmem:[#allocation2 + $0x278] sm:$0xff]
        %v8656 = vld [vmem:[#allocation2 + $0x280] sm:$0xff]
        %v8657 = vld [vmem:[#allocation2 + $0x288] sm:$0xff]
        %v8658 = vld [vmem:[#allocation2 + $0x290] sm:$0xff]
        %v8659 = vld [vmem:[#allocation2 + $0x298] sm:$0xff]
        %v8660 = vld [vmem:[#allocation2 + $0x2a0] sm:$0xff]
        %v8661 = vld [vmem:[#allocation2 + $0x2a8] sm:$0xff]
        %v8662 = vld [vmem:[#allocation2 + $0x2b0] sm:$0xff]
        %v8663 = vld [vmem:[#allocation2 + $0x2b8] sm:$0xff]
        %v8664 = vld [vmem:[#allocation2 + $0x2c0] sm:$0xff]
        %v8665 = vld [vmem:[#allocation2 + $0x2c8] sm:$0xff]
        %v8666 = vld [vmem:[#allocation2 + $0x2d0] sm:$0xff]
        %v8667 = vld [vmem:[#allocation2 + $0x2d8] sm:$0xff]
        %v8668 = vld [vmem:[#allocation2 + $0x2e0] sm:$0xff]
        %v8669 = vld [vmem:[#allocation2 + $0x2e8] sm:$0xff]
        %v8670 = vld [vmem:[#allocation2 + $0x2f0] sm:$0xff]
        %v8671 = vld [vmem:[#allocation2 + $0x2f8] sm:$0xff]
        %v8672 = vld [vmem:[#allocation2 + $0x300] sm:$0xff]
        %v8673 = vld [vmem:[#allocation2 + $0x308] sm:$0xff]
        %v8674 = vld [vmem:[#allocation2 + $0x310] sm:$0xff]
        %v8675 = vld [vmem:[#allocation2 + $0x318] sm:$0xff]
        %v8676 = vld [vmem:[#allocation2 + $0x320] sm:$0xff]
        %v8677 = vld [vmem:[#allocation2 + $0x328] sm:$0xff]
        %v8678 = vld [vmem:[#allocation2 + $0x330] sm:$0xff]
        %v8679 = vld [vmem:[#allocation2 + $0x338] sm:$0xff]
        %v8680 = vld [vmem:[#allocation2 + $0x340] sm:$0xff]
        %v8681 = vld [vmem:[#allocation2 + $0x348] sm:$0xff]
        %v8682 = vld [vmem:[#allocation2 + $0x350] sm:$0xff]
        %v8683 = vld [vmem:[#allocation2 + $0x358] sm:$0xff]
        %v8684 = vld [vmem:[#allocation2 + $0x360] sm:$0xff]
        %v8685 = vld [vmem:[#allocation2 + $0x368] sm:$0xff]
        %v8686 = vld [vmem:[#allocation2 + $0x370] sm:$0xff]
        %v8687 = vld [vmem:[#allocation2 + $0x378] sm:$0xff]
        %v8688 = vld [vmem:[#allocation2 + $0x380] sm:$0xff]
        %v8689 = vld [vmem:[#allocation2 + $0x388] sm:$0xff]
        %v8690 = vld [vmem:[#allocation2 + $0x390] sm:$0xff]
        %v8691 = vld [vmem:[#allocation2 + $0x398] sm:$0xff]
        %v8692 = vld [vmem:[#allocation2 + $0x3a0] sm:$0xff]
        %v8693 = vld [vmem:[#allocation2 + $0x3a8] sm:$0xff]
        %v8694 = vld [vmem:[#allocation2 + $0x3b0] sm:$0xff]
        %v8695 = vld [vmem:[#allocation2 + $0x3b8] sm:$0xff]
        %v8696 = vld [vmem:[#allocation2 + $0x3c0] sm:$0xff]
        %v8697 = vld [vmem:[#allocation2 + $0x3c8] sm:$0xff]
        %v8698 = vld [vmem:[#allocation2 + $0x3d0] sm:$0xff]
        %v8699 = vld [vmem:[#allocation2 + $0x3d8] sm:$0xff]
        %v8700 = vld [vmem:[#allocation2 + $0x3e0] sm:$0xff]
        %v8701 = vld [vmem:[#allocation2 + $0x3e8] sm:$0xff]
        %v8702 = vld [vmem:[#allocation2 + $0x3f0] sm:$0xff]
        %v8703 = vld [vmem:[#allocation2 + $0x3f8] sm:$0xff]
        %v8704 = vld [vmem:[#allocation2 + $0x400] sm:$0xff]
        %v8705 = vld [vmem:[#allocation2 + $0x408] sm:$0xff]
        %v8706 = vld [vmem:[#allocation2 + $0x410] sm:$0xff]
        %v8707 = vld [vmem:[#allocation2 + $0x418] sm:$0xff]
        %v8708 = vld [vmem:[#allocation2 + $0x420] sm:$0xff]
        %v8709 = vld [vmem:[#allocation2 + $0x428] sm:$0xff]
        %v8710 = vld [vmem:[#allocation2 + $0x430] sm:$0xff]
        %v8711 = vld [vmem:[#allocation2 + $0x438] sm:$0xff]
        %v8712 = vld [vmem:[#allocation2 + $0x440] sm:$0xff]
        %v8713 = vld [vmem:[#allocation2 + $0x448] sm:$0xff]
        %v8714 = vld [vmem:[#allocation2 + $0x450] sm:$0xff]
        %v8715 = vld [vmem:[#allocation2 + $0x458] sm:$0xff]
        %v8716 = vld [vmem:[#allocation2 + $0x460] sm:$0xff]
        %v8717 = vld [vmem:[#allocation2 + $0x468] sm:$0xff]
        %v8718 = vld [vmem:[#allocation2 + $0x470] sm:$0xff]
        %v8719 = vld [vmem:[#allocation2 + $0x478] sm:$0xff]
        %v8720 = vld [vmem:[#allocation2 + $0x480] sm:$0xff]
        %v8721 = vld [vmem:[#allocation2 + $0x488] sm:$0xff]
        %v8722 = vld [vmem:[#allocation2 + $0x490] sm:$0xff]
        %v8723 = vld [vmem:[#allocation2 + $0x498] sm:$0xff]
        %v8724 = vld [vmem:[#allocation2 + $0x4a0] sm:$0xff]
        %v8725 = vld [vmem:[#allocation2 + $0x4a8] sm:$0xff]
        %v8726 = vld [vmem:[#allocation2 + $0x4b0] sm:$0xff]
        %v8727 = vld [vmem:[#allocation2 + $0x4b8] sm:$0xff]
        %v8728 = vld [vmem:[#allocation2 + $0x4c0] sm:$0xff]
        %v8729 = vld [vmem:[#allocation2 + $0x4c8] sm:$0xff]
        %v8730 = vld [vmem:[#allocation2 + $0x4d0] sm:$0xff]
        %v8731 = vld [vmem:[#allocation2 + $0x4d8] sm:$0xff]
        %v8732 = vld [vmem:[#allocation2 + $0x4e0] sm:$0xff]
        %v8733 = vld [vmem:[#allocation2 + $0x4e8] sm:$0xff]
        %v8734 = vld [vmem:[#allocation2 + $0x4f0] sm:$0xff]
        %v8735 = vld [vmem:[#allocation2 + $0x4f8] sm:$0xff]
        %v8736 = vld [vmem:[#allocation2 + $0x500] sm:$0xff]
        %v8737 = vld [vmem:[#allocation2 + $0x508] sm:$0xff]
        %v8738 = vld [vmem:[#allocation2 + $0x510] sm:$0xff]
        %v8739 = vld [vmem:[#allocation2 + $0x518] sm:$0xff]
        %v8740 = vld [vmem:[#allocation2 + $0x520] sm:$0xff]
        %v8741 = vld [vmem:[#allocation2 + $0x528] sm:$0xff]
        %v8742 = vld [vmem:[#allocation2 + $0x530] sm:$0xff]
        %v8743 = vld [vmem:[#allocation2 + $0x538] sm:$0xff]
        %v8744 = vld [vmem:[#allocation2 + $0x540] sm:$0xff]
        %v8745 = vld [vmem:[#allocation2 + $0x548] sm:$0xff]
        %v8746 = vld [vmem:[#allocation2 + $0x550] sm:$0xff]
        %v8747 = vld [vmem:[#allocation2 + $0x558] sm:$0xff]
        %v8748 = vld [vmem:[#allocation2 + $0x560] sm:$0xff]
        %v8749 = vld [vmem:[#allocation2 + $0x568] sm:$0xff]
        %v8750 = vld [vmem:[#allocation2 + $0x570] sm:$0xff]
        %v8751 = vld [vmem:[#allocation2 + $0x578] sm:$0xff]
        %v8752 = vld [vmem:[#allocation2 + $0x580] sm:$0xff]
        %v8753 = vld [vmem:[#allocation2 + $0x588] sm:$0xff]
        %v8754 = vld [vmem:[#allocation2 + $0x590] sm:$0xff]
        %v8755 = vld [vmem:[#allocation2 + $0x598] sm:$0xff]
        %v8756 = vld [vmem:[#allocation2 + $0x5a0] sm:$0xff]
        %v8757 = vld [vmem:[#allocation2 + $0x5a8] sm:$0xff]
        %v8758 = vld [vmem:[#allocation2 + $0x5b0] sm:$0xff]
        %v8759 = vld [vmem:[#allocation2 + $0x5b8] sm:$0xff]
        %v8760 = vld [vmem:[#allocation2 + $0x5c0] sm:$0xff]
        %v8761 = vld [vmem:[#allocation2 + $0x5c8] sm:$0xff]
        %v8762 = vld [vmem:[#allocation2 + $0x5d0] sm:$0xff]
        %v8763 = vld [vmem:[#allocation2 + $0x5d8] sm:$0xff]
        %v8764 = vld [vmem:[#allocation2 + $0x5e0] sm:$0xff]
        %v8765 = vld [vmem:[#allocation2 + $0x5e8] sm:$0xff]
        %v8766 = vld [vmem:[#allocation2 + $0x5f0] sm:$0xff]
        %v8767 = vld [vmem:[#allocation2 + $0x5f8] sm:$0xff]
        %v8768 = vld [vmem:[#allocation2 + $0x600] sm:$0xff]
        %v8769 = vld [vmem:[#allocation2 + $0x608] sm:$0xff]
        %v8770 = vld [vmem:[#allocation2 + $0x610] sm:$0xff]
        %v8771 = vld [vmem:[#allocation2 + $0x618] sm:$0xff]
        %v8772 = vld [vmem:[#allocation2 + $0x620] sm:$0xff]
        %v8773 = vld [vmem:[#allocation2 + $0x628] sm:$0xff]
        %v8774 = vld [vmem:[#allocation2 + $0x630] sm:$0xff]
        %v8775 = vld [vmem:[#allocation2 + $0x638] sm:$0xff]
        %v8776 = vld [vmem:[#allocation2 + $0x640] sm:$0xff]
        %v8777 = vld [vmem:[#allocation2 + $0x648] sm:$0xff]
        %v8778 = vld [vmem:[#allocation2 + $0x650] sm:$0xff]
        %v8779 = vld [vmem:[#allocation2 + $0x658] sm:$0xff]
        %v8780 = vld [vmem:[#allocation2 + $0x660] sm:$0xff]
        %v8781 = vld [vmem:[#allocation2 + $0x668] sm:$0xff]
        %v8782 = vld [vmem:[#allocation2 + $0x670] sm:$0xff]
        %v8783 = vld [vmem:[#allocation2 + $0x678] sm:$0xff]
        %v8784 = vld [vmem:[#allocation2 + $0x680] sm:$0xff]
        %v8785 = vld [vmem:[#allocation2 + $0x688] sm:$0xff]
        %v8786 = vld [vmem:[#allocation2 + $0x690] sm:$0xff]
        %v8787 = vld [vmem:[#allocation2 + $0x698] sm:$0xff]
        %v8788 = vld [vmem:[#allocation2 + $0x6a0] sm:$0xff]
        %v8789 = vld [vmem:[#allocation2 + $0x6a8] sm:$0xff]
        %v8790 = vld [vmem:[#allocation2 + $0x6b0] sm:$0xff]
        %v8791 = vld [vmem:[#allocation2 + $0x6b8] sm:$0xff]
        %v8792 = vld [vmem:[#allocation2 + $0x6c0] sm:$0xff]
        %v8793 = vld [vmem:[#allocation2 + $0x6c8] sm:$0xff]
        %v8794 = vld [vmem:[#allocation2 + $0x6d0] sm:$0xff]
        %v8795 = vld [vmem:[#allocation2 + $0x6d8] sm:$0xff]
        %v8796 = vld [vmem:[#allocation2 + $0x6e0] sm:$0xff]
        %v8797 = vld [vmem:[#allocation2 + $0x6e8] sm:$0xff]
        %v8798 = vld [vmem:[#allocation2 + $0x6f0] sm:$0xff]
        %v8799 = vld [vmem:[#allocation2 + $0x6f8] sm:$0xff]
        %v8800 = vld [vmem:[#allocation2 + $0x700] sm:$0xff]
        %v8801 = vld [vmem:[#allocation2 + $0x708] sm:$0xff]
        %v8802 = vld [vmem:[#allocation2 + $0x710] sm:$0xff]
        %v8803 = vld [vmem:[#allocation2 + $0x718] sm:$0xff]
        %v8804 = vld [vmem:[#allocation2 + $0x720] sm:$0xff]
        %v8805 = vld [vmem:[#allocation2 + $0x728] sm:$0xff]
        %v8806 = vld [vmem:[#allocation2 + $0x730] sm:$0xff]
        %v8807 = vld [vmem:[#allocation2 + $0x738] sm:$0xff]
        %v8808 = vld [vmem:[#allocation2 + $0x740] sm:$0xff]
        %v8809 = vld [vmem:[#allocation2 + $0x748] sm:$0xff]
        %v8810 = vld [vmem:[#allocation2 + $0x750] sm:$0xff]
        %v8811 = vld [vmem:[#allocation2 + $0x758] sm:$0xff]
        %v8812 = vld [vmem:[#allocation2 + $0x760] sm:$0xff]
        %v8813 = vld [vmem:[#allocation2 + $0x768] sm:$0xff]
        %v8814 = vld [vmem:[#allocation2 + $0x770] sm:$0xff]
        %v8815 = vld [vmem:[#allocation2 + $0x778] sm:$0xff]
        %v8816 = vld [vmem:[#allocation2 + $0x780] sm:$0xff]
        %v8817 = vld [vmem:[#allocation2 + $0x788] sm:$0xff]
        %v8818 = vld [vmem:[#allocation2 + $0x790] sm:$0xff]
        %v8819 = vld [vmem:[#allocation2 + $0x798] sm:$0xff]
        %v8820 = vld [vmem:[#allocation2 + $0x7a0] sm:$0xff]
        %v8821 = vld [vmem:[#allocation2 + $0x7a8] sm:$0xff]
        %v8822 = vld [vmem:[#allocation2 + $0x7b0] sm:$0xff]
        %v8823 = vld [vmem:[#allocation2 + $0x7b8] sm:$0xff]
        %v8824 = vld [vmem:[#allocation2 + $0x7c0] sm:$0xff]
        %v8825 = vld [vmem:[#allocation2 + $0x7c8] sm:$0xff]
        %v8826 = vld [vmem:[#allocation2 + $0x7d0] sm:$0xff]
        %v8827 = vld [vmem:[#allocation2 + $0x7d8] sm:$0xff]
        %v8828 = vld [vmem:[#allocation2 + $0x7e0] sm:$0xff]
        %v8829 = vld [vmem:[#allocation2 + $0x7e8] sm:$0xff]
        %v8830 = vld [vmem:[#allocation2 + $0x7f0] sm:$0xff]
        %v8831 = vld [vmem:[#allocation2 + $0x7f8] sm:$0xff]
        %v8832 = vld [vmem:[%s8] sm:$0xf]
        %v8834 = vlaneseq
        %v8835 = vshrl.u32 %v8834, 7
        %v8836 = vsub.s32 0, %v8835
        %v8837 = vrot.slane %v8832, %v8836
        %v8838 = vlaneseq
        %v8839 = vshrl.u32 %v8838, 7
        %v8840 = vsub.s32 1, %v8839
        %v8841 = vrot.slane %v8832, %v8840
        %v8842 = vlaneseq
        %v8843 = vshrl.u32 %v8842, 7
        %v8844 = vsub.s32 2, %v8843
        %v8845 = vrot.slane %v8832, %v8844
        %v8846 = vlaneseq
        %v8847 = vshrl.u32 %v8846, 7
        %v8848 = vsub.s32 3, %v8847
        %v8849 = vrot.slane %v8832, %v8848
        %v8918 = vunpack.c.l.b16 %v7504
        %v8919 = vunpack.c.l.b16 %v7521
        %v8920 = vunpack.c.l.b16 %v7538
        %v8921 = vunpack.c.l.b16 %v7555
        %v8922 = vunpack.c.l.b16 %v7572
        %v8923 = vunpack.c.l.b16 %v7589
        %v8924 = vunpack.c.l.b16 %v7606
        %v8925 = vunpack.c.l.b16 %v7623
        %v8926 = vunpack.c.l.b16 %v7640
        %v8927 = vunpack.c.l.b16 %v7657
        %v8928 = vunpack.c.l.b16 %v7674
        %v8929 = vunpack.c.l.b16 %v7691
        %v8930 = vunpack.c.l.b16 %v7708
        %v8931 = vunpack.c.l.b16 %v7725
        %v8932 = vunpack.c.l.b16 %v7742
        %v8933 = vunpack.c.l.b16 %v7759
        %v8934 = vunpack.c.l.b16 %v7776
        %v8935 = vunpack.c.l.b16 %v7793
        %v8936 = vunpack.c.l.b16 %v7810
        %v8937 = vunpack.c.l.b16 %v7827
        %v8938 = vunpack.c.l.b16 %v7844
        %v8939 = vunpack.c.l.b16 %v7861
        %v8940 = vunpack.c.l.b16 %v7878
        %v8941 = vunpack.c.l.b16 %v7895
        %v8942 = vunpack.c.l.b16 %v7912
        %v8943 = vunpack.c.l.b16 %v7929
        %v8944 = vunpack.c.l.b16 %v7946
        %v8945 = vunpack.c.l.b16 %v7963
        %v8946 = vunpack.c.l.b16 %v7980
        %v8947 = vunpack.c.l.b16 %v7997
        %v8948 = vunpack.c.l.b16 %v8014
        %v8949 = vunpack.c.l.b16 %v8031
        %v8950 = vunpack.c.l.b16 %v8048
        %v8951 = vunpack.c.l.b16 %v8065
        %v8952 = vunpack.c.l.b16 %v8082
        %v8953 = vunpack.c.l.b16 %v8099
        %v8954 = vunpack.c.l.b16 %v8116
        %v8955 = vunpack.c.l.b16 %v8133
        %v8956 = vunpack.c.l.b16 %v8150
        %v8957 = vunpack.c.l.b16 %v8167
        %v8958 = vunpack.c.l.b16 %v8184
        %v8959 = vunpack.c.l.b16 %v8201
        %v8960 = vunpack.c.l.b16 %v8218
        %v8961 = vunpack.c.l.b16 %v8235
        %v8962 = vunpack.c.l.b16 %v8252
        %v8963 = vunpack.c.l.b16 %v8269
        %v8964 = vunpack.c.l.b16 %v8286
        %v8965 = vunpack.c.l.b16 %v8303
        %v8966 = vunpack.c.l.b16 %v8320
        %v8967 = vunpack.c.l.b16 %v8337
        %v8968 = vunpack.c.l.b16 %v8354
        %v8969 = vunpack.c.l.b16 %v8371
        %v8970 = vunpack.c.l.b16 %v8388
        %v8971 = vunpack.c.l.b16 %v8405
        %v8972 = vunpack.c.l.b16 %v8422
        %v8973 = vunpack.c.l.b16 %v8439
        %v8974 = vunpack.c.l.b16 %v8456
        %v8975 = vunpack.c.l.b16 %v8473
        %v8976 = vunpack.c.l.b16 %v8490
        %v8977 = vunpack.c.l.b16 %v8507
        %v8978 = vunpack.c.l.b16 %v8524
        %v8979 = vunpack.c.l.b16 %v8541
        %v8980 = vunpack.c.l.b16 %v8558
        %v8981 = vunpack.c.l.b16 %v8575
        %vm8982 = vcmask 1041409
        %v8983 = vsel %vm8982, %v8926, %v8918
        %vm8984 = vcmask 1042434
        %v8985 = vsel %vm8984, %v8934, %v8983
        %vm8986 = vcmask 1043459
        %v8987 = vsel %vm8986, %v8942, %v8985
        %vm8988 = vcmask 1044484
        %v8989 = vsel %vm8988, %v8950, %v8987
        %vm8990 = vcmask 1045509
        %v8991 = vsel %vm8990, %v8958, %v8989
        %vm8992 = vcmask 1046534
        %v8993 = vsel %vm8992, %v8966, %v8991
        %vm8994 = vcmask 1047559
        %v8995 = vsel %vm8994, %v8974, %v8993
        %v8996 = vsel %vm8982, %v8927, %v8919
        %v8997 = vsel %vm8984, %v8935, %v8996
        %v8998 = vsel %vm8986, %v8943, %v8997
        %v8999 = vsel %vm8988, %v8951, %v8998
        %v9000 = vsel %vm8990, %v8959, %v8999
        %v9001 = vsel %vm8992, %v8967, %v9000
        %v9002 = vsel %vm8994, %v8975, %v9001
        %v9003 = vsel %vm8982, %v8928, %v8920
        %v9004 = vsel %vm8984, %v8936, %v9003
        %v9005 = vsel %vm8986, %v8944, %v9004
        %v9006 = vsel %vm8988, %v8952, %v9005
        %v9007 = vsel %vm8990, %v8960, %v9006
        %v9008 = vsel %vm8992, %v8968, %v9007
        %v9009 = vsel %vm8994, %v8976, %v9008
        %v9010 = vsel %vm8982, %v8929, %v8921
        %v9011 = vsel %vm8984, %v8937, %v9010
        %v9012 = vsel %vm8986, %v8945, %v9011
        %v9013 = vsel %vm8988, %v8953, %v9012
        %v9014 = vsel %vm8990, %v8961, %v9013
        %v9015 = vsel %vm8992, %v8969, %v9014
        %v9016 = vsel %vm8994, %v8977, %v9015
        %v9017 = vsel %vm8982, %v8930, %v8922
        %v9018 = vsel %vm8984, %v8938, %v9017
        %v9019 = vsel %vm8986, %v8946, %v9018
        %v9020 = vsel %vm8988, %v8954, %v9019
        %v9021 = vsel %vm8990, %v8962, %v9020
        %v9022 = vsel %vm8992, %v8970, %v9021
        %v9023 = vsel %vm8994, %v8978, %v9022
        %v9024 = vsel %vm8982, %v8931, %v8923
        %v9025 = vsel %vm8984, %v8939, %v9024
        %v9026 = vsel %vm8986, %v8947, %v9025
        %v9027 = vsel %vm8988, %v8955, %v9026
        %v9028 = vsel %vm8990, %v8963, %v9027
        %v9029 = vsel %vm8992, %v8971, %v9028
        %v9030 = vsel %vm8994, %v8979, %v9029
        %v9031 = vsel %vm8982, %v8932, %v8924
        %v9032 = vsel %vm8984, %v8940, %v9031
        %v9033 = vsel %vm8986, %v8948, %v9032
        %v9034 = vsel %vm8988, %v8956, %v9033
        %v9035 = vsel %vm8990, %v8964, %v9034
        %v9036 = vsel %vm8992, %v8972, %v9035
        %v9037 = vsel %vm8994, %v8980, %v9036
        %v9038 = vsel %vm8982, %v8933, %v8925
        %v9039 = vsel %vm8984, %v8941, %v9038
        %v9040 = vsel %vm8986, %v8949, %v9039
        %v9041 = vsel %vm8988, %v8957, %v9040
        %v9042 = vsel %vm8990, %v8965, %v9041
        %v9043 = vsel %vm8992, %v8973, %v9042
        %v9044 = vsel %vm8994, %v8981, %v9043
        %v9045 = vpack.c.b16 %v8995, %v8995
        %v9046 = vpack.c.b16 %v9002, %v9002
        %v9047 = vpack.c.b16 %v9009, %v9009
        %v9048 = vpack.c.b16 %v9016, %v9016
        %v9049 = vpack.c.b16 %v9023, %v9023
        %v9050 = vpack.c.b16 %v9030, %v9030
        %v9051 = vpack.c.b16 %v9037, %v9037
        %v9052 = vpack.c.b16 %v9044, %v9044
        %v9317 = vunpack.c.l.b16 %v8576
        %v9318 = vunpack.c.h.b16 %v8576
        %v9319 = vunpack.c.l.b16 %v8577
        %v9320 = vunpack.c.h.b16 %v8577
        %v9321 = vunpack.c.l.b16 %v8578
        %v9322 = vunpack.c.h.b16 %v8578
        %v9323 = vunpack.c.l.b16 %v8579
        %v9324 = vunpack.c.h.b16 %v8579
        %v9325 = vunpack.c.l.b16 %v8580
        %v9326 = vunpack.c.h.b16 %v8580
        %v9327 = vunpack.c.l.b16 %v8581
        %v9328 = vunpack.c.h.b16 %v8581
        %v9329 = vunpack.c.l.b16 %v8582
        %v9330 = vunpack.c.h.b16 %v8582
        %v9331 = vunpack.c.l.b16 %v8583
        %v9332 = vunpack.c.h.b16 %v8583
        %v9333 = vunpack.c.l.b16 %v8584
        %v9334 = vunpack.c.h.b16 %v8584
        %v9335 = vunpack.c.l.b16 %v8585
        %v9336 = vunpack.c.h.b16 %v8585
        %v9337 = vunpack.c.l.b16 %v8586
        %v9338 = vunpack.c.h.b16 %v8586
        %v9339 = vunpack.c.l.b16 %v8587
        %v9340 = vunpack.c.h.b16 %v8587
        %v9341 = vunpack.c.l.b16 %v8588
        %v9342 = vunpack.c.h.b16 %v8588
        %v9343 = vunpack.c.l.b16 %v8589
        %v9344 = vunpack.c.h.b16 %v8589
        %v9345 = vunpack.c.l.b16 %v8590
        %v9346 = vunpack.c.h.b16 %v8590
        %v9347 = vunpack.c.l.b16 %v8591
        %v9348 = vunpack.c.h.b16 %v8591
        %v9349 = vunpack.c.l.b16 %v8592
        %v9350 = vunpack.c.h.b16 %v8592
        %v9351 = vunpack.c.l.b16 %v8593
        %v9352 = vunpack.c.h.b16 %v8593
        %v9353 = vunpack.c.l.b16 %v8594
        %v9354 = vunpack.c.h.b16 %v8594
        %v9355 = vunpack.c.l.b16 %v8595
        %v9356 = vunpack.c.h.b16 %v8595
        %v9357 = vunpack.c.l.b16 %v8596
        %v9358 = vunpack.c.h.b16 %v8596
        %v9359 = vunpack.c.l.b16 %v8597
        %v9360 = vunpack.c.h.b16 %v8597
        %v9361 = vunpack.c.l.b16 %v8598
        %v9362 = vunpack.c.h.b16 %v8598
        %v9363 = vunpack.c.l.b16 %v8599
        %v9364 = vunpack.c.h.b16 %v8599
        %v9365 = vunpack.c.l.b16 %v8600
        %v9366 = vunpack.c.h.b16 %v8600
        %v9367 = vunpack.c.l.b16 %v8601
        %v9368 = vunpack.c.h.b16 %v8601
        %v9369 = vunpack.c.l.b16 %v8602
        %v9370 = vunpack.c.h.b16 %v8602
        %v9371 = vunpack.c.l.b16 %v8603
        %v9372 = vunpack.c.h.b16 %v8603
        %v9373 = vunpack.c.l.b16 %v8604
        %v9374 = vunpack.c.h.b16 %v8604
        %v9375 = vunpack.c.l.b16 %v8605
        %v9376 = vunpack.c.h.b16 %v8605
        %v9377 = vunpack.c.l.b16 %v8606
        %v9378 = vunpack.c.h.b16 %v8606
        %v9379 = vunpack.c.l.b16 %v8607
        %v9380 = vunpack.c.h.b16 %v8607
        %v9381 = vunpack.c.l.b16 %v8608
        %v9382 = vunpack.c.h.b16 %v8608
        %v9383 = vunpack.c.l.b16 %v8609
        %v9384 = vunpack.c.h.b16 %v8609
        %v9385 = vunpack.c.l.b16 %v8610
        %v9386 = vunpack.c.h.b16 %v8610
        %v9387 = vunpack.c.l.b16 %v8611
        %v9388 = vunpack.c.h.b16 %v8611
        %v9389 = vunpack.c.l.b16 %v8612
        %v9390 = vunpack.c.h.b16 %v8612
        %v9391 = vunpack.c.l.b16 %v8613
        %v9392 = vunpack.c.h.b16 %v8613
        %v9393 = vunpack.c.l.b16 %v8614
        %v9394 = vunpack.c.h.b16 %v8614
        %v9395 = vunpack.c.l.b16 %v8615
        %v9396 = vunpack.c.h.b16 %v8615
        %v9397 = vunpack.c.l.b16 %v8616
        %v9398 = vunpack.c.h.b16 %v8616
        %v9399 = vunpack.c.l.b16 %v8617
        %v9400 = vunpack.c.h.b16 %v8617
        %v9401 = vunpack.c.l.b16 %v8618
        %v9402 = vunpack.c.h.b16 %v8618
        %v9403 = vunpack.c.l.b16 %v8619
        %v9404 = vunpack.c.h.b16 %v8619
        %v9405 = vunpack.c.l.b16 %v8620
        %v9406 = vunpack.c.h.b16 %v8620
        %v9407 = vunpack.c.l.b16 %v8621
        %v9408 = vunpack.c.h.b16 %v8621
        %v9409 = vunpack.c.l.b16 %v8622
        %v9410 = vunpack.c.h.b16 %v8622
        %v9411 = vunpack.c.l.b16 %v8623
        %v9412 = vunpack.c.h.b16 %v8623
        %v9413 = vunpack.c.l.b16 %v8624
        %v9414 = vunpack.c.h.b16 %v8624
        %v9415 = vunpack.c.l.b16 %v8625
        %v9416 = vunpack.c.h.b16 %v8625
        %v9417 = vunpack.c.l.b16 %v8626
        %v9418 = vunpack.c.h.b16 %v8626
        %v9419 = vunpack.c.l.b16 %v8627
        %v9420 = vunpack.c.h.b16 %v8627
        %v9421 = vunpack.c.l.b16 %v8628
        %v9422 = vunpack.c.h.b16 %v8628
        %v9423 = vunpack.c.l.b16 %v8629
        %v9424 = vunpack.c.h.b16 %v8629
        %v9425 = vunpack.c.l.b16 %v8630
        %v9426 = vunpack.c.h.b16 %v8630
        %v9427 = vunpack.c.l.b16 %v8631
        %v9428 = vunpack.c.h.b16 %v8631
        %v9429 = vunpack.c.l.b16 %v8632
        %v9430 = vunpack.c.h.b16 %v8632
        %v9431 = vunpack.c.l.b16 %v8633
        %v9432 = vunpack.c.h.b16 %v8633
        %v9433 = vunpack.c.l.b16 %v8634
        %v9434 = vunpack.c.h.b16 %v8634
        %v9435 = vunpack.c.l.b16 %v8635
        %v9436 = vunpack.c.h.b16 %v8635
        %v9437 = vunpack.c.l.b16 %v8636
        %v9438 = vunpack.c.h.b16 %v8636
        %v9439 = vunpack.c.l.b16 %v8637
        %v9440 = vunpack.c.h.b16 %v8637
        %v9441 = vunpack.c.l.b16 %v8638
        %v9442 = vunpack.c.h.b16 %v8638
        %v9443 = vunpack.c.l.b16 %v8639
        %v9444 = vunpack.c.h.b16 %v8639
        %v9445 = vunpack.c.l.b16 %v8640
        %v9446 = vunpack.c.h.b16 %v8640
        %v9447 = vunpack.c.l.b16 %v8641
        %v9448 = vunpack.c.h.b16 %v8641
        %v9449 = vunpack.c.l.b16 %v8642
        %v9450 = vunpack.c.h.b16 %v8642
        %v9451 = vunpack.c.l.b16 %v8643
        %v9452 = vunpack.c.h.b16 %v8643
        %v9453 = vunpack.c.l.b16 %v8644
        %v9454 = vunpack.c.h.b16 %v8644
        %v9455 = vunpack.c.l.b16 %v8645
        %v9456 = vunpack.c.h.b16 %v8645
        %v9457 = vunpack.c.l.b16 %v8646
        %v9458 = vunpack.c.h.b16 %v8646
        %v9459 = vunpack.c.l.b16 %v8647
        %v9460 = vunpack.c.h.b16 %v8647
        %v9461 = vunpack.c.l.b16 %v8648
        %v9462 = vunpack.c.h.b16 %v8648
        %v9463 = vunpack.c.l.b16 %v8649
        %v9464 = vunpack.c.h.b16 %v8649
        %v9465 = vunpack.c.l.b16 %v8650
        %v9466 = vunpack.c.h.b16 %v8650
        %v9467 = vunpack.c.l.b16 %v8651
        %v9468 = vunpack.c.h.b16 %v8651
        %v9469 = vunpack.c.l.b16 %v8652
        %v9470 = vunpack.c.h.b16 %v8652
        %v9471 = vunpack.c.l.b16 %v8653
        %v9472 = vunpack.c.h.b16 %v8653
        %v9473 = vunpack.c.l.b16 %v8654
        %v9474 = vunpack.c.h.b16 %v8654
        %v9475 = vunpack.c.l.b16 %v8655
        %v9476 = vunpack.c.h.b16 %v8655
        %v9477 = vunpack.c.l.b16 %v8656
        %v9478 = vunpack.c.h.b16 %v8656
        %v9479 = vunpack.c.l.b16 %v8657
        %v9480 = vunpack.c.h.b16 %v8657
        %v9481 = vunpack.c.l.b16 %v8658
        %v9482 = vunpack.c.h.b16 %v8658
        %v9483 = vunpack.c.l.b16 %v8659
        %v9484 = vunpack.c.h.b16 %v8659
        %v9485 = vunpack.c.l.b16 %v8660
        %v9486 = vunpack.c.h.b16 %v8660
        %v9487 = vunpack.c.l.b16 %v8661
        %v9488 = vunpack.c.h.b16 %v8661
        %v9489 = vunpack.c.l.b16 %v8662
        %v9490 = vunpack.c.h.b16 %v8662
        %v9491 = vunpack.c.l.b16 %v8663
        %v9492 = vunpack.c.h.b16 %v8663
        %v9493 = vunpack.c.l.b16 %v8664
        %v9494 = vunpack.c.h.b16 %v8664
        %v9495 = vunpack.c.l.b16 %v8665
        %v9496 = vunpack.c.h.b16 %v8665
        %v9497 = vunpack.c.l.b16 %v8666
        %v9498 = vunpack.c.h.b16 %v8666
        %v9499 = vunpack.c.l.b16 %v8667
        %v9500 = vunpack.c.h.b16 %v8667
        %v9501 = vunpack.c.l.b16 %v8668
        %v9502 = vunpack.c.h.b16 %v8668
        %v9503 = vunpack.c.l.b16 %v8669
        %v9504 = vunpack.c.h.b16 %v8669
        %v9505 = vunpack.c.l.b16 %v8670
        %v9506 = vunpack.c.h.b16 %v8670
        %v9507 = vunpack.c.l.b16 %v8671
        %v9508 = vunpack.c.h.b16 %v8671
        %v9509 = vunpack.c.l.b16 %v8672
        %v9510 = vunpack.c.h.b16 %v8672
        %v9511 = vunpack.c.l.b16 %v8673
        %v9512 = vunpack.c.h.b16 %v8673
        %v9513 = vunpack.c.l.b16 %v8674
        %v9514 = vunpack.c.h.b16 %v8674
        %v9515 = vunpack.c.l.b16 %v8675
        %v9516 = vunpack.c.h.b16 %v8675
        %v9517 = vunpack.c.l.b16 %v8676
        %v9518 = vunpack.c.h.b16 %v8676
        %v9519 = vunpack.c.l.b16 %v8677
        %v9520 = vunpack.c.h.b16 %v8677
        %v9521 = vunpack.c.l.b16 %v8678
        %v9522 = vunpack.c.h.b16 %v8678
        %v9523 = vunpack.c.l.b16 %v8679
        %v9524 = vunpack.c.h.b16 %v8679
        %v9525 = vunpack.c.l.b16 %v8680
        %v9526 = vunpack.c.h.b16 %v8680
        %v9527 = vunpack.c.l.b16 %v8681
        %v9528 = vunpack.c.h.b16 %v8681
        %v9529 = vunpack.c.l.b16 %v8682
        %v9530 = vunpack.c.h.b16 %v8682
        %v9531 = vunpack.c.l.b16 %v8683
        %v9532 = vunpack.c.h.b16 %v8683
        %v9533 = vunpack.c.l.b16 %v8684
        %v9534 = vunpack.c.h.b16 %v8684
        %v9535 = vunpack.c.l.b16 %v8685
        %v9536 = vunpack.c.h.b16 %v8685
        %v9537 = vunpack.c.l.b16 %v8686
        %v9538 = vunpack.c.h.b16 %v8686
        %v9539 = vunpack.c.l.b16 %v8687
        %v9540 = vunpack.c.h.b16 %v8687
        %v9541 = vunpack.c.l.b16 %v8688
        %v9542 = vunpack.c.h.b16 %v8688
        %v9543 = vunpack.c.l.b16 %v8689
        %v9544 = vunpack.c.h.b16 %v8689
        %v9545 = vunpack.c.l.b16 %v8690
        %v9546 = vunpack.c.h.b16 %v8690
        %v9547 = vunpack.c.l.b16 %v8691
        %v9548 = vunpack.c.h.b16 %v8691
        %v9549 = vunpack.c.l.b16 %v8692
        %v9550 = vunpack.c.h.b16 %v8692
        %v9551 = vunpack.c.l.b16 %v8693
        %v9552 = vunpack.c.h.b16 %v8693
        %v9553 = vunpack.c.l.b16 %v8694
        %v9554 = vunpack.c.h.b16 %v8694
        %v9555 = vunpack.c.l.b16 %v8695
        %v9556 = vunpack.c.h.b16 %v8695
        %v9557 = vunpack.c.l.b16 %v8696
        %v9558 = vunpack.c.h.b16 %v8696
        %v9559 = vunpack.c.l.b16 %v8697
        %v9560 = vunpack.c.h.b16 %v8697
        %v9561 = vunpack.c.l.b16 %v8698
        %v9562 = vunpack.c.h.b16 %v8698
        %v9563 = vunpack.c.l.b16 %v8699
        %v9564 = vunpack.c.h.b16 %v8699
        %v9565 = vunpack.c.l.b16 %v8700
        %v9566 = vunpack.c.h.b16 %v8700
        %v9567 = vunpack.c.l.b16 %v8701
        %v9568 = vunpack.c.h.b16 %v8701
        %v9569 = vunpack.c.l.b16 %v8702
        %v9570 = vunpack.c.h.b16 %v8702
        %v9571 = vunpack.c.l.b16 %v8703
        %v9572 = vunpack.c.h.b16 %v8703
        %v9573 = vunpack.c.l.b16 %v8704
        %v9574 = vunpack.c.h.b16 %v8704
        %v9575 = vunpack.c.l.b16 %v8705
        %v9576 = vunpack.c.h.b16 %v8705
        %v9577 = vunpack.c.l.b16 %v8706
        %v9578 = vunpack.c.h.b16 %v8706
        %v9579 = vunpack.c.l.b16 %v8707
        %v9580 = vunpack.c.h.b16 %v8707
        %v9581 = vunpack.c.l.b16 %v8708
        %v9582 = vunpack.c.h.b16 %v8708
        %v9583 = vunpack.c.l.b16 %v8709
        %v9584 = vunpack.c.h.b16 %v8709
        %v9585 = vunpack.c.l.b16 %v8710
        %v9586 = vunpack.c.h.b16 %v8710
        %v9587 = vunpack.c.l.b16 %v8711
        %v9588 = vunpack.c.h.b16 %v8711
        %v9589 = vunpack.c.l.b16 %v8712
        %v9590 = vunpack.c.h.b16 %v8712
        %v9591 = vunpack.c.l.b16 %v8713
        %v9592 = vunpack.c.h.b16 %v8713
        %v9593 = vunpack.c.l.b16 %v8714
        %v9594 = vunpack.c.h.b16 %v8714
        %v9595 = vunpack.c.l.b16 %v8715
        %v9596 = vunpack.c.h.b16 %v8715
        %v9597 = vunpack.c.l.b16 %v8716
        %v9598 = vunpack.c.h.b16 %v8716
        %v9599 = vunpack.c.l.b16 %v8717
        %v9600 = vunpack.c.h.b16 %v8717
        %v9601 = vunpack.c.l.b16 %v8718
        %v9602 = vunpack.c.h.b16 %v8718
        %v9603 = vunpack.c.l.b16 %v8719
        %v9604 = vunpack.c.h.b16 %v8719
        %v9605 = vunpack.c.l.b16 %v8720
        %v9606 = vunpack.c.h.b16 %v8720
        %v9607 = vunpack.c.l.b16 %v8721
        %v9608 = vunpack.c.h.b16 %v8721
        %v9609 = vunpack.c.l.b16 %v8722
        %v9610 = vunpack.c.h.b16 %v8722
        %v9611 = vunpack.c.l.b16 %v8723
        %v9612 = vunpack.c.h.b16 %v8723
        %v9613 = vunpack.c.l.b16 %v8724
        %v9614 = vunpack.c.h.b16 %v8724
        %v9615 = vunpack.c.l.b16 %v8725
        %v9616 = vunpack.c.h.b16 %v8725
        %v9617 = vunpack.c.l.b16 %v8726
        %v9618 = vunpack.c.h.b16 %v8726
        %v9619 = vunpack.c.l.b16 %v8727
        %v9620 = vunpack.c.h.b16 %v8727
        %v9621 = vunpack.c.l.b16 %v8728
        %v9622 = vunpack.c.h.b16 %v8728
        %v9623 = vunpack.c.l.b16 %v8729
        %v9624 = vunpack.c.h.b16 %v8729
        %v9625 = vunpack.c.l.b16 %v8730
        %v9626 = vunpack.c.h.b16 %v8730
        %v9627 = vunpack.c.l.b16 %v8731
        %v9628 = vunpack.c.h.b16 %v8731
        %v9629 = vunpack.c.l.b16 %v8732
        %v9630 = vunpack.c.h.b16 %v8732
        %v9631 = vunpack.c.l.b16 %v8733
        %v9632 = vunpack.c.h.b16 %v8733
        %v9633 = vunpack.c.l.b16 %v8734
        %v9634 = vunpack.c.h.b16 %v8734
        %v9635 = vunpack.c.l.b16 %v8735
        %v9636 = vunpack.c.h.b16 %v8735
        %v9637 = vunpack.c.l.b16 %v8736
        %v9638 = vunpack.c.h.b16 %v8736
        %v9639 = vunpack.c.l.b16 %v8737
        %v9640 = vunpack.c.h.b16 %v8737
        %v9641 = vunpack.c.l.b16 %v8738
        %v9642 = vunpack.c.h.b16 %v8738
        %v9643 = vunpack.c.l.b16 %v8739
        %v9644 = vunpack.c.h.b16 %v8739
        %v9645 = vunpack.c.l.b16 %v8740
        %v9646 = vunpack.c.h.b16 %v8740
        %v9647 = vunpack.c.l.b16 %v8741
        %v9648 = vunpack.c.h.b16 %v8741
        %v9649 = vunpack.c.l.b16 %v8742
        %v9650 = vunpack.c.h.b16 %v8742
        %v9651 = vunpack.c.l.b16 %v8743
        %v9652 = vunpack.c.h.b16 %v8743
        %v9653 = vunpack.c.l.b16 %v8744
        %v9654 = vunpack.c.h.b16 %v8744
        %v9655 = vunpack.c.l.b16 %v8745
        %v9656 = vunpack.c.h.b16 %v8745
        %v9657 = vunpack.c.l.b16 %v8746
        %v9658 = vunpack.c.h.b16 %v8746
        %v9659 = vunpack.c.l.b16 %v8747
        %v9660 = vunpack.c.h.b16 %v8747
        %v9661 = vunpack.c.l.b16 %v8748
        %v9662 = vunpack.c.h.b16 %v8748
        %v9663 = vunpack.c.l.b16 %v8749
        %v9664 = vunpack.c.h.b16 %v8749
        %v9665 = vunpack.c.l.b16 %v8750
        %v9666 = vunpack.c.h.b16 %v8750
        %v9667 = vunpack.c.l.b16 %v8751
        %v9668 = vunpack.c.h.b16 %v8751
        %v9669 = vunpack.c.l.b16 %v8752
        %v9670 = vunpack.c.h.b16 %v8752
        %v9671 = vunpack.c.l.b16 %v8753
        %v9672 = vunpack.c.h.b16 %v8753
        %v9673 = vunpack.c.l.b16 %v8754
        %v9674 = vunpack.c.h.b16 %v8754
        %v9675 = vunpack.c.l.b16 %v8755
        %v9676 = vunpack.c.h.b16 %v8755
        %v9677 = vunpack.c.l.b16 %v8756
        %v9678 = vunpack.c.h.b16 %v8756
        %v9679 = vunpack.c.l.b16 %v8757
        %v9680 = vunpack.c.h.b16 %v8757
        %v9681 = vunpack.c.l.b16 %v8758
        %v9682 = vunpack.c.h.b16 %v8758
        %v9683 = vunpack.c.l.b16 %v8759
        %v9684 = vunpack.c.h.b16 %v8759
        %v9685 = vunpack.c.l.b16 %v8760
        %v9686 = vunpack.c.h.b16 %v8760
        %v9687 = vunpack.c.l.b16 %v8761
        %v9688 = vunpack.c.h.b16 %v8761
        %v9689 = vunpack.c.l.b16 %v8762
        %v9690 = vunpack.c.h.b16 %v8762
        %v9691 = vunpack.c.l.b16 %v8763
        %v9692 = vunpack.c.h.b16 %v8763
        %v9693 = vunpack.c.l.b16 %v8764
        %v9694 = vunpack.c.h.b16 %v8764
        %v9695 = vunpack.c.l.b16 %v8765
        %v9696 = vunpack.c.h.b16 %v8765
        %v9697 = vunpack.c.l.b16 %v8766
        %v9698 = vunpack.c.h.b16 %v8766
        %v9699 = vunpack.c.l.b16 %v8767
        %v9700 = vunpack.c.h.b16 %v8767
        %v9701 = vunpack.c.l.b16 %v8768
        %v9702 = vunpack.c.h.b16 %v8768
        %v9703 = vunpack.c.l.b16 %v8769
        %v9704 = vunpack.c.h.b16 %v8769
        %v9705 = vunpack.c.l.b16 %v8770
        %v9706 = vunpack.c.h.b16 %v8770
        %v9707 = vunpack.c.l.b16 %v8771
        %v9708 = vunpack.c.h.b16 %v8771
        %v9709 = vunpack.c.l.b16 %v8772
        %v9710 = vunpack.c.h.b16 %v8772
        %v9711 = vunpack.c.l.b16 %v8773
        %v9712 = vunpack.c.h.b16 %v8773
        %v9713 = vunpack.c.l.b16 %v8774
        %v9714 = vunpack.c.h.b16 %v8774
        %v9715 = vunpack.c.l.b16 %v8775
        %v9716 = vunpack.c.h.b16 %v8775
        %v9717 = vunpack.c.l.b16 %v8776
        %v9718 = vunpack.c.h.b16 %v8776
        %v9719 = vunpack.c.l.b16 %v8777
        %v9720 = vunpack.c.h.b16 %v8777
        %v9721 = vunpack.c.l.b16 %v8778
        %v9722 = vunpack.c.h.b16 %v8778
        %v9723 = vunpack.c.l.b16 %v8779
        %v9724 = vunpack.c.h.b16 %v8779
        %v9725 = vunpack.c.l.b16 %v8780
        %v9726 = vunpack.c.h.b16 %v8780
        %v9727 = vunpack.c.l.b16 %v8781
        %v9728 = vunpack.c.h.b16 %v8781
        %v9729 = vunpack.c.l.b16 %v8782
        %v9730 = vunpack.c.h.b16 %v8782
        %v9731 = vunpack.c.l.b16 %v8783
        %v9732 = vunpack.c.h.b16 %v8783
        %v9733 = vunpack.c.l.b16 %v8784
        %v9734 = vunpack.c.h.b16 %v8784
        %v9735 = vunpack.c.l.b16 %v8785
        %v9736 = vunpack.c.h.b16 %v8785
        %v9737 = vunpack.c.l.b16 %v8786
        %v9738 = vunpack.c.h.b16 %v8786
        %v9739 = vunpack.c.l.b16 %v8787
        %v9740 = vunpack.c.h.b16 %v8787
        %v9741 = vunpack.c.l.b16 %v8788
        %v9742 = vunpack.c.h.b16 %v8788
        %v9743 = vunpack.c.l.b16 %v8789
        %v9744 = vunpack.c.h.b16 %v8789
        %v9745 = vunpack.c.l.b16 %v8790
        %v9746 = vunpack.c.h.b16 %v8790
        %v9747 = vunpack.c.l.b16 %v8791
        %v9748 = vunpack.c.h.b16 %v8791
        %v9749 = vunpack.c.l.b16 %v8792
        %v9750 = vunpack.c.h.b16 %v8792
        %v9751 = vunpack.c.l.b16 %v8793
        %v9752 = vunpack.c.h.b16 %v8793
        %v9753 = vunpack.c.l.b16 %v8794
        %v9754 = vunpack.c.h.b16 %v8794
        %v9755 = vunpack.c.l.b16 %v8795
        %v9756 = vunpack.c.h.b16 %v8795
        %v9757 = vunpack.c.l.b16 %v8796
        %v9758 = vunpack.c.h.b16 %v8796
        %v9759 = vunpack.c.l.b16 %v8797
        %v9760 = vunpack.c.h.b16 %v8797
        %v9761 = vunpack.c.l.b16 %v8798
        %v9762 = vunpack.c.h.b16 %v8798
        %v9763 = vunpack.c.l.b16 %v8799
        %v9764 = vunpack.c.h.b16 %v8799
        %v9765 = vunpack.c.l.b16 %v8800
        %v9766 = vunpack.c.h.b16 %v8800
        %v9767 = vunpack.c.l.b16 %v8801
        %v9768 = vunpack.c.h.b16 %v8801
        %v9769 = vunpack.c.l.b16 %v8802
        %v9770 = vunpack.c.h.b16 %v8802
        %v9771 = vunpack.c.l.b16 %v8803
        %v9772 = vunpack.c.h.b16 %v8803
        %v9773 = vunpack.c.l.b16 %v8804
        %v9774 = vunpack.c.h.b16 %v8804
        %v9775 = vunpack.c.l.b16 %v8805
        %v9776 = vunpack.c.h.b16 %v8805
        %v9777 = vunpack.c.l.b16 %v8806
        %v9778 = vunpack.c.h.b16 %v8806
        %v9779 = vunpack.c.l.b16 %v8807
        %v9780 = vunpack.c.h.b16 %v8807
        %v9781 = vunpack.c.l.b16 %v8808
        %v9782 = vunpack.c.h.b16 %v8808
        %v9783 = vunpack.c.l.b16 %v8809
        %v9784 = vunpack.c.h.b16 %v8809
        %v9785 = vunpack.c.l.b16 %v8810
        %v9786 = vunpack.c.h.b16 %v8810
        %v9787 = vunpack.c.l.b16 %v8811
        %v9788 = vunpack.c.h.b16 %v8811
        %v9789 = vunpack.c.l.b16 %v8812
        %v9790 = vunpack.c.h.b16 %v8812
        %v9791 = vunpack.c.l.b16 %v8813
        %v9792 = vunpack.c.h.b16 %v8813
        %v9793 = vunpack.c.l.b16 %v8814
        %v9794 = vunpack.c.h.b16 %v8814
        %v9795 = vunpack.c.l.b16 %v8815
        %v9796 = vunpack.c.h.b16 %v8815
        %v9797 = vunpack.c.l.b16 %v8816
        %v9798 = vunpack.c.h.b16 %v8816
        %v9799 = vunpack.c.l.b16 %v8817
        %v9800 = vunpack.c.h.b16 %v8817
        %v9801 = vunpack.c.l.b16 %v8818
        %v9802 = vunpack.c.h.b16 %v8818
        %v9803 = vunpack.c.l.b16 %v8819
        %v9804 = vunpack.c.h.b16 %v8819
        %v9805 = vunpack.c.l.b16 %v8820
        %v9806 = vunpack.c.h.b16 %v8820
        %v9807 = vunpack.c.l.b16 %v8821
        %v9808 = vunpack.c.h.b16 %v8821
        %v9809 = vunpack.c.l.b16 %v8822
        %v9810 = vunpack.c.h.b16 %v8822
        %v9811 = vunpack.c.l.b16 %v8823
        %v9812 = vunpack.c.h.b16 %v8823
        %v9813 = vunpack.c.l.b16 %v8824
        %v9814 = vunpack.c.h.b16 %v8824
        %v9815 = vunpack.c.l.b16 %v8825
        %v9816 = vunpack.c.h.b16 %v8825
        %v9817 = vunpack.c.l.b16 %v8826
        %v9818 = vunpack.c.h.b16 %v8826
        %v9819 = vunpack.c.l.b16 %v8827
        %v9820 = vunpack.c.h.b16 %v8827
        %v9821 = vunpack.c.l.b16 %v8828
        %v9822 = vunpack.c.h.b16 %v8828
        %v9823 = vunpack.c.l.b16 %v8829
        %v9824 = vunpack.c.h.b16 %v8829
        %v9825 = vunpack.c.l.b16 %v8830
        %v9826 = vunpack.c.h.b16 %v8830
        %v9827 = vunpack.c.l.b16 %v8831
        %v9828 = vunpack.c.h.b16 %v8831
        %v9829 = vpack.c.b16 %v9321, %v9317
        %v9830 = vpack.c.b16 %v9322, %v9318
        %v9831 = vpack.c.b16 %v9323, %v9319
        %v9832 = vpack.c.b16 %v9324, %v9320
        %v9833 = vpack.c.b16 %v9329, %v9325
        %v9834 = vpack.c.b16 %v9330, %v9326
        %v9835 = vpack.c.b16 %v9331, %v9327
        %v9836 = vpack.c.b16 %v9332, %v9328
        %v9837 = vpack.c.b16 %v9337, %v9333
        %v9838 = vpack.c.b16 %v9338, %v9334
        %v9839 = vpack.c.b16 %v9339, %v9335
        %v9840 = vpack.c.b16 %v9340, %v9336
        %v9841 = vpack.c.b16 %v9345, %v9341
        %v9842 = vpack.c.b16 %v9346, %v9342
        %v9843 = vpack.c.b16 %v9347, %v9343
        %v9844 = vpack.c.b16 %v9348, %v9344
        %v9845 = vpack.c.b16 %v9353, %v9349
        %v9846 = vpack.c.b16 %v9354, %v9350
        %v9847 = vpack.c.b16 %v9355, %v9351
        %v9848 = vpack.c.b16 %v9356, %v9352
        %v9849 = vpack.c.b16 %v9361, %v9357
        %v9850 = vpack.c.b16 %v9362, %v9358
        %v9851 = vpack.c.b16 %v9363, %v9359
        %v9852 = vpack.c.b16 %v9364, %v9360
        %v9853 = vpack.c.b16 %v9369, %v9365
        %v9854 = vpack.c.b16 %v9370, %v9366
        %v9855 = vpack.c.b16 %v9371, %v9367
        %v9856 = vpack.c.b16 %v9372, %v9368
        %v9857 = vpack.c.b16 %v9377, %v9373
        %v9858 = vpack.c.b16 %v9378, %v9374
        %v9859 = vpack.c.b16 %v9379, %v9375
        %v9860 = vpack.c.b16 %v9380, %v9376
        %v9861 = vpack.c.b16 %v9385, %v9381
        %v9862 = vpack.c.b16 %v9386, %v9382
        %v9863 = vpack.c.b16 %v9387, %v9383
        %v9864 = vpack.c.b16 %v9388, %v9384
        %v9865 = vpack.c.b16 %v9393, %v9389
        %v9866 = vpack.c.b16 %v9394, %v9390
        %v9867 = vpack.c.b16 %v9395, %v9391
        %v9868 = vpack.c.b16 %v9396, %v9392
        %v9869 = vpack.c.b16 %v9401, %v9397
        %v9870 = vpack.c.b16 %v9402, %v9398
        %v9871 = vpack.c.b16 %v9403, %v9399
        %v9872 = vpack.c.b16 %v9404, %v9400
        %v9873 = vpack.c.b16 %v9409, %v9405
        %v9874 = vpack.c.b16 %v9410, %v9406
        %v9875 = vpack.c.b16 %v9411, %v9407
        %v9876 = vpack.c.b16 %v9412, %v9408
        %v9877 = vpack.c.b16 %v9417, %v9413
        %v9878 = vpack.c.b16 %v9418, %v9414
        %v9879 = vpack.c.b16 %v9419, %v9415
        %v9880 = vpack.c.b16 %v9420, %v9416
        %v9881 = vpack.c.b16 %v9425, %v9421
        %v9882 = vpack.c.b16 %v9426, %v9422
        %v9883 = vpack.c.b16 %v9427, %v9423
        %v9884 = vpack.c.b16 %v9428, %v9424
        %v9885 = vpack.c.b16 %v9433, %v9429
        %v9886 = vpack.c.b16 %v9434, %v9430
        %v9887 = vpack.c.b16 %v9435, %v9431
        %v9888 = vpack.c.b16 %v9436, %v9432
        %v9889 = vpack.c.b16 %v9441, %v9437
        %v9890 = vpack.c.b16 %v9442, %v9438
        %v9891 = vpack.c.b16 %v9443, %v9439
        %v9892 = vpack.c.b16 %v9444, %v9440
        %v9893 = vpack.c.b16 %v9449, %v9445
        %v9894 = vpack.c.b16 %v9450, %v9446
        %v9895 = vpack.c.b16 %v9451, %v9447
        %v9896 = vpack.c.b16 %v9452, %v9448
        %v9897 = vpack.c.b16 %v9457, %v9453
        %v9898 = vpack.c.b16 %v9458, %v9454
        %v9899 = vpack.c.b16 %v9459, %v9455
        %v9900 = vpack.c.b16 %v9460, %v9456
        %v9901 = vpack.c.b16 %v9465, %v9461
        %v9902 = vpack.c.b16 %v9466, %v9462
        %v9903 = vpack.c.b16 %v9467, %v9463
        %v9904 = vpack.c.b16 %v9468, %v9464
        %v9905 = vpack.c.b16 %v9473, %v9469
        %v9906 = vpack.c.b16 %v9474, %v9470
        %v9907 = vpack.c.b16 %v9475, %v9471
        %v9908 = vpack.c.b16 %v9476, %v9472
        %v9909 = vpack.c.b16 %v9481, %v9477
        %v9910 = vpack.c.b16 %v9482, %v9478
        %v9911 = vpack.c.b16 %v9483, %v9479
        %v9912 = vpack.c.b16 %v9484, %v9480
        %v9913 = vpack.c.b16 %v9489, %v9485
        %v9914 = vpack.c.b16 %v9490, %v9486
        %v9915 = vpack.c.b16 %v9491, %v9487
        %v9916 = vpack.c.b16 %v9492, %v9488
        %v9917 = vpack.c.b16 %v9497, %v9493
        %v9918 = vpack.c.b16 %v9498, %v9494
        %v9919 = vpack.c.b16 %v9499, %v9495
        %v9920 = vpack.c.b16 %v9500, %v9496
        %v9921 = vpack.c.b16 %v9505, %v9501
        %v9922 = vpack.c.b16 %v9506, %v9502
        %v9923 = vpack.c.b16 %v9507, %v9503
        %v9924 = vpack.c.b16 %v9508, %v9504
        %v9925 = vpack.c.b16 %v9513, %v9509
        %v9926 = vpack.c.b16 %v9514, %v9510
        %v9927 = vpack.c.b16 %v9515, %v9511
        %v9928 = vpack.c.b16 %v9516, %v9512
        %v9929 = vpack.c.b16 %v9521, %v9517
        %v9930 = vpack.c.b16 %v9522, %v9518
        %v9931 = vpack.c.b16 %v9523, %v9519
        %v9932 = vpack.c.b16 %v9524, %v9520
        %v9933 = vpack.c.b16 %v9529, %v9525
        %v9934 = vpack.c.b16 %v9530, %v9526
        %v9935 = vpack.c.b16 %v9531, %v9527
        %v9936 = vpack.c.b16 %v9532, %v9528
        %v9937 = vpack.c.b16 %v9537, %v9533
        %v9938 = vpack.c.b16 %v9538, %v9534
        %v9939 = vpack.c.b16 %v9539, %v9535
        %v9940 = vpack.c.b16 %v9540, %v9536
        %v9941 = vpack.c.b16 %v9545, %v9541
        %v9942 = vpack.c.b16 %v9546, %v9542
        %v9943 = vpack.c.b16 %v9547, %v9543
        %v9944 = vpack.c.b16 %v9548, %v9544
        %v9945 = vpack.c.b16 %v9553, %v9549
        %v9946 = vpack.c.b16 %v9554, %v9550
        %v9947 = vpack.c.b16 %v9555, %v9551
        %v9948 = vpack.c.b16 %v9556, %v9552
        %v9949 = vpack.c.b16 %v9561, %v9557
        %v9950 = vpack.c.b16 %v9562, %v9558
        %v9951 = vpack.c.b16 %v9563, %v9559
        %v9952 = vpack.c.b16 %v9564, %v9560
        %v9953 = vpack.c.b16 %v9569, %v9565
        %v9954 = vpack.c.b16 %v9570, %v9566
        %v9955 = vpack.c.b16 %v9571, %v9567
        %v9956 = vpack.c.b16 %v9572, %v9568
        %v9957 = vpack.c.b16 %v9577, %v9573
        %v9958 = vpack.c.b16 %v9578, %v9574
        %v9959 = vpack.c.b16 %v9579, %v9575
        %v9960 = vpack.c.b16 %v9580, %v9576
        %v9961 = vpack.c.b16 %v9585, %v9581
        %v9962 = vpack.c.b16 %v9586, %v9582
        %v9963 = vpack.c.b16 %v9587, %v9583
        %v9964 = vpack.c.b16 %v9588, %v9584
        %v9965 = vpack.c.b16 %v9593, %v9589
        %v9966 = vpack.c.b16 %v9594, %v9590
        %v9967 = vpack.c.b16 %v9595, %v9591
        %v9968 = vpack.c.b16 %v9596, %v9592
        %v9969 = vpack.c.b16 %v9601, %v9597
        %v9970 = vpack.c.b16 %v9602, %v9598
        %v9971 = vpack.c.b16 %v9603, %v9599
        %v9972 = vpack.c.b16 %v9604, %v9600
        %v9973 = vpack.c.b16 %v9609, %v9605
        %v9974 = vpack.c.b16 %v9610, %v9606
        %v9975 = vpack.c.b16 %v9611, %v9607
        %v9976 = vpack.c.b16 %v9612, %v9608
        %v9977 = vpack.c.b16 %v9617, %v9613
        %v9978 = vpack.c.b16 %v9618, %v9614
        %v9979 = vpack.c.b16 %v9619, %v9615
        %v9980 = vpack.c.b16 %v9620, %v9616
        %v9981 = vpack.c.b16 %v9625, %v9621
        %v9982 = vpack.c.b16 %v9626, %v9622
        %v9983 = vpack.c.b16 %v9627, %v9623
        %v9984 = vpack.c.b16 %v9628, %v9624
        %v9985 = vpack.c.b16 %v9633, %v9629
        %v9986 = vpack.c.b16 %v9634, %v9630
        %v9987 = vpack.c.b16 %v9635, %v9631
        %v9988 = vpack.c.b16 %v9636, %v9632
        %v9989 = vpack.c.b16 %v9641, %v9637
        %v9990 = vpack.c.b16 %v9642, %v9638
        %v9991 = vpack.c.b16 %v9643, %v9639
        %v9992 = vpack.c.b16 %v9644, %v9640
        %v9993 = vpack.c.b16 %v9649, %v9645
        %v9994 = vpack.c.b16 %v9650, %v9646
        %v9995 = vpack.c.b16 %v9651, %v9647
        %v9996 = vpack.c.b16 %v9652, %v9648
        %v9997 = vpack.c.b16 %v9657, %v9653
        %v9998 = vpack.c.b16 %v9658, %v9654
        %v9999 = vpack.c.b16 %v9659, %v9655
        %v10000 = vpack.c.b16 %v9660, %v9656
        %v10001 = vpack.c.b16 %v9665, %v9661
        %v10002 = vpack.c.b16 %v9666, %v9662
        %v10003 = vpack.c.b16 %v9667, %v9663
        %v10004 = vpack.c.b16 %v9668, %v9664
        %v10005 = vpack.c.b16 %v9673, %v9669
        %v10006 = vpack.c.b16 %v9674, %v9670
        %v10007 = vpack.c.b16 %v9675, %v9671
        %v10008 = vpack.c.b16 %v9676, %v9672
        %v10009 = vpack.c.b16 %v9681, %v9677
        %v10010 = vpack.c.b16 %v9682, %v9678
        %v10011 = vpack.c.b16 %v9683, %v9679
        %v10012 = vpack.c.b16 %v9684, %v9680
        %v10013 = vpack.c.b16 %v9689, %v9685
        %v10014 = vpack.c.b16 %v9690, %v9686
        %v10015 = vpack.c.b16 %v9691, %v9687
        %v10016 = vpack.c.b16 %v9692, %v9688
        %v10017 = vpack.c.b16 %v9697, %v9693
        %v10018 = vpack.c.b16 %v9698, %v9694
        %v10019 = vpack.c.b16 %v9699, %v9695
        %v10020 = vpack.c.b16 %v9700, %v9696
        %v10021 = vpack.c.b16 %v9705, %v9701
        %v10022 = vpack.c.b16 %v9706, %v9702
        %v10023 = vpack.c.b16 %v9707, %v9703
        %v10024 = vpack.c.b16 %v9708, %v9704
        %v10025 = vpack.c.b16 %v9713, %v9709
        %v10026 = vpack.c.b16 %v9714, %v9710
        %v10027 = vpack.c.b16 %v9715, %v9711
        %v10028 = vpack.c.b16 %v9716, %v9712
        %v10029 = vpack.c.b16 %v9721, %v9717
        %v10030 = vpack.c.b16 %v9722, %v9718
        %v10031 = vpack.c.b16 %v9723, %v9719
        %v10032 = vpack.c.b16 %v9724, %v9720
        %v10033 = vpack.c.b16 %v9729, %v9725
        %v10034 = vpack.c.b16 %v9730, %v9726
        %v10035 = vpack.c.b16 %v9731, %v9727
        %v10036 = vpack.c.b16 %v9732, %v9728
        %v10037 = vpack.c.b16 %v9737, %v9733
        %v10038 = vpack.c.b16 %v9738, %v9734
        %v10039 = vpack.c.b16 %v9739, %v9735
        %v10040 = vpack.c.b16 %v9740, %v9736
        %v10041 = vpack.c.b16 %v9745, %v9741
        %v10042 = vpack.c.b16 %v9746, %v9742
        %v10043 = vpack.c.b16 %v9747, %v9743
        %v10044 = vpack.c.b16 %v9748, %v9744
        %v10045 = vpack.c.b16 %v9753, %v9749
        %v10046 = vpack.c.b16 %v9754, %v9750
        %v10047 = vpack.c.b16 %v9755, %v9751
        %v10048 = vpack.c.b16 %v9756, %v9752
        %v10049 = vpack.c.b16 %v9761, %v9757
        %v10050 = vpack.c.b16 %v9762, %v9758
        %v10051 = vpack.c.b16 %v9763, %v9759
        %v10052 = vpack.c.b16 %v9764, %v9760
        %v10053 = vpack.c.b16 %v9769, %v9765
        %v10054 = vpack.c.b16 %v9770, %v9766
        %v10055 = vpack.c.b16 %v9771, %v9767
        %v10056 = vpack.c.b16 %v9772, %v9768
        %v10057 = vpack.c.b16 %v9777, %v9773
        %v10058 = vpack.c.b16 %v9778, %v9774
        %v10059 = vpack.c.b16 %v9779, %v9775
        %v10060 = vpack.c.b16 %v9780, %v9776
        %v10061 = vpack.c.b16 %v9785, %v9781
        %v10062 = vpack.c.b16 %v9786, %v9782
        %v10063 = vpack.c.b16 %v9787, %v9783
        %v10064 = vpack.c.b16 %v9788, %v9784
        %v10065 = vpack.c.b16 %v9793, %v9789
        %v10066 = vpack.c.b16 %v9794, %v9790
        %v10067 = vpack.c.b16 %v9795, %v9791
        %v10068 = vpack.c.b16 %v9796, %v9792
        %v10069 = vpack.c.b16 %v9801, %v9797
        %v10070 = vpack.c.b16 %v9802, %v9798
        %v10071 = vpack.c.b16 %v9803, %v9799
        %v10072 = vpack.c.b16 %v9804, %v9800
        %v10073 = vpack.c.b16 %v9809, %v9805
        %v10074 = vpack.c.b16 %v9810, %v9806
        %v10075 = vpack.c.b16 %v9811, %v9807
        %v10076 = vpack.c.b16 %v9812, %v9808
        %v10077 = vpack.c.b16 %v9817, %v9813
        %v10078 = vpack.c.b16 %v9818, %v9814
        %v10079 = vpack.c.b16 %v9819, %v9815
        %v10080 = vpack.c.b16 %v9820, %v9816
        %v10081 = vpack.c.b16 %v9825, %v9821
        %v10082 = vpack.c.b16 %v9826, %v9822
        %v10083 = vpack.c.b16 %v9827, %v9823
        %v10084 = vpack.c.b16 %v9828, %v9824
        %10341 = vmatprep.subr.bf16.mxu0 %v9858
        %10342 = vmatpush1.bf16.msra.mxu0 %v9857
        %10343 = vmatprep.subr.bf16.mxu0 %v9854
        %10344 = vmatpush1.bf16.msra.mxu0 %v9853
        %10345 = vmatprep.subr.bf16.mxu0 %v9850
        %10346 = vmatpush1.bf16.msra.mxu0 %v9849
        %10347 = vmatprep.subr.bf16.mxu0 %v9846
        %10348 = vmatpush1.bf16.msra.mxu0 %v9845
        %10349 = vmatprep.subr.bf16.mxu0 %v9842
        %10350 = vmatpush1.bf16.msra.mxu0 %v9841
        %10351 = vmatprep.subr.bf16.mxu0 %v9838
        %10352 = vmatpush1.bf16.msra.mxu0 %v9837
        %10353 = vmatprep.subr.bf16.mxu0 %v9834
        %10354 = vmatpush1.bf16.msra.mxu0 %v9833
        %10355 = vmatprep.subr.bf16.mxu0 %v9830
        %10356 = vmatpush1.bf16.msra.mxu0 %v9829
        %10357 = vmatprep.subr.bf16.mxu0 %v9890
        %10358 = vmatpush2.bf16.msra.mxu0 %v9889
        %10359 = vmatprep.subr.bf16.mxu0 %v9886
        %10360 = vmatpush2.bf16.msra.mxu0 %v9885
        %10361 = vmatprep.subr.bf16.mxu0 %v9882
        %10362 = vmatpush2.bf16.msra.mxu0 %v9881
        %10363 = vmatprep.subr.bf16.mxu0 %v9878
        %10364 = vmatpush2.bf16.msra.mxu0 %v9877
        %10365 = vmatprep.subr.bf16.mxu0 %v9874
        %10366 = vmatpush2.bf16.msra.mxu0 %v9873
        %10367 = vmatprep.subr.bf16.mxu0 %v9870
        %10368 = vmatpush2.bf16.msra.mxu0 %v9869
        %10369 = vmatprep.subr.bf16.mxu0 %v9866
        %10370 = vmatpush2.bf16.msra.mxu0 %v9865
        %10371 = vmatprep.subr.bf16.mxu0 %v9862
        %10372 = vmatpush2.bf16.msra.mxu0 %v9861
        %10373 = vmatprep.mubr.bf16.mxu0 %v9046
        %10374 = vmatmul.mubr.bf16.gmra.mxu0 %v9045
        %v10375 = vpop.f32.mrf.mxu0
        %v10376 = vadd.f32 %v8837, %v10375
        %v10377 = vpop.f32.mrf.mxu0
        %v10378 = vadd.f32 %v8841, %v10377
        %v10379 = vpop.f32.mrf.mxu0
        %v10380 = vpop.f32.mrf.mxu0
        %10381 = vdwg.mxu0
        %10382 = vmatprep.subr.bf16.mxu0 %v9922
        %10383 = vmatpush1.bf16.msra.mxu0 %v9921
        %10384 = vmatprep.subr.bf16.mxu0 %v9918
        %10385 = vmatpush1.bf16.msra.mxu0 %v9917
        %10386 = vmatprep.subr.bf16.mxu0 %v9914
        %10387 = vmatpush1.bf16.msra.mxu0 %v9913
        %10388 = vmatprep.subr.bf16.mxu0 %v9910
        %10389 = vmatpush1.bf16.msra.mxu0 %v9909
        %10390 = vmatprep.subr.bf16.mxu0 %v9906
        %10391 = vmatpush1.bf16.msra.mxu0 %v9905
        %10392 = vmatprep.subr.bf16.mxu0 %v9902
        %10393 = vmatpush1.bf16.msra.mxu0 %v9901
        %10394 = vmatprep.subr.bf16.mxu0 %v9898
        %10395 = vmatpush1.bf16.msra.mxu0 %v9897
        %10396 = vmatprep.subr.bf16.mxu0 %v9894
        %10397 = vmatpush1.bf16.msra.mxu0 %v9893
        %10398 = vmatprep.subr.bf16.mxu0 %v9954
        %10399 = vmatpush2.bf16.msra.mxu0 %v9953
        %10400 = vmatprep.subr.bf16.mxu0 %v9950
        %10401 = vmatpush2.bf16.msra.mxu0 %v9949
        %10402 = vmatprep.subr.bf16.mxu0 %v9946
        %10403 = vmatpush2.bf16.msra.mxu0 %v9945
        %10404 = vmatprep.subr.bf16.mxu0 %v9942
        %10405 = vmatpush2.bf16.msra.mxu0 %v9941
        %10406 = vmatprep.subr.bf16.mxu0 %v9938
        %10407 = vmatpush2.bf16.msra.mxu0 %v9937
        %10408 = vmatprep.subr.bf16.mxu0 %v9934
        %10409 = vmatpush2.bf16.msra.mxu0 %v9933
        %10410 = vmatprep.subr.bf16.mxu0 %v9930
        %10411 = vmatpush2.bf16.msra.mxu0 %v9929
        %10412 = vmatprep.subr.bf16.mxu0 %v9926
        %10413 = vmatpush2.bf16.msra.mxu0 %v9925
        %10414 = vmatprep.mubr.bf16.mxu0 %v9048
        %10415 = vmatmul.mubr.bf16.gmra.mxu0 %v9047
        %v10416 = vpop.f32.mrf.mxu0
        %v10417 = vadd.f32 %v10376, %v10416
        %v10418 = vpop.f32.mrf.mxu0
        %v10419 = vadd.f32 %v10378, %v10418
        %v10420 = vpop.f32.mrf.mxu0
        %v10421 = vpop.f32.mrf.mxu0
        %10422 = vdwg.mxu0
        %10423 = vmatprep.subr.bf16.mxu0 %v9986
        %10424 = vmatpush1.bf16.msra.mxu0 %v9985
        %10425 = vmatprep.subr.bf16.mxu0 %v9982
        %10426 = vmatpush1.bf16.msra.mxu0 %v9981
        %10427 = vmatprep.subr.bf16.mxu0 %v9978
        %10428 = vmatpush1.bf16.msra.mxu0 %v9977
        %10429 = vmatprep.subr.bf16.mxu0 %v9974
        %10430 = vmatpush1.bf16.msra.mxu0 %v9973
        %10431 = vmatprep.subr.bf16.mxu0 %v9970
        %10432 = vmatpush1.bf16.msra.mxu0 %v9969
        %10433 = vmatprep.subr.bf16.mxu0 %v9966
        %10434 = vmatpush1.bf16.msra.mxu0 %v9965
        %10435 = vmatprep.subr.bf16.mxu0 %v9962
        %10436 = vmatpush1.bf16.msra.mxu0 %v9961
        %10437 = vmatprep.subr.bf16.mxu0 %v9958
        %10438 = vmatpush1.bf16.msra.mxu0 %v9957
        %10439 = vmatprep.subr.bf16.mxu0 %v10018
        %10440 = vmatpush2.bf16.msra.mxu0 %v10017
        %10441 = vmatprep.subr.bf16.mxu0 %v10014
        %10442 = vmatpush2.bf16.msra.mxu0 %v10013
        %10443 = vmatprep.subr.bf16.mxu0 %v10010
        %10444 = vmatpush2.bf16.msra.mxu0 %v10009
        %10445 = vmatprep.subr.bf16.mxu0 %v10006
        %10446 = vmatpush2.bf16.msra.mxu0 %v10005
        %10447 = vmatprep.subr.bf16.mxu0 %v10002
        %10448 = vmatpush2.bf16.msra.mxu0 %v10001
        %10449 = vmatprep.subr.bf16.mxu0 %v9998
        %10450 = vmatpush2.bf16.msra.mxu0 %v9997
        %10451 = vmatprep.subr.bf16.mxu0 %v9994
        %10452 = vmatpush2.bf16.msra.mxu0 %v9993
        %10453 = vmatprep.subr.bf16.mxu0 %v9990
        %10454 = vmatpush2.bf16.msra.mxu0 %v9989
        %10455 = vmatprep.mubr.bf16.mxu0 %v9050
        %10456 = vmatmul.mubr.bf16.gmra.mxu0 %v9049
        %v10457 = vpop.f32.mrf.mxu0
        %v10458 = vadd.f32 %v10417, %v10457
        %v10459 = vpop.f32.mrf.mxu0
        %v10460 = vadd.f32 %v10419, %v10459
        %v10461 = vpop.f32.mrf.mxu0
        %v10462 = vpop.f32.mrf.mxu0
        %10463 = vdwg.mxu0
        %10464 = vmatprep.subr.bf16.mxu0 %v10050
        %10465 = vmatpush1.bf16.msra.mxu0 %v10049
        %10466 = vmatprep.subr.bf16.mxu0 %v10046
        %10467 = vmatpush1.bf16.msra.mxu0 %v10045
        %10468 = vmatprep.subr.bf16.mxu0 %v10042
        %10469 = vmatpush1.bf16.msra.mxu0 %v10041
        %10470 = vmatprep.subr.bf16.mxu0 %v10038
        %10471 = vmatpush1.bf16.msra.mxu0 %v10037
        %10472 = vmatprep.subr.bf16.mxu0 %v10034
        %10473 = vmatpush1.bf16.msra.mxu0 %v10033
        %10474 = vmatprep.subr.bf16.mxu0 %v10030
        %10475 = vmatpush1.bf16.msra.mxu0 %v10029
        %10476 = vmatprep.subr.bf16.mxu0 %v10026
        %10477 = vmatpush1.bf16.msra.mxu0 %v10025
        %10478 = vmatprep.subr.bf16.mxu0 %v10022
        %10479 = vmatpush1.bf16.msra.mxu0 %v10021
        %10480 = vmatprep.subr.bf16.mxu0 %v10082
        %10481 = vmatpush2.bf16.msra.mxu0 %v10081
        %10482 = vmatprep.subr.bf16.mxu0 %v10078
        %10483 = vmatpush2.bf16.msra.mxu0 %v10077
        %10484 = vmatprep.subr.bf16.mxu0 %v10074
        %10485 = vmatpush2.bf16.msra.mxu0 %v10073
        %10486 = vmatprep.subr.bf16.mxu0 %v10070
        %10487 = vmatpush2.bf16.msra.mxu0 %v10069
        %10488 = vmatprep.subr.bf16.mxu0 %v10066
        %10489 = vmatpush2.bf16.msra.mxu0 %v10065
        %10490 = vmatprep.subr.bf16.mxu0 %v10062
        %10491 = vmatpush2.bf16.msra.mxu0 %v10061
        %10492 = vmatprep.subr.bf16.mxu0 %v10058
        %10493 = vmatpush2.bf16.msra.mxu0 %v10057
        %10494 = vmatprep.subr.bf16.mxu0 %v10054
        %10495 = vmatpush2.bf16.msra.mxu0 %v10053
        %10496 = vmatprep.mubr.bf16.mxu0 %v9052
        %10497 = vmatmul.mubr.bf16.gmra.mxu0 %v9051
        %v10498 = vpop.f32.mrf.mxu0
        %v10499 = vadd.f32 %v10458, %v10498
        %v10500 = vpop.f32.mrf.mxu0
        %v10501 = vadd.f32 %v10460, %v10500
        %v10502 = vpop.f32.mrf.mxu0
        %v10503 = vpop.f32.mrf.mxu0
        %10504 = vdwg.mxu0
        %10505 = vmatprep.subr.bf16.mxu0 %v9860
        %10506 = vmatpush1.bf16.msra.mxu0 %v9859
        %10507 = vmatprep.subr.bf16.mxu0 %v9856
        %10508 = vmatpush1.bf16.msra.mxu0 %v9855
        %10509 = vmatprep.subr.bf16.mxu0 %v9852
        %10510 = vmatpush1.bf16.msra.mxu0 %v9851
        %10511 = vmatprep.subr.bf16.mxu0 %v9848
        %10512 = vmatpush1.bf16.msra.mxu0 %v9847
        %10513 = vmatprep.subr.bf16.mxu0 %v9844
        %10514 = vmatpush1.bf16.msra.mxu0 %v9843
        %10515 = vmatprep.subr.bf16.mxu0 %v9840
        %10516 = vmatpush1.bf16.msra.mxu0 %v9839
        %10517 = vmatprep.subr.bf16.mxu0 %v9836
        %10518 = vmatpush1.bf16.msra.mxu0 %v9835
        %10519 = vmatprep.subr.bf16.mxu0 %v9832
        %10520 = vmatpush1.bf16.msra.mxu0 %v9831
        %10521 = vmatprep.subr.bf16.mxu0 %v9892
        %10522 = vmatpush2.bf16.msra.mxu0 %v9891
        %10523 = vmatprep.subr.bf16.mxu0 %v9888
        %10524 = vmatpush2.bf16.msra.mxu0 %v9887
        %10525 = vmatprep.subr.bf16.mxu0 %v9884
        %10526 = vmatpush2.bf16.msra.mxu0 %v9883
        %10527 = vmatprep.subr.bf16.mxu0 %v9880
        %10528 = vmatpush2.bf16.msra.mxu0 %v9879
        %10529 = vmatprep.subr.bf16.mxu0 %v9876
        %10530 = vmatpush2.bf16.msra.mxu0 %v9875
        %10531 = vmatprep.subr.bf16.mxu0 %v9872
        %10532 = vmatpush2.bf16.msra.mxu0 %v9871
        %10533 = vmatprep.subr.bf16.mxu0 %v9868
        %10534 = vmatpush2.bf16.msra.mxu0 %v9867
        %10535 = vmatprep.subr.bf16.mxu0 %v9864
        %10536 = vmatpush2.bf16.msra.mxu0 %v9863
        %10537 = vmatprep.mubr.bf16.mxu0 %v9046
        %10538 = vmatmul.mubr.bf16.gmra.mxu0 %v9045
        %v10539 = vpop.f32.mrf.mxu0
        %v10540 = vadd.f32 %v8845, %v10539
        %v10541 = vpop.f32.mrf.mxu0
        %v10542 = vadd.f32 %v8849, %v10541
        %v10543 = vpop.f32.mrf.mxu0
        %v10544 = vpop.f32.mrf.mxu0
        %10545 = vdwg.mxu0
        %10546 = vmatprep.subr.bf16.mxu0 %v9924
        %10547 = vmatpush1.bf16.msra.mxu0 %v9923
        %10548 = vmatprep.subr.bf16.mxu0 %v9920
        %10549 = vmatpush1.bf16.msra.mxu0 %v9919
        %10550 = vmatprep.subr.bf16.mxu0 %v9916
        %10551 = vmatpush1.bf16.msra.mxu0 %v9915
        %10552 = vmatprep.subr.bf16.mxu0 %v9912
        %10553 = vmatpush1.bf16.msra.mxu0 %v9911
        %10554 = vmatprep.subr.bf16.mxu0 %v9908
        %10555 = vmatpush1.bf16.msra.mxu0 %v9907
        %10556 = vmatprep.subr.bf16.mxu0 %v9904
        %10557 = vmatpush1.bf16.msra.mxu0 %v9903
        %10558 = vmatprep.subr.bf16.mxu0 %v9900
        %10559 = vmatpush1.bf16.msra.mxu0 %v9899
        %10560 = vmatprep.subr.bf16.mxu0 %v9896
        %10561 = vmatpush1.bf16.msra.mxu0 %v9895
        %10562 = vmatprep.subr.bf16.mxu0 %v9956
        %10563 = vmatpush2.bf16.msra.mxu0 %v9955
        %10564 = vmatprep.subr.bf16.mxu0 %v9952
        %10565 = vmatpush2.bf16.msra.mxu0 %v9951
        %10566 = vmatprep.subr.bf16.mxu0 %v9948
        %10567 = vmatpush2.bf16.msra.mxu0 %v9947
        %10568 = vmatprep.subr.bf16.mxu0 %v9944
        %10569 = vmatpush2.bf16.msra.mxu0 %v9943
        %10570 = vmatprep.subr.bf16.mxu0 %v9940
        %10571 = vmatpush2.bf16.msra.mxu0 %v9939
        %10572 = vmatprep.subr.bf16.mxu0 %v9936
        %10573 = vmatpush2.bf16.msra.mxu0 %v9935
        %10574 = vmatprep.subr.bf16.mxu0 %v9932
        %10575 = vmatpush2.bf16.msra.mxu0 %v9931
        %10576 = vmatprep.subr.bf16.mxu0 %v9928
        %10577 = vmatpush2.bf16.msra.mxu0 %v9927
        %10578 = vmatprep.mubr.bf16.mxu0 %v9048
        %10579 = vmatmul.mubr.bf16.gmra.mxu0 %v9047
        %v10580 = vpop.f32.mrf.mxu0
        %v10581 = vadd.f32 %v10540, %v10580
        %v10582 = vpop.f32.mrf.mxu0
        %v10583 = vadd.f32 %v10542, %v10582
        %v10584 = vpop.f32.mrf.mxu0
        %v10585 = vpop.f32.mrf.mxu0
        %10586 = vdwg.mxu0
        %10587 = vmatprep.subr.bf16.mxu0 %v9988
        %10588 = vmatpush1.bf16.msra.mxu0 %v9987
        %10589 = vmatprep.subr.bf16.mxu0 %v9984
        %10590 = vmatpush1.bf16.msra.mxu0 %v9983
        %10591 = vmatprep.subr.bf16.mxu0 %v9980
        %10592 = vmatpush1.bf16.msra.mxu0 %v9979
        %10593 = vmatprep.subr.bf16.mxu0 %v9976
        %10594 = vmatpush1.bf16.msra.mxu0 %v9975
        %10595 = vmatprep.subr.bf16.mxu0 %v9972
        %10596 = vmatpush1.bf16.msra.mxu0 %v9971
        %10597 = vmatprep.subr.bf16.mxu0 %v9968
        %10598 = vmatpush1.bf16.msra.mxu0 %v9967
        %10599 = vmatprep.subr.bf16.mxu0 %v9964
        %10600 = vmatpush1.bf16.msra.mxu0 %v9963
        %10601 = vmatprep.subr.bf16.mxu0 %v9960
        %10602 = vmatpush1.bf16.msra.mxu0 %v9959
        %10603 = vmatprep.subr.bf16.mxu0 %v10020
        %10604 = vmatpush2.bf16.msra.mxu0 %v10019
        %10605 = vmatprep.subr.bf16.mxu0 %v10016
        %10606 = vmatpush2.bf16.msra.mxu0 %v10015
        %10607 = vmatprep.subr.bf16.mxu0 %v10012
        %10608 = vmatpush2.bf16.msra.mxu0 %v10011
        %10609 = vmatprep.subr.bf16.mxu0 %v10008
        %10610 = vmatpush2.bf16.msra.mxu0 %v10007
        %10611 = vmatprep.subr.bf16.mxu0 %v10004
        %10612 = vmatpush2.bf16.msra.mxu0 %v10003
        %10613 = vmatprep.subr.bf16.mxu0 %v10000
        %10614 = vmatpush2.bf16.msra.mxu0 %v9999
        %10615 = vmatprep.subr.bf16.mxu0 %v9996
        %10616 = vmatpush2.bf16.msra.mxu0 %v9995
        %10617 = vmatprep.subr.bf16.mxu0 %v9992
        %10618 = vmatpush2.bf16.msra.mxu0 %v9991
        %10619 = vmatprep.mubr.bf16.mxu0 %v9050
        %10620 = vmatmul.mubr.bf16.gmra.mxu0 %v9049
        %v10621 = vpop.f32.mrf.mxu0
        %v10622 = vadd.f32 %v10581, %v10621
        %v10623 = vpop.f32.mrf.mxu0
        %v10624 = vadd.f32 %v10583, %v10623
        %v10625 = vpop.f32.mrf.mxu0
        %v10626 = vpop.f32.mrf.mxu0
        %10627 = vdwg.mxu0
        %10628 = vmatprep.subr.bf16.mxu0 %v10052
        %10629 = vmatpush1.bf16.msra.mxu0 %v10051
        %10630 = vmatprep.subr.bf16.mxu0 %v10048
        %10631 = vmatpush1.bf16.msra.mxu0 %v10047
        %10632 = vmatprep.subr.bf16.mxu0 %v10044
        %10633 = vmatpush1.bf16.msra.mxu0 %v10043
        %10634 = vmatprep.subr.bf16.mxu0 %v10040
        %10635 = vmatpush1.bf16.msra.mxu0 %v10039
        %10636 = vmatprep.subr.bf16.mxu0 %v10036
        %10637 = vmatpush1.bf16.msra.mxu0 %v10035
        %10638 = vmatprep.subr.bf16.mxu0 %v10032
        %10639 = vmatpush1.bf16.msra.mxu0 %v10031
        %10640 = vmatprep.subr.bf16.mxu0 %v10028
        %10641 = vmatpush1.bf16.msra.mxu0 %v10027
        %10642 = vmatprep.subr.bf16.mxu0 %v10024
        %10643 = vmatpush1.bf16.msra.mxu0 %v10023
        %10644 = vmatprep.subr.bf16.mxu0 %v10084
        %10645 = vmatpush2.bf16.msra.mxu0 %v10083
        %10646 = vmatprep.subr.bf16.mxu0 %v10080
        %10647 = vmatpush2.bf16.msra.mxu0 %v10079
        %10648 = vmatprep.subr.bf16.mxu0 %v10076
        %10649 = vmatpush2.bf16.msra.mxu0 %v10075
        %10650 = vmatprep.subr.bf16.mxu0 %v10072
        %10651 = vmatpush2.bf16.msra.mxu0 %v10071
        %10652 = vmatprep.subr.bf16.mxu0 %v10068
        %10653 = vmatpush2.bf16.msra.mxu0 %v10067
        %10654 = vmatprep.subr.bf16.mxu0 %v10064
        %10655 = vmatpush2.bf16.msra.mxu0 %v10063
        %10656 = vmatprep.subr.bf16.mxu0 %v10060
        %10657 = vmatpush2.bf16.msra.mxu0 %v10059
        %10658 = vmatprep.subr.bf16.mxu0 %v10056
        %10659 = vmatpush2.bf16.msra.mxu0 %v10055
        %10660 = vmatprep.mubr.bf16.mxu0 %v9052
        %10661 = vmatmul.mubr.bf16.gmra.mxu0 %v9051
        %v10662 = vpop.f32.mrf.mxu0
        %v10663 = vadd.f32 %v10622, %v10662
        %v10664 = vpop.f32.mrf.mxu0
        %v10665 = vadd.f32 %v10624, %v10664
        %v10666 = vpop.f32.mrf.mxu0
        %v10667 = vpop.f32.mrf.mxu0
        %10668 = vdwg.mxu0
        %v10669 = vmax.f32 %v10499, 0.0
        %v10670 = vmax.f32 %v10501, 0.0
        %v10671 = vmax.f32 %v10663, 0.0
        %v10672 = vmax.f32 %v10665, 0.0
        %v10673 = vpack.c.bf16 %v10669, %v10669
        %v10674 = vpack.c.bf16 %v10670, %v10670
        %v10675 = vpack.c.bf16 %v10671, %v10671
        %v10676 = vpack.c.bf16 %v10672, %v10672
        %v10677 = vld [vmem:[%s9] sm:$0xff]
        %v10678 = vld [vmem:[%s9 + $0x8] sm:$0xff]
        %v10679 = vld [vmem:[%s9 + $0x10] sm:$0xff]
        %v10680 = vld [vmem:[%s9 + $0x18] sm:$0xff]
        %v10681 = vld [vmem:[%s9 + $0x20] sm:$0xff]
        %v10682 = vld [vmem:[%s9 + $0x28] sm:$0xff]
        %v10683 = vld [vmem:[%s9 + $0x30] sm:$0xff]
        %v10684 = vld [vmem:[%s9 + $0x38] sm:$0xff]
        %v10685 = vld [vmem:[%s9 + $0x40] sm:$0xff]
        %v10686 = vld [vmem:[%s9 + $0x48] sm:$0xff]
        %v10687 = vld [vmem:[%s9 + $0x50] sm:$0xff]
        %v10688 = vld [vmem:[%s9 + $0x58] sm:$0xff]
        %v10689 = vld [vmem:[%s9 + $0x60] sm:$0xff]
        %v10690 = vld [vmem:[%s9 + $0x68] sm:$0xff]
        %v10691 = vld [vmem:[%s9 + $0x70] sm:$0xff]
        %v10692 = vld [vmem:[%s9 + $0x78] sm:$0xff]
        %v10693 = vld [vmem:[%s9 + $0x80] sm:$0xff]
        %v10694 = vld [vmem:[%s9 + $0x88] sm:$0xff]
        %v10695 = vld [vmem:[%s9 + $0x90] sm:$0xff]
        %v10696 = vld [vmem:[%s9 + $0x98] sm:$0xff]
        %v10697 = vld [vmem:[%s9 + $0xa0] sm:$0xff]
        %v10698 = vld [vmem:[%s9 + $0xa8] sm:$0xff]
        %v10699 = vld [vmem:[%s9 + $0xb0] sm:$0xff]
        %v10700 = vld [vmem:[%s9 + $0xb8] sm:$0xff]
        %v10701 = vld [vmem:[%s9 + $0xc0] sm:$0xff]
        %v10702 = vld [vmem:[%s9 + $0xc8] sm:$0xff]
        %v10703 = vld [vmem:[%s9 + $0xd0] sm:$0xff]
        %v10704 = vld [vmem:[%s9 + $0xd8] sm:$0xff]
        %v10705 = vld [vmem:[%s9 + $0xe0] sm:$0xff]
        %v10706 = vld [vmem:[%s9 + $0xe8] sm:$0xff]
        %v10707 = vld [vmem:[%s9 + $0xf0] sm:$0xff]
        %v10708 = vld [vmem:[%s9 + $0xf8] sm:$0xff]
        %v10709 = vld [vmem:[%s9 + $0x100] sm:$0xff]
        %v10710 = vld [vmem:[%s9 + $0x108] sm:$0xff]
        %v10711 = vld [vmem:[%s9 + $0x110] sm:$0xff]
        %v10712 = vld [vmem:[%s9 + $0x118] sm:$0xff]
        %v10713 = vld [vmem:[%s9 + $0x120] sm:$0xff]
        %v10714 = vld [vmem:[%s9 + $0x128] sm:$0xff]
        %v10715 = vld [vmem:[%s9 + $0x130] sm:$0xff]
        %v10716 = vld [vmem:[%s9 + $0x138] sm:$0xff]
        %v10717 = vld [vmem:[%s9 + $0x140] sm:$0xff]
        %v10718 = vld [vmem:[%s9 + $0x148] sm:$0xff]
        %v10719 = vld [vmem:[%s9 + $0x150] sm:$0xff]
        %v10720 = vld [vmem:[%s9 + $0x158] sm:$0xff]
        %v10721 = vld [vmem:[%s9 + $0x160] sm:$0xff]
        %v10722 = vld [vmem:[%s9 + $0x168] sm:$0xff]
        %v10723 = vld [vmem:[%s9 + $0x170] sm:$0xff]
        %v10724 = vld [vmem:[%s9 + $0x178] sm:$0xff]
        %v10725 = vld [vmem:[%s9 + $0x180] sm:$0xff]
        %v10726 = vld [vmem:[%s9 + $0x188] sm:$0xff]
        %v10727 = vld [vmem:[%s9 + $0x190] sm:$0xff]
        %v10728 = vld [vmem:[%s9 + $0x198] sm:$0xff]
        %v10729 = vld [vmem:[%s9 + $0x1a0] sm:$0xff]
        %v10730 = vld [vmem:[%s9 + $0x1a8] sm:$0xff]
        %v10731 = vld [vmem:[%s9 + $0x1b0] sm:$0xff]
        %v10732 = vld [vmem:[%s9 + $0x1b8] sm:$0xff]
        %v10733 = vld [vmem:[%s9 + $0x1c0] sm:$0xff]
        %v10734 = vld [vmem:[%s9 + $0x1c8] sm:$0xff]
        %v10735 = vld [vmem:[%s9 + $0x1d0] sm:$0xff]
        %v10736 = vld [vmem:[%s9 + $0x1d8] sm:$0xff]
        %v10737 = vld [vmem:[%s9 + $0x1e0] sm:$0xff]
        %v10738 = vld [vmem:[%s9 + $0x1e8] sm:$0xff]
        %v10739 = vld [vmem:[%s9 + $0x1f0] sm:$0xff]
        %v10740 = vld [vmem:[%s9 + $0x1f8] sm:$0xff]
        %v10741 = vld [vmem:[%s10] sm:$0x3]
        %v10743 = vlaneseq
        %v10744 = vshrl.u32 %v10743, 7
        %v10745 = vsub.s32 0, %v10744
        %v10746 = vrot.slane %v10741, %v10745
        %v10747 = vlaneseq
        %v10748 = vshrl.u32 %v10747, 7
        %v10749 = vsub.s32 1, %v10748
        %v10750 = vrot.slane %v10741, %v10749
        %v10817 = vunpack.c.l.b16 %v10677
        %v10818 = vunpack.c.h.b16 %v10677
        %v10819 = vunpack.c.l.b16 %v10678
        %v10820 = vunpack.c.h.b16 %v10678
        %v10821 = vunpack.c.l.b16 %v10679
        %v10822 = vunpack.c.h.b16 %v10679
        %v10823 = vunpack.c.l.b16 %v10680
        %v10824 = vunpack.c.h.b16 %v10680
        %v10825 = vunpack.c.l.b16 %v10681
        %v10826 = vunpack.c.h.b16 %v10681
        %v10827 = vunpack.c.l.b16 %v10682
        %v10828 = vunpack.c.h.b16 %v10682
        %v10829 = vunpack.c.l.b16 %v10683
        %v10830 = vunpack.c.h.b16 %v10683
        %v10831 = vunpack.c.l.b16 %v10684
        %v10832 = vunpack.c.h.b16 %v10684
        %v10833 = vunpack.c.l.b16 %v10685
        %v10834 = vunpack.c.h.b16 %v10685
        %v10835 = vunpack.c.l.b16 %v10686
        %v10836 = vunpack.c.h.b16 %v10686
        %v10837 = vunpack.c.l.b16 %v10687
        %v10838 = vunpack.c.h.b16 %v10687
        %v10839 = vunpack.c.l.b16 %v10688
        %v10840 = vunpack.c.h.b16 %v10688
        %v10841 = vunpack.c.l.b16 %v10689
        %v10842 = vunpack.c.h.b16 %v10689
        %v10843 = vunpack.c.l.b16 %v10690
        %v10844 = vunpack.c.h.b16 %v10690
        %v10845 = vunpack.c.l.b16 %v10691
        %v10846 = vunpack.c.h.b16 %v10691
        %v10847 = vunpack.c.l.b16 %v10692
        %v10848 = vunpack.c.h.b16 %v10692
        %v10849 = vunpack.c.l.b16 %v10693
        %v10850 = vunpack.c.h.b16 %v10693
        %v10851 = vunpack.c.l.b16 %v10694
        %v10852 = vunpack.c.h.b16 %v10694
        %v10853 = vunpack.c.l.b16 %v10695
        %v10854 = vunpack.c.h.b16 %v10695
        %v10855 = vunpack.c.l.b16 %v10696
        %v10856 = vunpack.c.h.b16 %v10696
        %v10857 = vunpack.c.l.b16 %v10697
        %v10858 = vunpack.c.h.b16 %v10697
        %v10859 = vunpack.c.l.b16 %v10698
        %v10860 = vunpack.c.h.b16 %v10698
        %v10861 = vunpack.c.l.b16 %v10699
        %v10862 = vunpack.c.h.b16 %v10699
        %v10863 = vunpack.c.l.b16 %v10700
        %v10864 = vunpack.c.h.b16 %v10700
        %v10865 = vunpack.c.l.b16 %v10701
        %v10866 = vunpack.c.h.b16 %v10701
        %v10867 = vunpack.c.l.b16 %v10702
        %v10868 = vunpack.c.h.b16 %v10702
        %v10869 = vunpack.c.l.b16 %v10703
        %v10870 = vunpack.c.h.b16 %v10703
        %v10871 = vunpack.c.l.b16 %v10704
        %v10872 = vunpack.c.h.b16 %v10704
        %v10873 = vunpack.c.l.b16 %v10705
        %v10874 = vunpack.c.h.b16 %v10705
        %v10875 = vunpack.c.l.b16 %v10706
        %v10876 = vunpack.c.h.b16 %v10706
        %v10877 = vunpack.c.l.b16 %v10707
        %v10878 = vunpack.c.h.b16 %v10707
        %v10879 = vunpack.c.l.b16 %v10708
        %v10880 = vunpack.c.h.b16 %v10708
        %v10881 = vunpack.c.l.b16 %v10709
        %v10882 = vunpack.c.h.b16 %v10709
        %v10883 = vunpack.c.l.b16 %v10710
        %v10884 = vunpack.c.h.b16 %v10710
        %v10885 = vunpack.c.l.b16 %v10711
        %v10886 = vunpack.c.h.b16 %v10711
        %v10887 = vunpack.c.l.b16 %v10712
        %v10888 = vunpack.c.h.b16 %v10712
        %v10889 = vunpack.c.l.b16 %v10713
        %v10890 = vunpack.c.h.b16 %v10713
        %v10891 = vunpack.c.l.b16 %v10714
        %v10892 = vunpack.c.h.b16 %v10714
        %v10893 = vunpack.c.l.b16 %v10715
        %v10894 = vunpack.c.h.b16 %v10715
        %v10895 = vunpack.c.l.b16 %v10716
        %v10896 = vunpack.c.h.b16 %v10716
        %v10897 = vunpack.c.l.b16 %v10717
        %v10898 = vunpack.c.h.b16 %v10717
        %v10899 = vunpack.c.l.b16 %v10718
        %v10900 = vunpack.c.h.b16 %v10718
        %v10901 = vunpack.c.l.b16 %v10719
        %v10902 = vunpack.c.h.b16 %v10719
        %v10903 = vunpack.c.l.b16 %v10720
        %v10904 = vunpack.c.h.b16 %v10720
        %v10905 = vunpack.c.l.b16 %v10721
        %v10906 = vunpack.c.h.b16 %v10721
        %v10907 = vunpack.c.l.b16 %v10722
        %v10908 = vunpack.c.h.b16 %v10722
        %v10909 = vunpack.c.l.b16 %v10723
        %v10910 = vunpack.c.h.b16 %v10723
        %v10911 = vunpack.c.l.b16 %v10724
        %v10912 = vunpack.c.h.b16 %v10724
        %v10913 = vunpack.c.l.b16 %v10725
        %v10914 = vunpack.c.h.b16 %v10725
        %v10915 = vunpack.c.l.b16 %v10726
        %v10916 = vunpack.c.h.b16 %v10726
        %v10917 = vunpack.c.l.b16 %v10727
        %v10918 = vunpack.c.h.b16 %v10727
        %v10919 = vunpack.c.l.b16 %v10728
        %v10920 = vunpack.c.h.b16 %v10728
        %v10921 = vunpack.c.l.b16 %v10729
        %v10922 = vunpack.c.h.b16 %v10729
        %v10923 = vunpack.c.l.b16 %v10730
        %v10924 = vunpack.c.h.b16 %v10730
        %v10925 = vunpack.c.l.b16 %v10731
        %v10926 = vunpack.c.h.b16 %v10731
        %v10927 = vunpack.c.l.b16 %v10732
        %v10928 = vunpack.c.h.b16 %v10732
        %v10929 = vunpack.c.l.b16 %v10733
        %v10930 = vunpack.c.h.b16 %v10733
        %v10931 = vunpack.c.l.b16 %v10734
        %v10932 = vunpack.c.h.b16 %v10734
        %v10933 = vunpack.c.l.b16 %v10735
        %v10934 = vunpack.c.h.b16 %v10735
        %v10935 = vunpack.c.l.b16 %v10736
        %v10936 = vunpack.c.h.b16 %v10736
        %v10937 = vunpack.c.l.b16 %v10737
        %v10938 = vunpack.c.h.b16 %v10737
        %v10939 = vunpack.c.l.b16 %v10738
        %v10940 = vunpack.c.h.b16 %v10738
        %v10941 = vunpack.c.l.b16 %v10739
        %v10942 = vunpack.c.h.b16 %v10739
        %v10943 = vunpack.c.l.b16 %v10740
        %v10944 = vunpack.c.h.b16 %v10740
        %v10945 = vpack.c.b16 %v10819, %v10817
        %v10946 = vpack.c.b16 %v10820, %v10818
        %v10947 = vpack.c.b16 %v10823, %v10821
        %v10948 = vpack.c.b16 %v10824, %v10822
        %v10949 = vpack.c.b16 %v10827, %v10825
        %v10950 = vpack.c.b16 %v10828, %v10826
        %v10951 = vpack.c.b16 %v10831, %v10829
        %v10952 = vpack.c.b16 %v10832, %v10830
        %v10953 = vpack.c.b16 %v10835, %v10833
        %v10954 = vpack.c.b16 %v10836, %v10834
        %v10955 = vpack.c.b16 %v10839, %v10837
        %v10956 = vpack.c.b16 %v10840, %v10838
        %v10957 = vpack.c.b16 %v10843, %v10841
        %v10958 = vpack.c.b16 %v10844, %v10842
        %v10959 = vpack.c.b16 %v10847, %v10845
        %v10960 = vpack.c.b16 %v10848, %v10846
        %v10961 = vpack.c.b16 %v10851, %v10849
        %v10962 = vpack.c.b16 %v10852, %v10850
        %v10963 = vpack.c.b16 %v10855, %v10853
        %v10964 = vpack.c.b16 %v10856, %v10854
        %v10965 = vpack.c.b16 %v10859, %v10857
        %v10966 = vpack.c.b16 %v10860, %v10858
        %v10967 = vpack.c.b16 %v10863, %v10861
        %v10968 = vpack.c.b16 %v10864, %v10862
        %v10969 = vpack.c.b16 %v10867, %v10865
        %v10970 = vpack.c.b16 %v10868, %v10866
        %v10971 = vpack.c.b16 %v10871, %v10869
        %v10972 = vpack.c.b16 %v10872, %v10870
        %v10973 = vpack.c.b16 %v10875, %v10873
        %v10974 = vpack.c.b16 %v10876, %v10874
        %v10975 = vpack.c.b16 %v10879, %v10877
        %v10976 = vpack.c.b16 %v10880, %v10878
        %v10977 = vpack.c.b16 %v10883, %v10881
        %v10978 = vpack.c.b16 %v10884, %v10882
        %v10979 = vpack.c.b16 %v10887, %v10885
        %v10980 = vpack.c.b16 %v10888, %v10886
        %v10981 = vpack.c.b16 %v10891, %v10889
        %v10982 = vpack.c.b16 %v10892, %v10890
        %v10983 = vpack.c.b16 %v10895, %v10893
        %v10984 = vpack.c.b16 %v10896, %v10894
        %v10985 = vpack.c.b16 %v10899, %v10897
        %v10986 = vpack.c.b16 %v10900, %v10898
        %v10987 = vpack.c.b16 %v10903, %v10901
        %v10988 = vpack.c.b16 %v10904, %v10902
        %v10989 = vpack.c.b16 %v10907, %v10905
        %v10990 = vpack.c.b16 %v10908, %v10906
        %v10991 = vpack.c.b16 %v10911, %v10909
        %v10992 = vpack.c.b16 %v10912, %v10910
        %v10993 = vpack.c.b16 %v10915, %v10913
        %v10994 = vpack.c.b16 %v10916, %v10914
        %v10995 = vpack.c.b16 %v10919, %v10917
        %v10996 = vpack.c.b16 %v10920, %v10918
        %v10997 = vpack.c.b16 %v10923, %v10921
        %v10998 = vpack.c.b16 %v10924, %v10922
        %v10999 = vpack.c.b16 %v10927, %v10925
        %v11000 = vpack.c.b16 %v10928, %v10926
        %v11001 = vpack.c.b16 %v10931, %v10929
        %v11002 = vpack.c.b16 %v10932, %v10930
        %v11003 = vpack.c.b16 %v10935, %v10933
        %v11004 = vpack.c.b16 %v10936, %v10934
        %v11005 = vpack.c.b16 %v10939, %v10937
        %v11006 = vpack.c.b16 %v10940, %v10938
        %v11007 = vpack.c.b16 %v10943, %v10941
        %v11008 = vpack.c.b16 %v10944, %v10942
        %11073 = vmatprep.subr.bf16.mxu0 %v10960
        %11074 = vmatpush1.bf16.msra.mxu0 %v10959
        %11075 = vmatprep.subr.bf16.mxu0 %v10958
        %11076 = vmatpush1.bf16.msra.mxu0 %v10957
        %11077 = vmatprep.subr.bf16.mxu0 %v10956
        %11078 = vmatpush1.bf16.msra.mxu0 %v10955
        %11079 = vmatprep.subr.bf16.mxu0 %v10954
        %11080 = vmatpush1.bf16.msra.mxu0 %v10953
        %11081 = vmatprep.subr.bf16.mxu0 %v10952
        %11082 = vmatpush1.bf16.msra.mxu0 %v10951
        %11083 = vmatprep.subr.bf16.mxu0 %v10950
        %11084 = vmatpush1.bf16.msra.mxu0 %v10949
        %11085 = vmatprep.subr.bf16.mxu0 %v10948
        %11086 = vmatpush1.bf16.msra.mxu0 %v10947
        %11087 = vmatprep.subr.bf16.mxu0 %v10946
        %11088 = vmatpush1.bf16.msra.mxu0 %v10945
        %11089 = vmatprep.subr.bf16.mxu0 %v10976
        %11090 = vmatpush2.bf16.msra.mxu0 %v10975
        %11091 = vmatprep.subr.bf16.mxu0 %v10974
        %11092 = vmatpush2.bf16.msra.mxu0 %v10973
        %11093 = vmatprep.subr.bf16.mxu0 %v10972
        %11094 = vmatpush2.bf16.msra.mxu0 %v10971
        %11095 = vmatprep.subr.bf16.mxu0 %v10970
        %11096 = vmatpush2.bf16.msra.mxu0 %v10969
        %11097 = vmatprep.subr.bf16.mxu0 %v10968
        %11098 = vmatpush2.bf16.msra.mxu0 %v10967
        %11099 = vmatprep.subr.bf16.mxu0 %v10966
        %11100 = vmatpush2.bf16.msra.mxu0 %v10965
        %11101 = vmatprep.subr.bf16.mxu0 %v10964
        %11102 = vmatpush2.bf16.msra.mxu0 %v10963
        %11103 = vmatprep.subr.bf16.mxu0 %v10962
        %11104 = vmatpush2.bf16.msra.mxu0 %v10961
        %11105 = vmatprep.mubr.bf16.mxu0 %v10674
        %11106 = vmatmul.mubr.bf16.gmra.mxu0 %v10673
        %v11107 = vpop.f32.mrf.mxu0
        %v11108 = vadd.f32 %v10746, %v11107
        %v11109 = vpop.f32.mrf.mxu0
        %v11110 = vadd.f32 %v10750, %v11109
        %v11111 = vpop.f32.mrf.mxu0
        %v11112 = vpop.f32.mrf.mxu0
        %11113 = vdwg.mxu0
        %11114 = vmatprep.subr.bf16.mxu0 %v10992
        %11115 = vmatpush1.bf16.msra.mxu0 %v10991
        %11116 = vmatprep.subr.bf16.mxu0 %v10990
        %11117 = vmatpush1.bf16.msra.mxu0 %v10989
        %11118 = vmatprep.subr.bf16.mxu0 %v10988
        %11119 = vmatpush1.bf16.msra.mxu0 %v10987
        %11120 = vmatprep.subr.bf16.mxu0 %v10986
        %11121 = vmatpush1.bf16.msra.mxu0 %v10985
        %11122 = vmatprep.subr.bf16.mxu0 %v10984
        %11123 = vmatpush1.bf16.msra.mxu0 %v10983
        %11124 = vmatprep.subr.bf16.mxu0 %v10982
        %11125 = vmatpush1.bf16.msra.mxu0 %v10981
        %11126 = vmatprep.subr.bf16.mxu0 %v10980
        %11127 = vmatpush1.bf16.msra.mxu0 %v10979
        %11128 = vmatprep.subr.bf16.mxu0 %v10978
        %11129 = vmatpush1.bf16.msra.mxu0 %v10977
        %11130 = vmatprep.subr.bf16.mxu0 %v11008
        %11131 = vmatpush2.bf16.msra.mxu0 %v11007
        %11132 = vmatprep.subr.bf16.mxu0 %v11006
        %11133 = vmatpush2.bf16.msra.mxu0 %v11005
        %11134 = vmatprep.subr.bf16.mxu0 %v11004
        %11135 = vmatpush2.bf16.msra.mxu0 %v11003
        %11136 = vmatprep.subr.bf16.mxu0 %v11002
        %11137 = vmatpush2.bf16.msra.mxu0 %v11001
        %11138 = vmatprep.subr.bf16.mxu0 %v11000
        %11139 = vmatpush2.bf16.msra.mxu0 %v10999
        %11140 = vmatprep.subr.bf16.mxu0 %v10998
        %11141 = vmatpush2.bf16.msra.mxu0 %v10997
        %11142 = vmatprep.subr.bf16.mxu0 %v10996
        %11143 = vmatpush2.bf16.msra.mxu0 %v10995
        %11144 = vmatprep.subr.bf16.mxu0 %v10994
        %11145 = vmatpush2.bf16.msra.mxu0 %v10993
        %11146 = vmatprep.mubr.bf16.mxu0 %v10676
        %11147 = vmatmul.mubr.bf16.gmra.mxu0 %v10675
        %v11148 = vpop.f32.mrf.mxu0
        %v11149 = vadd.f32 %v11108, %v11148
        %v11150 = vpop.f32.mrf.mxu0
        %v11151 = vadd.f32 %v11110, %v11150
        %v11152 = vpop.f32.mrf.mxu0
        %v11153 = vpop.f32.mrf.mxu0
        %11154 = vdwg.mxu0
        %v11155 = vmax.f32 %v11149, 0.0
        %v11156 = vmax.f32 %v11151, 0.0
        %v11157 = vpack.c.bf16 %v11155, %v11155
        %v11158 = vpack.c.bf16 %v11156, %v11156
        %v11159 = vld [vmem:[#allocation5] sm:$0xff]
        %v11160 = vld [vmem:[#allocation5 + $0x8] sm:$0xff]
        %v11161 = vld [vmem:[#allocation5 + $0x10] sm:$0xff]
        %v11162 = vld [vmem:[#allocation5 + $0x18] sm:$0xff]
        %v11163 = vld [vmem:[#allocation5 + $0x20] sm:$0xff]
        %v11164 = vld [vmem:[#allocation5 + $0x28] sm:$0xff]
        %v11165 = vld [vmem:[#allocation5 + $0x30] sm:$0xff]
        %v11166 = vld [vmem:[#allocation5 + $0x38] sm:$0xff]
        %v11167 = vld [vmem:[#allocation5 + $0x40] sm:$0xff]
        %v11168 = vld [vmem:[#allocation5 + $0x48] sm:$0xff]
        %v11169 = vld [vmem:[#allocation5 + $0x50] sm:$0xff]
        %v11170 = vld [vmem:[#allocation5 + $0x58] sm:$0xff]
        %v11171 = vld [vmem:[#allocation5 + $0x60] sm:$0xff]
        %v11172 = vld [vmem:[#allocation5 + $0x68] sm:$0xff]
        %v11173 = vld [vmem:[#allocation5 + $0x70] sm:$0xff]
        %v11174 = vld [vmem:[#allocation5 + $0x78] sm:$0xff]
        %v11175 = vld [vmem:[#allocation5 + $0x80] sm:$0xff]
        %v11176 = vld [vmem:[#allocation5 + $0x88] sm:$0xff]
        %v11177 = vld [vmem:[#allocation5 + $0x90] sm:$0xff]
        %v11178 = vld [vmem:[#allocation5 + $0x98] sm:$0xff]
        %v11179 = vld [vmem:[#allocation5 + $0xa0] sm:$0xff]
        %v11180 = vld [vmem:[#allocation5 + $0xa8] sm:$0xff]
        %v11181 = vld [vmem:[#allocation5 + $0xb0] sm:$0xff]
        %v11182 = vld [vmem:[#allocation5 + $0xb8] sm:$0xff]
        %v11183 = vld [vmem:[#allocation5 + $0xc0] sm:$0xff]
        %v11184 = vld [vmem:[#allocation5 + $0xc8] sm:$0xff]
        %v11185 = vld [vmem:[#allocation5 + $0xd0] sm:$0xff]
        %v11186 = vld [vmem:[#allocation5 + $0xd8] sm:$0xff]
        %v11187 = vld [vmem:[#allocation5 + $0xe0] sm:$0xff]
        %v11188 = vld [vmem:[#allocation5 + $0xe8] sm:$0xff]
        %v11189 = vld [vmem:[#allocation5 + $0xf0] sm:$0xff]
        %v11190 = vld [vmem:[#allocation5 + $0xf8] sm:$0xff]
        %v11191 = vld [vmem:[%s12] sm:$0x3]
        %v11193 = vlaneseq
        %v11194 = vshrl.u32 %v11193, 7
        %v11195 = vsub.s32 0, %v11194
        %v11196 = vrot.slane %v11191, %v11195
        %v11197 = vlaneseq
        %v11198 = vshrl.u32 %v11197, 7
        %v11199 = vsub.s32 1, %v11198
        %v11200 = vrot.slane %v11191, %v11199
        %v11235 = vunpack.c.l.b16 %v11159
        %v11236 = vunpack.c.h.b16 %v11159
        %v11237 = vunpack.c.l.b16 %v11160
        %v11238 = vunpack.c.h.b16 %v11160
        %v11239 = vunpack.c.l.b16 %v11161
        %v11240 = vunpack.c.h.b16 %v11161
        %v11241 = vunpack.c.l.b16 %v11162
        %v11242 = vunpack.c.h.b16 %v11162
        %v11243 = vunpack.c.l.b16 %v11163
        %v11244 = vunpack.c.h.b16 %v11163
        %v11245 = vunpack.c.l.b16 %v11164
        %v11246 = vunpack.c.h.b16 %v11164
        %v11247 = vunpack.c.l.b16 %v11165
        %v11248 = vunpack.c.h.b16 %v11165
        %v11249 = vunpack.c.l.b16 %v11166
        %v11250 = vunpack.c.h.b16 %v11166
        %v11251 = vunpack.c.l.b16 %v11167
        %v11252 = vunpack.c.h.b16 %v11167
        %v11253 = vunpack.c.l.b16 %v11168
        %v11254 = vunpack.c.h.b16 %v11168
        %v11255 = vunpack.c.l.b16 %v11169
        %v11256 = vunpack.c.h.b16 %v11169
        %v11257 = vunpack.c.l.b16 %v11170
        %v11258 = vunpack.c.h.b16 %v11170
        %v11259 = vunpack.c.l.b16 %v11171
        %v11260 = vunpack.c.h.b16 %v11171
        %v11261 = vunpack.c.l.b16 %v11172
        %v11262 = vunpack.c.h.b16 %v11172
        %v11263 = vunpack.c.l.b16 %v11173
        %v11264 = vunpack.c.h.b16 %v11173
        %v11265 = vunpack.c.l.b16 %v11174
        %v11266 = vunpack.c.h.b16 %v11174
        %v11267 = vunpack.c.l.b16 %v11175
        %v11268 = vunpack.c.h.b16 %v11175
        %v11269 = vunpack.c.l.b16 %v11176
        %v11270 = vunpack.c.h.b16 %v11176
        %v11271 = vunpack.c.l.b16 %v11177
        %v11272 = vunpack.c.h.b16 %v11177
        %v11273 = vunpack.c.l.b16 %v11178
        %v11274 = vunpack.c.h.b16 %v11178
        %v11275 = vunpack.c.l.b16 %v11179
        %v11276 = vunpack.c.h.b16 %v11179
        %v11277 = vunpack.c.l.b16 %v11180
        %v11278 = vunpack.c.h.b16 %v11180
        %v11279 = vunpack.c.l.b16 %v11181
        %v11280 = vunpack.c.h.b16 %v11181
        %v11281 = vunpack.c.l.b16 %v11182
        %v11282 = vunpack.c.h.b16 %v11182
        %v11283 = vunpack.c.l.b16 %v11183
        %v11284 = vunpack.c.h.b16 %v11183
        %v11285 = vunpack.c.l.b16 %v11184
        %v11286 = vunpack.c.h.b16 %v11184
        %v11287 = vunpack.c.l.b16 %v11185
        %v11288 = vunpack.c.h.b16 %v11185
        %v11289 = vunpack.c.l.b16 %v11186
        %v11290 = vunpack.c.h.b16 %v11186
        %v11291 = vunpack.c.l.b16 %v11187
        %v11292 = vunpack.c.h.b16 %v11187
        %v11293 = vunpack.c.l.b16 %v11188
        %v11294 = vunpack.c.h.b16 %v11188
        %v11295 = vunpack.c.l.b16 %v11189
        %v11296 = vunpack.c.h.b16 %v11189
        %v11297 = vunpack.c.l.b16 %v11190
        %v11298 = vunpack.c.h.b16 %v11190
        %v11299 = vpack.c.b16 %v11237, %v11235
        %v11300 = vpack.c.b16 %v11238, %v11236
        %v11301 = vpack.c.b16 %v11241, %v11239
        %v11302 = vpack.c.b16 %v11242, %v11240
        %v11303 = vpack.c.b16 %v11245, %v11243
        %v11304 = vpack.c.b16 %v11246, %v11244
        %v11305 = vpack.c.b16 %v11249, %v11247
        %v11306 = vpack.c.b16 %v11250, %v11248
        %v11307 = vpack.c.b16 %v11253, %v11251
        %v11308 = vpack.c.b16 %v11254, %v11252
        %v11309 = vpack.c.b16 %v11257, %v11255
        %v11310 = vpack.c.b16 %v11258, %v11256
        %v11311 = vpack.c.b16 %v11261, %v11259
        %v11312 = vpack.c.b16 %v11262, %v11260
        %v11313 = vpack.c.b16 %v11265, %v11263
        %v11314 = vpack.c.b16 %v11266, %v11264
        %v11315 = vpack.c.b16 %v11269, %v11267
        %v11316 = vpack.c.b16 %v11270, %v11268
        %v11317 = vpack.c.b16 %v11273, %v11271
        %v11318 = vpack.c.b16 %v11274, %v11272
        %v11319 = vpack.c.b16 %v11277, %v11275
        %v11320 = vpack.c.b16 %v11278, %v11276
        %v11321 = vpack.c.b16 %v11281, %v11279
        %v11322 = vpack.c.b16 %v11282, %v11280
        %v11323 = vpack.c.b16 %v11285, %v11283
        %v11324 = vpack.c.b16 %v11286, %v11284
        %v11325 = vpack.c.b16 %v11289, %v11287
        %v11326 = vpack.c.b16 %v11290, %v11288
        %v11327 = vpack.c.b16 %v11293, %v11291
        %v11328 = vpack.c.b16 %v11294, %v11292
        %v11329 = vpack.c.b16 %v11297, %v11295
        %v11330 = vpack.c.b16 %v11298, %v11296
        %11363 = vmatprep.subr.bf16.mxu0 %v11314
        %11364 = vmatpush1.bf16.msra.mxu0 %v11313
        %11365 = vmatprep.subr.bf16.mxu0 %v11312
        %11366 = vmatpush1.bf16.msra.mxu0 %v11311
        %11367 = vmatprep.subr.bf16.mxu0 %v11310
        %11368 = vmatpush1.bf16.msra.mxu0 %v11309
        %11369 = vmatprep.subr.bf16.mxu0 %v11308
        %11370 = vmatpush1.bf16.msra.mxu0 %v11307
        %11371 = vmatprep.subr.bf16.mxu0 %v11306
        %11372 = vmatpush1.bf16.msra.mxu0 %v11305
        %11373 = vmatprep.subr.bf16.mxu0 %v11304
        %11374 = vmatpush1.bf16.msra.mxu0 %v11303
        %11375 = vmatprep.subr.bf16.mxu0 %v11302
        %11376 = vmatpush1.bf16.msra.mxu0 %v11301
        %11377 = vmatprep.subr.bf16.mxu0 %v11300
        %11378 = vmatpush1.bf16.msra.mxu0 %v11299
        %11379 = vmatprep.subr.bf16.mxu0 %v11330
        %11380 = vmatpush2.bf16.msra.mxu0 %v11329
        %11381 = vmatprep.subr.bf16.mxu0 %v11328
        %11382 = vmatpush2.bf16.msra.mxu0 %v11327
        %11383 = vmatprep.subr.bf16.mxu0 %v11326
        %11384 = vmatpush2.bf16.msra.mxu0 %v11325
        %11385 = vmatprep.subr.bf16.mxu0 %v11324
        %11386 = vmatpush2.bf16.msra.mxu0 %v11323
        %11387 = vmatprep.subr.bf16.mxu0 %v11322
        %11388 = vmatpush2.bf16.msra.mxu0 %v11321
        %11389 = vmatprep.subr.bf16.mxu0 %v11320
        %11390 = vmatpush2.bf16.msra.mxu0 %v11319
        %11391 = vmatprep.subr.bf16.mxu0 %v11318
        %11392 = vmatpush2.bf16.msra.mxu0 %v11317
        %11393 = vmatprep.subr.bf16.mxu0 %v11316
        %11394 = vmatpush2.bf16.msra.mxu0 %v11315
        %11395 = vmatprep.mubr.bf16.mxu0 %v11158
        %11396 = vmatmul.mubr.bf16.gmra.mxu0 %v11157
        %v11397 = vpop.f32.mrf.mxu0
        %v11398 = vadd.f32 %v11196, %v11397
        %v11399 = vpop.f32.mrf.mxu0
        %v11400 = vadd.f32 %v11200, %v11399
        %v11401 = vpop.f32.mrf.mxu0
        %v11402 = vpop.f32.mrf.mxu0
        %11403 = vdwg.mxu0
        %11404 = vst [vmem:[%s464] sm:$0xff] %v11398
        %11405 = vst [vmem:[%s464 + $0x8] sm:$0xff] %v11400
        %s11406 = sand.u32 %s315, 1
        %s11407 = scalar_lea.sflag [#allocation4], %s11406
        %s11408 = sand.u32 %s315, 1
        %s11409 = smul.addr %s11408, 16
        %s11410 = scalar_lea.vmem [#allocation7], %s11409
        // Predicated region
        $region81: #{tpu_custom_call.1} parent=71 // pred_check
          %p11411 = pneg %p325
        $region82: #{tpu_custom_call.1} parent=71 // pred_check_branch
          %11413 = sbr.rel (%p11411) target = $region84
        $region83: #{tpu_custom_call.1} parent=71 // pred_region
          %s11415 = ssub.s32 256, 256
          %11416 = vsyncadd %s11407, %s11415
          %s11417 = smul.addr %s29, 2
          %s11418 = smul.addr %s11417, 128
          %s11419 = scalar_lea.hbm %s13, %s11418
          %s11421 = sshll.u32 %s11410, 4
          %s11422 = int_to_ptr.vmem [resolvable:$true] %s11421
          %11424 = dma.vmem_to_hbm [thread:$0]  %s11422, 256, %s11419, %s11407
        $region84: #{tpu_custom_call.1} parent=71 // pred_fallthru
          _
      $region72: #{tpu_custom_call.1} parent=5 // pred_fallthru
        _
      %p11425 = scmp.le.s32.totalorder 2, %s24
      // Predicated region
      $region85: #{tpu_custom_call.1} parent=5 // pred_check
        %p11426 = pneg %p11425
      $region86: #{tpu_custom_call.1} parent=5 // pred_check_branch
        %11428 = sbr.rel (%p11426) target = $region88
      $region87: #{tpu_custom_call.1} parent=5 // pred_region
        %s11429 = ssub.s32 %s24, 2
        // Predicated region
        $region89: #{tpu_custom_call.1} parent=87 // pred_check
          %p11430 = pneg %p331
        $region90: #{tpu_custom_call.1} parent=87 // pred_check_branch
          %11432 = sbr.rel (%p11430) target = $region92
        $region91: #{tpu_custom_call.1} parent=87 // pred_region
          %s11433 = sand.u32 %s316, 1
          %s11434 = scalar_lea.sflag [#allocation4], %s11433
          %s11435 = sand.u32 %s316, 1
          %s11436 = smul.addr %s11435, 16
          %s11437 = scalar_lea.vmem [#allocation7], %s11436
          %11438 = dma.done %s11434, 256
        $region92: #{tpu_custom_call.1} parent=87 // pred_fallthru
          _
      $region88: #{tpu_custom_call.1} parent=5 // pred_fallthru
        _
    $region6: #{tpu_custom_call.1} parent=1 // loop_footer
      %s28 = sadd.s32 1, %s24
    $region7: #{tpu_custom_call.1} parent=1 // loop_footer_branch
      %23 = sbr.rel target = $region3
    $region8: #{tpu_custom_call.1} parent=1 // loop_exit
      _
    %11439 = vsyncpa [#allocation3], 1
    %s11440 = scalar_lea.sflag [#allocation3], 1
    %11441 = vsyncpa %s11440, 1
    %11442 = vsyncpa [#allocation6], 1
    %11443 = vsyncpa [#allocation4], 1
    %s11444 = scalar_lea.sflag [#allocation4], 1
    %11445 = vsyncpa %s11444, 1

</llo_original>
